<compile_context>
chip_gen: v7x
topology: tpu7x:2x2x1
jax: 0.10.0
libtpu: 0.0.40
codegen_flags: <defaults>
</compile_context>

<pallas_src>
import jax
import jax.numpy as jnp
import numpy as np
from jax.experimental import pallas as pl
from jax.experimental.pallas import tpu as pltpu

# ----------------------------- configuration --------------------------------
MEM_DIM = 32                     # mem_dim
M2 = 2 * MEM_DIM                 # ChildSumTreeLSTM internal dim (= 2*mem_dim), rep width
IN_DIM = 2 * MEM_DIM             # original code implicitly requires in_dim == 2*mem_dim
HIDDEN_DIM = 32
NUM_CLASSES = 2
OUT_PAD = 128                    # lane-dense padded logits width
VOCAB = 50
MAX_NUM_PARA = 2
MAX_NUM_SENT = 3

_VMEM = pl.BlockSpec(memory_space=pltpu.MemorySpace.VMEM)


# ------------------------------- tree glue -----------------------------------
class Tree:
    def __init__(self, idx, children=()):
        self.idx = idx
        self.children = list(children)
        self.num_children = len(self.children)


def _collect_nodes(tree, uid, node_info):
    """Record level / children / token position for every node of `tree`."""
    if tree.num_children == 0:
        node_info[(uid, tree.idx)] = {'level': 0, 'children': [], 'token_pos': tree.idx}
        return 0
    lvl = 1 + max(_collect_nodes(ch, uid, node_info) for ch in tree.children)
    node_info[(uid, tree.idx)] = {
        'level': lvl,
        'children': [(uid, ch.idx) for ch in tree.children],
        'token_pos': tree.idx,
    }
    return lvl


def build_schedule(body, max_num_para=MAX_NUM_PARA, max_num_sent=MAX_NUM_SENT):
    """Levelize all trees of a document into a static (host-side) schedule."""
    node_info = {}
    tree_tokens = {}

    rtree = body['headline']['rtree']
    rsent = body['headline']['rsent']
    _collect_nodes(rtree, 'head', node_info)
    tree_tokens['head'] = rsent
    headline_root = ('head', rtree.idx)

    sent_slots = [[None] * max_num_sent for _ in range(max_num_para)]
    count = 0
    for p_id in body['body_list']:
        count += 1
        if count > max_num_para:
            break
        p = count - 1
        for s, (ltree, lsent) in enumerate(body['body_list'][p_id]):
            if s >= max_num_sent:
                break                    # outputs beyond max_num_sent are discarded anyway
            uid = ('p', p, s)
            _collect_nodes(ltree, uid, node_info)
            tree_tokens[uid] = lsent
            sent_slots[p][s] = (uid, ltree.idx)
    num_real_paras = min(len(body['body_list']), max_num_para)

    max_level = max(info['level'] for info in node_info.values())
    levels, tokens = [], []
    for lvl in range(max_level + 1):
        keys = sorted((k for k, info in node_info.items() if info['level'] == lvl), key=repr)
        entries = []
        for k in keys:
            row = len(tokens)
            tokens.append(int(tree_tokens[k[0]][node_info[k]['token_pos']]))
            entries.append({'key': k, 'x_row': row, 'children': node_info[k]['children']})
        levels.append(entries)
    for entries in levels:                               # levels occupy contiguous x rows
        for j, e in enumerate(entries):
            assert e['x_row'] == entries[0]['x_row'] + j

    return {
        'levels': levels,
        'headline_root': headline_root,
        'sent_slots': sent_slots,
        'num_real_paras': num_real_paras,
        'node_tokens': jnp.asarray(tokens, dtype=jnp.int32),
        'num_nodes': len(tokens),
    }


# --------------------------- fused forward kernel ----------------------------
def build_kernel(schedule):
    levels = schedule['levels']
    sent_slots = schedule['sent_slots']
    headline_root = schedule['headline_root']
    num_paras = schedule['num_real_paras']

    def kernel(x_ref,
               wx_iou_ref, bx_iou_ref, wh_iou_ref, bh_iou_ref,
               wfx_ref, bfx_ref, wfh_ref, bfh_ref,
               pf_wih_ref, pf_whh_ref, pf_b_ref,
               pb_wih_ref, pb_whh_ref, pb_b_ref,
               bd_wih_ref, bd_whh_ref, bd_b_ref,
               sel_wh_ref, sel_wp_ref, sel_b_ref,
               sim_wh_ref, sim_bh_ref, sim_wp_ref, sim_bp_ref,
               sent_pad_ref, para_pad_ref,
               out_ref):
        f32 = jnp.float32

        def mm(a, b):
            return jnp.dot(a, b, preferred_element_type=f32)

        # ------------- ChildSumTreeLSTM over every tree, level by level -------------
        states = {}                                   # key -> (c, h), each (1, M2)

        # Level 0: all leaves of all trees in one batched update. For leaves the
        # children are all-zero rows, so iouh contributes only its bias and the
        # forget-gate term vanishes (f * 0 == 0) — exactly the original math.
        leaves = levels[0]
        nl = len(leaves)
        r0 = leaves[0]['x_row']
        x_leaf = x_ref[r0:r0 + nl, :]                 # (nl, IN_DIM), contiguous rows

        def leaf_gate(g, act):
            return act(mm(x_leaf, wx_iou_ref[g]) + bx_iou_ref[g] + bh_iou_ref[g])

        li = leaf_gate(0, jax.nn.sigmoid)
        lo = leaf_gate(1, jax.nn.sigmoid)
        lu = leaf_gate(2, jnp.tanh)
        lc = li * lu
        lh = lo * jnp.tanh(lc)
        for b, entry in enumerate(leaves):
            states[entry['key']] = (lc[b:b + 1, :], lh[b:b + 1, :])

        # Higher levels: every node of the level batched on the sublane axis.
        for entries in levels[1:]:
            nb = len(entries)
            row0 = entries[0]['x_row']
            x_blk = x_ref[row0:row0 + nb, :]          # (nb, IN_DIM)
            hsum_rows, chh_rows, chc_rows, counts = [], [], [], []
            for entry in entries:
                # Reproduce the original forward()'s swap: node_forward's child_h
                # argument receives the children's *c* states and child_c their *h*.
                ch_arg = [states[ck][0] for ck in entry['children']]     # children c
                cc_arg = [states[ck][1] for ck in entry['children']]     # children h
                hs = ch_arg[0]
                for extra in ch_arg[1:]:
                    hs = hs + extra
                hsum_rows.append(hs)
                chh_rows.extend(ch_arg)
                chc_rows.extend(cc_arg)
                counts.append(len(entry['children']))
            hsum_blk = jnp.concatenate(hsum_rows, axis=0)                # (nb, M2)
            chh_blk = jnp.concatenate(chh_rows, axis=0)                  # (nc, M2)
            chc_blk = jnp.concatenate(chc_rows, axis=0)                  # (nc, M2)

            def gate(g, act):
                return act(mm(x_blk, wx_iou_ref[g]) + bx_iou_ref[g]
                           + mm(hsum_blk, wh_iou_ref[g]) + bh_iou_ref[g])

            gi = gate(0, jax.nn.sigmoid)
            go = gate(1, jax.nn.sigmoid)
            gu = gate(2, jnp.tanh)
            iu = gi * gu
            fx = mm(x_blk, wfx_ref[...]) + bfx_ref[...]                  # (nb, M2)
            fh = mm(chh_blk, wfh_ref[...]) + bfh_ref[...]                # (nc, M2)
            off = 0
            for b, entry in enumerate(entries):
                k = counts[b]
                f = jax.nn.sigmoid(fh[off:off + k, :] + fx[b:b + 1, :])
                fcsum = jnp.sum(f * chc_blk[off:off + k, :], axis=0, keepdims=True)
                c = iu[b:b + 1, :] + fcsum
                h = go[b:b + 1, :] * jnp.tanh(c)
                states[entry['key']] = (c, h)
                off += k

        # --------------------------- LSTM cell helper --------------------------------
        def lstm_step(x, h, c, wih_ref, whh_ref, b_ref):
            def g(k, act):
                return act(mm(x, wih_ref[k]) + mm(h, whh_ref[k]) + b_ref[k])
            i = g(0, jax.nn.sigmoid)
            f = g(1, jax.nn.sigmoid)
            cand = g(2, jnp.tanh)
            o = g(3, jax.nn.sigmoid)
            c_new = f * c + i * cand
            h_new = o * jnp.tanh(c_new)
            return h_new, c_new

        sent_pad = sent_pad_ref[...]
        para_pad = para_pad_ref[...]

        # -------- bidirectional Para_LSTM, batched over the real paragraphs ----------
        p_hidden = []
        if num_paras > 0:
            sent_enc = [[states[sent_slots[p][t]][0] if sent_slots[p][t] is not None
                         else sent_pad
                         for t in range(MAX_NUM_SENT)]
                        for p in range(num_paras)]
            zeros_ph = jnp.zeros((num_paras, MEM_DIM), f32)
            h_f, c_f, h_b, c_b = zeros_ph, zeros_ph, zeros_ph, zeros_ph
            for t in range(MAX_NUM_SENT):
                x_f = jnp.concatenate([sent_enc[p][t] for p in range(num_paras)], axis=0)
                x_b = jnp.concatenate([sent_enc[p][MAX_NUM_SENT - 1 - t]
                                       for p in range(num_paras)], axis=0)
                h_f, c_f = lstm_step(x_f, h_f, c_f, pf_wih_ref, pf_whh_ref, pf_b_ref)
                h_b, c_b = lstm_step(x_b, h_b, c_b, pb_wih_ref, pb_whh_ref, pb_b_ref)
            h_para = jnp.concatenate([h_f, h_b], axis=1)                 # (num_paras, M2)
            p_hidden = [h_para[p:p + 1, :] for p in range(num_paras)]
        p_hidden += [para_pad] * (MAX_NUM_PARA - num_paras)

        # ----- body_LSTM forward / "backward" sweep (the backward step deliberately
        # ----- uses the just-updated forward hidden, exactly as the original) --------
        zero_h1 = jnp.zeros((1, MEM_DIM), f32)
        h_for, c_for, c_back = zero_h1, zero_h1, zero_h1
        h_fwd_list, h_bwd_list = [], []
        forward_rep = backward_rep = None
        k_rev = MAX_NUM_PARA - 1
        for i in range(MAX_NUM_PARA):
            h_for, c_for = lstm_step(p_hidden[i], h_for, c_for,
                                     bd_wih_ref, bd_whh_ref, bd_b_ref)
            if i == MAX_NUM_PARA - 1:
                forward_rep = h_for
            h_fwd_list.append(h_for)
            h_back, c_back = lstm_step(p_hidden[k_rev], h_for, c_back,
                                       bd_wih_ref, bd_whh_ref, bd_b_ref)
            h_bwd_list.append(h_back)
            k_rev -= 1
            if k_rev < 0:
                backward_rep = h_back

        para_rep = jnp.concatenate([forward_rep, backward_rep], axis=1)  # (1, M2)
        h_body = jnp.concatenate(
            [jnp.concatenate([h_fwd_list[i], h_bwd_list[i]], axis=1)
             for i in range(MAX_NUM_PARA)], axis=0)                      # (P, M2)

        # ---------------- selective gate -> softmax -> weighted sum ------------------
        logits = (mm(h_body, sel_wh_ref[...]) + mm(para_rep, sel_wp_ref[...])
                  + sel_b_ref[...])                                      # (P, M2)
        lmax = jnp.max(logits, axis=1, keepdims=True)
        e = jnp.exp(logits - lmax)
        soft = e * pl.reciprocal(jnp.sum(e, axis=1, keepdims=True), approx=True)
        h_body_prime = jnp.sum(h_body * soft, axis=0, keepdims=True)     # (1, M2)

        # ------------------------------- similarity MLP ------------------------------
        lvec = h_body_prime
        rvec = states[headline_root][0]                                  # headline root c
        mult = lvec * rvec
        absd = jnp.abs(lvec - rvec)
        hid = jax.nn.sigmoid(mm(mult, sim_wh_ref[0]) + mm(absd, sim_wh_ref[1])
                             + mm(lvec, sim_wh_ref[2]) + mm(rvec, sim_wh_ref[3])
                             + sim_bh_ref[...])                          # (1, HIDDEN_DIM)
        out_ref[...] = mm(hid, sim_wp_ref[...]) + sim_bp_ref[...]        # (1, OUT_PAD)

    return kernel


def build_forward(schedule):
    kernel = build_kernel(schedule)

    @jax.jit
    def forward(params, node_tokens):
        x_nodes = params['emb'][node_tokens]                   # (num_nodes, IN_DIM)
        out_padded = pl.pallas_call(
            kernel,
            out_shape=jax.ShapeDtypeStruct((1, OUT_PAD), jnp.float32),
            in_specs=[_VMEM] * 27,
            out_specs=_VMEM,
        )(x_nodes,
          params['wx_iou'], params['bx_iou'], params['wh_iou'], params['bh_iou'],
          params['wfx'], params['bfx'], params['wfh'], params['bfh'],
          params['pf_wih'], params['pf_whh'], params['pf_b'],
          params['pb_wih'], params['pb_whh'], params['pb_b'],
          params['bd_wih'], params['bd_whh'], params['bd_b'],
          params['sel_wh'], params['sel_wp'], params['sel_b'],
          params['sim_wh'], params['sim_bh'], params['sim_wp'], params['sim_bp'],
          params['sent_pad'], params['para_pad'])
        return out_padded[:, :NUM_CLASSES]

    return forward


# ------------------------------ parameters -----------------------------------
def _uniform(key, shape, bound):
    return jax.random.uniform(key, shape, jnp.float32, -bound, bound)


def init_params(key):
    ks = iter(jax.random.split(key, 40))
    p = {}
    emb = 0.1 * jax.random.normal(next(ks), (VOCAB, IN_DIM), jnp.float32)
    p['emb'] = emb.at[0].set(0.0)                              # padding_idx = 0

    b_in = 1.0 / (IN_DIM ** 0.5)
    b_m2 = 1.0 / (M2 ** 0.5)
    b_h = 1.0 / (MEM_DIM ** 0.5)

    # ChildSumTreeLSTM — per-gate stacked [i, o, u]
    p['wx_iou'] = _uniform(next(ks), (3, IN_DIM, M2), b_in)
    p['bx_iou'] = _uniform(next(ks), (3, 1, M2), b_in)
    p['wh_iou'] = _uniform(next(ks), (3, M2, M2), b_m2)
    p['bh_iou'] = _uniform(next(ks), (3, 1, M2), b_m2)
    p['wfx'] = _uniform(next(ks), (IN_DIM, M2), b_in)
    p['bfx'] = _uniform(next(ks), (1, M2), b_in)
    p['wfh'] = _uniform(next(ks), (M2, M2), b_m2)
    p['bfh'] = _uniform(next(ks), (1, M2), b_m2)

    # LSTM cells — per-gate stacked [i, f, g, o]; bias = b_ih + b_hh (combined)
    def lstm_params(k1, k2, k3):
        return (_uniform(k1, (4, M2, MEM_DIM), b_h),
                _uniform(k2, (4, MEM_DIM, MEM_DIM), b_h),
                _uniform(k3, (4, 1, MEM_DIM), b_h))

    p['pf_wih'], p['pf_whh'], p['pf_b'] = lstm_params(next(ks), next(ks), next(ks))
    p['pb_wih'], p['pb_whh'], p['pb_b'] = lstm_params(next(ks), next(ks), next(ks))
    p['bd_wih'], p['bd_whh'], p['bd_b'] = lstm_params(next(ks), next(ks), next(ks))

    # selective gate: Linear(4*mem, 2*mem) split into the h_t block and para_rep block
    b_sel = 1.0 / ((4 * MEM_DIM) ** 0.5)
    p['sel_wh'] = _uniform(next(ks), (M2, M2), b_sel)
    p['sel_wp'] = _uniform(next(ks), (M2, M2), b_sel)
    p['sel_b'] = _uniform(next(ks), (1, M2), b_sel)

    # similarity: wh split into four blocks over [mult, |l-r|, l, r]; wp lane-padded
    b_wh = 1.0 / ((8 * MEM_DIM) ** 0.5)
    p['sim_wh'] = _uniform(next(ks), (4, M2, HIDDEN_DIM), b_wh)
    p['sim_bh'] = _uniform(next(ks), (1, HIDDEN_DIM), b_wh)
    b_wp = 1.0 / (HIDDEN_DIM ** 0.5)
    wp = _uniform(next(ks), (HIDDEN_DIM, NUM_CLASSES), b_wp)
    bp = _uniform(next(ks), (1, NUM_CLASSES), b_wp)
    p['sim_wp'] = jnp.zeros((HIDDEN_DIM, OUT_PAD), jnp.float32).at[:, :NUM_CLASSES].set(wp)
    p['sim_bp'] = jnp.zeros((1, OUT_PAD), jnp.float32).at[:, :NUM_CLASSES].set(bp)

    p['sent_pad'] = jax.random.normal(next(ks), (1, IN_DIM), jnp.float32)
    p['para_pad'] = jax.random.normal(next(ks), (1, IN_DIM), jnp.float32)
    return p


# -------------------------- pure-JAX reference --------------------------------
def _ref_node_forward(params, x, child_c, child_h):
    h_sum = jnp.sum(child_h, axis=0, keepdims=True)
    g = [x @ params['wx_iou'][k] + params['bx_iou'][k]
         + h_sum @ params['wh_iou'][k] + params['bh_iou'][k] for k in range(3)]
    i, o, u = jax.nn.sigmoid(g[0]), jax.nn.sigmoid(g[1]), jnp.tanh(g[2])
    f = jax.nn.sigmoid(child_h @ params['wfh'] + params['bfh']
                       + x @ params['wfx'] + params['bfx'])
    c = i * u + jnp.sum(f * child_c, axis=0, keepdims=True)
    h = o * jnp.tanh(c)
    return c, h


def _ref_tree_lstm(params, tree, inputs):
    hc = {}

    def rec(node):
        for ch in node.children:
            rec(ch)
        if node.num_children == 0:
            child_c = jnp.zeros((1, M2), jnp.float32)
            child_h = jnp.zeros((1, M2), jnp.float32)
        else:
            # original swap: child_c gets the children's h, child_h the children's c
            child_c = jnp.concatenate([hc[ch.idx][1] for ch in node.children], axis=0)
            child_h = jnp.concatenate([hc[ch.idx][0] for ch in node.children], axis=0)
        c, h = _ref_node_forward(params, inputs[node.idx:node.idx + 1], child_c, child_h)
        hc[node.idx] = (c, h)

    rec(tree)
    return hc[tree.idx][1], hc[tree.idx][0]          # (root_h, root_c)


def _ref_lstm_step(x, h, c, wih, whh, b):
    g = [x @ wih[k] + h @ whh[k] + b[k] for k in range(4)]
    i, f, cand, o = (jax.nn.sigmoid(g[0]), jax.nn.sigmoid(g[1]),
                     jnp.tanh(g[2]), jax.nn.sigmoid(g[3]))
    c_new = f * c + i * cand
    return o * jnp.tanh(c_new), c_new


def ref_forward(params, body):
    rtree = body['headline']['rtree']
    rinputs = params['emb'][body['headline']['rsent']]
    _, rhidden = _ref_tree_lstm(params, rtree, rinputs)

    p_hidden_list = []
    count = 0
    for p_id in body['body_list']:
        count += 1
        if count > MAX_NUM_PARA:
            break
        s_hidden_list = []
        for (ltree, lsent) in body['body_list'][p_id]:
            _, lhidden = _ref_tree_lstm(params, ltree, params['emb'][lsent])
            s_hidden_list.append(lhidden)
        if len(s_hidden_list) < MAX_NUM_SENT:
            s_hidden_list += [params['sent_pad']] * (MAX_NUM_SENT - len(s_hidden_list))
        sent_enc = s_hidden_list[:MAX_NUM_SENT]
        h_f = jnp.zeros((1, MEM_DIM), jnp.float32)
        c_f = h_f
        for t in range(MAX_NUM_SENT):
            h_f, c_f = _ref_lstm_step(sent_enc[t], h_f, c_f,
                                      params['pf_wih'], params['pf_whh'], params['pf_b'])
        h_b = jnp.zeros((1, MEM_DIM), jnp.float32)
        c_b = h_b
        for t in range(MAX_NUM_SENT - 1, -1, -1):
            h_b, c_b = _ref_lstm_step(sent_enc[t], h_b, c_b,
                                      params['pb_wih'], params['pb_whh'], params['pb_b'])
        p_hidden_list.append(jnp.concatenate([h_f, h_b], axis=1))
    p_hidden_list += [params['para_pad']] * (MAX_NUM_PARA - len(p_hidden_list))

    h_for = jnp.zeros((1, MEM_DIM), jnp.float32)
    c_for = h_for
    c_back = h_for
    h_fwd, h_bwd = [], []
    forward_rep = backward_rep = None
    k_rev = len(p_hidden_list) - 1
    for i in range(len(p_hidden_list)):
        h_for, c_for = _ref_lstm_step(p_hidden_list[i], h_for, c_for,
                                      params['bd_wih'], params['bd_whh'], params['bd_b'])
        if i == len(p_hidden_list) - 1:
            forward_rep = h_for
        h_fwd.append(h_for)
        h_back, c_back = _ref_lstm_step(p_hidden_list[k_rev], h_for, c_back,
                                        params['bd_wih'], params['bd_whh'], params['bd_b'])
        h_bwd.append(h_back)
        k_rev -= 1
        if k_rev < 0:
            backward_rep = h_back

    para_rep = jnp.concatenate([forward_rep, backward_rep], axis=1)
    h_body = jnp.concatenate([jnp.concatenate([h_fwd[i], h_bwd[i]], axis=1)
                              for i in range(len(h_bwd))], axis=0)
    logits = h_body @ params['sel_wh'] + para_rep @ params['sel_wp'] + params['sel_b']
    soft = jax.nn.softmax(logits, axis=1)
    h_body_prime = jnp.sum(h_body * soft, axis=0, keepdims=True)

    lvec, rvec = h_body_prime, rhidden
    hid = jax.nn.sigmoid((lvec * rvec) @ params['sim_wh'][0]
                         + jnp.abs(lvec - rvec) @ params['sim_wh'][1]
                         + lvec @ params['sim_wh'][2] + rvec @ params['sim_wh'][3]
                         + params['sim_bh'])
    out = hid @ params['sim_wp'] + params['sim_bp']
    return out[:, :NUM_CLASSES]
    # TODO(synk): domain_feature=True branch (feature_vec concat) not exercised.


# ------------------------------- main ----------------------------------------
if __name__ == "__main__":
    key = jax.random.PRNGKey(0)
    kp, kd = jax.random.split(key)
    params = init_params(kp)

    # deterministic synthetic document:
    #   headline: 5-token sentence, 5-node tree (two internal levels)
    #   body: 2 paragraphs x 2 sentences, each sentence 3 tokens / 3-node tree
    headline_tree = Tree(0, [Tree(1, [Tree(3), Tree(4)]), Tree(2)])
    ks = jax.random.split(kd, 6)
    rsent = jax.random.randint(ks[0], (5,), 1, VOCAB)

    body_list = {}
    for p in range(2):
        sents = []
        for s in range(2):
            tok = jax.random.randint(ks[1 + 2 * p + s], (3,), 1, VOCAB)
            sents.append((Tree(0, [Tree(1), Tree(2)]), tok))
        body_list[f"p{p}"] = sents

    body = {'headline': {'rtree': headline_tree, 'rsent': rsent},
            'body_list': body_list}

    schedule = build_schedule(body)
    forward = build_forward(schedule)

    out = forward(params, schedule['node_tokens'])
    out = jax.block_until_ready(out)
    assert out.shape == (1, NUM_CLASSES)

    ref = jax.block_until_ready(ref_forward(params, body))
    np.testing.assert_allclose(np.asarray(out), np.asarray(ref), rtol=5e-2, atol=5e-2)

    print("KERNEL_OK")
</pallas_src>

<mosaic_0001>
module attributes {stable_mosaic.version = 11 : i64} {
  func.func @kernel(%arg0: memref<17x64xf32, #tpu.memory_space<vmem>>, %arg1: memref<3x64x64xf32, #tpu.memory_space<vmem>>, %arg2: memref<3x1x64xf32, #tpu.memory_space<vmem>>, %arg3: memref<3x64x64xf32, #tpu.memory_space<vmem>>, %arg4: memref<3x1x64xf32, #tpu.memory_space<vmem>>, %arg5: memref<64x64xf32, #tpu.memory_space<vmem>>, %arg6: memref<1x64xf32, #tpu.memory_space<vmem>>, %arg7: memref<64x64xf32, #tpu.memory_space<vmem>>, %arg8: memref<1x64xf32, #tpu.memory_space<vmem>>, %arg9: memref<4x64x32xf32, #tpu.memory_space<vmem>>, %arg10: memref<4x32x32xf32, #tpu.memory_space<vmem>>, %arg11: memref<4x1x32xf32, #tpu.memory_space<vmem>>, %arg12: memref<4x64x32xf32, #tpu.memory_space<vmem>>, %arg13: memref<4x32x32xf32, #tpu.memory_space<vmem>>, %arg14: memref<4x1x32xf32, #tpu.memory_space<vmem>>, %arg15: memref<4x64x32xf32, #tpu.memory_space<vmem>>, %arg16: memref<4x32x32xf32, #tpu.memory_space<vmem>>, %arg17: memref<4x1x32xf32, #tpu.memory_space<vmem>>, %arg18: memref<64x64xf32, #tpu.memory_space<vmem>>, %arg19: memref<64x64xf32, #tpu.memory_space<vmem>>, %arg20: memref<1x64xf32, #tpu.memory_space<vmem>>, %arg21: memref<4x64x32xf32, #tpu.memory_space<vmem>>, %arg22: memref<1x32xf32, #tpu.memory_space<vmem>>, %arg23: memref<32x128xf32, #tpu.memory_space<vmem>>, %arg24: memref<1x128xf32, #tpu.memory_space<vmem>>, %arg25: memref<1x64xf32, #tpu.memory_space<vmem>>, %arg26: memref<1x64xf32, #tpu.memory_space<vmem>>, %arg27: memref<1x128xf32, #tpu.memory_space<vmem>>) attributes {dimension_semantics = [], scalar_prefetch = 0 : i64, scratch_operands = 0 : i64, tpu.core_type = #tpu.core_type<tc>} {
    %c0 = arith.constant 0 : index
    %c0_0 = arith.constant 0 : index
    %0 = vector.load %arg0[%c0, %c0_0] : memref<17x64xf32, #tpu.memory_space<vmem>>, vector<11x64xf32>
    %c0_1 = arith.constant 0 : index
    %c0_2 = arith.constant 0 : index
    %c0_3 = arith.constant 0 : index
    %1 = vector.load %arg1[%c0_1, %c0_2, %c0_3] : memref<3x64x64xf32, #tpu.memory_space<vmem>>, vector<1x64x64xf32>
    %2 = vector.shape_cast %1 : vector<1x64x64xf32> to vector<64x64xf32>
    %cst = arith.constant dense<0.000000e+00> : vector<11x64xf32>
    %3 = tpu.matmul %0, %2, %cst {dimension_numbers = #tpu.dot_dimension_numbers<[1], [0], [0], [1], [0, 0, 1, 1], [], []>} : vector<11x64xf32>, vector<64x64xf32>, vector<11x64xf32> -> vector<11x64xf32>
    %c0_4 = arith.constant 0 : index
    %c0_5 = arith.constant 0 : index
    %c0_6 = arith.constant 0 : index
    %4 = vector.load %arg2[%c0_4, %c0_5, %c0_6] : memref<3x1x64xf32, #tpu.memory_space<vmem>>, vector<1x1x64xf32>
    %5 = vector.shape_cast %4 : vector<1x1x64xf32> to vector<1x64xf32>
    %6 = vector.broadcast %5 : vector<1x64xf32> to vector<11x64xf32>
    %7 = arith.addf %3, %6 : vector<11x64xf32>
    %c0_7 = arith.constant 0 : index
    %c0_8 = arith.constant 0 : index
    %c0_9 = arith.constant 0 : index
    %8 = vector.load %arg4[%c0_7, %c0_8, %c0_9] : memref<3x1x64xf32, #tpu.memory_space<vmem>>, vector<1x1x64xf32>
    %9 = vector.shape_cast %8 : vector<1x1x64xf32> to vector<1x64xf32>
    %10 = vector.broadcast %9 : vector<1x64xf32> to vector<11x64xf32>
    %11 = arith.addf %7, %10 : vector<11x64xf32>
    %12 = arith.negf %11 : vector<11x64xf32>
    %13 = math.exp %12 : vector<11x64xf32>
    %cst_10 = arith.constant 1.000000e+00 : f32
    %14 = vector.broadcast %cst_10 : f32 to vector<11x64xf32>
    %15 = arith.addf %14, %13 : vector<11x64xf32>
    %16 = arith.divf %14, %15 : vector<11x64xf32>
    %c1 = arith.constant 1 : index
    %c0_11 = arith.constant 0 : index
    %c0_12 = arith.constant 0 : index
    %17 = vector.load %arg1[%c1, %c0_11, %c0_12] : memref<3x64x64xf32, #tpu.memory_space<vmem>>, vector<1x64x64xf32>
    %18 = vector.shape_cast %17 : vector<1x64x64xf32> to vector<64x64xf32>
    %cst_13 = arith.constant dense<0.000000e+00> : vector<11x64xf32>
    %19 = tpu.matmul %0, %18, %cst_13 {dimension_numbers = #tpu.dot_dimension_numbers<[1], [0], [0], [1], [0, 0, 1, 1], [], []>} : vector<11x64xf32>, vector<64x64xf32>, vector<11x64xf32> -> vector<11x64xf32>
    %c1_14 = arith.constant 1 : index
    %c0_15 = arith.constant 0 : index
    %c0_16 = arith.constant 0 : index
    %20 = vector.load %arg2[%c1_14, %c0_15, %c0_16] : memref<3x1x64xf32, #tpu.memory_space<vmem>>, vector<1x1x64xf32>
    %21 = vector.shape_cast %20 : vector<1x1x64xf32> to vector<1x64xf32>
    %22 = vector.broadcast %21 : vector<1x64xf32> to vector<11x64xf32>
    %23 = arith.addf %19, %22 : vector<11x64xf32>
    %c1_17 = arith.constant 1 : index
    %c0_18 = arith.constant 0 : index
    %c0_19 = arith.constant 0 : index
    %24 = vector.load %arg4[%c1_17, %c0_18, %c0_19] : memref<3x1x64xf32, #tpu.memory_space<vmem>>, vector<1x1x64xf32>
    %25 = vector.shape_cast %24 : vector<1x1x64xf32> to vector<1x64xf32>
    %26 = vector.broadcast %25 : vector<1x64xf32> to vector<11x64xf32>
    %27 = arith.addf %23, %26 : vector<11x64xf32>
    %28 = arith.negf %27 : vector<11x64xf32>
    %29 = math.exp %28 : vector<11x64xf32>
    %cst_20 = arith.constant 1.000000e+00 : f32
    %30 = vector.broadcast %cst_20 : f32 to vector<11x64xf32>
    %31 = arith.addf %30, %29 : vector<11x64xf32>
    %32 = arith.divf %30, %31 : vector<11x64xf32>
    %c2 = arith.constant 2 : index
    %c0_21 = arith.constant 0 : index
    %c0_22 = arith.constant 0 : index
    %33 = vector.load %arg1[%c2, %c0_21, %c0_22] : memref<3x64x64xf32, #tpu.memory_space<vmem>>, vector<1x64x64xf32>
    %34 = vector.shape_cast %33 : vector<1x64x64xf32> to vector<64x64xf32>
    %cst_23 = arith.constant dense<0.000000e+00> : vector<11x64xf32>
    %35 = tpu.matmul %0, %34, %cst_23 {dimension_numbers = #tpu.dot_dimension_numbers<[1], [0], [0], [1], [0, 0, 1, 1], [], []>} : vector<11x64xf32>, vector<64x64xf32>, vector<11x64xf32> -> vector<11x64xf32>
    %c2_24 = arith.constant 2 : index
    %c0_25 = arith.constant 0 : index
    %c0_26 = arith.constant 0 : index
    %36 = vector.load %arg2[%c2_24, %c0_25, %c0_26] : memref<3x1x64xf32, #tpu.memory_space<vmem>>, vector<1x1x64xf32>
    %37 = vector.shape_cast %36 : vector<1x1x64xf32> to vector<1x64xf32>
    %38 = vector.broadcast %37 : vector<1x64xf32> to vector<11x64xf32>
    %39 = arith.addf %35, %38 : vector<11x64xf32>
    %c2_27 = arith.constant 2 : index
    %c0_28 = arith.constant 0 : index
    %c0_29 = arith.constant 0 : index
    %40 = vector.load %arg4[%c2_27, %c0_28, %c0_29] : memref<3x1x64xf32, #tpu.memory_space<vmem>>, vector<1x1x64xf32>
    %41 = vector.shape_cast %40 : vector<1x1x64xf32> to vector<1x64xf32>
    %42 = vector.broadcast %41 : vector<1x64xf32> to vector<11x64xf32>
    %43 = arith.addf %39, %42 : vector<11x64xf32>
    %44 = math.tanh %43 : vector<11x64xf32>
    %45 = arith.mulf %16, %44 : vector<11x64xf32>
    %46 = math.tanh %45 : vector<11x64xf32>
    %47 = arith.mulf %32, %46 : vector<11x64xf32>
    %48 = vector.extract_strided_slice %45 {offsets = [0, 0], sizes = [1, 64], strides = [1, 1]} : vector<11x64xf32> to vector<1x64xf32>
    %49 = vector.extract_strided_slice %47 {offsets = [0, 0], sizes = [1, 64], strides = [1, 1]} : vector<11x64xf32> to vector<1x64xf32>
    %50 = vector.extract_strided_slice %45 {offsets = [1, 0], sizes = [1, 64], strides = [1, 1]} : vector<11x64xf32> to vector<1x64xf32>
    %51 = vector.extract_strided_slice %47 {offsets = [1, 0], sizes = [1, 64], strides = [1, 1]} : vector<11x64xf32> to vector<1x64xf32>
    %52 = vector.extract_strided_slice %45 {offsets = [2, 0], sizes = [1, 64], strides = [1, 1]} : vector<11x64xf32> to vector<1x64xf32>
    %53 = vector.extract_strided_slice %47 {offsets = [2, 0], sizes = [1, 64], strides = [1, 1]} : vector<11x64xf32> to vector<1x64xf32>
    %54 = vector.extract_strided_slice %45 {offsets = [3, 0], sizes = [1, 64], strides = [1, 1]} : vector<11x64xf32> to vector<1x64xf32>
    %55 = vector.extract_strided_slice %47 {offsets = [3, 0], sizes = [1, 64], strides = [1, 1]} : vector<11x64xf32> to vector<1x64xf32>
    %56 = vector.extract_strided_slice %45 {offsets = [4, 0], sizes = [1, 64], strides = [1, 1]} : vector<11x64xf32> to vector<1x64xf32>
    %57 = vector.extract_strided_slice %47 {offsets = [4, 0], sizes = [1, 64], strides = [1, 1]} : vector<11x64xf32> to vector<1x64xf32>
    %58 = vector.extract_strided_slice %45 {offsets = [5, 0], sizes = [1, 64], strides = [1, 1]} : vector<11x64xf32> to vector<1x64xf32>
    %59 = vector.extract_strided_slice %47 {offsets = [5, 0], sizes = [1, 64], strides = [1, 1]} : vector<11x64xf32> to vector<1x64xf32>
    %60 = vector.extract_strided_slice %45 {offsets = [6, 0], sizes = [1, 64], strides = [1, 1]} : vector<11x64xf32> to vector<1x64xf32>
    %61 = vector.extract_strided_slice %47 {offsets = [6, 0], sizes = [1, 64], strides = [1, 1]} : vector<11x64xf32> to vector<1x64xf32>
    %62 = vector.extract_strided_slice %45 {offsets = [7, 0], sizes = [1, 64], strides = [1, 1]} : vector<11x64xf32> to vector<1x64xf32>
    %63 = vector.extract_strided_slice %47 {offsets = [7, 0], sizes = [1, 64], strides = [1, 1]} : vector<11x64xf32> to vector<1x64xf32>
    %64 = vector.extract_strided_slice %45 {offsets = [8, 0], sizes = [1, 64], strides = [1, 1]} : vector<11x64xf32> to vector<1x64xf32>
    %65 = vector.extract_strided_slice %47 {offsets = [8, 0], sizes = [1, 64], strides = [1, 1]} : vector<11x64xf32> to vector<1x64xf32>
    %66 = vector.extract_strided_slice %45 {offsets = [9, 0], sizes = [1, 64], strides = [1, 1]} : vector<11x64xf32> to vector<1x64xf32>
    %67 = vector.extract_strided_slice %47 {offsets = [9, 0], sizes = [1, 64], strides = [1, 1]} : vector<11x64xf32> to vector<1x64xf32>
    %68 = vector.extract_strided_slice %45 {offsets = [10, 0], sizes = [1, 64], strides = [1, 1]} : vector<11x64xf32> to vector<1x64xf32>
    %69 = vector.extract_strided_slice %47 {offsets = [10, 0], sizes = [1, 64], strides = [1, 1]} : vector<11x64xf32> to vector<1x64xf32>
    %c11 = arith.constant 11 : index
    %c0_30 = arith.constant 0 : index
    %70 = vector.load %arg0[%c11, %c0_30] : memref<17x64xf32, #tpu.memory_space<vmem>>, vector<5x64xf32>
    %71 = arith.addf %50, %52 : vector<1x64xf32>
    %72 = arith.addf %54, %56 : vector<1x64xf32>
    %73 = arith.addf %58, %60 : vector<1x64xf32>
    %74 = arith.addf %62, %64 : vector<1x64xf32>
    %75 = arith.addf %66, %68 : vector<1x64xf32>
    %76 = tpu.concatenate %71, %72, %73, %74, %75 in 0 : vector<1x64xf32>, vector<1x64xf32>, vector<1x64xf32>, vector<1x64xf32>, vector<1x64xf32> -> vector<5x64xf32>
    %77 = tpu.concatenate %50, %52, %54, %56, %58, %60, %62, %64, %66, %68 in 0 : vector<1x64xf32>, vector<1x64xf32>, vector<1x64xf32>, vector<1x64xf32>, vector<1x64xf32>, vector<1x64xf32>, vector<1x64xf32>, vector<1x64xf32>, vector<1x64xf32>, vector<1x64xf32> -> vector<10x64xf32>
    %78 = tpu.concatenate %51, %53, %55, %57, %59, %61, %63, %65, %67, %69 in 0 : vector<1x64xf32>, vector<1x64xf32>, vector<1x64xf32>, vector<1x64xf32>, vector<1x64xf32>, vector<1x64xf32>, vector<1x64xf32>, vector<1x64xf32>, vector<1x64xf32>, vector<1x64xf32> -> vector<10x64xf32>
    %c0_31 = arith.constant 0 : index
    %c0_32 = arith.constant 0 : index
    %c0_33 = arith.constant 0 : index
    %79 = vector.load %arg1[%c0_31, %c0_32, %c0_33] : memref<3x64x64xf32, #tpu.memory_space<vmem>>, vector<1x64x64xf32>
    %80 = vector.shape_cast %79 : vector<1x64x64xf32> to vector<64x64xf32>
    %cst_34 = arith.constant dense<0.000000e+00> : vector<5x64xf32>
    %81 = tpu.matmul %70, %80, %cst_34 {dimension_numbers = #tpu.dot_dimension_numbers<[1], [0], [0], [1], [0, 0, 1, 1], [], []>} : vector<5x64xf32>, vector<64x64xf32>, vector<5x64xf32> -> vector<5x64xf32>
    %c0_35 = arith.constant 0 : index
    %c0_36 = arith.constant 0 : index
    %c0_37 = arith.constant 0 : index
    %82 = vector.load %arg2[%c0_35, %c0_36, %c0_37] : memref<3x1x64xf32, #tpu.memory_space<vmem>>, vector<1x1x64xf32>
    %83 = vector.shape_cast %82 : vector<1x1x64xf32> to vector<1x64xf32>
    %84 = vector.broadcast %83 : vector<1x64xf32> to vector<5x64xf32>
    %85 = arith.addf %81, %84 : vector<5x64xf32>
    %c0_38 = arith.constant 0 : index
    %c0_39 = arith.constant 0 : index
    %c0_40 = arith.constant 0 : index
    %86 = vector.load %arg3[%c0_38, %c0_39, %c0_40] : memref<3x64x64xf32, #tpu.memory_space<vmem>>, vector<1x64x64xf32>
    %87 = vector.shape_cast %86 : vector<1x64x64xf32> to vector<64x64xf32>
    %cst_41 = arith.constant dense<0.000000e+00> : vector<5x64xf32>
    %88 = tpu.matmul %76, %87, %cst_41 {dimension_numbers = #tpu.dot_dimension_numbers<[1], [0], [0], [1], [0, 0, 1, 1], [], []>} : vector<5x64xf32>, vector<64x64xf32>, vector<5x64xf32> -> vector<5x64xf32>
    %89 = arith.addf %85, %88 : vector<5x64xf32>
    %c0_42 = arith.constant 0 : index
    %c0_43 = arith.constant 0 : index
    %c0_44 = arith.constant 0 : index
    %90 = vector.load %arg4[%c0_42, %c0_43, %c0_44] : memref<3x1x64xf32, #tpu.memory_space<vmem>>, vector<1x1x64xf32>
    %91 = vector.shape_cast %90 : vector<1x1x64xf32> to vector<1x64xf32>
    %92 = vector.broadcast %91 : vector<1x64xf32> to vector<5x64xf32>
    %93 = arith.addf %89, %92 : vector<5x64xf32>
    %94 = arith.negf %93 : vector<5x64xf32>
    %95 = math.exp %94 : vector<5x64xf32>
    %cst_45 = arith.constant 1.000000e+00 : f32
    %96 = vector.broadcast %cst_45 : f32 to vector<5x64xf32>
    %97 = arith.addf %96, %95 : vector<5x64xf32>
    %98 = arith.divf %96, %97 : vector<5x64xf32>
    %c1_46 = arith.constant 1 : index
    %c0_47 = arith.constant 0 : index
    %c0_48 = arith.constant 0 : index
    %99 = vector.load %arg1[%c1_46, %c0_47, %c0_48] : memref<3x64x64xf32, #tpu.memory_space<vmem>>, vector<1x64x64xf32>
    %100 = vector.shape_cast %99 : vector<1x64x64xf32> to vector<64x64xf32>
    %cst_49 = arith.constant dense<0.000000e+00> : vector<5x64xf32>
    %101 = tpu.matmul %70, %100, %cst_49 {dimension_numbers = #tpu.dot_dimension_numbers<[1], [0], [0], [1], [0, 0, 1, 1], [], []>} : vector<5x64xf32>, vector<64x64xf32>, vector<5x64xf32> -> vector<5x64xf32>
    %c1_50 = arith.constant 1 : index
    %c0_51 = arith.constant 0 : index
    %c0_52 = arith.constant 0 : index
    %102 = vector.load %arg2[%c1_50, %c0_51, %c0_52] : memref<3x1x64xf32, #tpu.memory_space<vmem>>, vector<1x1x64xf32>
    %103 = vector.shape_cast %102 : vector<1x1x64xf32> to vector<1x64xf32>
    %104 = vector.broadcast %103 : vector<1x64xf32> to vector<5x64xf32>
    %105 = arith.addf %101, %104 : vector<5x64xf32>
    %c1_53 = arith.constant 1 : index
    %c0_54 = arith.constant 0 : index
    %c0_55 = arith.constant 0 : index
    %106 = vector.load %arg3[%c1_53, %c0_54, %c0_55] : memref<3x64x64xf32, #tpu.memory_space<vmem>>, vector<1x64x64xf32>
    %107 = vector.shape_cast %106 : vector<1x64x64xf32> to vector<64x64xf32>
    %cst_56 = arith.constant dense<0.000000e+00> : vector<5x64xf32>
    %108 = tpu.matmul %76, %107, %cst_56 {dimension_numbers = #tpu.dot_dimension_numbers<[1], [0], [0], [1], [0, 0, 1, 1], [], []>} : vector<5x64xf32>, vector<64x64xf32>, vector<5x64xf32> -> vector<5x64xf32>
    %109 = arith.addf %105, %108 : vector<5x64xf32>
    %c1_57 = arith.constant 1 : index
    %c0_58 = arith.constant 0 : index
    %c0_59 = arith.constant 0 : index
    %110 = vector.load %arg4[%c1_57, %c0_58, %c0_59] : memref<3x1x64xf32, #tpu.memory_space<vmem>>, vector<1x1x64xf32>
    %111 = vector.shape_cast %110 : vector<1x1x64xf32> to vector<1x64xf32>
    %112 = vector.broadcast %111 : vector<1x64xf32> to vector<5x64xf32>
    %113 = arith.addf %109, %112 : vector<5x64xf32>
    %114 = arith.negf %113 : vector<5x64xf32>
    %115 = math.exp %114 : vector<5x64xf32>
    %cst_60 = arith.constant 1.000000e+00 : f32
    %116 = vector.broadcast %cst_60 : f32 to vector<5x64xf32>
    %117 = arith.addf %116, %115 : vector<5x64xf32>
    %118 = arith.divf %116, %117 : vector<5x64xf32>
    %c2_61 = arith.constant 2 : index
    %c0_62 = arith.constant 0 : index
    %c0_63 = arith.constant 0 : index
    %119 = vector.load %arg1[%c2_61, %c0_62, %c0_63] : memref<3x64x64xf32, #tpu.memory_space<vmem>>, vector<1x64x64xf32>
    %120 = vector.shape_cast %119 : vector<1x64x64xf32> to vector<64x64xf32>
    %cst_64 = arith.constant dense<0.000000e+00> : vector<5x64xf32>
    %121 = tpu.matmul %70, %120, %cst_64 {dimension_numbers = #tpu.dot_dimension_numbers<[1], [0], [0], [1], [0, 0, 1, 1], [], []>} : vector<5x64xf32>, vector<64x64xf32>, vector<5x64xf32> -> vector<5x64xf32>
    %c2_65 = arith.constant 2 : index
    %c0_66 = arith.constant 0 : index
    %c0_67 = arith.constant 0 : index
    %122 = vector.load %arg2[%c2_65, %c0_66, %c0_67] : memref<3x1x64xf32, #tpu.memory_space<vmem>>, vector<1x1x64xf32>
    %123 = vector.shape_cast %122 : vector<1x1x64xf32> to vector<1x64xf32>
    %124 = vector.broadcast %123 : vector<1x64xf32> to vector<5x64xf32>
    %125 = arith.addf %121, %124 : vector<5x64xf32>
    %c2_68 = arith.constant 2 : index
    %c0_69 = arith.constant 0 : index
    %c0_70 = arith.constant 0 : index
    %126 = vector.load %arg3[%c2_68, %c0_69, %c0_70] : memref<3x64x64xf32, #tpu.memory_space<vmem>>, vector<1x64x64xf32>
    %127 = vector.shape_cast %126 : vector<1x64x64xf32> to vector<64x64xf32>
    %cst_71 = arith.constant dense<0.000000e+00> : vector<5x64xf32>
    %128 = tpu.matmul %76, %127, %cst_71 {dimension_numbers = #tpu.dot_dimension_numbers<[1], [0], [0], [1], [0, 0, 1, 1], [], []>} : vector<5x64xf32>, vector<64x64xf32>, vector<5x64xf32> -> vector<5x64xf32>
    %129 = arith.addf %125, %128 : vector<5x64xf32>
    %c2_72 = arith.constant 2 : index
    %c0_73 = arith.constant 0 : index
    %c0_74 = arith.constant 0 : index
    %130 = vector.load %arg4[%c2_72, %c0_73, %c0_74] : memref<3x1x64xf32, #tpu.memory_space<vmem>>, vector<1x1x64xf32>
    %131 = vector.shape_cast %130 : vector<1x1x64xf32> to vector<1x64xf32>
    %132 = vector.broadcast %131 : vector<1x64xf32> to vector<5x64xf32>
    %133 = arith.addf %129, %132 : vector<5x64xf32>
    %134 = math.tanh %133 : vector<5x64xf32>
    %135 = arith.mulf %98, %134 : vector<5x64xf32>
    %c0_75 = arith.constant 0 : index
    %c0_76 = arith.constant 0 : index
    %136 = vector.load %arg5[%c0_75, %c0_76] : memref<64x64xf32, #tpu.memory_space<vmem>>, vector<64x64xf32>
    %cst_77 = arith.constant dense<0.000000e+00> : vector<5x64xf32>
    %137 = tpu.matmul %70, %136, %cst_77 {dimension_numbers = #tpu.dot_dimension_numbers<[1], [0], [0], [1], [0, 0, 1, 1], [], []>} : vector<5x64xf32>, vector<64x64xf32>, vector<5x64xf32> -> vector<5x64xf32>
    %c0_78 = arith.constant 0 : index
    %c0_79 = arith.constant 0 : index
    %138 = vector.load %arg6[%c0_78, %c0_79] : memref<1x64xf32, #tpu.memory_space<vmem>>, vector<1x64xf32>
    %139 = vector.broadcast %138 : vector<1x64xf32> to vector<5x64xf32>
    %140 = arith.addf %137, %139 : vector<5x64xf32>
    %c0_80 = arith.constant 0 : index
    %c0_81 = arith.constant 0 : index
    %141 = vector.load %arg7[%c0_80, %c0_81] : memref<64x64xf32, #tpu.memory_space<vmem>>, vector<64x64xf32>
    %cst_82 = arith.constant dense<0.000000e+00> : vector<10x64xf32>
    %142 = tpu.matmul %77, %141, %cst_82 {dimension_numbers = #tpu.dot_dimension_numbers<[1], [0], [0], [1], [0, 0, 1, 1], [], []>} : vector<10x64xf32>, vector<64x64xf32>, vector<10x64xf32> -> vector<10x64xf32>
    %c0_83 = arith.constant 0 : index
    %c0_84 = arith.constant 0 : index
    %143 = vector.load %arg8[%c0_83, %c0_84] : memref<1x64xf32, #tpu.memory_space<vmem>>, vector<1x64xf32>
    %144 = vector.broadcast %143 : vector<1x64xf32> to vector<10x64xf32>
    %145 = arith.addf %142, %144 : vector<10x64xf32>
    %146 = vector.extract_strided_slice %145 {offsets = [0, 0], sizes = [2, 64], strides = [1, 1]} : vector<10x64xf32> to vector<2x64xf32>
    %147 = vector.extract_strided_slice %140 {offsets = [0, 0], sizes = [1, 64], strides = [1, 1]} : vector<5x64xf32> to vector<1x64xf32>
    %148 = vector.broadcast %147 : vector<1x64xf32> to vector<2x64xf32>
    %149 = arith.addf %146, %148 : vector<2x64xf32>
    %150 = arith.negf %149 : vector<2x64xf32>
    %151 = math.exp %150 : vector<2x64xf32>
    %cst_85 = arith.constant 1.000000e+00 : f32
    %152 = vector.broadcast %cst_85 : f32 to vector<2x64xf32>
    %153 = arith.addf %152, %151 : vector<2x64xf32>
    %154 = arith.divf %152, %153 : vector<2x64xf32>
    %155 = vector.extract_strided_slice %78 {offsets = [0, 0], sizes = [2, 64], strides = [1, 1]} : vector<10x64xf32> to vector<2x64xf32>
    %156 = arith.mulf %154, %155 : vector<2x64xf32>
    %cst_86 = arith.constant dense<0.000000e+00> : vector<64xf32>
    %157 = vector.multi_reduction <add>, %156, %cst_86 [0] : vector<2x64xf32> to vector<64xf32>
    %158 = vector.shape_cast %157 : vector<64xf32> to vector<1x64xf32>
    %159 = vector.extract_strided_slice %135 {offsets = [0, 0], sizes = [1, 64], strides = [1, 1]} : vector<5x64xf32> to vector<1x64xf32>
    %160 = arith.addf %159, %158 : vector<1x64xf32>
    %161 = vector.extract_strided_slice %118 {offsets = [0, 0], sizes = [1, 64], strides = [1, 1]} : vector<5x64xf32> to vector<1x64xf32>
    %162 = math.tanh %160 : vector<1x64xf32>
    %163 = arith.mulf %161, %162 : vector<1x64xf32>
    %164 = vector.extract_strided_slice %145 {offsets = [2, 0], sizes = [2, 64], strides = [1, 1]} : vector<10x64xf32> to vector<2x64xf32>
    %165 = vector.extract_strided_slice %140 {offsets = [1, 0], sizes = [1, 64], strides = [1, 1]} : vector<5x64xf32> to vector<1x64xf32>
    %166 = vector.broadcast %165 : vector<1x64xf32> to vector<2x64xf32>
    %167 = arith.addf %164, %166 : vector<2x64xf32>
    %168 = arith.negf %167 : vector<2x64xf32>
    %169 = math.exp %168 : vector<2x64xf32>
    %cst_87 = arith.constant 1.000000e+00 : f32
    %170 = vector.broadcast %cst_87 : f32 to vector<2x64xf32>
    %171 = arith.addf %170, %169 : vector<2x64xf32>
    %172 = arith.divf %170, %171 : vector<2x64xf32>
    %173 = vector.extract_strided_slice %78 {offsets = [2, 0], sizes = [2, 64], strides = [1, 1]} : vector<10x64xf32> to vector<2x64xf32>
    %174 = arith.mulf %172, %173 : vector<2x64xf32>
    %cst_88 = arith.constant dense<0.000000e+00> : vector<64xf32>
    %175 = vector.multi_reduction <add>, %174, %cst_88 [0] : vector<2x64xf32> to vector<64xf32>
    %176 = vector.shape_cast %175 : vector<64xf32> to vector<1x64xf32>
    %177 = vector.extract_strided_slice %135 {offsets = [1, 0], sizes = [1, 64], strides = [1, 1]} : vector<5x64xf32> to vector<1x64xf32>
    %178 = arith.addf %177, %176 : vector<1x64xf32>
    %179 = vector.extract_strided_slice %145 {offsets = [4, 0], sizes = [2, 64], strides = [1, 1]} : vector<10x64xf32> to vector<2x64xf32>
    %180 = vector.extract_strided_slice %140 {offsets = [2, 0], sizes = [1, 64], strides = [1, 1]} : vector<5x64xf32> to vector<1x64xf32>
    %181 = vector.broadcast %180 : vector<1x64xf32> to vector<2x64xf32>
    %182 = arith.addf %179, %181 : vector<2x64xf32>
    %183 = arith.negf %182 : vector<2x64xf32>
    %184 = math.exp %183 : vector<2x64xf32>
    %cst_89 = arith.constant 1.000000e+00 : f32
    %185 = vector.broadcast %cst_89 : f32 to vector<2x64xf32>
    %186 = arith.addf %185, %184 : vector<2x64xf32>
    %187 = arith.divf %185, %186 : vector<2x64xf32>
    %188 = vector.extract_strided_slice %78 {offsets = [4, 0], sizes = [2, 64], strides = [1, 1]} : vector<10x64xf32> to vector<2x64xf32>
    %189 = arith.mulf %187, %188 : vector<2x64xf32>
    %cst_90 = arith.constant dense<0.000000e+00> : vector<64xf32>
    %190 = vector.multi_reduction <add>, %189, %cst_90 [0] : vector<2x64xf32> to vector<64xf32>
    %191 = vector.shape_cast %190 : vector<64xf32> to vector<1x64xf32>
    %192 = vector.extract_strided_slice %135 {offsets = [2, 0], sizes = [1, 64], strides = [1, 1]} : vector<5x64xf32> to vector<1x64xf32>
    %193 = arith.addf %192, %191 : vector<1x64xf32>
    %194 = vector.extract_strided_slice %145 {offsets = [6, 0], sizes = [2, 64], strides = [1, 1]} : vector<10x64xf32> to vector<2x64xf32>
    %195 = vector.extract_strided_slice %140 {offsets = [3, 0], sizes = [1, 64], strides = [1, 1]} : vector<5x64xf32> to vector<1x64xf32>
    %196 = vector.broadcast %195 : vector<1x64xf32> to vector<2x64xf32>
    %197 = arith.addf %194, %196 : vector<2x64xf32>
    %198 = arith.negf %197 : vector<2x64xf32>
    %199 = math.exp %198 : vector<2x64xf32>
    %cst_91 = arith.constant 1.000000e+00 : f32
    %200 = vector.broadcast %cst_91 : f32 to vector<2x64xf32>
    %201 = arith.addf %200, %199 : vector<2x64xf32>
    %202 = arith.divf %200, %201 : vector<2x64xf32>
    %203 = vector.extract_strided_slice %78 {offsets = [6, 0], sizes = [2, 64], strides = [1, 1]} : vector<10x64xf32> to vector<2x64xf32>
    %204 = arith.mulf %202, %203 : vector<2x64xf32>
    %cst_92 = arith.constant dense<0.000000e+00> : vector<64xf32>
    %205 = vector.multi_reduction <add>, %204, %cst_92 [0] : vector<2x64xf32> to vector<64xf32>
    %206 = vector.shape_cast %205 : vector<64xf32> to vector<1x64xf32>
    %207 = vector.extract_strided_slice %135 {offsets = [3, 0], sizes = [1, 64], strides = [1, 1]} : vector<5x64xf32> to vector<1x64xf32>
    %208 = arith.addf %207, %206 : vector<1x64xf32>
    %209 = vector.extract_strided_slice %145 {offsets = [8, 0], sizes = [2, 64], strides = [1, 1]} : vector<10x64xf32> to vector<2x64xf32>
    %210 = vector.extract_strided_slice %140 {offsets = [4, 0], sizes = [1, 64], strides = [1, 1]} : vector<5x64xf32> to vector<1x64xf32>
    %211 = vector.broadcast %210 : vector<1x64xf32> to vector<2x64xf32>
    %212 = arith.addf %209, %211 : vector<2x64xf32>
    %213 = arith.negf %212 : vector<2x64xf32>
    %214 = math.exp %213 : vector<2x64xf32>
    %cst_93 = arith.constant 1.000000e+00 : f32
    %215 = vector.broadcast %cst_93 : f32 to vector<2x64xf32>
    %216 = arith.addf %215, %214 : vector<2x64xf32>
    %217 = arith.divf %215, %216 : vector<2x64xf32>
    %218 = vector.extract_strided_slice %78 {offsets = [8, 0], sizes = [2, 64], strides = [1, 1]} : vector<10x64xf32> to vector<2x64xf32>
    %219 = arith.mulf %217, %218 : vector<2x64xf32>
    %cst_94 = arith.constant dense<0.000000e+00> : vector<64xf32>
    %220 = vector.multi_reduction <add>, %219, %cst_94 [0] : vector<2x64xf32> to vector<64xf32>
    %221 = vector.shape_cast %220 : vector<64xf32> to vector<1x64xf32>
    %222 = vector.extract_strided_slice %135 {offsets = [4, 0], sizes = [1, 64], strides = [1, 1]} : vector<5x64xf32> to vector<1x64xf32>
    %223 = arith.addf %222, %221 : vector<1x64xf32>
    %c16 = arith.constant 16 : index
    %c0_95 = arith.constant 0 : index
    %224 = vector.load %arg0[%c16, %c0_95] : memref<17x64xf32, #tpu.memory_space<vmem>>, vector<1x64xf32>
    %225 = arith.addf %160, %48 : vector<1x64xf32>
    %226 = tpu.concatenate %160, %48 in 0 : vector<1x64xf32>, vector<1x64xf32> -> vector<2x64xf32>
    %227 = tpu.concatenate %163, %49 in 0 : vector<1x64xf32>, vector<1x64xf32> -> vector<2x64xf32>
    %c0_96 = arith.constant 0 : index
    %c0_97 = arith.constant 0 : index
    %c0_98 = arith.constant 0 : index
    %228 = vector.load %arg1[%c0_96, %c0_97, %c0_98] : memref<3x64x64xf32, #tpu.memory_space<vmem>>, vector<1x64x64xf32>
    %229 = vector.shape_cast %228 : vector<1x64x64xf32> to vector<64x64xf32>
    %cst_99 = arith.constant dense<0.000000e+00> : vector<1x64xf32>
    %230 = tpu.matmul %224, %229, %cst_99 {dimension_numbers = #tpu.dot_dimension_numbers<[1], [0], [0], [1], [0, 0, 1, 1], [], []>} : vector<1x64xf32>, vector<64x64xf32>, vector<1x64xf32> -> vector<1x64xf32>
    %c0_100 = arith.constant 0 : index
    %c0_101 = arith.constant 0 : index
    %c0_102 = arith.constant 0 : index
    %231 = vector.load %arg2[%c0_100, %c0_101, %c0_102] : memref<3x1x64xf32, #tpu.memory_space<vmem>>, vector<1x1x64xf32>
    %232 = vector.shape_cast %231 : vector<1x1x64xf32> to vector<1x64xf32>
    %233 = arith.addf %230, %232 : vector<1x64xf32>
    %c0_103 = arith.constant 0 : index
    %c0_104 = arith.constant 0 : index
    %c0_105 = arith.constant 0 : index
    %234 = vector.load %arg3[%c0_103, %c0_104, %c0_105] : memref<3x64x64xf32, #tpu.memory_space<vmem>>, vector<1x64x64xf32>
    %235 = vector.shape_cast %234 : vector<1x64x64xf32> to vector<64x64xf32>
    %cst_106 = arith.constant dense<0.000000e+00> : vector<1x64xf32>
    %236 = tpu.matmul %225, %235, %cst_106 {dimension_numbers = #tpu.dot_dimension_numbers<[1], [0], [0], [1], [0, 0, 1, 1], [], []>} : vector<1x64xf32>, vector<64x64xf32>, vector<1x64xf32> -> vector<1x64xf32>
    %237 = arith.addf %233, %236 : vector<1x64xf32>
    %c0_107 = arith.constant 0 : index
    %c0_108 = arith.constant 0 : index
    %c0_109 = arith.constant 0 : index
    %238 = vector.load %arg4[%c0_107, %c0_108, %c0_109] : memref<3x1x64xf32, #tpu.memory_space<vmem>>, vector<1x1x64xf32>
    %239 = vector.shape_cast %238 : vector<1x1x64xf32> to vector<1x64xf32>
    %240 = arith.addf %237, %239 : vector<1x64xf32>
    %241 = arith.negf %240 : vector<1x64xf32>
    %242 = math.exp %241 : vector<1x64xf32>
    %cst_110 = arith.constant 1.000000e+00 : f32
    %243 = vector.broadcast %cst_110 : f32 to vector<1x64xf32>
    %244 = arith.addf %243, %242 : vector<1x64xf32>
    %245 = arith.divf %243, %244 : vector<1x64xf32>
    %c2_111 = arith.constant 2 : index
    %c0_112 = arith.constant 0 : index
    %c0_113 = arith.constant 0 : index
    %246 = vector.load %arg1[%c2_111, %c0_112, %c0_113] : memref<3x64x64xf32, #tpu.memory_space<vmem>>, vector<1x64x64xf32>
    %247 = vector.shape_cast %246 : vector<1x64x64xf32> to vector<64x64xf32>
    %cst_114 = arith.constant dense<0.000000e+00> : vector<1x64xf32>
    %248 = tpu.matmul %224, %247, %cst_114 {dimension_numbers = #tpu.dot_dimension_numbers<[1], [0], [0], [1], [0, 0, 1, 1], [], []>} : vector<1x64xf32>, vector<64x64xf32>, vector<1x64xf32> -> vector<1x64xf32>
    %c2_115 = arith.constant 2 : index
    %c0_116 = arith.constant 0 : index
    %c0_117 = arith.constant 0 : index
    %249 = vector.load %arg2[%c2_115, %c0_116, %c0_117] : memref<3x1x64xf32, #tpu.memory_space<vmem>>, vector<1x1x64xf32>
    %250 = vector.shape_cast %249 : vector<1x1x64xf32> to vector<1x64xf32>
    %251 = arith.addf %248, %250 : vector<1x64xf32>
    %c2_118 = arith.constant 2 : index
    %c0_119 = arith.constant 0 : index
    %c0_120 = arith.constant 0 : index
    %252 = vector.load %arg3[%c2_118, %c0_119, %c0_120] : memref<3x64x64xf32, #tpu.memory_space<vmem>>, vector<1x64x64xf32>
    %253 = vector.shape_cast %252 : vector<1x64x64xf32> to vector<64x64xf32>
    %cst_121 = arith.constant dense<0.000000e+00> : vector<1x64xf32>
    %254 = tpu.matmul %225, %253, %cst_121 {dimension_numbers = #tpu.dot_dimension_numbers<[1], [0], [0], [1], [0, 0, 1, 1], [], []>} : vector<1x64xf32>, vector<64x64xf32>, vector<1x64xf32> -> vector<1x64xf32>
    %255 = arith.addf %251, %254 : vector<1x64xf32>
    %c2_122 = arith.constant 2 : index
    %c0_123 = arith.constant 0 : index
    %c0_124 = arith.constant 0 : index
    %256 = vector.load %arg4[%c2_122, %c0_123, %c0_124] : memref<3x1x64xf32, #tpu.memory_space<vmem>>, vector<1x1x64xf32>
    %257 = vector.shape_cast %256 : vector<1x1x64xf32> to vector<1x64xf32>
    %258 = arith.addf %255, %257 : vector<1x64xf32>
    %259 = math.tanh %258 : vector<1x64xf32>
    %260 = arith.mulf %245, %259 : vector<1x64xf32>
    %c0_125 = arith.constant 0 : index
    %c0_126 = arith.constant 0 : index
    %261 = vector.load %arg5[%c0_125, %c0_126] : memref<64x64xf32, #tpu.memory_space<vmem>>, vector<64x64xf32>
    %cst_127 = arith.constant dense<0.000000e+00> : vector<1x64xf32>
    %262 = tpu.matmul %224, %261, %cst_127 {dimension_numbers = #tpu.dot_dimension_numbers<[1], [0], [0], [1], [0, 0, 1, 1], [], []>} : vector<1x64xf32>, vector<64x64xf32>, vector<1x64xf32> -> vector<1x64xf32>
    %c0_128 = arith.constant 0 : index
    %c0_129 = arith.constant 0 : index
    %263 = vector.load %arg6[%c0_128, %c0_129] : memref<1x64xf32, #tpu.memory_space<vmem>>, vector<1x64xf32>
    %264 = arith.addf %262, %263 : vector<1x64xf32>
    %c0_130 = arith.constant 0 : index
    %c0_131 = arith.constant 0 : index
    %265 = vector.load %arg7[%c0_130, %c0_131] : memref<64x64xf32, #tpu.memory_space<vmem>>, vector<64x64xf32>
    %cst_132 = arith.constant dense<0.000000e+00> : vector<2x64xf32>
    %266 = tpu.matmul %226, %265, %cst_132 {dimension_numbers = #tpu.dot_dimension_numbers<[1], [0], [0], [1], [0, 0, 1, 1], [], []>} : vector<2x64xf32>, vector<64x64xf32>, vector<2x64xf32> -> vector<2x64xf32>
    %c0_133 = arith.constant 0 : index
    %c0_134 = arith.constant 0 : index
    %267 = vector.load %arg8[%c0_133, %c0_134] : memref<1x64xf32, #tpu.memory_space<vmem>>, vector<1x64xf32>
    %268 = vector.broadcast %267 : vector<1x64xf32> to vector<2x64xf32>
    %269 = arith.addf %266, %268 : vector<2x64xf32>
    %270 = vector.broadcast %264 : vector<1x64xf32> to vector<2x64xf32>
    %271 = arith.addf %269, %270 : vector<2x64xf32>
    %272 = arith.negf %271 : vector<2x64xf32>
    %273 = math.exp %272 : vector<2x64xf32>
    %cst_135 = arith.constant 1.000000e+00 : f32
    %274 = vector.broadcast %cst_135 : f32 to vector<2x64xf32>
    %275 = arith.addf %274, %273 : vector<2x64xf32>
    %276 = arith.divf %274, %275 : vector<2x64xf32>
    %277 = arith.mulf %276, %227 : vector<2x64xf32>
    %cst_136 = arith.constant dense<0.000000e+00> : vector<64xf32>
    %278 = vector.multi_reduction <add>, %277, %cst_136 [0] : vector<2x64xf32> to vector<64xf32>
    %279 = vector.shape_cast %278 : vector<64xf32> to vector<1x64xf32>
    %280 = arith.addf %260, %279 : vector<1x64xf32>
    %c0_137 = arith.constant 0 : index
    %c0_138 = arith.constant 0 : index
    %281 = vector.load %arg25[%c0_137, %c0_138] : memref<1x64xf32, #tpu.memory_space<vmem>>, vector<1x64xf32>
    %cst_139 = arith.constant 0.000000e+00 : f32
    %282 = vector.broadcast %cst_139 : f32 to vector<2x32xf32>
    %283 = tpu.concatenate %178, %208 in 0 : vector<1x64xf32>, vector<1x64xf32> -> vector<2x64xf32>
    %284 = tpu.concatenate %281, %281 in 0 : vector<1x64xf32>, vector<1x64xf32> -> vector<2x64xf32>
    %c0_140 = arith.constant 0 : index
    %c0_141 = arith.constant 0 : index
    %c0_142 = arith.constant 0 : index
    %285 = vector.load %arg9[%c0_140, %c0_141, %c0_142] : memref<4x64x32xf32, #tpu.memory_space<vmem>>, vector<1x64x32xf32>
    %286 = vector.shape_cast %285 : vector<1x64x32xf32> to vector<64x32xf32>
    %cst_143 = arith.constant dense<0.000000e+00> : vector<2x32xf32>
    %287 = tpu.matmul %283, %286, %cst_143 {dimension_numbers = #tpu.dot_dimension_numbers<[1], [0], [0], [1], [0, 0, 1, 1], [], []>} : vector<2x64xf32>, vector<64x32xf32>, vector<2x32xf32> -> vector<2x32xf32>
    %c0_144 = arith.constant 0 : index
    %c0_145 = arith.constant 0 : index
    %c0_146 = arith.constant 0 : index
    %288 = vector.load %arg10[%c0_144, %c0_145, %c0_146] : memref<4x32x32xf32, #tpu.memory_space<vmem>>, vector<1x32x32xf32>
    %289 = vector.shape_cast %288 : vector<1x32x32xf32> to vector<32x32xf32>
    %cst_147 = arith.constant dense<0.000000e+00> : vector<2x32xf32>
    %290 = tpu.matmul %282, %289, %cst_147 {dimension_numbers = #tpu.dot_dimension_numbers<[1], [0], [0], [1], [0, 0, 1, 1], [], []>} : vector<2x32xf32>, vector<32x32xf32>, vector<2x32xf32> -> vector<2x32xf32>
    %291 = arith.addf %287, %290 : vector<2x32xf32>
    %c0_148 = arith.constant 0 : index
    %c0_149 = arith.constant 0 : index
    %c0_150 = arith.constant 0 : index
    %292 = vector.load %arg11[%c0_148, %c0_149, %c0_150] : memref<4x1x32xf32, #tpu.memory_space<vmem>>, vector<1x1x32xf32>
    %293 = vector.shape_cast %292 : vector<1x1x32xf32> to vector<1x32xf32>
    %294 = vector.broadcast %293 : vector<1x32xf32> to vector<2x32xf32>
    %295 = arith.addf %291, %294 : vector<2x32xf32>
    %296 = arith.negf %295 : vector<2x32xf32>
    %297 = math.exp %296 : vector<2x32xf32>
    %cst_151 = arith.constant 1.000000e+00 : f32
    %298 = vector.broadcast %cst_151 : f32 to vector<2x32xf32>
    %299 = arith.addf %298, %297 : vector<2x32xf32>
    %300 = arith.divf %298, %299 : vector<2x32xf32>
    %c1_152 = arith.constant 1 : index
    %c0_153 = arith.constant 0 : index
    %c0_154 = arith.constant 0 : index
    %301 = vector.load %arg9[%c1_152, %c0_153, %c0_154] : memref<4x64x32xf32, #tpu.memory_space<vmem>>, vector<1x64x32xf32>
    %302 = vector.shape_cast %301 : vector<1x64x32xf32> to vector<64x32xf32>
    %cst_155 = arith.constant dense<0.000000e+00> : vector<2x32xf32>
    %303 = tpu.matmul %283, %302, %cst_155 {dimension_numbers = #tpu.dot_dimension_numbers<[1], [0], [0], [1], [0, 0, 1, 1], [], []>} : vector<2x64xf32>, vector<64x32xf32>, vector<2x32xf32> -> vector<2x32xf32>
    %c1_156 = arith.constant 1 : index
    %c0_157 = arith.constant 0 : index
    %c0_158 = arith.constant 0 : index
    %304 = vector.load %arg10[%c1_156, %c0_157, %c0_158] : memref<4x32x32xf32, #tpu.memory_space<vmem>>, vector<1x32x32xf32>
    %305 = vector.shape_cast %304 : vector<1x32x32xf32> to vector<32x32xf32>
    %cst_159 = arith.constant dense<0.000000e+00> : vector<2x32xf32>
    %306 = tpu.matmul %282, %305, %cst_159 {dimension_numbers = #tpu.dot_dimension_numbers<[1], [0], [0], [1], [0, 0, 1, 1], [], []>} : vector<2x32xf32>, vector<32x32xf32>, vector<2x32xf32> -> vector<2x32xf32>
    %307 = arith.addf %303, %306 : vector<2x32xf32>
    %c1_160 = arith.constant 1 : index
    %c0_161 = arith.constant 0 : index
    %c0_162 = arith.constant 0 : index
    %308 = vector.load %arg11[%c1_160, %c0_161, %c0_162] : memref<4x1x32xf32, #tpu.memory_space<vmem>>, vector<1x1x32xf32>
    %309 = vector.shape_cast %308 : vector<1x1x32xf32> to vector<1x32xf32>
    %310 = vector.broadcast %309 : vector<1x32xf32> to vector<2x32xf32>
    %311 = arith.addf %307, %310 : vector<2x32xf32>
    %312 = arith.negf %311 : vector<2x32xf32>
    %313 = math.exp %312 : vector<2x32xf32>
    %cst_163 = arith.constant 1.000000e+00 : f32
    %314 = vector.broadcast %cst_163 : f32 to vector<2x32xf32>
    %315 = arith.addf %314, %313 : vector<2x32xf32>
    %316 = arith.divf %314, %315 : vector<2x32xf32>
    %c2_164 = arith.constant 2 : index
    %c0_165 = arith.constant 0 : index
    %c0_166 = arith.constant 0 : index
    %317 = vector.load %arg9[%c2_164, %c0_165, %c0_166] : memref<4x64x32xf32, #tpu.memory_space<vmem>>, vector<1x64x32xf32>
    %318 = vector.shape_cast %317 : vector<1x64x32xf32> to vector<64x32xf32>
    %cst_167 = arith.constant dense<0.000000e+00> : vector<2x32xf32>
    %319 = tpu.matmul %283, %318, %cst_167 {dimension_numbers = #tpu.dot_dimension_numbers<[1], [0], [0], [1], [0, 0, 1, 1], [], []>} : vector<2x64xf32>, vector<64x32xf32>, vector<2x32xf32> -> vector<2x32xf32>
    %c2_168 = arith.constant 2 : index
    %c0_169 = arith.constant 0 : index
    %c0_170 = arith.constant 0 : index
    %320 = vector.load %arg10[%c2_168, %c0_169, %c0_170] : memref<4x32x32xf32, #tpu.memory_space<vmem>>, vector<1x32x32xf32>
    %321 = vector.shape_cast %320 : vector<1x32x32xf32> to vector<32x32xf32>
    %cst_171 = arith.constant dense<0.000000e+00> : vector<2x32xf32>
    %322 = tpu.matmul %282, %321, %cst_171 {dimension_numbers = #tpu.dot_dimension_numbers<[1], [0], [0], [1], [0, 0, 1, 1], [], []>} : vector<2x32xf32>, vector<32x32xf32>, vector<2x32xf32> -> vector<2x32xf32>
    %323 = arith.addf %319, %322 : vector<2x32xf32>
    %c2_172 = arith.constant 2 : index
    %c0_173 = arith.constant 0 : index
    %c0_174 = arith.constant 0 : index
    %324 = vector.load %arg11[%c2_172, %c0_173, %c0_174] : memref<4x1x32xf32, #tpu.memory_space<vmem>>, vector<1x1x32xf32>
    %325 = vector.shape_cast %324 : vector<1x1x32xf32> to vector<1x32xf32>
    %326 = vector.broadcast %325 : vector<1x32xf32> to vector<2x32xf32>
    %327 = arith.addf %323, %326 : vector<2x32xf32>
    %328 = math.tanh %327 : vector<2x32xf32>
    %c3 = arith.constant 3 : index
    %c0_175 = arith.constant 0 : index
    %c0_176 = arith.constant 0 : index
    %329 = vector.load %arg9[%c3, %c0_175, %c0_176] : memref<4x64x32xf32, #tpu.memory_space<vmem>>, vector<1x64x32xf32>
    %330 = vector.shape_cast %329 : vector<1x64x32xf32> to vector<64x32xf32>
    %cst_177 = arith.constant dense<0.000000e+00> : vector<2x32xf32>
    %331 = tpu.matmul %283, %330, %cst_177 {dimension_numbers = #tpu.dot_dimension_numbers<[1], [0], [0], [1], [0, 0, 1, 1], [], []>} : vector<2x64xf32>, vector<64x32xf32>, vector<2x32xf32> -> vector<2x32xf32>
    %c3_178 = arith.constant 3 : index
    %c0_179 = arith.constant 0 : index
    %c0_180 = arith.constant 0 : index
    %332 = vector.load %arg10[%c3_178, %c0_179, %c0_180] : memref<4x32x32xf32, #tpu.memory_space<vmem>>, vector<1x32x32xf32>
    %333 = vector.shape_cast %332 : vector<1x32x32xf32> to vector<32x32xf32>
    %cst_181 = arith.constant dense<0.000000e+00> : vector<2x32xf32>
    %334 = tpu.matmul %282, %333, %cst_181 {dimension_numbers = #tpu.dot_dimension_numbers<[1], [0], [0], [1], [0, 0, 1, 1], [], []>} : vector<2x32xf32>, vector<32x32xf32>, vector<2x32xf32> -> vector<2x32xf32>
    %335 = arith.addf %331, %334 : vector<2x32xf32>
    %c3_182 = arith.constant 3 : index
    %c0_183 = arith.constant 0 : index
    %c0_184 = arith.constant 0 : index
    %336 = vector.load %arg11[%c3_182, %c0_183, %c0_184] : memref<4x1x32xf32, #tpu.memory_space<vmem>>, vector<1x1x32xf32>
    %337 = vector.shape_cast %336 : vector<1x1x32xf32> to vector<1x32xf32>
    %338 = vector.broadcast %337 : vector<1x32xf32> to vector<2x32xf32>
    %339 = arith.addf %335, %338 : vector<2x32xf32>
    %340 = arith.negf %339 : vector<2x32xf32>
    %341 = math.exp %340 : vector<2x32xf32>
    %cst_185 = arith.constant 1.000000e+00 : f32
    %342 = vector.broadcast %cst_185 : f32 to vector<2x32xf32>
    %343 = arith.addf %342, %341 : vector<2x32xf32>
    %344 = arith.divf %342, %343 : vector<2x32xf32>
    %345 = arith.mulf %316, %282 : vector<2x32xf32>
    %346 = arith.mulf %300, %328 : vector<2x32xf32>
    %347 = arith.addf %345, %346 : vector<2x32xf32>
    %348 = math.tanh %347 : vector<2x32xf32>
    %349 = arith.mulf %344, %348 : vector<2x32xf32>
    %c0_186 = arith.constant 0 : index
    %c0_187 = arith.constant 0 : index
    %c0_188 = arith.constant 0 : index
    %350 = vector.load %arg12[%c0_186, %c0_187, %c0_188] : memref<4x64x32xf32, #tpu.memory_space<vmem>>, vector<1x64x32xf32>
    %351 = vector.shape_cast %350 : vector<1x64x32xf32> to vector<64x32xf32>
    %cst_189 = arith.constant dense<0.000000e+00> : vector<2x32xf32>
    %352 = tpu.matmul %284, %351, %cst_189 {dimension_numbers = #tpu.dot_dimension_numbers<[1], [0], [0], [1], [0, 0, 1, 1], [], []>} : vector<2x64xf32>, vector<64x32xf32>, vector<2x32xf32> -> vector<2x32xf32>
    %c0_190 = arith.constant 0 : index
    %c0_191 = arith.constant 0 : index
    %c0_192 = arith.constant 0 : index
    %353 = vector.load %arg13[%c0_190, %c0_191, %c0_192] : memref<4x32x32xf32, #tpu.memory_space<vmem>>, vector<1x32x32xf32>
    %354 = vector.shape_cast %353 : vector<1x32x32xf32> to vector<32x32xf32>
    %cst_193 = arith.constant dense<0.000000e+00> : vector<2x32xf32>
    %355 = tpu.matmul %282, %354, %cst_193 {dimension_numbers = #tpu.dot_dimension_numbers<[1], [0], [0], [1], [0, 0, 1, 1], [], []>} : vector<2x32xf32>, vector<32x32xf32>, vector<2x32xf32> -> vector<2x32xf32>
    %356 = arith.addf %352, %355 : vector<2x32xf32>
    %c0_194 = arith.constant 0 : index
    %c0_195 = arith.constant 0 : index
    %c0_196 = arith.constant 0 : index
    %357 = vector.load %arg14[%c0_194, %c0_195, %c0_196] : memref<4x1x32xf32, #tpu.memory_space<vmem>>, vector<1x1x32xf32>
    %358 = vector.shape_cast %357 : vector<1x1x32xf32> to vector<1x32xf32>
    %359 = vector.broadcast %358 : vector<1x32xf32> to vector<2x32xf32>
    %360 = arith.addf %356, %359 : vector<2x32xf32>
    %361 = arith.negf %360 : vector<2x32xf32>
    %362 = math.exp %361 : vector<2x32xf32>
    %cst_197 = arith.constant 1.000000e+00 : f32
    %363 = vector.broadcast %cst_197 : f32 to vector<2x32xf32>
    %364 = arith.addf %363, %362 : vector<2x32xf32>
    %365 = arith.divf %363, %364 : vector<2x32xf32>
    %c1_198 = arith.constant 1 : index
    %c0_199 = arith.constant 0 : index
    %c0_200 = arith.constant 0 : index
    %366 = vector.load %arg12[%c1_198, %c0_199, %c0_200] : memref<4x64x32xf32, #tpu.memory_space<vmem>>, vector<1x64x32xf32>
    %367 = vector.shape_cast %366 : vector<1x64x32xf32> to vector<64x32xf32>
    %cst_201 = arith.constant dense<0.000000e+00> : vector<2x32xf32>
    %368 = tpu.matmul %284, %367, %cst_201 {dimension_numbers = #tpu.dot_dimension_numbers<[1], [0], [0], [1], [0, 0, 1, 1], [], []>} : vector<2x64xf32>, vector<64x32xf32>, vector<2x32xf32> -> vector<2x32xf32>
    %c1_202 = arith.constant 1 : index
    %c0_203 = arith.constant 0 : index
    %c0_204 = arith.constant 0 : index
    %369 = vector.load %arg13[%c1_202, %c0_203, %c0_204] : memref<4x32x32xf32, #tpu.memory_space<vmem>>, vector<1x32x32xf32>
    %370 = vector.shape_cast %369 : vector<1x32x32xf32> to vector<32x32xf32>
    %cst_205 = arith.constant dense<0.000000e+00> : vector<2x32xf32>
    %371 = tpu.matmul %282, %370, %cst_205 {dimension_numbers = #tpu.dot_dimension_numbers<[1], [0], [0], [1], [0, 0, 1, 1], [], []>} : vector<2x32xf32>, vector<32x32xf32>, vector<2x32xf32> -> vector<2x32xf32>
    %372 = arith.addf %368, %371 : vector<2x32xf32>
    %c1_206 = arith.constant 1 : index
    %c0_207 = arith.constant 0 : index
    %c0_208 = arith.constant 0 : index
    %373 = vector.load %arg14[%c1_206, %c0_207, %c0_208] : memref<4x1x32xf32, #tpu.memory_space<vmem>>, vector<1x1x32xf32>
    %374 = vector.shape_cast %373 : vector<1x1x32xf32> to vector<1x32xf32>
    %375 = vector.broadcast %374 : vector<1x32xf32> to vector<2x32xf32>
    %376 = arith.addf %372, %375 : vector<2x32xf32>
    %377 = arith.negf %376 : vector<2x32xf32>
    %378 = math.exp %377 : vector<2x32xf32>
    %cst_209 = arith.constant 1.000000e+00 : f32
    %379 = vector.broadcast %cst_209 : f32 to vector<2x32xf32>
    %380 = arith.addf %379, %378 : vector<2x32xf32>
    %381 = arith.divf %379, %380 : vector<2x32xf32>
    %c2_210 = arith.constant 2 : index
    %c0_211 = arith.constant 0 : index
    %c0_212 = arith.constant 0 : index
    %382 = vector.load %arg12[%c2_210, %c0_211, %c0_212] : memref<4x64x32xf32, #tpu.memory_space<vmem>>, vector<1x64x32xf32>
    %383 = vector.shape_cast %382 : vector<1x64x32xf32> to vector<64x32xf32>
    %cst_213 = arith.constant dense<0.000000e+00> : vector<2x32xf32>
    %384 = tpu.matmul %284, %383, %cst_213 {dimension_numbers = #tpu.dot_dimension_numbers<[1], [0], [0], [1], [0, 0, 1, 1], [], []>} : vector<2x64xf32>, vector<64x32xf32>, vector<2x32xf32> -> vector<2x32xf32>
    %c2_214 = arith.constant 2 : index
    %c0_215 = arith.constant 0 : index
    %c0_216 = arith.constant 0 : index
    %385 = vector.load %arg13[%c2_214, %c0_215, %c0_216] : memref<4x32x32xf32, #tpu.memory_space<vmem>>, vector<1x32x32xf32>
    %386 = vector.shape_cast %385 : vector<1x32x32xf32> to vector<32x32xf32>
    %cst_217 = arith.constant dense<0.000000e+00> : vector<2x32xf32>
    %387 = tpu.matmul %282, %386, %cst_217 {dimension_numbers = #tpu.dot_dimension_numbers<[1], [0], [0], [1], [0, 0, 1, 1], [], []>} : vector<2x32xf32>, vector<32x32xf32>, vector<2x32xf32> -> vector<2x32xf32>
    %388 = arith.addf %384, %387 : vector<2x32xf32>
    %c2_218 = arith.constant 2 : index
    %c0_219 = arith.constant 0 : index
    %c0_220 = arith.constant 0 : index
    %389 = vector.load %arg14[%c2_218, %c0_219, %c0_220] : memref<4x1x32xf32, #tpu.memory_space<vmem>>, vector<1x1x32xf32>
    %390 = vector.shape_cast %389 : vector<1x1x32xf32> to vector<1x32xf32>
    %391 = vector.broadcast %390 : vector<1x32xf32> to vector<2x32xf32>
    %392 = arith.addf %388, %391 : vector<2x32xf32>
    %393 = math.tanh %392 : vector<2x32xf32>
    %c3_221 = arith.constant 3 : index
    %c0_222 = arith.constant 0 : index
    %c0_223 = arith.constant 0 : index
    %394 = vector.load %arg12[%c3_221, %c0_222, %c0_223] : memref<4x64x32xf32, #tpu.memory_space<vmem>>, vector<1x64x32xf32>
    %395 = vector.shape_cast %394 : vector<1x64x32xf32> to vector<64x32xf32>
    %cst_224 = arith.constant dense<0.000000e+00> : vector<2x32xf32>
    %396 = tpu.matmul %284, %395, %cst_224 {dimension_numbers = #tpu.dot_dimension_numbers<[1], [0], [0], [1], [0, 0, 1, 1], [], []>} : vector<2x64xf32>, vector<64x32xf32>, vector<2x32xf32> -> vector<2x32xf32>
    %c3_225 = arith.constant 3 : index
    %c0_226 = arith.constant 0 : index
    %c0_227 = arith.constant 0 : index
    %397 = vector.load %arg13[%c3_225, %c0_226, %c0_227] : memref<4x32x32xf32, #tpu.memory_space<vmem>>, vector<1x32x32xf32>
    %398 = vector.shape_cast %397 : vector<1x32x32xf32> to vector<32x32xf32>
    %cst_228 = arith.constant dense<0.000000e+00> : vector<2x32xf32>
    %399 = tpu.matmul %282, %398, %cst_228 {dimension_numbers = #tpu.dot_dimension_numbers<[1], [0], [0], [1], [0, 0, 1, 1], [], []>} : vector<2x32xf32>, vector<32x32xf32>, vector<2x32xf32> -> vector<2x32xf32>
    %400 = arith.addf %396, %399 : vector<2x32xf32>
    %c3_229 = arith.constant 3 : index
    %c0_230 = arith.constant 0 : index
    %c0_231 = arith.constant 0 : index
    %401 = vector.load %arg14[%c3_229, %c0_230, %c0_231] : memref<4x1x32xf32, #tpu.memory_space<vmem>>, vector<1x1x32xf32>
    %402 = vector.shape_cast %401 : vector<1x1x32xf32> to vector<1x32xf32>
    %403 = vector.broadcast %402 : vector<1x32xf32> to vector<2x32xf32>
    %404 = arith.addf %400, %403 : vector<2x32xf32>
    %405 = arith.negf %404 : vector<2x32xf32>
    %406 = math.exp %405 : vector<2x32xf32>
    %cst_232 = arith.constant 1.000000e+00 : f32
    %407 = vector.broadcast %cst_232 : f32 to vector<2x32xf32>
    %408 = arith.addf %407, %406 : vector<2x32xf32>
    %409 = arith.divf %407, %408 : vector<2x32xf32>
    %410 = arith.mulf %381, %282 : vector<2x32xf32>
    %411 = arith.mulf %365, %393 : vector<2x32xf32>
    %412 = arith.addf %410, %411 : vector<2x32xf32>
    %413 = math.tanh %412 : vector<2x32xf32>
    %414 = arith.mulf %409, %413 : vector<2x32xf32>
    %415 = tpu.concatenate %193, %223 in 0 : vector<1x64xf32>, vector<1x64xf32> -> vector<2x64xf32>
    %416 = tpu.concatenate %193, %223 in 0 : vector<1x64xf32>, vector<1x64xf32> -> vector<2x64xf32>
    %c0_233 = arith.constant 0 : index
    %c0_234 = arith.constant 0 : index
    %c0_235 = arith.constant 0 : index
    %417 = vector.load %arg9[%c0_233, %c0_234, %c0_235] : memref<4x64x32xf32, #tpu.memory_space<vmem>>, vector<1x64x32xf32>
    %418 = vector.shape_cast %417 : vector<1x64x32xf32> to vector<64x32xf32>
    %cst_236 = arith.constant dense<0.000000e+00> : vector<2x32xf32>
    %419 = tpu.matmul %415, %418, %cst_236 {dimension_numbers = #tpu.dot_dimension_numbers<[1], [0], [0], [1], [0, 0, 1, 1], [], []>} : vector<2x64xf32>, vector<64x32xf32>, vector<2x32xf32> -> vector<2x32xf32>
    %c0_237 = arith.constant 0 : index
    %c0_238 = arith.constant 0 : index
    %c0_239 = arith.constant 0 : index
    %420 = vector.load %arg10[%c0_237, %c0_238, %c0_239] : memref<4x32x32xf32, #tpu.memory_space<vmem>>, vector<1x32x32xf32>
    %421 = vector.shape_cast %420 : vector<1x32x32xf32> to vector<32x32xf32>
    %cst_240 = arith.constant dense<0.000000e+00> : vector<2x32xf32>
    %422 = tpu.matmul %349, %421, %cst_240 {dimension_numbers = #tpu.dot_dimension_numbers<[1], [0], [0], [1], [0, 0, 1, 1], [], []>} : vector<2x32xf32>, vector<32x32xf32>, vector<2x32xf32> -> vector<2x32xf32>
    %423 = arith.addf %419, %422 : vector<2x32xf32>
    %c0_241 = arith.constant 0 : index
    %c0_242 = arith.constant 0 : index
    %c0_243 = arith.constant 0 : index
    %424 = vector.load %arg11[%c0_241, %c0_242, %c0_243] : memref<4x1x32xf32, #tpu.memory_space<vmem>>, vector<1x1x32xf32>
    %425 = vector.shape_cast %424 : vector<1x1x32xf32> to vector<1x32xf32>
    %426 = vector.broadcast %425 : vector<1x32xf32> to vector<2x32xf32>
    %427 = arith.addf %423, %426 : vector<2x32xf32>
    %428 = arith.negf %427 : vector<2x32xf32>
    %429 = math.exp %428 : vector<2x32xf32>
    %cst_244 = arith.constant 1.000000e+00 : f32
    %430 = vector.broadcast %cst_244 : f32 to vector<2x32xf32>
    %431 = arith.addf %430, %429 : vector<2x32xf32>
    %432 = arith.divf %430, %431 : vector<2x32xf32>
    %c1_245 = arith.constant 1 : index
    %c0_246 = arith.constant 0 : index
    %c0_247 = arith.constant 0 : index
    %433 = vector.load %arg9[%c1_245, %c0_246, %c0_247] : memref<4x64x32xf32, #tpu.memory_space<vmem>>, vector<1x64x32xf32>
    %434 = vector.shape_cast %433 : vector<1x64x32xf32> to vector<64x32xf32>
    %cst_248 = arith.constant dense<0.000000e+00> : vector<2x32xf32>
    %435 = tpu.matmul %415, %434, %cst_248 {dimension_numbers = #tpu.dot_dimension_numbers<[1], [0], [0], [1], [0, 0, 1, 1], [], []>} : vector<2x64xf32>, vector<64x32xf32>, vector<2x32xf32> -> vector<2x32xf32>
    %c1_249 = arith.constant 1 : index
    %c0_250 = arith.constant 0 : index
    %c0_251 = arith.constant 0 : index
    %436 = vector.load %arg10[%c1_249, %c0_250, %c0_251] : memref<4x32x32xf32, #tpu.memory_space<vmem>>, vector<1x32x32xf32>
    %437 = vector.shape_cast %436 : vector<1x32x32xf32> to vector<32x32xf32>
    %cst_252 = arith.constant dense<0.000000e+00> : vector<2x32xf32>
    %438 = tpu.matmul %349, %437, %cst_252 {dimension_numbers = #tpu.dot_dimension_numbers<[1], [0], [0], [1], [0, 0, 1, 1], [], []>} : vector<2x32xf32>, vector<32x32xf32>, vector<2x32xf32> -> vector<2x32xf32>
    %439 = arith.addf %435, %438 : vector<2x32xf32>
    %c1_253 = arith.constant 1 : index
    %c0_254 = arith.constant 0 : index
    %c0_255 = arith.constant 0 : index
    %440 = vector.load %arg11[%c1_253, %c0_254, %c0_255] : memref<4x1x32xf32, #tpu.memory_space<vmem>>, vector<1x1x32xf32>
    %441 = vector.shape_cast %440 : vector<1x1x32xf32> to vector<1x32xf32>
    %442 = vector.broadcast %441 : vector<1x32xf32> to vector<2x32xf32>
    %443 = arith.addf %439, %442 : vector<2x32xf32>
    %444 = arith.negf %443 : vector<2x32xf32>
    %445 = math.exp %444 : vector<2x32xf32>
    %cst_256 = arith.constant 1.000000e+00 : f32
    %446 = vector.broadcast %cst_256 : f32 to vector<2x32xf32>
    %447 = arith.addf %446, %445 : vector<2x32xf32>
    %448 = arith.divf %446, %447 : vector<2x32xf32>
    %c2_257 = arith.constant 2 : index
    %c0_258 = arith.constant 0 : index
    %c0_259 = arith.constant 0 : index
    %449 = vector.load %arg9[%c2_257, %c0_258, %c0_259] : memref<4x64x32xf32, #tpu.memory_space<vmem>>, vector<1x64x32xf32>
    %450 = vector.shape_cast %449 : vector<1x64x32xf32> to vector<64x32xf32>
    %cst_260 = arith.constant dense<0.000000e+00> : vector<2x32xf32>
    %451 = tpu.matmul %415, %450, %cst_260 {dimension_numbers = #tpu.dot_dimension_numbers<[1], [0], [0], [1], [0, 0, 1, 1], [], []>} : vector<2x64xf32>, vector<64x32xf32>, vector<2x32xf32> -> vector<2x32xf32>
    %c2_261 = arith.constant 2 : index
    %c0_262 = arith.constant 0 : index
    %c0_263 = arith.constant 0 : index
    %452 = vector.load %arg10[%c2_261, %c0_262, %c0_263] : memref<4x32x32xf32, #tpu.memory_space<vmem>>, vector<1x32x32xf32>
    %453 = vector.shape_cast %452 : vector<1x32x32xf32> to vector<32x32xf32>
    %cst_264 = arith.constant dense<0.000000e+00> : vector<2x32xf32>
    %454 = tpu.matmul %349, %453, %cst_264 {dimension_numbers = #tpu.dot_dimension_numbers<[1], [0], [0], [1], [0, 0, 1, 1], [], []>} : vector<2x32xf32>, vector<32x32xf32>, vector<2x32xf32> -> vector<2x32xf32>
    %455 = arith.addf %451, %454 : vector<2x32xf32>
    %c2_265 = arith.constant 2 : index
    %c0_266 = arith.constant 0 : index
    %c0_267 = arith.constant 0 : index
    %456 = vector.load %arg11[%c2_265, %c0_266, %c0_267] : memref<4x1x32xf32, #tpu.memory_space<vmem>>, vector<1x1x32xf32>
    %457 = vector.shape_cast %456 : vector<1x1x32xf32> to vector<1x32xf32>
    %458 = vector.broadcast %457 : vector<1x32xf32> to vector<2x32xf32>
    %459 = arith.addf %455, %458 : vector<2x32xf32>
    %460 = math.tanh %459 : vector<2x32xf32>
    %c3_268 = arith.constant 3 : index
    %c0_269 = arith.constant 0 : index
    %c0_270 = arith.constant 0 : index
    %461 = vector.load %arg9[%c3_268, %c0_269, %c0_270] : memref<4x64x32xf32, #tpu.memory_space<vmem>>, vector<1x64x32xf32>
    %462 = vector.shape_cast %461 : vector<1x64x32xf32> to vector<64x32xf32>
    %cst_271 = arith.constant dense<0.000000e+00> : vector<2x32xf32>
    %463 = tpu.matmul %415, %462, %cst_271 {dimension_numbers = #tpu.dot_dimension_numbers<[1], [0], [0], [1], [0, 0, 1, 1], [], []>} : vector<2x64xf32>, vector<64x32xf32>, vector<2x32xf32> -> vector<2x32xf32>
    %c3_272 = arith.constant 3 : index
    %c0_273 = arith.constant 0 : index
    %c0_274 = arith.constant 0 : index
    %464 = vector.load %arg10[%c3_272, %c0_273, %c0_274] : memref<4x32x32xf32, #tpu.memory_space<vmem>>, vector<1x32x32xf32>
    %465 = vector.shape_cast %464 : vector<1x32x32xf32> to vector<32x32xf32>
    %cst_275 = arith.constant dense<0.000000e+00> : vector<2x32xf32>
    %466 = tpu.matmul %349, %465, %cst_275 {dimension_numbers = #tpu.dot_dimension_numbers<[1], [0], [0], [1], [0, 0, 1, 1], [], []>} : vector<2x32xf32>, vector<32x32xf32>, vector<2x32xf32> -> vector<2x32xf32>
    %467 = arith.addf %463, %466 : vector<2x32xf32>
    %c3_276 = arith.constant 3 : index
    %c0_277 = arith.constant 0 : index
    %c0_278 = arith.constant 0 : index
    %468 = vector.load %arg11[%c3_276, %c0_277, %c0_278] : memref<4x1x32xf32, #tpu.memory_space<vmem>>, vector<1x1x32xf32>
    %469 = vector.shape_cast %468 : vector<1x1x32xf32> to vector<1x32xf32>
    %470 = vector.broadcast %469 : vector<1x32xf32> to vector<2x32xf32>
    %471 = arith.addf %467, %470 : vector<2x32xf32>
    %472 = arith.negf %471 : vector<2x32xf32>
    %473 = math.exp %472 : vector<2x32xf32>
    %cst_279 = arith.constant 1.000000e+00 : f32
    %474 = vector.broadcast %cst_279 : f32 to vector<2x32xf32>
    %475 = arith.addf %474, %473 : vector<2x32xf32>
    %476 = arith.divf %474, %475 : vector<2x32xf32>
    %477 = arith.mulf %448, %347 : vector<2x32xf32>
    %478 = arith.mulf %432, %460 : vector<2x32xf32>
    %479 = arith.addf %477, %478 : vector<2x32xf32>
    %480 = math.tanh %479 : vector<2x32xf32>
    %481 = arith.mulf %476, %480 : vector<2x32xf32>
    %c0_280 = arith.constant 0 : index
    %c0_281 = arith.constant 0 : index
    %c0_282 = arith.constant 0 : index
    %482 = vector.load %arg12[%c0_280, %c0_281, %c0_282] : memref<4x64x32xf32, #tpu.memory_space<vmem>>, vector<1x64x32xf32>
    %483 = vector.shape_cast %482 : vector<1x64x32xf32> to vector<64x32xf32>
    %cst_283 = arith.constant dense<0.000000e+00> : vector<2x32xf32>
    %484 = tpu.matmul %416, %483, %cst_283 {dimension_numbers = #tpu.dot_dimension_numbers<[1], [0], [0], [1], [0, 0, 1, 1], [], []>} : vector<2x64xf32>, vector<64x32xf32>, vector<2x32xf32> -> vector<2x32xf32>
    %c0_284 = arith.constant 0 : index
    %c0_285 = arith.constant 0 : index
    %c0_286 = arith.constant 0 : index
    %485 = vector.load %arg13[%c0_284, %c0_285, %c0_286] : memref<4x32x32xf32, #tpu.memory_space<vmem>>, vector<1x32x32xf32>
    %486 = vector.shape_cast %485 : vector<1x32x32xf32> to vector<32x32xf32>
    %cst_287 = arith.constant dense<0.000000e+00> : vector<2x32xf32>
    %487 = tpu.matmul %414, %486, %cst_287 {dimension_numbers = #tpu.dot_dimension_numbers<[1], [0], [0], [1], [0, 0, 1, 1], [], []>} : vector<2x32xf32>, vector<32x32xf32>, vector<2x32xf32> -> vector<2x32xf32>
    %488 = arith.addf %484, %487 : vector<2x32xf32>
    %c0_288 = arith.constant 0 : index
    %c0_289 = arith.constant 0 : index
    %c0_290 = arith.constant 0 : index
    %489 = vector.load %arg14[%c0_288, %c0_289, %c0_290] : memref<4x1x32xf32, #tpu.memory_space<vmem>>, vector<1x1x32xf32>
    %490 = vector.shape_cast %489 : vector<1x1x32xf32> to vector<1x32xf32>
    %491 = vector.broadcast %490 : vector<1x32xf32> to vector<2x32xf32>
    %492 = arith.addf %488, %491 : vector<2x32xf32>
    %493 = arith.negf %492 : vector<2x32xf32>
    %494 = math.exp %493 : vector<2x32xf32>
    %cst_291 = arith.constant 1.000000e+00 : f32
    %495 = vector.broadcast %cst_291 : f32 to vector<2x32xf32>
    %496 = arith.addf %495, %494 : vector<2x32xf32>
    %497 = arith.divf %495, %496 : vector<2x32xf32>
    %c1_292 = arith.constant 1 : index
    %c0_293 = arith.constant 0 : index
    %c0_294 = arith.constant 0 : index
    %498 = vector.load %arg12[%c1_292, %c0_293, %c0_294] : memref<4x64x32xf32, #tpu.memory_space<vmem>>, vector<1x64x32xf32>
    %499 = vector.shape_cast %498 : vector<1x64x32xf32> to vector<64x32xf32>
    %cst_295 = arith.constant dense<0.000000e+00> : vector<2x32xf32>
    %500 = tpu.matmul %416, %499, %cst_295 {dimension_numbers = #tpu.dot_dimension_numbers<[1], [0], [0], [1], [0, 0, 1, 1], [], []>} : vector<2x64xf32>, vector<64x32xf32>, vector<2x32xf32> -> vector<2x32xf32>
    %c1_296 = arith.constant 1 : index
    %c0_297 = arith.constant 0 : index
    %c0_298 = arith.constant 0 : index
    %501 = vector.load %arg13[%c1_296, %c0_297, %c0_298] : memref<4x32x32xf32, #tpu.memory_space<vmem>>, vector<1x32x32xf32>
    %502 = vector.shape_cast %501 : vector<1x32x32xf32> to vector<32x32xf32>
    %cst_299 = arith.constant dense<0.000000e+00> : vector<2x32xf32>
    %503 = tpu.matmul %414, %502, %cst_299 {dimension_numbers = #tpu.dot_dimension_numbers<[1], [0], [0], [1], [0, 0, 1, 1], [], []>} : vector<2x32xf32>, vector<32x32xf32>, vector<2x32xf32> -> vector<2x32xf32>
    %504 = arith.addf %500, %503 : vector<2x32xf32>
    %c1_300 = arith.constant 1 : index
    %c0_301 = arith.constant 0 : index
    %c0_302 = arith.constant 0 : index
    %505 = vector.load %arg14[%c1_300, %c0_301, %c0_302] : memref<4x1x32xf32, #tpu.memory_space<vmem>>, vector<1x1x32xf32>
    %506 = vector.shape_cast %505 : vector<1x1x32xf32> to vector<1x32xf32>
    %507 = vector.broadcast %506 : vector<1x32xf32> to vector<2x32xf32>
    %508 = arith.addf %504, %507 : vector<2x32xf32>
    %509 = arith.negf %508 : vector<2x32xf32>
    %510 = math.exp %509 : vector<2x32xf32>
    %cst_303 = arith.constant 1.000000e+00 : f32
    %511 = vector.broadcast %cst_303 : f32 to vector<2x32xf32>
    %512 = arith.addf %511, %510 : vector<2x32xf32>
    %513 = arith.divf %511, %512 : vector<2x32xf32>
    %c2_304 = arith.constant 2 : index
    %c0_305 = arith.constant 0 : index
    %c0_306 = arith.constant 0 : index
    %514 = vector.load %arg12[%c2_304, %c0_305, %c0_306] : memref<4x64x32xf32, #tpu.memory_space<vmem>>, vector<1x64x32xf32>
    %515 = vector.shape_cast %514 : vector<1x64x32xf32> to vector<64x32xf32>
    %cst_307 = arith.constant dense<0.000000e+00> : vector<2x32xf32>
    %516 = tpu.matmul %416, %515, %cst_307 {dimension_numbers = #tpu.dot_dimension_numbers<[1], [0], [0], [1], [0, 0, 1, 1], [], []>} : vector<2x64xf32>, vector<64x32xf32>, vector<2x32xf32> -> vector<2x32xf32>
    %c2_308 = arith.constant 2 : index
    %c0_309 = arith.constant 0 : index
    %c0_310 = arith.constant 0 : index
    %517 = vector.load %arg13[%c2_308, %c0_309, %c0_310] : memref<4x32x32xf32, #tpu.memory_space<vmem>>, vector<1x32x32xf32>
    %518 = vector.shape_cast %517 : vector<1x32x32xf32> to vector<32x32xf32>
    %cst_311 = arith.constant dense<0.000000e+00> : vector<2x32xf32>
    %519 = tpu.matmul %414, %518, %cst_311 {dimension_numbers = #tpu.dot_dimension_numbers<[1], [0], [0], [1], [0, 0, 1, 1], [], []>} : vector<2x32xf32>, vector<32x32xf32>, vector<2x32xf32> -> vector<2x32xf32>
    %520 = arith.addf %516, %519 : vector<2x32xf32>
    %c2_312 = arith.constant 2 : index
    %c0_313 = arith.constant 0 : index
    %c0_314 = arith.constant 0 : index
    %521 = vector.load %arg14[%c2_312, %c0_313, %c0_314] : memref<4x1x32xf32, #tpu.memory_space<vmem>>, vector<1x1x32xf32>
    %522 = vector.shape_cast %521 : vector<1x1x32xf32> to vector<1x32xf32>
    %523 = vector.broadcast %522 : vector<1x32xf32> to vector<2x32xf32>
    %524 = arith.addf %520, %523 : vector<2x32xf32>
    %525 = math.tanh %524 : vector<2x32xf32>
    %c3_315 = arith.constant 3 : index
    %c0_316 = arith.constant 0 : index
    %c0_317 = arith.constant 0 : index
    %526 = vector.load %arg12[%c3_315, %c0_316, %c0_317] : memref<4x64x32xf32, #tpu.memory_space<vmem>>, vector<1x64x32xf32>
    %527 = vector.shape_cast %526 : vector<1x64x32xf32> to vector<64x32xf32>
    %cst_318 = arith.constant dense<0.000000e+00> : vector<2x32xf32>
    %528 = tpu.matmul %416, %527, %cst_318 {dimension_numbers = #tpu.dot_dimension_numbers<[1], [0], [0], [1], [0, 0, 1, 1], [], []>} : vector<2x64xf32>, vector<64x32xf32>, vector<2x32xf32> -> vector<2x32xf32>
    %c3_319 = arith.constant 3 : index
    %c0_320 = arith.constant 0 : index
    %c0_321 = arith.constant 0 : index
    %529 = vector.load %arg13[%c3_319, %c0_320, %c0_321] : memref<4x32x32xf32, #tpu.memory_space<vmem>>, vector<1x32x32xf32>
    %530 = vector.shape_cast %529 : vector<1x32x32xf32> to vector<32x32xf32>
    %cst_322 = arith.constant dense<0.000000e+00> : vector<2x32xf32>
    %531 = tpu.matmul %414, %530, %cst_322 {dimension_numbers = #tpu.dot_dimension_numbers<[1], [0], [0], [1], [0, 0, 1, 1], [], []>} : vector<2x32xf32>, vector<32x32xf32>, vector<2x32xf32> -> vector<2x32xf32>
    %532 = arith.addf %528, %531 : vector<2x32xf32>
    %c3_323 = arith.constant 3 : index
    %c0_324 = arith.constant 0 : index
    %c0_325 = arith.constant 0 : index
    %533 = vector.load %arg14[%c3_323, %c0_324, %c0_325] : memref<4x1x32xf32, #tpu.memory_space<vmem>>, vector<1x1x32xf32>
    %534 = vector.shape_cast %533 : vector<1x1x32xf32> to vector<1x32xf32>
    %535 = vector.broadcast %534 : vector<1x32xf32> to vector<2x32xf32>
    %536 = arith.addf %532, %535 : vector<2x32xf32>
    %537 = arith.negf %536 : vector<2x32xf32>
    %538 = math.exp %537 : vector<2x32xf32>
    %cst_326 = arith.constant 1.000000e+00 : f32
    %539 = vector.broadcast %cst_326 : f32 to vector<2x32xf32>
    %540 = arith.addf %539, %538 : vector<2x32xf32>
    %541 = arith.divf %539, %540 : vector<2x32xf32>
    %542 = arith.mulf %513, %412 : vector<2x32xf32>
    %543 = arith.mulf %497, %525 : vector<2x32xf32>
    %544 = arith.addf %542, %543 : vector<2x32xf32>
    %545 = math.tanh %544 : vector<2x32xf32>
    %546 = arith.mulf %541, %545 : vector<2x32xf32>
    %547 = tpu.concatenate %281, %281 in 0 : vector<1x64xf32>, vector<1x64xf32> -> vector<2x64xf32>
    %548 = tpu.concatenate %178, %208 in 0 : vector<1x64xf32>, vector<1x64xf32> -> vector<2x64xf32>
    %c0_327 = arith.constant 0 : index
    %c0_328 = arith.constant 0 : index
    %c0_329 = arith.constant 0 : index
    %549 = vector.load %arg9[%c0_327, %c0_328, %c0_329] : memref<4x64x32xf32, #tpu.memory_space<vmem>>, vector<1x64x32xf32>
    %550 = vector.shape_cast %549 : vector<1x64x32xf32> to vector<64x32xf32>
    %cst_330 = arith.constant dense<0.000000e+00> : vector<2x32xf32>
    %551 = tpu.matmul %547, %550, %cst_330 {dimension_numbers = #tpu.dot_dimension_numbers<[1], [0], [0], [1], [0, 0, 1, 1], [], []>} : vector<2x64xf32>, vector<64x32xf32>, vector<2x32xf32> -> vector<2x32xf32>
    %c0_331 = arith.constant 0 : index
    %c0_332 = arith.constant 0 : index
    %c0_333 = arith.constant 0 : index
    %552 = vector.load %arg10[%c0_331, %c0_332, %c0_333] : memref<4x32x32xf32, #tpu.memory_space<vmem>>, vector<1x32x32xf32>
    %553 = vector.shape_cast %552 : vector<1x32x32xf32> to vector<32x32xf32>
    %cst_334 = arith.constant dense<0.000000e+00> : vector<2x32xf32>
    %554 = tpu.matmul %481, %553, %cst_334 {dimension_numbers = #tpu.dot_dimension_numbers<[1], [0], [0], [1], [0, 0, 1, 1], [], []>} : vector<2x32xf32>, vector<32x32xf32>, vector<2x32xf32> -> vector<2x32xf32>
    %555 = arith.addf %551, %554 : vector<2x32xf32>
    %c0_335 = arith.constant 0 : index
    %c0_336 = arith.constant 0 : index
    %c0_337 = arith.constant 0 : index
    %556 = vector.load %arg11[%c0_335, %c0_336, %c0_337] : memref<4x1x32xf32, #tpu.memory_space<vmem>>, vector<1x1x32xf32>
    %557 = vector.shape_cast %556 : vector<1x1x32xf32> to vector<1x32xf32>
    %558 = vector.broadcast %557 : vector<1x32xf32> to vector<2x32xf32>
    %559 = arith.addf %555, %558 : vector<2x32xf32>
    %560 = arith.negf %559 : vector<2x32xf32>
    %561 = math.exp %560 : vector<2x32xf32>
    %cst_338 = arith.constant 1.000000e+00 : f32
    %562 = vector.broadcast %cst_338 : f32 to vector<2x32xf32>
    %563 = arith.addf %562, %561 : vector<2x32xf32>
    %564 = arith.divf %562, %563 : vector<2x32xf32>
    %c1_339 = arith.constant 1 : index
    %c0_340 = arith.constant 0 : index
    %c0_341 = arith.constant 0 : index
    %565 = vector.load %arg9[%c1_339, %c0_340, %c0_341] : memref<4x64x32xf32, #tpu.memory_space<vmem>>, vector<1x64x32xf32>
    %566 = vector.shape_cast %565 : vector<1x64x32xf32> to vector<64x32xf32>
    %cst_342 = arith.constant dense<0.000000e+00> : vector<2x32xf32>
    %567 = tpu.matmul %547, %566, %cst_342 {dimension_numbers = #tpu.dot_dimension_numbers<[1], [0], [0], [1], [0, 0, 1, 1], [], []>} : vector<2x64xf32>, vector<64x32xf32>, vector<2x32xf32> -> vector<2x32xf32>
    %c1_343 = arith.constant 1 : index
    %c0_344 = arith.constant 0 : index
    %c0_345 = arith.constant 0 : index
    %568 = vector.load %arg10[%c1_343, %c0_344, %c0_345] : memref<4x32x32xf32, #tpu.memory_space<vmem>>, vector<1x32x32xf32>
    %569 = vector.shape_cast %568 : vector<1x32x32xf32> to vector<32x32xf32>
    %cst_346 = arith.constant dense<0.000000e+00> : vector<2x32xf32>
    %570 = tpu.matmul %481, %569, %cst_346 {dimension_numbers = #tpu.dot_dimension_numbers<[1], [0], [0], [1], [0, 0, 1, 1], [], []>} : vector<2x32xf32>, vector<32x32xf32>, vector<2x32xf32> -> vector<2x32xf32>
    %571 = arith.addf %567, %570 : vector<2x32xf32>
    %c1_347 = arith.constant 1 : index
    %c0_348 = arith.constant 0 : index
    %c0_349 = arith.constant 0 : index
    %572 = vector.load %arg11[%c1_347, %c0_348, %c0_349] : memref<4x1x32xf32, #tpu.memory_space<vmem>>, vector<1x1x32xf32>
    %573 = vector.shape_cast %572 : vector<1x1x32xf32> to vector<1x32xf32>
    %574 = vector.broadcast %573 : vector<1x32xf32> to vector<2x32xf32>
    %575 = arith.addf %571, %574 : vector<2x32xf32>
    %576 = arith.negf %575 : vector<2x32xf32>
    %577 = math.exp %576 : vector<2x32xf32>
    %cst_350 = arith.constant 1.000000e+00 : f32
    %578 = vector.broadcast %cst_350 : f32 to vector<2x32xf32>
    %579 = arith.addf %578, %577 : vector<2x32xf32>
    %580 = arith.divf %578, %579 : vector<2x32xf32>
    %c2_351 = arith.constant 2 : index
    %c0_352 = arith.constant 0 : index
    %c0_353 = arith.constant 0 : index
    %581 = vector.load %arg9[%c2_351, %c0_352, %c0_353] : memref<4x64x32xf32, #tpu.memory_space<vmem>>, vector<1x64x32xf32>
    %582 = vector.shape_cast %581 : vector<1x64x32xf32> to vector<64x32xf32>
    %cst_354 = arith.constant dense<0.000000e+00> : vector<2x32xf32>
    %583 = tpu.matmul %547, %582, %cst_354 {dimension_numbers = #tpu.dot_dimension_numbers<[1], [0], [0], [1], [0, 0, 1, 1], [], []>} : vector<2x64xf32>, vector<64x32xf32>, vector<2x32xf32> -> vector<2x32xf32>
    %c2_355 = arith.constant 2 : index
    %c0_356 = arith.constant 0 : index
    %c0_357 = arith.constant 0 : index
    %584 = vector.load %arg10[%c2_355, %c0_356, %c0_357] : memref<4x32x32xf32, #tpu.memory_space<vmem>>, vector<1x32x32xf32>
    %585 = vector.shape_cast %584 : vector<1x32x32xf32> to vector<32x32xf32>
    %cst_358 = arith.constant dense<0.000000e+00> : vector<2x32xf32>
    %586 = tpu.matmul %481, %585, %cst_358 {dimension_numbers = #tpu.dot_dimension_numbers<[1], [0], [0], [1], [0, 0, 1, 1], [], []>} : vector<2x32xf32>, vector<32x32xf32>, vector<2x32xf32> -> vector<2x32xf32>
    %587 = arith.addf %583, %586 : vector<2x32xf32>
    %c2_359 = arith.constant 2 : index
    %c0_360 = arith.constant 0 : index
    %c0_361 = arith.constant 0 : index
    %588 = vector.load %arg11[%c2_359, %c0_360, %c0_361] : memref<4x1x32xf32, #tpu.memory_space<vmem>>, vector<1x1x32xf32>
    %589 = vector.shape_cast %588 : vector<1x1x32xf32> to vector<1x32xf32>
    %590 = vector.broadcast %589 : vector<1x32xf32> to vector<2x32xf32>
    %591 = arith.addf %587, %590 : vector<2x32xf32>
    %592 = math.tanh %591 : vector<2x32xf32>
    %c3_362 = arith.constant 3 : index
    %c0_363 = arith.constant 0 : index
    %c0_364 = arith.constant 0 : index
    %593 = vector.load %arg9[%c3_362, %c0_363, %c0_364] : memref<4x64x32xf32, #tpu.memory_space<vmem>>, vector<1x64x32xf32>
    %594 = vector.shape_cast %593 : vector<1x64x32xf32> to vector<64x32xf32>
    %cst_365 = arith.constant dense<0.000000e+00> : vector<2x32xf32>
    %595 = tpu.matmul %547, %594, %cst_365 {dimension_numbers = #tpu.dot_dimension_numbers<[1], [0], [0], [1], [0, 0, 1, 1], [], []>} : vector<2x64xf32>, vector<64x32xf32>, vector<2x32xf32> -> vector<2x32xf32>
    %c3_366 = arith.constant 3 : index
    %c0_367 = arith.constant 0 : index
    %c0_368 = arith.constant 0 : index
    %596 = vector.load %arg10[%c3_366, %c0_367, %c0_368] : memref<4x32x32xf32, #tpu.memory_space<vmem>>, vector<1x32x32xf32>
    %597 = vector.shape_cast %596 : vector<1x32x32xf32> to vector<32x32xf32>
    %cst_369 = arith.constant dense<0.000000e+00> : vector<2x32xf32>
    %598 = tpu.matmul %481, %597, %cst_369 {dimension_numbers = #tpu.dot_dimension_numbers<[1], [0], [0], [1], [0, 0, 1, 1], [], []>} : vector<2x32xf32>, vector<32x32xf32>, vector<2x32xf32> -> vector<2x32xf32>
    %599 = arith.addf %595, %598 : vector<2x32xf32>
    %c3_370 = arith.constant 3 : index
    %c0_371 = arith.constant 0 : index
    %c0_372 = arith.constant 0 : index
    %600 = vector.load %arg11[%c3_370, %c0_371, %c0_372] : memref<4x1x32xf32, #tpu.memory_space<vmem>>, vector<1x1x32xf32>
    %601 = vector.shape_cast %600 : vector<1x1x32xf32> to vector<1x32xf32>
    %602 = vector.broadcast %601 : vector<1x32xf32> to vector<2x32xf32>
    %603 = arith.addf %599, %602 : vector<2x32xf32>
    %604 = arith.negf %603 : vector<2x32xf32>
    %605 = math.exp %604 : vector<2x32xf32>
    %cst_373 = arith.constant 1.000000e+00 : f32
    %606 = vector.broadcast %cst_373 : f32 to vector<2x32xf32>
    %607 = arith.addf %606, %605 : vector<2x32xf32>
    %608 = arith.divf %606, %607 : vector<2x32xf32>
    %609 = arith.mulf %580, %479 : vector<2x32xf32>
    %610 = arith.mulf %564, %592 : vector<2x32xf32>
    %611 = arith.addf %609, %610 : vector<2x32xf32>
    %612 = math.tanh %611 : vector<2x32xf32>
    %613 = arith.mulf %608, %612 : vector<2x32xf32>
    %c0_374 = arith.constant 0 : index
    %c0_375 = arith.constant 0 : index
    %c0_376 = arith.constant 0 : index
    %614 = vector.load %arg12[%c0_374, %c0_375, %c0_376] : memref<4x64x32xf32, #tpu.memory_space<vmem>>, vector<1x64x32xf32>
    %615 = vector.shape_cast %614 : vector<1x64x32xf32> to vector<64x32xf32>
    %cst_377 = arith.constant dense<0.000000e+00> : vector<2x32xf32>
    %616 = tpu.matmul %548, %615, %cst_377 {dimension_numbers = #tpu.dot_dimension_numbers<[1], [0], [0], [1], [0, 0, 1, 1], [], []>} : vector<2x64xf32>, vector<64x32xf32>, vector<2x32xf32> -> vector<2x32xf32>
    %c0_378 = arith.constant 0 : index
    %c0_379 = arith.constant 0 : index
    %c0_380 = arith.constant 0 : index
    %617 = vector.load %arg13[%c0_378, %c0_379, %c0_380] : memref<4x32x32xf32, #tpu.memory_space<vmem>>, vector<1x32x32xf32>
    %618 = vector.shape_cast %617 : vector<1x32x32xf32> to vector<32x32xf32>
    %cst_381 = arith.constant dense<0.000000e+00> : vector<2x32xf32>
    %619 = tpu.matmul %546, %618, %cst_381 {dimension_numbers = #tpu.dot_dimension_numbers<[1], [0], [0], [1], [0, 0, 1, 1], [], []>} : vector<2x32xf32>, vector<32x32xf32>, vector<2x32xf32> -> vector<2x32xf32>
    %620 = arith.addf %616, %619 : vector<2x32xf32>
    %c0_382 = arith.constant 0 : index
    %c0_383 = arith.constant 0 : index
    %c0_384 = arith.constant 0 : index
    %621 = vector.load %arg14[%c0_382, %c0_383, %c0_384] : memref<4x1x32xf32, #tpu.memory_space<vmem>>, vector<1x1x32xf32>
    %622 = vector.shape_cast %621 : vector<1x1x32xf32> to vector<1x32xf32>
    %623 = vector.broadcast %622 : vector<1x32xf32> to vector<2x32xf32>
    %624 = arith.addf %620, %623 : vector<2x32xf32>
    %625 = arith.negf %624 : vector<2x32xf32>
    %626 = math.exp %625 : vector<2x32xf32>
    %cst_385 = arith.constant 1.000000e+00 : f32
    %627 = vector.broadcast %cst_385 : f32 to vector<2x32xf32>
    %628 = arith.addf %627, %626 : vector<2x32xf32>
    %629 = arith.divf %627, %628 : vector<2x32xf32>
    %c1_386 = arith.constant 1 : index
    %c0_387 = arith.constant 0 : index
    %c0_388 = arith.constant 0 : index
    %630 = vector.load %arg12[%c1_386, %c0_387, %c0_388] : memref<4x64x32xf32, #tpu.memory_space<vmem>>, vector<1x64x32xf32>
    %631 = vector.shape_cast %630 : vector<1x64x32xf32> to vector<64x32xf32>
    %cst_389 = arith.constant dense<0.000000e+00> : vector<2x32xf32>
    %632 = tpu.matmul %548, %631, %cst_389 {dimension_numbers = #tpu.dot_dimension_numbers<[1], [0], [0], [1], [0, 0, 1, 1], [], []>} : vector<2x64xf32>, vector<64x32xf32>, vector<2x32xf32> -> vector<2x32xf32>
    %c1_390 = arith.constant 1 : index
    %c0_391 = arith.constant 0 : index
    %c0_392 = arith.constant 0 : index
    %633 = vector.load %arg13[%c1_390, %c0_391, %c0_392] : memref<4x32x32xf32, #tpu.memory_space<vmem>>, vector<1x32x32xf32>
    %634 = vector.shape_cast %633 : vector<1x32x32xf32> to vector<32x32xf32>
    %cst_393 = arith.constant dense<0.000000e+00> : vector<2x32xf32>
    %635 = tpu.matmul %546, %634, %cst_393 {dimension_numbers = #tpu.dot_dimension_numbers<[1], [0], [0], [1], [0, 0, 1, 1], [], []>} : vector<2x32xf32>, vector<32x32xf32>, vector<2x32xf32> -> vector<2x32xf32>
    %636 = arith.addf %632, %635 : vector<2x32xf32>
    %c1_394 = arith.constant 1 : index
    %c0_395 = arith.constant 0 : index
    %c0_396 = arith.constant 0 : index
    %637 = vector.load %arg14[%c1_394, %c0_395, %c0_396] : memref<4x1x32xf32, #tpu.memory_space<vmem>>, vector<1x1x32xf32>
    %638 = vector.shape_cast %637 : vector<1x1x32xf32> to vector<1x32xf32>
    %639 = vector.broadcast %638 : vector<1x32xf32> to vector<2x32xf32>
    %640 = arith.addf %636, %639 : vector<2x32xf32>
    %641 = arith.negf %640 : vector<2x32xf32>
    %642 = math.exp %641 : vector<2x32xf32>
    %cst_397 = arith.constant 1.000000e+00 : f32
    %643 = vector.broadcast %cst_397 : f32 to vector<2x32xf32>
    %644 = arith.addf %643, %642 : vector<2x32xf32>
    %645 = arith.divf %643, %644 : vector<2x32xf32>
    %c2_398 = arith.constant 2 : index
    %c0_399 = arith.constant 0 : index
    %c0_400 = arith.constant 0 : index
    %646 = vector.load %arg12[%c2_398, %c0_399, %c0_400] : memref<4x64x32xf32, #tpu.memory_space<vmem>>, vector<1x64x32xf32>
    %647 = vector.shape_cast %646 : vector<1x64x32xf32> to vector<64x32xf32>
    %cst_401 = arith.constant dense<0.000000e+00> : vector<2x32xf32>
    %648 = tpu.matmul %548, %647, %cst_401 {dimension_numbers = #tpu.dot_dimension_numbers<[1], [0], [0], [1], [0, 0, 1, 1], [], []>} : vector<2x64xf32>, vector<64x32xf32>, vector<2x32xf32> -> vector<2x32xf32>
    %c2_402 = arith.constant 2 : index
    %c0_403 = arith.constant 0 : index
    %c0_404 = arith.constant 0 : index
    %649 = vector.load %arg13[%c2_402, %c0_403, %c0_404] : memref<4x32x32xf32, #tpu.memory_space<vmem>>, vector<1x32x32xf32>
    %650 = vector.shape_cast %649 : vector<1x32x32xf32> to vector<32x32xf32>
    %cst_405 = arith.constant dense<0.000000e+00> : vector<2x32xf32>
    %651 = tpu.matmul %546, %650, %cst_405 {dimension_numbers = #tpu.dot_dimension_numbers<[1], [0], [0], [1], [0, 0, 1, 1], [], []>} : vector<2x32xf32>, vector<32x32xf32>, vector<2x32xf32> -> vector<2x32xf32>
    %652 = arith.addf %648, %651 : vector<2x32xf32>
    %c2_406 = arith.constant 2 : index
    %c0_407 = arith.constant 0 : index
    %c0_408 = arith.constant 0 : index
    %653 = vector.load %arg14[%c2_406, %c0_407, %c0_408] : memref<4x1x32xf32, #tpu.memory_space<vmem>>, vector<1x1x32xf32>
    %654 = vector.shape_cast %653 : vector<1x1x32xf32> to vector<1x32xf32>
    %655 = vector.broadcast %654 : vector<1x32xf32> to vector<2x32xf32>
    %656 = arith.addf %652, %655 : vector<2x32xf32>
    %657 = math.tanh %656 : vector<2x32xf32>
    %c3_409 = arith.constant 3 : index
    %c0_410 = arith.constant 0 : index
    %c0_411 = arith.constant 0 : index
    %658 = vector.load %arg12[%c3_409, %c0_410, %c0_411] : memref<4x64x32xf32, #tpu.memory_space<vmem>>, vector<1x64x32xf32>
    %659 = vector.shape_cast %658 : vector<1x64x32xf32> to vector<64x32xf32>
    %cst_412 = arith.constant dense<0.000000e+00> : vector<2x32xf32>
    %660 = tpu.matmul %548, %659, %cst_412 {dimension_numbers = #tpu.dot_dimension_numbers<[1], [0], [0], [1], [0, 0, 1, 1], [], []>} : vector<2x64xf32>, vector<64x32xf32>, vector<2x32xf32> -> vector<2x32xf32>
    %c3_413 = arith.constant 3 : index
    %c0_414 = arith.constant 0 : index
    %c0_415 = arith.constant 0 : index
    %661 = vector.load %arg13[%c3_413, %c0_414, %c0_415] : memref<4x32x32xf32, #tpu.memory_space<vmem>>, vector<1x32x32xf32>
    %662 = vector.shape_cast %661 : vector<1x32x32xf32> to vector<32x32xf32>
    %cst_416 = arith.constant dense<0.000000e+00> : vector<2x32xf32>
    %663 = tpu.matmul %546, %662, %cst_416 {dimension_numbers = #tpu.dot_dimension_numbers<[1], [0], [0], [1], [0, 0, 1, 1], [], []>} : vector<2x32xf32>, vector<32x32xf32>, vector<2x32xf32> -> vector<2x32xf32>
    %664 = arith.addf %660, %663 : vector<2x32xf32>
    %c3_417 = arith.constant 3 : index
    %c0_418 = arith.constant 0 : index
    %c0_419 = arith.constant 0 : index
    %665 = vector.load %arg14[%c3_417, %c0_418, %c0_419] : memref<4x1x32xf32, #tpu.memory_space<vmem>>, vector<1x1x32xf32>
    %666 = vector.shape_cast %665 : vector<1x1x32xf32> to vector<1x32xf32>
    %667 = vector.broadcast %666 : vector<1x32xf32> to vector<2x32xf32>
    %668 = arith.addf %664, %667 : vector<2x32xf32>
    %669 = arith.negf %668 : vector<2x32xf32>
    %670 = math.exp %669 : vector<2x32xf32>
    %cst_420 = arith.constant 1.000000e+00 : f32
    %671 = vector.broadcast %cst_420 : f32 to vector<2x32xf32>
    %672 = arith.addf %671, %670 : vector<2x32xf32>
    %673 = arith.divf %671, %672 : vector<2x32xf32>
    %674 = arith.mulf %645, %544 : vector<2x32xf32>
    %675 = arith.mulf %629, %657 : vector<2x32xf32>
    %676 = arith.addf %674, %675 : vector<2x32xf32>
    %677 = math.tanh %676 : vector<2x32xf32>
    %678 = arith.mulf %673, %677 : vector<2x32xf32>
    %679 = tpu.concatenate %613, %678 in 1 : vector<2x32xf32>, vector<2x32xf32> -> vector<2x64xf32>
    %680 = vector.extract_strided_slice %679 {offsets = [0, 0], sizes = [1, 64], strides = [1, 1]} : vector<2x64xf32> to vector<1x64xf32>
    %681 = vector.extract_strided_slice %679 {offsets = [1, 0], sizes = [1, 64], strides = [1, 1]} : vector<2x64xf32> to vector<1x64xf32>
    %cst_421 = arith.constant 0.000000e+00 : f32
    %682 = vector.broadcast %cst_421 : f32 to vector<1x32xf32>
    %c0_422 = arith.constant 0 : index
    %c0_423 = arith.constant 0 : index
    %c0_424 = arith.constant 0 : index
    %683 = vector.load %arg15[%c0_422, %c0_423, %c0_424] : memref<4x64x32xf32, #tpu.memory_space<vmem>>, vector<1x64x32xf32>
    %684 = vector.shape_cast %683 : vector<1x64x32xf32> to vector<64x32xf32>
    %cst_425 = arith.constant dense<0.000000e+00> : vector<1x32xf32>
    %685 = tpu.matmul %680, %684, %cst_425 {dimension_numbers = #tpu.dot_dimension_numbers<[1], [0], [0], [1], [0, 0, 1, 1], [], []>} : vector<1x64xf32>, vector<64x32xf32>, vector<1x32xf32> -> vector<1x32xf32>
    %c0_426 = arith.constant 0 : index
    %c0_427 = arith.constant 0 : index
    %c0_428 = arith.constant 0 : index
    %686 = vector.load %arg16[%c0_426, %c0_427, %c0_428] : memref<4x32x32xf32, #tpu.memory_space<vmem>>, vector<1x32x32xf32>
    %687 = vector.shape_cast %686 : vector<1x32x32xf32> to vector<32x32xf32>
    %cst_429 = arith.constant dense<0.000000e+00> : vector<1x32xf32>
    %688 = tpu.matmul %682, %687, %cst_429 {dimension_numbers = #tpu.dot_dimension_numbers<[1], [0], [0], [1], [0, 0, 1, 1], [], []>} : vector<1x32xf32>, vector<32x32xf32>, vector<1x32xf32> -> vector<1x32xf32>
    %689 = arith.addf %685, %688 : vector<1x32xf32>
    %c0_430 = arith.constant 0 : index
    %c0_431 = arith.constant 0 : index
    %c0_432 = arith.constant 0 : index
    %690 = vector.load %arg17[%c0_430, %c0_431, %c0_432] : memref<4x1x32xf32, #tpu.memory_space<vmem>>, vector<1x1x32xf32>
    %691 = vector.shape_cast %690 : vector<1x1x32xf32> to vector<1x32xf32>
    %692 = arith.addf %689, %691 : vector<1x32xf32>
    %693 = arith.negf %692 : vector<1x32xf32>
    %694 = math.exp %693 : vector<1x32xf32>
    %cst_433 = arith.constant 1.000000e+00 : f32
    %695 = vector.broadcast %cst_433 : f32 to vector<1x32xf32>
    %696 = arith.addf %695, %694 : vector<1x32xf32>
    %697 = arith.divf %695, %696 : vector<1x32xf32>
    %c1_434 = arith.constant 1 : index
    %c0_435 = arith.constant 0 : index
    %c0_436 = arith.constant 0 : index
    %698 = vector.load %arg15[%c1_434, %c0_435, %c0_436] : memref<4x64x32xf32, #tpu.memory_space<vmem>>, vector<1x64x32xf32>
    %699 = vector.shape_cast %698 : vector<1x64x32xf32> to vector<64x32xf32>
    %cst_437 = arith.constant dense<0.000000e+00> : vector<1x32xf32>
    %700 = tpu.matmul %680, %699, %cst_437 {dimension_numbers = #tpu.dot_dimension_numbers<[1], [0], [0], [1], [0, 0, 1, 1], [], []>} : vector<1x64xf32>, vector<64x32xf32>, vector<1x32xf32> -> vector<1x32xf32>
    %c1_438 = arith.constant 1 : index
    %c0_439 = arith.constant 0 : index
    %c0_440 = arith.constant 0 : index
    %701 = vector.load %arg16[%c1_438, %c0_439, %c0_440] : memref<4x32x32xf32, #tpu.memory_space<vmem>>, vector<1x32x32xf32>
    %702 = vector.shape_cast %701 : vector<1x32x32xf32> to vector<32x32xf32>
    %cst_441 = arith.constant dense<0.000000e+00> : vector<1x32xf32>
    %703 = tpu.matmul %682, %702, %cst_441 {dimension_numbers = #tpu.dot_dimension_numbers<[1], [0], [0], [1], [0, 0, 1, 1], [], []>} : vector<1x32xf32>, vector<32x32xf32>, vector<1x32xf32> -> vector<1x32xf32>
    %704 = arith.addf %700, %703 : vector<1x32xf32>
    %c1_442 = arith.constant 1 : index
    %c0_443 = arith.constant 0 : index
    %c0_444 = arith.constant 0 : index
    %705 = vector.load %arg17[%c1_442, %c0_443, %c0_444] : memref<4x1x32xf32, #tpu.memory_space<vmem>>, vector<1x1x32xf32>
    %706 = vector.shape_cast %705 : vector<1x1x32xf32> to vector<1x32xf32>
    %707 = arith.addf %704, %706 : vector<1x32xf32>
    %708 = arith.negf %707 : vector<1x32xf32>
    %709 = math.exp %708 : vector<1x32xf32>
    %cst_445 = arith.constant 1.000000e+00 : f32
    %710 = vector.broadcast %cst_445 : f32 to vector<1x32xf32>
    %711 = arith.addf %710, %709 : vector<1x32xf32>
    %712 = arith.divf %710, %711 : vector<1x32xf32>
    %c2_446 = arith.constant 2 : index
    %c0_447 = arith.constant 0 : index
    %c0_448 = arith.constant 0 : index
    %713 = vector.load %arg15[%c2_446, %c0_447, %c0_448] : memref<4x64x32xf32, #tpu.memory_space<vmem>>, vector<1x64x32xf32>
    %714 = vector.shape_cast %713 : vector<1x64x32xf32> to vector<64x32xf32>
    %cst_449 = arith.constant dense<0.000000e+00> : vector<1x32xf32>
    %715 = tpu.matmul %680, %714, %cst_449 {dimension_numbers = #tpu.dot_dimension_numbers<[1], [0], [0], [1], [0, 0, 1, 1], [], []>} : vector<1x64xf32>, vector<64x32xf32>, vector<1x32xf32> -> vector<1x32xf32>
    %c2_450 = arith.constant 2 : index
    %c0_451 = arith.constant 0 : index
    %c0_452 = arith.constant 0 : index
    %716 = vector.load %arg16[%c2_450, %c0_451, %c0_452] : memref<4x32x32xf32, #tpu.memory_space<vmem>>, vector<1x32x32xf32>
    %717 = vector.shape_cast %716 : vector<1x32x32xf32> to vector<32x32xf32>
    %cst_453 = arith.constant dense<0.000000e+00> : vector<1x32xf32>
    %718 = tpu.matmul %682, %717, %cst_453 {dimension_numbers = #tpu.dot_dimension_numbers<[1], [0], [0], [1], [0, 0, 1, 1], [], []>} : vector<1x32xf32>, vector<32x32xf32>, vector<1x32xf32> -> vector<1x32xf32>
    %719 = arith.addf %715, %718 : vector<1x32xf32>
    %c2_454 = arith.constant 2 : index
    %c0_455 = arith.constant 0 : index
    %c0_456 = arith.constant 0 : index
    %720 = vector.load %arg17[%c2_454, %c0_455, %c0_456] : memref<4x1x32xf32, #tpu.memory_space<vmem>>, vector<1x1x32xf32>
    %721 = vector.shape_cast %720 : vector<1x1x32xf32> to vector<1x32xf32>
    %722 = arith.addf %719, %721 : vector<1x32xf32>
    %723 = math.tanh %722 : vector<1x32xf32>
    %c3_457 = arith.constant 3 : index
    %c0_458 = arith.constant 0 : index
    %c0_459 = arith.constant 0 : index
    %724 = vector.load %arg15[%c3_457, %c0_458, %c0_459] : memref<4x64x32xf32, #tpu.memory_space<vmem>>, vector<1x64x32xf32>
    %725 = vector.shape_cast %724 : vector<1x64x32xf32> to vector<64x32xf32>
    %cst_460 = arith.constant dense<0.000000e+00> : vector<1x32xf32>
    %726 = tpu.matmul %680, %725, %cst_460 {dimension_numbers = #tpu.dot_dimension_numbers<[1], [0], [0], [1], [0, 0, 1, 1], [], []>} : vector<1x64xf32>, vector<64x32xf32>, vector<1x32xf32> -> vector<1x32xf32>
    %c3_461 = arith.constant 3 : index
    %c0_462 = arith.constant 0 : index
    %c0_463 = arith.constant 0 : index
    %727 = vector.load %arg16[%c3_461, %c0_462, %c0_463] : memref<4x32x32xf32, #tpu.memory_space<vmem>>, vector<1x32x32xf32>
    %728 = vector.shape_cast %727 : vector<1x32x32xf32> to vector<32x32xf32>
    %cst_464 = arith.constant dense<0.000000e+00> : vector<1x32xf32>
    %729 = tpu.matmul %682, %728, %cst_464 {dimension_numbers = #tpu.dot_dimension_numbers<[1], [0], [0], [1], [0, 0, 1, 1], [], []>} : vector<1x32xf32>, vector<32x32xf32>, vector<1x32xf32> -> vector<1x32xf32>
    %730 = arith.addf %726, %729 : vector<1x32xf32>
    %c3_465 = arith.constant 3 : index
    %c0_466 = arith.constant 0 : index
    %c0_467 = arith.constant 0 : index
    %731 = vector.load %arg17[%c3_465, %c0_466, %c0_467] : memref<4x1x32xf32, #tpu.memory_space<vmem>>, vector<1x1x32xf32>
    %732 = vector.shape_cast %731 : vector<1x1x32xf32> to vector<1x32xf32>
    %733 = arith.addf %730, %732 : vector<1x32xf32>
    %734 = arith.negf %733 : vector<1x32xf32>
    %735 = math.exp %734 : vector<1x32xf32>
    %cst_468 = arith.constant 1.000000e+00 : f32
    %736 = vector.broadcast %cst_468 : f32 to vector<1x32xf32>
    %737 = arith.addf %736, %735 : vector<1x32xf32>
    %738 = arith.divf %736, %737 : vector<1x32xf32>
    %739 = arith.mulf %712, %682 : vector<1x32xf32>
    %740 = arith.mulf %697, %723 : vector<1x32xf32>
    %741 = arith.addf %739, %740 : vector<1x32xf32>
    %742 = math.tanh %741 : vector<1x32xf32>
    %743 = arith.mulf %738, %742 : vector<1x32xf32>
    %c0_469 = arith.constant 0 : index
    %c0_470 = arith.constant 0 : index
    %c0_471 = arith.constant 0 : index
    %744 = vector.load %arg15[%c0_469, %c0_470, %c0_471] : memref<4x64x32xf32, #tpu.memory_space<vmem>>, vector<1x64x32xf32>
    %745 = vector.shape_cast %744 : vector<1x64x32xf32> to vector<64x32xf32>
    %cst_472 = arith.constant dense<0.000000e+00> : vector<1x32xf32>
    %746 = tpu.matmul %681, %745, %cst_472 {dimension_numbers = #tpu.dot_dimension_numbers<[1], [0], [0], [1], [0, 0, 1, 1], [], []>} : vector<1x64xf32>, vector<64x32xf32>, vector<1x32xf32> -> vector<1x32xf32>
    %c0_473 = arith.constant 0 : index
    %c0_474 = arith.constant 0 : index
    %c0_475 = arith.constant 0 : index
    %747 = vector.load %arg16[%c0_473, %c0_474, %c0_475] : memref<4x32x32xf32, #tpu.memory_space<vmem>>, vector<1x32x32xf32>
    %748 = vector.shape_cast %747 : vector<1x32x32xf32> to vector<32x32xf32>
    %cst_476 = arith.constant dense<0.000000e+00> : vector<1x32xf32>
    %749 = tpu.matmul %743, %748, %cst_476 {dimension_numbers = #tpu.dot_dimension_numbers<[1], [0], [0], [1], [0, 0, 1, 1], [], []>} : vector<1x32xf32>, vector<32x32xf32>, vector<1x32xf32> -> vector<1x32xf32>
    %750 = arith.addf %746, %749 : vector<1x32xf32>
    %c0_477 = arith.constant 0 : index
    %c0_478 = arith.constant 0 : index
    %c0_479 = arith.constant 0 : index
    %751 = vector.load %arg17[%c0_477, %c0_478, %c0_479] : memref<4x1x32xf32, #tpu.memory_space<vmem>>, vector<1x1x32xf32>
    %752 = vector.shape_cast %751 : vector<1x1x32xf32> to vector<1x32xf32>
    %753 = arith.addf %750, %752 : vector<1x32xf32>
    %754 = arith.negf %753 : vector<1x32xf32>
    %755 = math.exp %754 : vector<1x32xf32>
    %cst_480 = arith.constant 1.000000e+00 : f32
    %756 = vector.broadcast %cst_480 : f32 to vector<1x32xf32>
    %757 = arith.addf %756, %755 : vector<1x32xf32>
    %758 = arith.divf %756, %757 : vector<1x32xf32>
    %c1_481 = arith.constant 1 : index
    %c0_482 = arith.constant 0 : index
    %c0_483 = arith.constant 0 : index
    %759 = vector.load %arg15[%c1_481, %c0_482, %c0_483] : memref<4x64x32xf32, #tpu.memory_space<vmem>>, vector<1x64x32xf32>
    %760 = vector.shape_cast %759 : vector<1x64x32xf32> to vector<64x32xf32>
    %cst_484 = arith.constant dense<0.000000e+00> : vector<1x32xf32>
    %761 = tpu.matmul %681, %760, %cst_484 {dimension_numbers = #tpu.dot_dimension_numbers<[1], [0], [0], [1], [0, 0, 1, 1], [], []>} : vector<1x64xf32>, vector<64x32xf32>, vector<1x32xf32> -> vector<1x32xf32>
    %c1_485 = arith.constant 1 : index
    %c0_486 = arith.constant 0 : index
    %c0_487 = arith.constant 0 : index
    %762 = vector.load %arg16[%c1_485, %c0_486, %c0_487] : memref<4x32x32xf32, #tpu.memory_space<vmem>>, vector<1x32x32xf32>
    %763 = vector.shape_cast %762 : vector<1x32x32xf32> to vector<32x32xf32>
    %cst_488 = arith.constant dense<0.000000e+00> : vector<1x32xf32>
    %764 = tpu.matmul %743, %763, %cst_488 {dimension_numbers = #tpu.dot_dimension_numbers<[1], [0], [0], [1], [0, 0, 1, 1], [], []>} : vector<1x32xf32>, vector<32x32xf32>, vector<1x32xf32> -> vector<1x32xf32>
    %765 = arith.addf %761, %764 : vector<1x32xf32>
    %c1_489 = arith.constant 1 : index
    %c0_490 = arith.constant 0 : index
    %c0_491 = arith.constant 0 : index
    %766 = vector.load %arg17[%c1_489, %c0_490, %c0_491] : memref<4x1x32xf32, #tpu.memory_space<vmem>>, vector<1x1x32xf32>
    %767 = vector.shape_cast %766 : vector<1x1x32xf32> to vector<1x32xf32>
    %768 = arith.addf %765, %767 : vector<1x32xf32>
    %769 = arith.negf %768 : vector<1x32xf32>
    %770 = math.exp %769 : vector<1x32xf32>
    %cst_492 = arith.constant 1.000000e+00 : f32
    %771 = vector.broadcast %cst_492 : f32 to vector<1x32xf32>
    %772 = arith.addf %771, %770 : vector<1x32xf32>
    %773 = arith.divf %771, %772 : vector<1x32xf32>
    %c2_493 = arith.constant 2 : index
    %c0_494 = arith.constant 0 : index
    %c0_495 = arith.constant 0 : index
    %774 = vector.load %arg15[%c2_493, %c0_494, %c0_495] : memref<4x64x32xf32, #tpu.memory_space<vmem>>, vector<1x64x32xf32>
    %775 = vector.shape_cast %774 : vector<1x64x32xf32> to vector<64x32xf32>
    %cst_496 = arith.constant dense<0.000000e+00> : vector<1x32xf32>
    %776 = tpu.matmul %681, %775, %cst_496 {dimension_numbers = #tpu.dot_dimension_numbers<[1], [0], [0], [1], [0, 0, 1, 1], [], []>} : vector<1x64xf32>, vector<64x32xf32>, vector<1x32xf32> -> vector<1x32xf32>
    %c2_497 = arith.constant 2 : index
    %c0_498 = arith.constant 0 : index
    %c0_499 = arith.constant 0 : index
    %777 = vector.load %arg16[%c2_497, %c0_498, %c0_499] : memref<4x32x32xf32, #tpu.memory_space<vmem>>, vector<1x32x32xf32>
    %778 = vector.shape_cast %777 : vector<1x32x32xf32> to vector<32x32xf32>
    %cst_500 = arith.constant dense<0.000000e+00> : vector<1x32xf32>
    %779 = tpu.matmul %743, %778, %cst_500 {dimension_numbers = #tpu.dot_dimension_numbers<[1], [0], [0], [1], [0, 0, 1, 1], [], []>} : vector<1x32xf32>, vector<32x32xf32>, vector<1x32xf32> -> vector<1x32xf32>
    %780 = arith.addf %776, %779 : vector<1x32xf32>
    %c2_501 = arith.constant 2 : index
    %c0_502 = arith.constant 0 : index
    %c0_503 = arith.constant 0 : index
    %781 = vector.load %arg17[%c2_501, %c0_502, %c0_503] : memref<4x1x32xf32, #tpu.memory_space<vmem>>, vector<1x1x32xf32>
    %782 = vector.shape_cast %781 : vector<1x1x32xf32> to vector<1x32xf32>
    %783 = arith.addf %780, %782 : vector<1x32xf32>
    %784 = math.tanh %783 : vector<1x32xf32>
    %c3_504 = arith.constant 3 : index
    %c0_505 = arith.constant 0 : index
    %c0_506 = arith.constant 0 : index
    %785 = vector.load %arg15[%c3_504, %c0_505, %c0_506] : memref<4x64x32xf32, #tpu.memory_space<vmem>>, vector<1x64x32xf32>
    %786 = vector.shape_cast %785 : vector<1x64x32xf32> to vector<64x32xf32>
    %cst_507 = arith.constant dense<0.000000e+00> : vector<1x32xf32>
    %787 = tpu.matmul %681, %786, %cst_507 {dimension_numbers = #tpu.dot_dimension_numbers<[1], [0], [0], [1], [0, 0, 1, 1], [], []>} : vector<1x64xf32>, vector<64x32xf32>, vector<1x32xf32> -> vector<1x32xf32>
    %c3_508 = arith.constant 3 : index
    %c0_509 = arith.constant 0 : index
    %c0_510 = arith.constant 0 : index
    %788 = vector.load %arg16[%c3_508, %c0_509, %c0_510] : memref<4x32x32xf32, #tpu.memory_space<vmem>>, vector<1x32x32xf32>
    %789 = vector.shape_cast %788 : vector<1x32x32xf32> to vector<32x32xf32>
    %cst_511 = arith.constant dense<0.000000e+00> : vector<1x32xf32>
    %790 = tpu.matmul %743, %789, %cst_511 {dimension_numbers = #tpu.dot_dimension_numbers<[1], [0], [0], [1], [0, 0, 1, 1], [], []>} : vector<1x32xf32>, vector<32x32xf32>, vector<1x32xf32> -> vector<1x32xf32>
    %791 = arith.addf %787, %790 : vector<1x32xf32>
    %c3_512 = arith.constant 3 : index
    %c0_513 = arith.constant 0 : index
    %c0_514 = arith.constant 0 : index
    %792 = vector.load %arg17[%c3_512, %c0_513, %c0_514] : memref<4x1x32xf32, #tpu.memory_space<vmem>>, vector<1x1x32xf32>
    %793 = vector.shape_cast %792 : vector<1x1x32xf32> to vector<1x32xf32>
    %794 = arith.addf %791, %793 : vector<1x32xf32>
    %795 = arith.negf %794 : vector<1x32xf32>
    %796 = math.exp %795 : vector<1x32xf32>
    %cst_515 = arith.constant 1.000000e+00 : f32
    %797 = vector.broadcast %cst_515 : f32 to vector<1x32xf32>
    %798 = arith.addf %797, %796 : vector<1x32xf32>
    %799 = arith.divf %797, %798 : vector<1x32xf32>
    %800 = arith.mulf %773, %682 : vector<1x32xf32>
    %801 = arith.mulf %758, %784 : vector<1x32xf32>
    %802 = arith.addf %800, %801 : vector<1x32xf32>
    %803 = math.tanh %802 : vector<1x32xf32>
    %804 = arith.mulf %799, %803 : vector<1x32xf32>
    %c0_516 = arith.constant 0 : index
    %c0_517 = arith.constant 0 : index
    %c0_518 = arith.constant 0 : index
    %805 = vector.load %arg15[%c0_516, %c0_517, %c0_518] : memref<4x64x32xf32, #tpu.memory_space<vmem>>, vector<1x64x32xf32>
    %806 = vector.shape_cast %805 : vector<1x64x32xf32> to vector<64x32xf32>
    %cst_519 = arith.constant dense<0.000000e+00> : vector<1x32xf32>
    %807 = tpu.matmul %681, %806, %cst_519 {dimension_numbers = #tpu.dot_dimension_numbers<[1], [0], [0], [1], [0, 0, 1, 1], [], []>} : vector<1x64xf32>, vector<64x32xf32>, vector<1x32xf32> -> vector<1x32xf32>
    %c0_520 = arith.constant 0 : index
    %c0_521 = arith.constant 0 : index
    %c0_522 = arith.constant 0 : index
    %808 = vector.load %arg16[%c0_520, %c0_521, %c0_522] : memref<4x32x32xf32, #tpu.memory_space<vmem>>, vector<1x32x32xf32>
    %809 = vector.shape_cast %808 : vector<1x32x32xf32> to vector<32x32xf32>
    %cst_523 = arith.constant dense<0.000000e+00> : vector<1x32xf32>
    %810 = tpu.matmul %743, %809, %cst_523 {dimension_numbers = #tpu.dot_dimension_numbers<[1], [0], [0], [1], [0, 0, 1, 1], [], []>} : vector<1x32xf32>, vector<32x32xf32>, vector<1x32xf32> -> vector<1x32xf32>
    %811 = arith.addf %807, %810 : vector<1x32xf32>
    %c0_524 = arith.constant 0 : index
    %c0_525 = arith.constant 0 : index
    %c0_526 = arith.constant 0 : index
    %812 = vector.load %arg17[%c0_524, %c0_525, %c0_526] : memref<4x1x32xf32, #tpu.memory_space<vmem>>, vector<1x1x32xf32>
    %813 = vector.shape_cast %812 : vector<1x1x32xf32> to vector<1x32xf32>
    %814 = arith.addf %811, %813 : vector<1x32xf32>
    %815 = arith.negf %814 : vector<1x32xf32>
    %816 = math.exp %815 : vector<1x32xf32>
    %cst_527 = arith.constant 1.000000e+00 : f32
    %817 = vector.broadcast %cst_527 : f32 to vector<1x32xf32>
    %818 = arith.addf %817, %816 : vector<1x32xf32>
    %819 = arith.divf %817, %818 : vector<1x32xf32>
    %c1_528 = arith.constant 1 : index
    %c0_529 = arith.constant 0 : index
    %c0_530 = arith.constant 0 : index
    %820 = vector.load %arg15[%c1_528, %c0_529, %c0_530] : memref<4x64x32xf32, #tpu.memory_space<vmem>>, vector<1x64x32xf32>
    %821 = vector.shape_cast %820 : vector<1x64x32xf32> to vector<64x32xf32>
    %cst_531 = arith.constant dense<0.000000e+00> : vector<1x32xf32>
    %822 = tpu.matmul %681, %821, %cst_531 {dimension_numbers = #tpu.dot_dimension_numbers<[1], [0], [0], [1], [0, 0, 1, 1], [], []>} : vector<1x64xf32>, vector<64x32xf32>, vector<1x32xf32> -> vector<1x32xf32>
    %c1_532 = arith.constant 1 : index
    %c0_533 = arith.constant 0 : index
    %c0_534 = arith.constant 0 : index
    %823 = vector.load %arg16[%c1_532, %c0_533, %c0_534] : memref<4x32x32xf32, #tpu.memory_space<vmem>>, vector<1x32x32xf32>
    %824 = vector.shape_cast %823 : vector<1x32x32xf32> to vector<32x32xf32>
    %cst_535 = arith.constant dense<0.000000e+00> : vector<1x32xf32>
    %825 = tpu.matmul %743, %824, %cst_535 {dimension_numbers = #tpu.dot_dimension_numbers<[1], [0], [0], [1], [0, 0, 1, 1], [], []>} : vector<1x32xf32>, vector<32x32xf32>, vector<1x32xf32> -> vector<1x32xf32>
    %826 = arith.addf %822, %825 : vector<1x32xf32>
    %c1_536 = arith.constant 1 : index
    %c0_537 = arith.constant 0 : index
    %c0_538 = arith.constant 0 : index
    %827 = vector.load %arg17[%c1_536, %c0_537, %c0_538] : memref<4x1x32xf32, #tpu.memory_space<vmem>>, vector<1x1x32xf32>
    %828 = vector.shape_cast %827 : vector<1x1x32xf32> to vector<1x32xf32>
    %829 = arith.addf %826, %828 : vector<1x32xf32>
    %830 = arith.negf %829 : vector<1x32xf32>
    %831 = math.exp %830 : vector<1x32xf32>
    %cst_539 = arith.constant 1.000000e+00 : f32
    %832 = vector.broadcast %cst_539 : f32 to vector<1x32xf32>
    %833 = arith.addf %832, %831 : vector<1x32xf32>
    %834 = arith.divf %832, %833 : vector<1x32xf32>
    %c2_540 = arith.constant 2 : index
    %c0_541 = arith.constant 0 : index
    %c0_542 = arith.constant 0 : index
    %835 = vector.load %arg15[%c2_540, %c0_541, %c0_542] : memref<4x64x32xf32, #tpu.memory_space<vmem>>, vector<1x64x32xf32>
    %836 = vector.shape_cast %835 : vector<1x64x32xf32> to vector<64x32xf32>
    %cst_543 = arith.constant dense<0.000000e+00> : vector<1x32xf32>
    %837 = tpu.matmul %681, %836, %cst_543 {dimension_numbers = #tpu.dot_dimension_numbers<[1], [0], [0], [1], [0, 0, 1, 1], [], []>} : vector<1x64xf32>, vector<64x32xf32>, vector<1x32xf32> -> vector<1x32xf32>
    %c2_544 = arith.constant 2 : index
    %c0_545 = arith.constant 0 : index
    %c0_546 = arith.constant 0 : index
    %838 = vector.load %arg16[%c2_544, %c0_545, %c0_546] : memref<4x32x32xf32, #tpu.memory_space<vmem>>, vector<1x32x32xf32>
    %839 = vector.shape_cast %838 : vector<1x32x32xf32> to vector<32x32xf32>
    %cst_547 = arith.constant dense<0.000000e+00> : vector<1x32xf32>
    %840 = tpu.matmul %743, %839, %cst_547 {dimension_numbers = #tpu.dot_dimension_numbers<[1], [0], [0], [1], [0, 0, 1, 1], [], []>} : vector<1x32xf32>, vector<32x32xf32>, vector<1x32xf32> -> vector<1x32xf32>
    %841 = arith.addf %837, %840 : vector<1x32xf32>
    %c2_548 = arith.constant 2 : index
    %c0_549 = arith.constant 0 : index
    %c0_550 = arith.constant 0 : index
    %842 = vector.load %arg17[%c2_548, %c0_549, %c0_550] : memref<4x1x32xf32, #tpu.memory_space<vmem>>, vector<1x1x32xf32>
    %843 = vector.shape_cast %842 : vector<1x1x32xf32> to vector<1x32xf32>
    %844 = arith.addf %841, %843 : vector<1x32xf32>
    %845 = math.tanh %844 : vector<1x32xf32>
    %c3_551 = arith.constant 3 : index
    %c0_552 = arith.constant 0 : index
    %c0_553 = arith.constant 0 : index
    %846 = vector.load %arg15[%c3_551, %c0_552, %c0_553] : memref<4x64x32xf32, #tpu.memory_space<vmem>>, vector<1x64x32xf32>
    %847 = vector.shape_cast %846 : vector<1x64x32xf32> to vector<64x32xf32>
    %cst_554 = arith.constant dense<0.000000e+00> : vector<1x32xf32>
    %848 = tpu.matmul %681, %847, %cst_554 {dimension_numbers = #tpu.dot_dimension_numbers<[1], [0], [0], [1], [0, 0, 1, 1], [], []>} : vector<1x64xf32>, vector<64x32xf32>, vector<1x32xf32> -> vector<1x32xf32>
    %c3_555 = arith.constant 3 : index
    %c0_556 = arith.constant 0 : index
    %c0_557 = arith.constant 0 : index
    %849 = vector.load %arg16[%c3_555, %c0_556, %c0_557] : memref<4x32x32xf32, #tpu.memory_space<vmem>>, vector<1x32x32xf32>
    %850 = vector.shape_cast %849 : vector<1x32x32xf32> to vector<32x32xf32>
    %cst_558 = arith.constant dense<0.000000e+00> : vector<1x32xf32>
    %851 = tpu.matmul %743, %850, %cst_558 {dimension_numbers = #tpu.dot_dimension_numbers<[1], [0], [0], [1], [0, 0, 1, 1], [], []>} : vector<1x32xf32>, vector<32x32xf32>, vector<1x32xf32> -> vector<1x32xf32>
    %852 = arith.addf %848, %851 : vector<1x32xf32>
    %c3_559 = arith.constant 3 : index
    %c0_560 = arith.constant 0 : index
    %c0_561 = arith.constant 0 : index
    %853 = vector.load %arg17[%c3_559, %c0_560, %c0_561] : memref<4x1x32xf32, #tpu.memory_space<vmem>>, vector<1x1x32xf32>
    %854 = vector.shape_cast %853 : vector<1x1x32xf32> to vector<1x32xf32>
    %855 = arith.addf %852, %854 : vector<1x32xf32>
    %856 = arith.negf %855 : vector<1x32xf32>
    %857 = math.exp %856 : vector<1x32xf32>
    %cst_562 = arith.constant 1.000000e+00 : f32
    %858 = vector.broadcast %cst_562 : f32 to vector<1x32xf32>
    %859 = arith.addf %858, %857 : vector<1x32xf32>
    %860 = arith.divf %858, %859 : vector<1x32xf32>
    %861 = arith.mulf %834, %741 : vector<1x32xf32>
    %862 = arith.mulf %819, %845 : vector<1x32xf32>
    %863 = arith.addf %861, %862 : vector<1x32xf32>
    %864 = math.tanh %863 : vector<1x32xf32>
    %865 = arith.mulf %860, %864 : vector<1x32xf32>
    %c0_563 = arith.constant 0 : index
    %c0_564 = arith.constant 0 : index
    %c0_565 = arith.constant 0 : index
    %866 = vector.load %arg15[%c0_563, %c0_564, %c0_565] : memref<4x64x32xf32, #tpu.memory_space<vmem>>, vector<1x64x32xf32>
    %867 = vector.shape_cast %866 : vector<1x64x32xf32> to vector<64x32xf32>
    %cst_566 = arith.constant dense<0.000000e+00> : vector<1x32xf32>
    %868 = tpu.matmul %680, %867, %cst_566 {dimension_numbers = #tpu.dot_dimension_numbers<[1], [0], [0], [1], [0, 0, 1, 1], [], []>} : vector<1x64xf32>, vector<64x32xf32>, vector<1x32xf32> -> vector<1x32xf32>
    %c0_567 = arith.constant 0 : index
    %c0_568 = arith.constant 0 : index
    %c0_569 = arith.constant 0 : index
    %869 = vector.load %arg16[%c0_567, %c0_568, %c0_569] : memref<4x32x32xf32, #tpu.memory_space<vmem>>, vector<1x32x32xf32>
    %870 = vector.shape_cast %869 : vector<1x32x32xf32> to vector<32x32xf32>
    %cst_570 = arith.constant dense<0.000000e+00> : vector<1x32xf32>
    %871 = tpu.matmul %865, %870, %cst_570 {dimension_numbers = #tpu.dot_dimension_numbers<[1], [0], [0], [1], [0, 0, 1, 1], [], []>} : vector<1x32xf32>, vector<32x32xf32>, vector<1x32xf32> -> vector<1x32xf32>
    %872 = arith.addf %868, %871 : vector<1x32xf32>
    %c0_571 = arith.constant 0 : index
    %c0_572 = arith.constant 0 : index
    %c0_573 = arith.constant 0 : index
    %873 = vector.load %arg17[%c0_571, %c0_572, %c0_573] : memref<4x1x32xf32, #tpu.memory_space<vmem>>, vector<1x1x32xf32>
    %874 = vector.shape_cast %873 : vector<1x1x32xf32> to vector<1x32xf32>
    %875 = arith.addf %872, %874 : vector<1x32xf32>
    %876 = arith.negf %875 : vector<1x32xf32>
    %877 = math.exp %876 : vector<1x32xf32>
    %cst_574 = arith.constant 1.000000e+00 : f32
    %878 = vector.broadcast %cst_574 : f32 to vector<1x32xf32>
    %879 = arith.addf %878, %877 : vector<1x32xf32>
    %880 = arith.divf %878, %879 : vector<1x32xf32>
    %c1_575 = arith.constant 1 : index
    %c0_576 = arith.constant 0 : index
    %c0_577 = arith.constant 0 : index
    %881 = vector.load %arg15[%c1_575, %c0_576, %c0_577] : memref<4x64x32xf32, #tpu.memory_space<vmem>>, vector<1x64x32xf32>
    %882 = vector.shape_cast %881 : vector<1x64x32xf32> to vector<64x32xf32>
    %cst_578 = arith.constant dense<0.000000e+00> : vector<1x32xf32>
    %883 = tpu.matmul %680, %882, %cst_578 {dimension_numbers = #tpu.dot_dimension_numbers<[1], [0], [0], [1], [0, 0, 1, 1], [], []>} : vector<1x64xf32>, vector<64x32xf32>, vector<1x32xf32> -> vector<1x32xf32>
    %c1_579 = arith.constant 1 : index
    %c0_580 = arith.constant 0 : index
    %c0_581 = arith.constant 0 : index
    %884 = vector.load %arg16[%c1_579, %c0_580, %c0_581] : memref<4x32x32xf32, #tpu.memory_space<vmem>>, vector<1x32x32xf32>
    %885 = vector.shape_cast %884 : vector<1x32x32xf32> to vector<32x32xf32>
    %cst_582 = arith.constant dense<0.000000e+00> : vector<1x32xf32>
    %886 = tpu.matmul %865, %885, %cst_582 {dimension_numbers = #tpu.dot_dimension_numbers<[1], [0], [0], [1], [0, 0, 1, 1], [], []>} : vector<1x32xf32>, vector<32x32xf32>, vector<1x32xf32> -> vector<1x32xf32>
    %887 = arith.addf %883, %886 : vector<1x32xf32>
    %c1_583 = arith.constant 1 : index
    %c0_584 = arith.constant 0 : index
    %c0_585 = arith.constant 0 : index
    %888 = vector.load %arg17[%c1_583, %c0_584, %c0_585] : memref<4x1x32xf32, #tpu.memory_space<vmem>>, vector<1x1x32xf32>
    %889 = vector.shape_cast %888 : vector<1x1x32xf32> to vector<1x32xf32>
    %890 = arith.addf %887, %889 : vector<1x32xf32>
    %891 = arith.negf %890 : vector<1x32xf32>
    %892 = math.exp %891 : vector<1x32xf32>
    %cst_586 = arith.constant 1.000000e+00 : f32
    %893 = vector.broadcast %cst_586 : f32 to vector<1x32xf32>
    %894 = arith.addf %893, %892 : vector<1x32xf32>
    %895 = arith.divf %893, %894 : vector<1x32xf32>
    %c2_587 = arith.constant 2 : index
    %c0_588 = arith.constant 0 : index
    %c0_589 = arith.constant 0 : index
    %896 = vector.load %arg15[%c2_587, %c0_588, %c0_589] : memref<4x64x32xf32, #tpu.memory_space<vmem>>, vector<1x64x32xf32>
    %897 = vector.shape_cast %896 : vector<1x64x32xf32> to vector<64x32xf32>
    %cst_590 = arith.constant dense<0.000000e+00> : vector<1x32xf32>
    %898 = tpu.matmul %680, %897, %cst_590 {dimension_numbers = #tpu.dot_dimension_numbers<[1], [0], [0], [1], [0, 0, 1, 1], [], []>} : vector<1x64xf32>, vector<64x32xf32>, vector<1x32xf32> -> vector<1x32xf32>
    %c2_591 = arith.constant 2 : index
    %c0_592 = arith.constant 0 : index
    %c0_593 = arith.constant 0 : index
    %899 = vector.load %arg16[%c2_591, %c0_592, %c0_593] : memref<4x32x32xf32, #tpu.memory_space<vmem>>, vector<1x32x32xf32>
    %900 = vector.shape_cast %899 : vector<1x32x32xf32> to vector<32x32xf32>
    %cst_594 = arith.constant dense<0.000000e+00> : vector<1x32xf32>
    %901 = tpu.matmul %865, %900, %cst_594 {dimension_numbers = #tpu.dot_dimension_numbers<[1], [0], [0], [1], [0, 0, 1, 1], [], []>} : vector<1x32xf32>, vector<32x32xf32>, vector<1x32xf32> -> vector<1x32xf32>
    %902 = arith.addf %898, %901 : vector<1x32xf32>
    %c2_595 = arith.constant 2 : index
    %c0_596 = arith.constant 0 : index
    %c0_597 = arith.constant 0 : index
    %903 = vector.load %arg17[%c2_595, %c0_596, %c0_597] : memref<4x1x32xf32, #tpu.memory_space<vmem>>, vector<1x1x32xf32>
    %904 = vector.shape_cast %903 : vector<1x1x32xf32> to vector<1x32xf32>
    %905 = arith.addf %902, %904 : vector<1x32xf32>
    %906 = math.tanh %905 : vector<1x32xf32>
    %c3_598 = arith.constant 3 : index
    %c0_599 = arith.constant 0 : index
    %c0_600 = arith.constant 0 : index
    %907 = vector.load %arg15[%c3_598, %c0_599, %c0_600] : memref<4x64x32xf32, #tpu.memory_space<vmem>>, vector<1x64x32xf32>
    %908 = vector.shape_cast %907 : vector<1x64x32xf32> to vector<64x32xf32>
    %cst_601 = arith.constant dense<0.000000e+00> : vector<1x32xf32>
    %909 = tpu.matmul %680, %908, %cst_601 {dimension_numbers = #tpu.dot_dimension_numbers<[1], [0], [0], [1], [0, 0, 1, 1], [], []>} : vector<1x64xf32>, vector<64x32xf32>, vector<1x32xf32> -> vector<1x32xf32>
    %c3_602 = arith.constant 3 : index
    %c0_603 = arith.constant 0 : index
    %c0_604 = arith.constant 0 : index
    %910 = vector.load %arg16[%c3_602, %c0_603, %c0_604] : memref<4x32x32xf32, #tpu.memory_space<vmem>>, vector<1x32x32xf32>
    %911 = vector.shape_cast %910 : vector<1x32x32xf32> to vector<32x32xf32>
    %cst_605 = arith.constant dense<0.000000e+00> : vector<1x32xf32>
    %912 = tpu.matmul %865, %911, %cst_605 {dimension_numbers = #tpu.dot_dimension_numbers<[1], [0], [0], [1], [0, 0, 1, 1], [], []>} : vector<1x32xf32>, vector<32x32xf32>, vector<1x32xf32> -> vector<1x32xf32>
    %913 = arith.addf %909, %912 : vector<1x32xf32>
    %c3_606 = arith.constant 3 : index
    %c0_607 = arith.constant 0 : index
    %c0_608 = arith.constant 0 : index
    %914 = vector.load %arg17[%c3_606, %c0_607, %c0_608] : memref<4x1x32xf32, #tpu.memory_space<vmem>>, vector<1x1x32xf32>
    %915 = vector.shape_cast %914 : vector<1x1x32xf32> to vector<1x32xf32>
    %916 = arith.addf %913, %915 : vector<1x32xf32>
    %917 = arith.negf %916 : vector<1x32xf32>
    %918 = math.exp %917 : vector<1x32xf32>
    %cst_609 = arith.constant 1.000000e+00 : f32
    %919 = vector.broadcast %cst_609 : f32 to vector<1x32xf32>
    %920 = arith.addf %919, %918 : vector<1x32xf32>
    %921 = arith.divf %919, %920 : vector<1x32xf32>
    %922 = arith.mulf %895, %802 : vector<1x32xf32>
    %923 = arith.mulf %880, %906 : vector<1x32xf32>
    %924 = arith.addf %922, %923 : vector<1x32xf32>
    %925 = math.tanh %924 : vector<1x32xf32>
    %926 = arith.mulf %921, %925 : vector<1x32xf32>
    %927 = tpu.concatenate %865, %926 in 1 : vector<1x32xf32>, vector<1x32xf32> -> vector<1x64xf32>
    %928 = tpu.concatenate %743, %804 in 1 : vector<1x32xf32>, vector<1x32xf32> -> vector<1x64xf32>
    %929 = tpu.concatenate %865, %926 in 1 : vector<1x32xf32>, vector<1x32xf32> -> vector<1x64xf32>
    %930 = tpu.concatenate %928, %929 in 0 : vector<1x64xf32>, vector<1x64xf32> -> vector<2x64xf32>
    %c0_610 = arith.constant 0 : index
    %c0_611 = arith.constant 0 : index
    %931 = vector.load %arg18[%c0_610, %c0_611] : memref<64x64xf32, #tpu.memory_space<vmem>>, vector<64x64xf32>
    %cst_612 = arith.constant dense<0.000000e+00> : vector<2x64xf32>
    %932 = tpu.matmul %930, %931, %cst_612 {dimension_numbers = #tpu.dot_dimension_numbers<[1], [0], [0], [1], [0, 0, 1, 1], [], []>} : vector<2x64xf32>, vector<64x64xf32>, vector<2x64xf32> -> vector<2x64xf32>
    %c0_613 = arith.constant 0 : index
    %c0_614 = arith.constant 0 : index
    %933 = vector.load %arg19[%c0_613, %c0_614] : memref<64x64xf32, #tpu.memory_space<vmem>>, vector<64x64xf32>
    %cst_615 = arith.constant dense<0.000000e+00> : vector<1x64xf32>
    %934 = tpu.matmul %927, %933, %cst_615 {dimension_numbers = #tpu.dot_dimension_numbers<[1], [0], [0], [1], [0, 0, 1, 1], [], []>} : vector<1x64xf32>, vector<64x64xf32>, vector<1x64xf32> -> vector<1x64xf32>
    %935 = vector.broadcast %934 : vector<1x64xf32> to vector<2x64xf32>
    %936 = arith.addf %932, %935 : vector<2x64xf32>
    %c0_616 = arith.constant 0 : index
    %c0_617 = arith.constant 0 : index
    %937 = vector.load %arg20[%c0_616, %c0_617] : memref<1x64xf32, #tpu.memory_space<vmem>>, vector<1x64xf32>
    %938 = vector.broadcast %937 : vector<1x64xf32> to vector<2x64xf32>
    %939 = arith.addf %936, %938 : vector<2x64xf32>
    %cst_618 = arith.constant dense<0xFF800000> : vector<2xf32>
    %940 = vector.multi_reduction <maximumf>, %939, %cst_618 [1] : vector<2x64xf32> to vector<2xf32>
    %941 = vector.shape_cast %940 : vector<2xf32> to vector<2x1xf32>
    %942 = vector.broadcast %941 : vector<2x1xf32> to vector<2x64xf32>
    %943 = arith.subf %939, %942 : vector<2x64xf32>
    %944 = math.exp %943 : vector<2x64xf32>
    %cst_619 = arith.constant dense<0.000000e+00> : vector<2xf32>
    %945 = vector.multi_reduction <add>, %944, %cst_619 [1] : vector<2x64xf32> to vector<2xf32>
    %946 = vector.shape_cast %945 : vector<2xf32> to vector<2x1xf32>
    %947 = tpu.reciprocal %946 {approx = true} : vector<2x1xf32> -> vector<2x1xf32>
    %948 = vector.broadcast %947 : vector<2x1xf32> to vector<2x64xf32>
    %949 = arith.mulf %944, %948 : vector<2x64xf32>
    %950 = arith.mulf %930, %949 : vector<2x64xf32>
    %cst_620 = arith.constant dense<0.000000e+00> : vector<64xf32>
    %951 = vector.multi_reduction <add>, %950, %cst_620 [0] : vector<2x64xf32> to vector<64xf32>
    %952 = vector.shape_cast %951 : vector<64xf32> to vector<1x64xf32>
    %953 = arith.mulf %952, %280 : vector<1x64xf32>
    %954 = arith.subf %952, %280 : vector<1x64xf32>
    %955 = math.absf %954 : vector<1x64xf32>
    %c0_621 = arith.constant 0 : index
    %c0_622 = arith.constant 0 : index
    %c0_623 = arith.constant 0 : index
    %956 = vector.load %arg21[%c0_621, %c0_622, %c0_623] : memref<4x64x32xf32, #tpu.memory_space<vmem>>, vector<1x64x32xf32>
    %957 = vector.shape_cast %956 : vector<1x64x32xf32> to vector<64x32xf32>
    %cst_624 = arith.constant dense<0.000000e+00> : vector<1x32xf32>
    %958 = tpu.matmul %953, %957, %cst_624 {dimension_numbers = #tpu.dot_dimension_numbers<[1], [0], [0], [1], [0, 0, 1, 1], [], []>} : vector<1x64xf32>, vector<64x32xf32>, vector<1x32xf32> -> vector<1x32xf32>
    %c1_625 = arith.constant 1 : index
    %c0_626 = arith.constant 0 : index
    %c0_627 = arith.constant 0 : index
    %959 = vector.load %arg21[%c1_625, %c0_626, %c0_627] : memref<4x64x32xf32, #tpu.memory_space<vmem>>, vector<1x64x32xf32>
    %960 = vector.shape_cast %959 : vector<1x64x32xf32> to vector<64x32xf32>
    %cst_628 = arith.constant dense<0.000000e+00> : vector<1x32xf32>
    %961 = tpu.matmul %955, %960, %cst_628 {dimension_numbers = #tpu.dot_dimension_numbers<[1], [0], [0], [1], [0, 0, 1, 1], [], []>} : vector<1x64xf32>, vector<64x32xf32>, vector<1x32xf32> -> vector<1x32xf32>
    %962 = arith.addf %958, %961 : vector<1x32xf32>
    %c2_629 = arith.constant 2 : index
    %c0_630 = arith.constant 0 : index
    %c0_631 = arith.constant 0 : index
    %963 = vector.load %arg21[%c2_629, %c0_630, %c0_631] : memref<4x64x32xf32, #tpu.memory_space<vmem>>, vector<1x64x32xf32>
    %964 = vector.shape_cast %963 : vector<1x64x32xf32> to vector<64x32xf32>
    %cst_632 = arith.constant dense<0.000000e+00> : vector<1x32xf32>
    %965 = tpu.matmul %952, %964, %cst_632 {dimension_numbers = #tpu.dot_dimension_numbers<[1], [0], [0], [1], [0, 0, 1, 1], [], []>} : vector<1x64xf32>, vector<64x32xf32>, vector<1x32xf32> -> vector<1x32xf32>
    %966 = arith.addf %962, %965 : vector<1x32xf32>
    %c3_633 = arith.constant 3 : index
    %c0_634 = arith.constant 0 : index
    %c0_635 = arith.constant 0 : index
    %967 = vector.load %arg21[%c3_633, %c0_634, %c0_635] : memref<4x64x32xf32, #tpu.memory_space<vmem>>, vector<1x64x32xf32>
    %968 = vector.shape_cast %967 : vector<1x64x32xf32> to vector<64x32xf32>
    %cst_636 = arith.constant dense<0.000000e+00> : vector<1x32xf32>
    %969 = tpu.matmul %280, %968, %cst_636 {dimension_numbers = #tpu.dot_dimension_numbers<[1], [0], [0], [1], [0, 0, 1, 1], [], []>} : vector<1x64xf32>, vector<64x32xf32>, vector<1x32xf32> -> vector<1x32xf32>
    %970 = arith.addf %966, %969 : vector<1x32xf32>
    %c0_637 = arith.constant 0 : index
    %c0_638 = arith.constant 0 : index
    %971 = vector.load %arg22[%c0_637, %c0_638] : memref<1x32xf32, #tpu.memory_space<vmem>>, vector<1x32xf32>
    %972 = arith.addf %970, %971 : vector<1x32xf32>
    %973 = arith.negf %972 : vector<1x32xf32>
    %974 = math.exp %973 : vector<1x32xf32>
    %cst_639 = arith.constant 1.000000e+00 : f32
    %975 = vector.broadcast %cst_639 : f32 to vector<1x32xf32>
    %976 = arith.addf %975, %974 : vector<1x32xf32>
    %977 = arith.divf %975, %976 : vector<1x32xf32>
    %c0_640 = arith.constant 0 : index
    %c0_641 = arith.constant 0 : index
    %978 = vector.load %arg23[%c0_640, %c0_641] : memref<32x128xf32, #tpu.memory_space<vmem>>, vector<32x128xf32>
    %cst_642 = arith.constant dense<0.000000e+00> : vector<1x128xf32>
    %979 = tpu.matmul %977, %978, %cst_642 {dimension_numbers = #tpu.dot_dimension_numbers<[1], [0], [0], [1], [0, 0, 1, 1], [], []>} : vector<1x32xf32>, vector<32x128xf32>, vector<1x128xf32> -> vector<1x128xf32>
    %c0_643 = arith.constant 0 : index
    %c0_644 = arith.constant 0 : index
    %980 = vector.load %arg24[%c0_643, %c0_644] : memref<1x128xf32, #tpu.memory_space<vmem>>, vector<1x128xf32>
    %981 = arith.addf %979, %980 : vector<1x128xf32>
    %c0_645 = arith.constant 0 : index
    %c0_646 = arith.constant 0 : index
    %982 = vector.load %arg27[%c0_645, %c0_646] : memref<1x128xf32, #tpu.memory_space<vmem>>, vector<1x128xf32>
    tpu.vector_store %arg27[%c0_645, %c0_646], %981 {strides = array<i32>} : memref<1x128xf32, #tpu.memory_space<vmem>>, vector<1x128xf32>,
    return
  }
}

</mosaic_0001>

<llo_original>
// kernel: forward.1
$region0: #{forward.1}
  #allocation0 [shape = 'u32[]', space=smem, size = 0x4, offset = 0x4, fixed_abs, tag = 'smem constant byte address 0x4 - core index']
  #allocation1 [shape = 'u32[144,128]{1,0:T(1,128)}', space=vmem, size = 0x12000, scoped, tag = 'internal scratch']
  %s0 = inlined_call_operand.vmem [shape: f32[17,64], index: 0, kind: input, shape index: {}]
  %s1 = inlined_call_operand.vmem [shape: f32[3,64,64], index: 1, kind: input, shape index: {}]
  %s2 = inlined_call_operand.vmem [shape: f32[3,1,64], index: 2, kind: input, shape index: {}]
  %s3 = inlined_call_operand.vmem [shape: f32[3,64,64], index: 3, kind: input, shape index: {}]
  %s4 = inlined_call_operand.vmem [shape: f32[3,1,64], index: 4, kind: input, shape index: {}]
  %s5 = inlined_call_operand.vmem [shape: f32[64,64], index: 5, kind: input, shape index: {}]
  %s6 = inlined_call_operand.vmem [shape: f32[1,64], index: 6, kind: input, shape index: {}]
  %s7 = inlined_call_operand.vmem [shape: f32[64,64], index: 7, kind: input, shape index: {}]
  %s8 = inlined_call_operand.vmem [shape: f32[1,64], index: 8, kind: input, shape index: {}]
  %s9 = inlined_call_operand.vmem [shape: f32[4,64,32], index: 9, kind: input, shape index: {}]
  %s10 = inlined_call_operand.vmem [shape: f32[4,32,32], index: 10, kind: input, shape index: {}]
  %s11 = inlined_call_operand.vmem [shape: f32[4,1,32], index: 11, kind: input, shape index: {}]
  %s12 = inlined_call_operand.vmem [shape: f32[4,64,32], index: 12, kind: input, shape index: {}]
  %s13 = inlined_call_operand.vmem [shape: f32[4,32,32], index: 13, kind: input, shape index: {}]
  %s14 = inlined_call_operand.vmem [shape: f32[4,1,32], index: 14, kind: input, shape index: {}]
  %s15 = inlined_call_operand.vmem [shape: f32[4,64,32], index: 15, kind: input, shape index: {}]
  %s16 = inlined_call_operand.vmem [shape: f32[4,32,32], index: 16, kind: input, shape index: {}]
  %s17 = inlined_call_operand.vmem [shape: f32[4,1,32], index: 17, kind: input, shape index: {}]
  %s18 = inlined_call_operand.vmem [shape: f32[64,64], index: 18, kind: input, shape index: {}]
  %s19 = inlined_call_operand.vmem [shape: f32[64,64], index: 19, kind: input, shape index: {}]
  %s20 = inlined_call_operand.vmem [shape: f32[1,64], index: 20, kind: input, shape index: {}]
  %s21 = inlined_call_operand.vmem [shape: f32[4,64,32], index: 21, kind: input, shape index: {}]
  %s22 = inlined_call_operand.vmem [shape: f32[1,32], index: 22, kind: input, shape index: {}]
  %s23 = inlined_call_operand.vmem [shape: f32[32,128], index: 23, kind: input, shape index: {}]
  %s24 = inlined_call_operand.vmem [shape: f32[1,128], index: 24, kind: input, shape index: {}]
  %s25 = inlined_call_operand.vmem [shape: f32[1,64], index: 25, kind: input, shape index: {}]
  %s26 = inlined_call_operand.vmem [shape: f32[1,64], index: 26, kind: input, shape index: {}]
  %s27 = inlined_call_operand.hbm [shape: f32[1,128], index: 27, kind: output, shape index: {}]
  %s28 = sld [smem:[#allocation0]]
  $region118: #{forward.1} parent=0
    _
  %s30 = ssub.s32 1, %s28
  %s31 = scalar_select 0, %s30, %s28
  $region1: #{forward.1} parent=0
    #allocation2 [shape = 'u8[512]{0}', space=vmem, size = 0x400, scoped, tag = 'output window, operand 0, single buffered']
    #allocation3 [shape = 's32[1]{0}', space=sflag, size = 0x4, scoped, tag = 'scoped memory for forward.1']
    %32 = vsyncpa [#allocation3], 0
    // Predicated region
    $region2: #{forward.1} parent=1 // pred_check
      _
    $region3: #{forward.1} parent=1 // pred_check_branch
      %34 = sbr.rel (0) target = $region5
    $region4: #{forward.1} parent=1 // pred_region
      _
    $region5: #{forward.1} parent=1 // pred_fallthru
      _
    // Predicated region
    $region6: #{forward.1} parent=1 // pred_check
      _
    $region7: #{forward.1} parent=1 // pred_check_branch
      %36 = sbr.rel (0) target = $region9
    $region8: #{forward.1} parent=1 // pred_region
      _
    $region9: #{forward.1} parent=1 // pred_fallthru
      _
    // Predicated region
    $region10: #{forward.1} parent=1 // pred_check
      _
    $region11: #{forward.1} parent=1 // pred_check_branch
      %38 = sbr.rel (0) target = $region13
    $region12: #{forward.1} parent=1 // pred_region
      _
    $region13: #{forward.1} parent=1 // pred_fallthru
      _
    // Predicated region
    $region14: #{forward.1} parent=1 // pred_check
      _
    $region15: #{forward.1} parent=1 // pred_check_branch
      %40 = sbr.rel (0) target = $region17
    $region16: #{forward.1} parent=1 // pred_region
      _
    $region17: #{forward.1} parent=1 // pred_fallthru
      _
    // Predicated region
    $region18: #{forward.1} parent=1 // pred_check
      _
    $region19: #{forward.1} parent=1 // pred_check_branch
      %42 = sbr.rel (0) target = $region21
    $region20: #{forward.1} parent=1 // pred_region
      _
    $region21: #{forward.1} parent=1 // pred_fallthru
      _
    // Predicated region
    $region22: #{forward.1} parent=1 // pred_check
      _
    $region23: #{forward.1} parent=1 // pred_check_branch
      %44 = sbr.rel (0) target = $region25
    $region24: #{forward.1} parent=1 // pred_region
      _
    $region25: #{forward.1} parent=1 // pred_fallthru
      _
    // Predicated region
    $region26: #{forward.1} parent=1 // pred_check
      _
    $region27: #{forward.1} parent=1 // pred_check_branch
      %46 = sbr.rel (0) target = $region29
    $region28: #{forward.1} parent=1 // pred_region
      _
    $region29: #{forward.1} parent=1 // pred_fallthru
      _
    // Predicated region
    $region30: #{forward.1} parent=1 // pred_check
      _
    $region31: #{forward.1} parent=1 // pred_check_branch
      %48 = sbr.rel (0) target = $region33
    $region32: #{forward.1} parent=1 // pred_region
      _
    $region33: #{forward.1} parent=1 // pred_fallthru
      _
    // Predicated region
    $region34: #{forward.1} parent=1 // pred_check
      _
    $region35: #{forward.1} parent=1 // pred_check_branch
      %50 = sbr.rel (0) target = $region37
    $region36: #{forward.1} parent=1 // pred_region
      _
    $region37: #{forward.1} parent=1 // pred_fallthru
      _
    // Predicated region
    $region38: #{forward.1} parent=1 // pred_check
      _
    $region39: #{forward.1} parent=1 // pred_check_branch
      %52 = sbr.rel (0) target = $region41
    $region40: #{forward.1} parent=1 // pred_region
      _
    $region41: #{forward.1} parent=1 // pred_fallthru
      _
    // Predicated region
    $region42: #{forward.1} parent=1 // pred_check
      _
    $region43: #{forward.1} parent=1 // pred_check_branch
      %54 = sbr.rel (0) target = $region45
    $region44: #{forward.1} parent=1 // pred_region
      _
    $region45: #{forward.1} parent=1 // pred_fallthru
      _
    // Predicated region
    $region46: #{forward.1} parent=1 // pred_check
      _
    $region47: #{forward.1} parent=1 // pred_check_branch
      %56 = sbr.rel (0) target = $region49
    $region48: #{forward.1} parent=1 // pred_region
      _
    $region49: #{forward.1} parent=1 // pred_fallthru
      _
    // Predicated region
    $region50: #{forward.1} parent=1 // pred_check
      _
    $region51: #{forward.1} parent=1 // pred_check_branch
      %58 = sbr.rel (0) target = $region53
    $region52: #{forward.1} parent=1 // pred_region
      _
    $region53: #{forward.1} parent=1 // pred_fallthru
      _
    // Predicated region
    $region54: #{forward.1} parent=1 // pred_check
      _
    $region55: #{forward.1} parent=1 // pred_check_branch
      %60 = sbr.rel (0) target = $region57
    $region56: #{forward.1} parent=1 // pred_region
      _
    $region57: #{forward.1} parent=1 // pred_fallthru
      _
    // Predicated region
    $region58: #{forward.1} parent=1 // pred_check
      _
    $region59: #{forward.1} parent=1 // pred_check_branch
      %62 = sbr.rel (0) target = $region61
    $region60: #{forward.1} parent=1 // pred_region
      _
    $region61: #{forward.1} parent=1 // pred_fallthru
      _
    // Predicated region
    $region62: #{forward.1} parent=1 // pred_check
      _
    $region63: #{forward.1} parent=1 // pred_check_branch
      %64 = sbr.rel (0) target = $region65
    $region64: #{forward.1} parent=1 // pred_region
      _
    $region65: #{forward.1} parent=1 // pred_fallthru
      _
    // Predicated region
    $region66: #{forward.1} parent=1 // pred_check
      _
    $region67: #{forward.1} parent=1 // pred_check_branch
      %66 = sbr.rel (0) target = $region69
    $region68: #{forward.1} parent=1 // pred_region
      _
    $region69: #{forward.1} parent=1 // pred_fallthru
      _
    // Predicated region
    $region70: #{forward.1} parent=1 // pred_check
      _
    $region71: #{forward.1} parent=1 // pred_check_branch
      %68 = sbr.rel (0) target = $region73
    $region72: #{forward.1} parent=1 // pred_region
      _
    $region73: #{forward.1} parent=1 // pred_fallthru
      _
    // Predicated region
    $region74: #{forward.1} parent=1 // pred_check
      _
    $region75: #{forward.1} parent=1 // pred_check_branch
      %70 = sbr.rel (0) target = $region77
    $region76: #{forward.1} parent=1 // pred_region
      _
    $region77: #{forward.1} parent=1 // pred_fallthru
      _
    // Predicated region
    $region78: #{forward.1} parent=1 // pred_check
      _
    $region79: #{forward.1} parent=1 // pred_check_branch
      %72 = sbr.rel (0) target = $region81
    $region80: #{forward.1} parent=1 // pred_region
      _
    $region81: #{forward.1} parent=1 // pred_fallthru
      _
    // Predicated region
    $region82: #{forward.1} parent=1 // pred_check
      _
    $region83: #{forward.1} parent=1 // pred_check_branch
      %74 = sbr.rel (0) target = $region85
    $region84: #{forward.1} parent=1 // pred_region
      _
    $region85: #{forward.1} parent=1 // pred_fallthru
      _
    // Predicated region
    $region86: #{forward.1} parent=1 // pred_check
      _
    $region87: #{forward.1} parent=1 // pred_check_branch
      %76 = sbr.rel (0) target = $region89
    $region88: #{forward.1} parent=1 // pred_region
      _
    $region89: #{forward.1} parent=1 // pred_fallthru
      _
    // Predicated region
    $region90: #{forward.1} parent=1 // pred_check
      _
    $region91: #{forward.1} parent=1 // pred_check_branch
      %78 = sbr.rel (0) target = $region93
    $region92: #{forward.1} parent=1 // pred_region
      _
    $region93: #{forward.1} parent=1 // pred_fallthru
      _
    // Predicated region
    $region94: #{forward.1} parent=1 // pred_check
      _
    $region95: #{forward.1} parent=1 // pred_check_branch
      %80 = sbr.rel (0) target = $region97
    $region96: #{forward.1} parent=1 // pred_region
      _
    $region97: #{forward.1} parent=1 // pred_fallthru
      _
    // Predicated region
    $region98: #{forward.1} parent=1 // pred_check
      _
    $region99: #{forward.1} parent=1 // pred_check_branch
      %82 = sbr.rel (0) target = $region101
    $region100: #{forward.1} parent=1 // pred_region
      _
    $region101: #{forward.1} parent=1 // pred_fallthru
      _
    // Predicated region
    $region102: #{forward.1} parent=1 // pred_check
      _
    $region103: #{forward.1} parent=1 // pred_check_branch
      %84 = sbr.rel (0) target = $region105
    $region104: #{forward.1} parent=1 // pred_region
      _
    $region105: #{forward.1} parent=1 // pred_fallthru
      _
    // Predicated region
    $region106: #{forward.1} parent=1 // pred_check
      _
    $region107: #{forward.1} parent=1 // pred_check_branch
      %86 = sbr.rel (0) target = $region109
    $region108: #{forward.1} parent=1 // pred_region
      _
    $region109: #{forward.1} parent=1 // pred_fallthru
      _
    %v87 = vld [vmem:[%s0] sm:$0xff]
    %v88 = vld [vmem:[%s0 + $0x8] sm:$0x7]
    %v89 = vld [vmem:[%s1] sm:$0xff]
    %v90 = vld [vmem:[%s1 + $0x8] sm:$0xff]
    %v91 = vld [vmem:[%s1 + $0x10] sm:$0xff]
    %v92 = vld [vmem:[%s1 + $0x18] sm:$0xff]
    %v93 = vld [vmem:[%s1 + $0x20] sm:$0xff]
    %v94 = vld [vmem:[%s1 + $0x28] sm:$0xff]
    %v95 = vld [vmem:[%s1 + $0x30] sm:$0xff]
    %v96 = vld [vmem:[%s1 + $0x38] sm:$0xff]
    %v97 = vld [vmem:[%s2] sm:$0x1]
    %v99 = vlaneseq
    %v100 = vshrl.u32 %v99, 7
    %v101 = vsub.s32 0, %v100
    %v102 = vrot.slane %v97, %v101
    %vm104 = vcmask 523264
    %v106 = vsel %vm104, %v87, 0
    %v109 = vsel %vm104, %v88, 0
    %111 = vmatprep.subr.mxu0 0.0
    %112 = vmatpush1.msra.mxu0 %v89
    %113 = vmatprep.subr.mxu0 0.0
    %114 = vmatpush1.msra.mxu0 %v90
    %115 = vmatprep.subr.mxu0 0.0
    %116 = vmatpush1.msra.mxu0 %v91
    %117 = vmatprep.subr.mxu0 0.0
    %118 = vmatpush1.msra.mxu0 %v92
    %119 = vmatprep.subr.mxu0 0.0
    %120 = vmatpush1.msra.mxu0 %v93
    %121 = vmatprep.subr.mxu0 0.0
    %122 = vmatpush1.msra.mxu0 %v94
    %123 = vmatprep.subr.mxu0 0.0
    %124 = vmatpush1.msra.mxu0 %v95
    %125 = vmatprep.subr.mxu0 0.0
    %126 = vmatpush1.msra.mxu0 %v96
    %127 = vmatprep.subr.mxu0 0.0
    %128 = vmatpush1.msra.mxu0 0.0
    %129 = vmatprep.subr.mxu0 0.0
    %130 = vmatpush1.msra.mxu0 0.0
    %131 = vmatprep.subr.mxu0 0.0
    %132 = vmatpush1.msra.mxu0 0.0
    %133 = vmatprep.subr.mxu0 0.0
    %134 = vmatpush1.msra.mxu0 0.0
    %135 = vmatprep.subr.mxu0 0.0
    %136 = vmatpush1.msra.mxu0 0.0
    %137 = vmatprep.subr.mxu0 0.0
    %138 = vmatpush1.msra.mxu0 0.0
    %139 = vmatprep.subr.mxu0 0.0
    %140 = vmatpush1.msra.mxu0 0.0
    %141 = vmatprep.subr.mxu0 0.0
    %142 = vmatpush1.msra.mxu0 0.0
    %143 = vmatprep.subr.mxu0 0.0
    %144 = vmatpush1.msra.mxu0 0.0
    %145 = vmatprep.subr.mxu0 0.0
    %146 = vmatpush1.msra.mxu0 0.0
    %147 = vmatprep.subr.mxu0 0.0
    %148 = vmatpush1.msra.mxu0 0.0
    %149 = vmatprep.subr.mxu0 0.0
    %150 = vmatpush1.msra.mxu0 0.0
    %151 = vmatprep.subr.mxu0 0.0
    %152 = vmatpush1.msra.mxu0 0.0
    %153 = vmatprep.subr.mxu0 0.0
    %154 = vmatpush1.msra.mxu0 0.0
    %155 = vmatprep.subr.mxu0 0.0
    %156 = vmatpush1.msra.mxu0 0.0
    %157 = vmatprep.subr.mxu0 0.0
    %158 = vmatpush1.msra.mxu0 0.0
    %159 = vmatprep.subr.mxu0 0.0
    %160 = vmatpush1.msra.mxu0 0.0
    %161 = vmatprep.subr.mxu0 0.0
    %162 = vmatpush1.msra.mxu0 0.0
    %163 = vmatprep.subr.mxu0 0.0
    %164 = vmatpush1.msra.mxu0 0.0
    %165 = vmatprep.subr.mxu0 0.0
    %166 = vmatpush1.msra.mxu0 0.0
    %167 = vmatprep.subr.mxu0 0.0
    %168 = vmatpush1.msra.mxu0 0.0
    %169 = vmatprep.subr.mxu0 0.0
    %170 = vmatpush1.msra.mxu0 0.0
    %171 = vmatprep.subr.mxu0 0.0
    %172 = vmatpush1.msra.mxu0 0.0
    %173 = vmatprep.subr.mxu0 0.0
    %174 = vmatpush1.msra.mxu0 0.0
    %175 = vmatprep.mubr.f32.mxu0 0.0
    %176 = vmatmul.mubr.f32.gmra.mrb[0].mxu0 %v106
    %v177 = vpop.f32.mrb[0].mxu0
    %v178 = vadd.f32 %v102, %v177
    %v179 = vpop.f32.mrb[0].mxu0
    %180 = vmatprep.mubr.f32.mxu0 0.0
    %181 = vmatmul.mubr.f32.gmra.mrb[0].mxu0 %v109
    %v182 = vpop.f32.mrb[0].mxu0
    %v183 = vadd.f32 %v102, %v182
    %v184 = vpop.f32.mrb[0].mxu0
    %185 = vdwg.mxu0
    %v186 = vld [vmem:[%s4] sm:$0x1]
    %v188 = vlaneseq
    %v189 = vshrl.u32 %v188, 7
    %v190 = vsub.s32 0, %v189
    %v191 = vrot.slane %v186, %v190
    %v193 = vadd.f32 %v178, %v191
    %v194 = vadd.f32 %v183, %v191
    %v195 = vxor.u32 %v193, 2147483648
    %v196 = vxor.u32 %v194, 2147483648
    %v197 = vmul.f32 %v195, 1.442695
    %v198 = vpow.pop %v197
    %v199 = vmul.f32 %v196, 1.442695
    %v200 = vpow.pop %v199
    %v201 = vadd.f32 %v198, 1.0
    %v202 = vadd.f32 %v200, 1.0
    %v203 = vrcp.pop %v201
    %v204 = vmul.f32 1.0, %v203
    %v205 = vrcp.pop %v202
    %v206 = vmul.f32 1.0, %v205
    %s207 = scalar_lea.vmem %s1, 64
    %v208 = vld [vmem:[%s207] sm:$0xff]
    %v209 = vld [vmem:[%s207 + $0x8] sm:$0xff]
    %v210 = vld [vmem:[%s207 + $0x10] sm:$0xff]
    %v211 = vld [vmem:[%s207 + $0x18] sm:$0xff]
    %v212 = vld [vmem:[%s207 + $0x20] sm:$0xff]
    %v213 = vld [vmem:[%s207 + $0x28] sm:$0xff]
    %v214 = vld [vmem:[%s207 + $0x30] sm:$0xff]
    %v215 = vld [vmem:[%s207 + $0x38] sm:$0xff]
    %s216 = scalar_lea.vmem %s2, 1
    %v217 = vld [vmem:[%s216] sm:$0x1]
    %v219 = vlaneseq
    %v220 = vshrl.u32 %v219, 7
    %v221 = vsub.s32 0, %v220
    %v222 = vrot.slane %v217, %v221
    %224 = vmatprep.subr.mxu0 0.0
    %225 = vmatpush1.msra.mxu0 %v208
    %226 = vmatprep.subr.mxu0 0.0
    %227 = vmatpush1.msra.mxu0 %v209
    %228 = vmatprep.subr.mxu0 0.0
    %229 = vmatpush1.msra.mxu0 %v210
    %230 = vmatprep.subr.mxu0 0.0
    %231 = vmatpush1.msra.mxu0 %v211
    %232 = vmatprep.subr.mxu0 0.0
    %233 = vmatpush1.msra.mxu0 %v212
    %234 = vmatprep.subr.mxu0 0.0
    %235 = vmatpush1.msra.mxu0 %v213
    %236 = vmatprep.subr.mxu0 0.0
    %237 = vmatpush1.msra.mxu0 %v214
    %238 = vmatprep.subr.mxu0 0.0
    %239 = vmatpush1.msra.mxu0 %v215
    %240 = vmatprep.subr.mxu0 0.0
    %241 = vmatpush1.msra.mxu0 0.0
    %242 = vmatprep.subr.mxu0 0.0
    %243 = vmatpush1.msra.mxu0 0.0
    %244 = vmatprep.subr.mxu0 0.0
    %245 = vmatpush1.msra.mxu0 0.0
    %246 = vmatprep.subr.mxu0 0.0
    %247 = vmatpush1.msra.mxu0 0.0
    %248 = vmatprep.subr.mxu0 0.0
    %249 = vmatpush1.msra.mxu0 0.0
    %250 = vmatprep.subr.mxu0 0.0
    %251 = vmatpush1.msra.mxu0 0.0
    %252 = vmatprep.subr.mxu0 0.0
    %253 = vmatpush1.msra.mxu0 0.0
    %254 = vmatprep.subr.mxu0 0.0
    %255 = vmatpush1.msra.mxu0 0.0
    %256 = vmatprep.subr.mxu0 0.0
    %257 = vmatpush1.msra.mxu0 0.0
    %258 = vmatprep.subr.mxu0 0.0
    %259 = vmatpush1.msra.mxu0 0.0
    %260 = vmatprep.subr.mxu0 0.0
    %261 = vmatpush1.msra.mxu0 0.0
    %262 = vmatprep.subr.mxu0 0.0
    %263 = vmatpush1.msra.mxu0 0.0
    %264 = vmatprep.subr.mxu0 0.0
    %265 = vmatpush1.msra.mxu0 0.0
    %266 = vmatprep.subr.mxu0 0.0
    %267 = vmatpush1.msra.mxu0 0.0
    %268 = vmatprep.subr.mxu0 0.0
    %269 = vmatpush1.msra.mxu0 0.0
    %270 = vmatprep.subr.mxu0 0.0
    %271 = vmatpush1.msra.mxu0 0.0
    %272 = vmatprep.subr.mxu0 0.0
    %273 = vmatpush1.msra.mxu0 0.0
    %274 = vmatprep.subr.mxu0 0.0
    %275 = vmatpush1.msra.mxu0 0.0
    %276 = vmatprep.subr.mxu0 0.0
    %277 = vmatpush1.msra.mxu0 0.0
    %278 = vmatprep.subr.mxu0 0.0
    %279 = vmatpush1.msra.mxu0 0.0
    %280 = vmatprep.subr.mxu0 0.0
    %281 = vmatpush1.msra.mxu0 0.0
    %282 = vmatprep.subr.mxu0 0.0
    %283 = vmatpush1.msra.mxu0 0.0
    %284 = vmatprep.subr.mxu0 0.0
    %285 = vmatpush1.msra.mxu0 0.0
    %286 = vmatprep.subr.mxu0 0.0
    %287 = vmatpush1.msra.mxu0 0.0
    %288 = vmatprep.mubr.f32.mxu0 0.0
    %289 = vmatmul.mubr.f32.gmra.mrb[0].mxu0 %v106
    %v290 = vpop.f32.mrb[0].mxu0
    %v291 = vadd.f32 %v222, %v290
    %v292 = vpop.f32.mrb[0].mxu0
    %293 = vmatprep.mubr.f32.mxu0 0.0
    %294 = vmatmul.mubr.f32.gmra.mrb[0].mxu0 %v109
    %v295 = vpop.f32.mrb[0].mxu0
    %v296 = vadd.f32 %v222, %v295
    %v297 = vpop.f32.mrb[0].mxu0
    %298 = vdwg.mxu0
    %s299 = scalar_lea.vmem %s4, 1
    %v300 = vld [vmem:[%s299] sm:$0x1]
    %v302 = vlaneseq
    %v303 = vshrl.u32 %v302, 7
    %v304 = vsub.s32 0, %v303
    %v305 = vrot.slane %v300, %v304
    %v307 = vadd.f32 %v291, %v305
    %v308 = vadd.f32 %v296, %v305
    %v309 = vxor.u32 %v307, 2147483648
    %v310 = vxor.u32 %v308, 2147483648
    %v311 = vmul.f32 %v309, 1.442695
    %v312 = vpow.pop %v311
    %v313 = vmul.f32 %v310, 1.442695
    %v314 = vpow.pop %v313
    %v315 = vadd.f32 %v312, 1.0
    %v316 = vadd.f32 %v314, 1.0
    %v317 = vrcp.pop %v315
    %v318 = vmul.f32 1.0, %v317
    %v319 = vrcp.pop %v316
    %v320 = vmul.f32 1.0, %v319
    %s321 = scalar_lea.vmem %s1, 128
    %v322 = vld [vmem:[%s321] sm:$0xff]
    %v323 = vld [vmem:[%s321 + $0x8] sm:$0xff]
    %v324 = vld [vmem:[%s321 + $0x10] sm:$0xff]
    %v325 = vld [vmem:[%s321 + $0x18] sm:$0xff]
    %v326 = vld [vmem:[%s321 + $0x20] sm:$0xff]
    %v327 = vld [vmem:[%s321 + $0x28] sm:$0xff]
    %v328 = vld [vmem:[%s321 + $0x30] sm:$0xff]
    %v329 = vld [vmem:[%s321 + $0x38] sm:$0xff]
    %s330 = scalar_lea.vmem %s2, 2
    %v331 = vld [vmem:[%s330] sm:$0x1]
    %v333 = vlaneseq
    %v334 = vshrl.u32 %v333, 7
    %v335 = vsub.s32 0, %v334
    %v336 = vrot.slane %v331, %v335
    %338 = vmatprep.subr.mxu0 0.0
    %339 = vmatpush1.msra.mxu0 %v322
    %340 = vmatprep.subr.mxu0 0.0
    %341 = vmatpush1.msra.mxu0 %v323
    %342 = vmatprep.subr.mxu0 0.0
    %343 = vmatpush1.msra.mxu0 %v324
    %344 = vmatprep.subr.mxu0 0.0
    %345 = vmatpush1.msra.mxu0 %v325
    %346 = vmatprep.subr.mxu0 0.0
    %347 = vmatpush1.msra.mxu0 %v326
    %348 = vmatprep.subr.mxu0 0.0
    %349 = vmatpush1.msra.mxu0 %v327
    %350 = vmatprep.subr.mxu0 0.0
    %351 = vmatpush1.msra.mxu0 %v328
    %352 = vmatprep.subr.mxu0 0.0
    %353 = vmatpush1.msra.mxu0 %v329
    %354 = vmatprep.subr.mxu0 0.0
    %355 = vmatpush1.msra.mxu0 0.0
    %356 = vmatprep.subr.mxu0 0.0
    %357 = vmatpush1.msra.mxu0 0.0
    %358 = vmatprep.subr.mxu0 0.0
    %359 = vmatpush1.msra.mxu0 0.0
    %360 = vmatprep.subr.mxu0 0.0
    %361 = vmatpush1.msra.mxu0 0.0
    %362 = vmatprep.subr.mxu0 0.0
    %363 = vmatpush1.msra.mxu0 0.0
    %364 = vmatprep.subr.mxu0 0.0
    %365 = vmatpush1.msra.mxu0 0.0
    %366 = vmatprep.subr.mxu0 0.0
    %367 = vmatpush1.msra.mxu0 0.0
    %368 = vmatprep.subr.mxu0 0.0
    %369 = vmatpush1.msra.mxu0 0.0
    %370 = vmatprep.subr.mxu0 0.0
    %371 = vmatpush1.msra.mxu0 0.0
    %372 = vmatprep.subr.mxu0 0.0
    %373 = vmatpush1.msra.mxu0 0.0
    %374 = vmatprep.subr.mxu0 0.0
    %375 = vmatpush1.msra.mxu0 0.0
    %376 = vmatprep.subr.mxu0 0.0
    %377 = vmatpush1.msra.mxu0 0.0
    %378 = vmatprep.subr.mxu0 0.0
    %379 = vmatpush1.msra.mxu0 0.0
    %380 = vmatprep.subr.mxu0 0.0
    %381 = vmatpush1.msra.mxu0 0.0
    %382 = vmatprep.subr.mxu0 0.0
    %383 = vmatpush1.msra.mxu0 0.0
    %384 = vmatprep.subr.mxu0 0.0
    %385 = vmatpush1.msra.mxu0 0.0
    %386 = vmatprep.subr.mxu0 0.0
    %387 = vmatpush1.msra.mxu0 0.0
    %388 = vmatprep.subr.mxu0 0.0
    %389 = vmatpush1.msra.mxu0 0.0
    %390 = vmatprep.subr.mxu0 0.0
    %391 = vmatpush1.msra.mxu0 0.0
    %392 = vmatprep.subr.mxu0 0.0
    %393 = vmatpush1.msra.mxu0 0.0
    %394 = vmatprep.subr.mxu0 0.0
    %395 = vmatpush1.msra.mxu0 0.0
    %396 = vmatprep.subr.mxu0 0.0
    %397 = vmatpush1.msra.mxu0 0.0
    %398 = vmatprep.subr.mxu0 0.0
    %399 = vmatpush1.msra.mxu0 0.0
    %400 = vmatprep.subr.mxu0 0.0
    %401 = vmatpush1.msra.mxu0 0.0
    %402 = vmatprep.mubr.f32.mxu0 0.0
    %403 = vmatmul.mubr.f32.gmra.mrb[0].mxu0 %v106
    %v404 = vpop.f32.mrb[0].mxu0
    %v405 = vadd.f32 %v336, %v404
    %v406 = vpop.f32.mrb[0].mxu0
    %407 = vmatprep.mubr.f32.mxu0 0.0
    %408 = vmatmul.mubr.f32.gmra.mrb[0].mxu0 %v109
    %v409 = vpop.f32.mrb[0].mxu0
    %v410 = vadd.f32 %v336, %v409
    %v411 = vpop.f32.mrb[0].mxu0
    %412 = vdwg.mxu0
    %s413 = scalar_lea.vmem %s4, 2
    %v414 = vld [vmem:[%s413] sm:$0x1]
    %v416 = vlaneseq
    %v417 = vshrl.u32 %v416, 7
    %v418 = vsub.s32 0, %v417
    %v419 = vrot.slane %v414, %v418
    %v421 = vadd.f32 %v405, %v419
    %v422 = vadd.f32 %v410, %v419
    %v423 = vtanh.pop %v421
    %v424 = vtanh.pop %v422
    %v425 = vmul.f32 %v204, %v423
    %v426 = vmul.f32 %v206, %v424
    %v427 = vtanh.pop %v425
    %v428 = vtanh.pop %v426
    %v429 = vmul.f32 %v318, %v427
    %v430 = vmul.f32 %v320, %v428
    %v431 = vld [vmem:[%s0 + $0xb] sm:$0x1f]
    %v433 = vrot.slane %v425, 1
    %v435 = vadd.f32 %v425, %v433
    %v437 = vrot.slane %v426, 1
    %v439 = vadd.f32 %v425, %v437
    %v440 = vadd.f32 %v426, %v437
    %v442 = vrot.slane %v435, 1
    %v444 = vrot.slane %v435, 2
    %v446 = vrot.slane %v435, 3
    %v449 = vrot.slane %v439, 4
    %v452 = vrot.slane %v440, 5
    %vm454 = vcmask 1040384
    %v455 = vsel %vm454, %v442, %v444
    %vm456 = vcmask 1041408
    %v457 = vsel %vm456, %v455, %v446
    %vm458 = vcmask 1042432
    %v459 = vsel %vm458, %v457, %v449
    %vm460 = vcmask 1043456
    %v461 = vsel %vm460, %v459, %v452
    %v462 = vsel %vm456, %v433, %v433
    %v463 = vsel %vm458, %v462, %v433
    %v464 = vsel %vm460, %v463, %v433
    %vm465 = vcmask 1044480
    %v466 = vsel %vm465, %v464, %v433
    %vm467 = vcmask 1045504
    %v468 = vsel %vm467, %v466, %v433
    %vm469 = vcmask 1046528
    %v470 = vsel %vm469, %v468, %v437
    %v472 = vrot.slane %v429, 1
    %v475 = vrot.slane %v430, 1
    %v477 = vsel %vm456, %v472, %v472
    %v478 = vsel %vm458, %v477, %v472
    %v479 = vsel %vm460, %v478, %v472
    %v480 = vsel %vm465, %v479, %v472
    %v481 = vsel %vm467, %v480, %v472
    %v482 = vsel %vm469, %v481, %v475
    %v484 = vsel %vm104, %v431, 0
    %486 = vmatprep.subr.mxu0 0.0
    %487 = vmatpush1.msra.mxu0 %v89
    %488 = vmatprep.subr.mxu0 0.0
    %489 = vmatpush1.msra.mxu0 %v90
    %490 = vmatprep.subr.mxu0 0.0
    %491 = vmatpush1.msra.mxu0 %v91
    %492 = vmatprep.subr.mxu0 0.0
    %493 = vmatpush1.msra.mxu0 %v92
    %494 = vmatprep.subr.mxu0 0.0
    %495 = vmatpush1.msra.mxu0 %v93
    %496 = vmatprep.subr.mxu0 0.0
    %497 = vmatpush1.msra.mxu0 %v94
    %498 = vmatprep.subr.mxu0 0.0
    %499 = vmatpush1.msra.mxu0 %v95
    %500 = vmatprep.subr.mxu0 0.0
    %501 = vmatpush1.msra.mxu0 %v96
    %502 = vmatprep.subr.mxu0 0.0
    %503 = vmatpush1.msra.mxu0 0.0
    %504 = vmatprep.subr.mxu0 0.0
    %505 = vmatpush1.msra.mxu0 0.0
    %506 = vmatprep.subr.mxu0 0.0
    %507 = vmatpush1.msra.mxu0 0.0
    %508 = vmatprep.subr.mxu0 0.0
    %509 = vmatpush1.msra.mxu0 0.0
    %510 = vmatprep.subr.mxu0 0.0
    %511 = vmatpush1.msra.mxu0 0.0
    %512 = vmatprep.subr.mxu0 0.0
    %513 = vmatpush1.msra.mxu0 0.0
    %514 = vmatprep.subr.mxu0 0.0
    %515 = vmatpush1.msra.mxu0 0.0
    %516 = vmatprep.subr.mxu0 0.0
    %517 = vmatpush1.msra.mxu0 0.0
    %518 = vmatprep.subr.mxu0 0.0
    %519 = vmatpush1.msra.mxu0 0.0
    %520 = vmatprep.subr.mxu0 0.0
    %521 = vmatpush1.msra.mxu0 0.0
    %522 = vmatprep.subr.mxu0 0.0
    %523 = vmatpush1.msra.mxu0 0.0
    %524 = vmatprep.subr.mxu0 0.0
    %525 = vmatpush1.msra.mxu0 0.0
    %526 = vmatprep.subr.mxu0 0.0
    %527 = vmatpush1.msra.mxu0 0.0
    %528 = vmatprep.subr.mxu0 0.0
    %529 = vmatpush1.msra.mxu0 0.0
    %530 = vmatprep.subr.mxu0 0.0
    %531 = vmatpush1.msra.mxu0 0.0
    %532 = vmatprep.subr.mxu0 0.0
    %533 = vmatpush1.msra.mxu0 0.0
    %534 = vmatprep.subr.mxu0 0.0
    %535 = vmatpush1.msra.mxu0 0.0
    %536 = vmatprep.subr.mxu0 0.0
    %537 = vmatpush1.msra.mxu0 0.0
    %538 = vmatprep.subr.mxu0 0.0
    %539 = vmatpush1.msra.mxu0 0.0
    %540 = vmatprep.subr.mxu0 0.0
    %541 = vmatpush1.msra.mxu0 0.0
    %542 = vmatprep.subr.mxu0 0.0
    %543 = vmatpush1.msra.mxu0 0.0
    %544 = vmatprep.subr.mxu0 0.0
    %545 = vmatpush1.msra.mxu0 0.0
    %546 = vmatprep.subr.mxu0 0.0
    %547 = vmatpush1.msra.mxu0 0.0
    %548 = vmatprep.subr.mxu0 0.0
    %549 = vmatpush1.msra.mxu0 0.0
    %550 = vmatprep.mubr.f32.mxu0 0.0
    %551 = vmatmul.mubr.f32.gmra.mrb[0].mxu0 %v484
    %v552 = vpop.f32.mrb[0].mxu0
    %v553 = vadd.f32 %v102, %v552
    %v554 = vpop.f32.mrb[0].mxu0
    %555 = vdwg.mxu0
    %v556 = vld [vmem:[%s3] sm:$0xff]
    %v557 = vld [vmem:[%s3 + $0x8] sm:$0xff]
    %v558 = vld [vmem:[%s3 + $0x10] sm:$0xff]
    %v559 = vld [vmem:[%s3 + $0x18] sm:$0xff]
    %v560 = vld [vmem:[%s3 + $0x20] sm:$0xff]
    %v561 = vld [vmem:[%s3 + $0x28] sm:$0xff]
    %v562 = vld [vmem:[%s3 + $0x30] sm:$0xff]
    %v563 = vld [vmem:[%s3 + $0x38] sm:$0xff]
    %v565 = vsel %vm104, %v461, 0
    %567 = vmatprep.subr.mxu0 0.0
    %568 = vmatpush1.msra.mxu0 %v556
    %569 = vmatprep.subr.mxu0 0.0
    %570 = vmatpush1.msra.mxu0 %v557
    %571 = vmatprep.subr.mxu0 0.0
    %572 = vmatpush1.msra.mxu0 %v558
    %573 = vmatprep.subr.mxu0 0.0
    %574 = vmatpush1.msra.mxu0 %v559
    %575 = vmatprep.subr.mxu0 0.0
    %576 = vmatpush1.msra.mxu0 %v560
    %577 = vmatprep.subr.mxu0 0.0
    %578 = vmatpush1.msra.mxu0 %v561
    %579 = vmatprep.subr.mxu0 0.0
    %580 = vmatpush1.msra.mxu0 %v562
    %581 = vmatprep.subr.mxu0 0.0
    %582 = vmatpush1.msra.mxu0 %v563
    %583 = vmatprep.subr.mxu0 0.0
    %584 = vmatpush1.msra.mxu0 0.0
    %585 = vmatprep.subr.mxu0 0.0
    %586 = vmatpush1.msra.mxu0 0.0
    %587 = vmatprep.subr.mxu0 0.0
    %588 = vmatpush1.msra.mxu0 0.0
    %589 = vmatprep.subr.mxu0 0.0
    %590 = vmatpush1.msra.mxu0 0.0
    %591 = vmatprep.subr.mxu0 0.0
    %592 = vmatpush1.msra.mxu0 0.0
    %593 = vmatprep.subr.mxu0 0.0
    %594 = vmatpush1.msra.mxu0 0.0
    %595 = vmatprep.subr.mxu0 0.0
    %596 = vmatpush1.msra.mxu0 0.0
    %597 = vmatprep.subr.mxu0 0.0
    %598 = vmatpush1.msra.mxu0 0.0
    %599 = vmatprep.subr.mxu0 0.0
    %600 = vmatpush1.msra.mxu0 0.0
    %601 = vmatprep.subr.mxu0 0.0
    %602 = vmatpush1.msra.mxu0 0.0
    %603 = vmatprep.subr.mxu0 0.0
    %604 = vmatpush1.msra.mxu0 0.0
    %605 = vmatprep.subr.mxu0 0.0
    %606 = vmatpush1.msra.mxu0 0.0
    %607 = vmatprep.subr.mxu0 0.0
    %608 = vmatpush1.msra.mxu0 0.0
    %609 = vmatprep.subr.mxu0 0.0
    %610 = vmatpush1.msra.mxu0 0.0
    %611 = vmatprep.subr.mxu0 0.0
    %612 = vmatpush1.msra.mxu0 0.0
    %613 = vmatprep.subr.mxu0 0.0
    %614 = vmatpush1.msra.mxu0 0.0
    %615 = vmatprep.subr.mxu0 0.0
    %616 = vmatpush1.msra.mxu0 0.0
    %617 = vmatprep.subr.mxu0 0.0
    %618 = vmatpush1.msra.mxu0 0.0
    %619 = vmatprep.subr.mxu0 0.0
    %620 = vmatpush1.msra.mxu0 0.0
    %621 = vmatprep.subr.mxu0 0.0
    %622 = vmatpush1.msra.mxu0 0.0
    %623 = vmatprep.subr.mxu0 0.0
    %624 = vmatpush1.msra.mxu0 0.0
    %625 = vmatprep.subr.mxu0 0.0
    %626 = vmatpush1.msra.mxu0 0.0
    %627 = vmatprep.subr.mxu0 0.0
    %628 = vmatpush1.msra.mxu0 0.0
    %629 = vmatprep.subr.mxu0 0.0
    %630 = vmatpush1.msra.mxu0 0.0
    %631 = vmatprep.mubr.f32.mxu0 0.0
    %632 = vmatmul.mubr.f32.gmra.mrb[0].mxu0 %v565
    %v633 = vpop.f32.mrb[0].mxu0
    %v634 = vadd.f32 0.0, %v633
    %v635 = vpop.f32.mrb[0].mxu0
    %636 = vdwg.mxu0
    %v637 = vadd.f32 %v553, %v634
    %v638 = vadd.f32 %v637, %v191
    %v639 = vxor.u32 %v638, 2147483648
    %v640 = vmul.f32 %v639, 1.442695
    %v641 = vpow.pop %v640
    %v642 = vadd.f32 %v641, 1.0
    %v643 = vrcp.pop %v642
    %v644 = vmul.f32 1.0, %v643
    %645 = vmatprep.subr.mxu0 0.0
    %646 = vmatpush1.msra.mxu0 %v208
    %647 = vmatprep.subr.mxu0 0.0
    %648 = vmatpush1.msra.mxu0 %v209
    %649 = vmatprep.subr.mxu0 0.0
    %650 = vmatpush1.msra.mxu0 %v210
    %651 = vmatprep.subr.mxu0 0.0
    %652 = vmatpush1.msra.mxu0 %v211
    %653 = vmatprep.subr.mxu0 0.0
    %654 = vmatpush1.msra.mxu0 %v212
    %655 = vmatprep.subr.mxu0 0.0
    %656 = vmatpush1.msra.mxu0 %v213
    %657 = vmatprep.subr.mxu0 0.0
    %658 = vmatpush1.msra.mxu0 %v214
    %659 = vmatprep.subr.mxu0 0.0
    %660 = vmatpush1.msra.mxu0 %v215
    %661 = vmatprep.subr.mxu0 0.0
    %662 = vmatpush1.msra.mxu0 0.0
    %663 = vmatprep.subr.mxu0 0.0
    %664 = vmatpush1.msra.mxu0 0.0
    %665 = vmatprep.subr.mxu0 0.0
    %666 = vmatpush1.msra.mxu0 0.0
    %667 = vmatprep.subr.mxu0 0.0
    %668 = vmatpush1.msra.mxu0 0.0
    %669 = vmatprep.subr.mxu0 0.0
    %670 = vmatpush1.msra.mxu0 0.0
    %671 = vmatprep.subr.mxu0 0.0
    %672 = vmatpush1.msra.mxu0 0.0
    %673 = vmatprep.subr.mxu0 0.0
    %674 = vmatpush1.msra.mxu0 0.0
    %675 = vmatprep.subr.mxu0 0.0
    %676 = vmatpush1.msra.mxu0 0.0
    %677 = vmatprep.subr.mxu0 0.0
    %678 = vmatpush1.msra.mxu0 0.0
    %679 = vmatprep.subr.mxu0 0.0
    %680 = vmatpush1.msra.mxu0 0.0
    %681 = vmatprep.subr.mxu0 0.0
    %682 = vmatpush1.msra.mxu0 0.0
    %683 = vmatprep.subr.mxu0 0.0
    %684 = vmatpush1.msra.mxu0 0.0
    %685 = vmatprep.subr.mxu0 0.0
    %686 = vmatpush1.msra.mxu0 0.0
    %687 = vmatprep.subr.mxu0 0.0
    %688 = vmatpush1.msra.mxu0 0.0
    %689 = vmatprep.subr.mxu0 0.0
    %690 = vmatpush1.msra.mxu0 0.0
    %691 = vmatprep.subr.mxu0 0.0
    %692 = vmatpush1.msra.mxu0 0.0
    %693 = vmatprep.subr.mxu0 0.0
    %694 = vmatpush1.msra.mxu0 0.0
    %695 = vmatprep.subr.mxu0 0.0
    %696 = vmatpush1.msra.mxu0 0.0
    %697 = vmatprep.subr.mxu0 0.0
    %698 = vmatpush1.msra.mxu0 0.0
    %699 = vmatprep.subr.mxu0 0.0
    %700 = vmatpush1.msra.mxu0 0.0
    %701 = vmatprep.subr.mxu0 0.0
    %702 = vmatpush1.msra.mxu0 0.0
    %703 = vmatprep.subr.mxu0 0.0
    %704 = vmatpush1.msra.mxu0 0.0
    %705 = vmatprep.subr.mxu0 0.0
    %706 = vmatpush1.msra.mxu0 0.0
    %707 = vmatprep.subr.mxu0 0.0
    %708 = vmatpush1.msra.mxu0 0.0
    %709 = vmatprep.mubr.f32.mxu0 0.0
    %710 = vmatmul.mubr.f32.gmra.mrb[0].mxu0 %v484
    %v711 = vpop.f32.mrb[0].mxu0
    %v712 = vadd.f32 %v222, %v711
    %v713 = vpop.f32.mrb[0].mxu0
    %714 = vdwg.mxu0
    %s715 = scalar_lea.vmem %s3, 64
    %v716 = vld [vmem:[%s715] sm:$0xff]
    %v717 = vld [vmem:[%s715 + $0x8] sm:$0xff]
    %v718 = vld [vmem:[%s715 + $0x10] sm:$0xff]
    %v719 = vld [vmem:[%s715 + $0x18] sm:$0xff]
    %v720 = vld [vmem:[%s715 + $0x20] sm:$0xff]
    %v721 = vld [vmem:[%s715 + $0x28] sm:$0xff]
    %v722 = vld [vmem:[%s715 + $0x30] sm:$0xff]
    %v723 = vld [vmem:[%s715 + $0x38] sm:$0xff]
    %724 = vmatprep.subr.mxu0 0.0
    %725 = vmatpush1.msra.mxu0 %v716
    %726 = vmatprep.subr.mxu0 0.0
    %727 = vmatpush1.msra.mxu0 %v717
    %728 = vmatprep.subr.mxu0 0.0
    %729 = vmatpush1.msra.mxu0 %v718
    %730 = vmatprep.subr.mxu0 0.0
    %731 = vmatpush1.msra.mxu0 %v719
    %732 = vmatprep.subr.mxu0 0.0
    %733 = vmatpush1.msra.mxu0 %v720
    %734 = vmatprep.subr.mxu0 0.0
    %735 = vmatpush1.msra.mxu0 %v721
    %736 = vmatprep.subr.mxu0 0.0
    %737 = vmatpush1.msra.mxu0 %v722
    %738 = vmatprep.subr.mxu0 0.0
    %739 = vmatpush1.msra.mxu0 %v723
    %740 = vmatprep.subr.mxu0 0.0
    %741 = vmatpush1.msra.mxu0 0.0
    %742 = vmatprep.subr.mxu0 0.0
    %743 = vmatpush1.msra.mxu0 0.0
    %744 = vmatprep.subr.mxu0 0.0
    %745 = vmatpush1.msra.mxu0 0.0
    %746 = vmatprep.subr.mxu0 0.0
    %747 = vmatpush1.msra.mxu0 0.0
    %748 = vmatprep.subr.mxu0 0.0
    %749 = vmatpush1.msra.mxu0 0.0
    %750 = vmatprep.subr.mxu0 0.0
    %751 = vmatpush1.msra.mxu0 0.0
    %752 = vmatprep.subr.mxu0 0.0
    %753 = vmatpush1.msra.mxu0 0.0
    %754 = vmatprep.subr.mxu0 0.0
    %755 = vmatpush1.msra.mxu0 0.0
    %756 = vmatprep.subr.mxu0 0.0
    %757 = vmatpush1.msra.mxu0 0.0
    %758 = vmatprep.subr.mxu0 0.0
    %759 = vmatpush1.msra.mxu0 0.0
    %760 = vmatprep.subr.mxu0 0.0
    %761 = vmatpush1.msra.mxu0 0.0
    %762 = vmatprep.subr.mxu0 0.0
    %763 = vmatpush1.msra.mxu0 0.0
    %764 = vmatprep.subr.mxu0 0.0
    %765 = vmatpush1.msra.mxu0 0.0
    %766 = vmatprep.subr.mxu0 0.0
    %767 = vmatpush1.msra.mxu0 0.0
    %768 = vmatprep.subr.mxu0 0.0
    %769 = vmatpush1.msra.mxu0 0.0
    %770 = vmatprep.subr.mxu0 0.0
    %771 = vmatpush1.msra.mxu0 0.0
    %772 = vmatprep.subr.mxu0 0.0
    %773 = vmatpush1.msra.mxu0 0.0
    %774 = vmatprep.subr.mxu0 0.0
    %775 = vmatpush1.msra.mxu0 0.0
    %776 = vmatprep.subr.mxu0 0.0
    %777 = vmatpush1.msra.mxu0 0.0
    %778 = vmatprep.subr.mxu0 0.0
    %779 = vmatpush1.msra.mxu0 0.0
    %780 = vmatprep.subr.mxu0 0.0
    %781 = vmatpush1.msra.mxu0 0.0
    %782 = vmatprep.subr.mxu0 0.0
    %783 = vmatpush1.msra.mxu0 0.0
    %784 = vmatprep.subr.mxu0 0.0
    %785 = vmatpush1.msra.mxu0 0.0
    %786 = vmatprep.subr.mxu0 0.0
    %787 = vmatpush1.msra.mxu0 0.0
    %788 = vmatprep.mubr.f32.mxu0 0.0
    %789 = vmatmul.mubr.f32.gmra.mrb[0].mxu0 %v565
    %v790 = vpop.f32.mrb[0].mxu0
    %v791 = vadd.f32 0.0, %v790
    %v792 = vpop.f32.mrb[0].mxu0
    %793 = vdwg.mxu0
    %v794 = vadd.f32 %v712, %v791
    %v795 = vadd.f32 %v794, %v305
    %v796 = vxor.u32 %v795, 2147483648
    %v797 = vmul.f32 %v796, 1.442695
    %v798 = vpow.pop %v797
    %v799 = vadd.f32 %v798, 1.0
    %v800 = vrcp.pop %v799
    %v801 = vmul.f32 1.0, %v800
    %802 = vmatprep.subr.mxu0 0.0
    %803 = vmatpush1.msra.mxu0 %v322
    %804 = vmatprep.subr.mxu0 0.0
    %805 = vmatpush1.msra.mxu0 %v323
    %806 = vmatprep.subr.mxu0 0.0
    %807 = vmatpush1.msra.mxu0 %v324
    %808 = vmatprep.subr.mxu0 0.0
    %809 = vmatpush1.msra.mxu0 %v325
    %810 = vmatprep.subr.mxu0 0.0
    %811 = vmatpush1.msra.mxu0 %v326
    %812 = vmatprep.subr.mxu0 0.0
    %813 = vmatpush1.msra.mxu0 %v327
    %814 = vmatprep.subr.mxu0 0.0
    %815 = vmatpush1.msra.mxu0 %v328
    %816 = vmatprep.subr.mxu0 0.0
    %817 = vmatpush1.msra.mxu0 %v329
    %818 = vmatprep.subr.mxu0 0.0
    %819 = vmatpush1.msra.mxu0 0.0
    %820 = vmatprep.subr.mxu0 0.0
    %821 = vmatpush1.msra.mxu0 0.0
    %822 = vmatprep.subr.mxu0 0.0
    %823 = vmatpush1.msra.mxu0 0.0
    %824 = vmatprep.subr.mxu0 0.0
    %825 = vmatpush1.msra.mxu0 0.0
    %826 = vmatprep.subr.mxu0 0.0
    %827 = vmatpush1.msra.mxu0 0.0
    %828 = vmatprep.subr.mxu0 0.0
    %829 = vmatpush1.msra.mxu0 0.0
    %830 = vmatprep.subr.mxu0 0.0
    %831 = vmatpush1.msra.mxu0 0.0
    %832 = vmatprep.subr.mxu0 0.0
    %833 = vmatpush1.msra.mxu0 0.0
    %834 = vmatprep.subr.mxu0 0.0
    %835 = vmatpush1.msra.mxu0 0.0
    %836 = vmatprep.subr.mxu0 0.0
    %837 = vmatpush1.msra.mxu0 0.0
    %838 = vmatprep.subr.mxu0 0.0
    %839 = vmatpush1.msra.mxu0 0.0
    %840 = vmatprep.subr.mxu0 0.0
    %841 = vmatpush1.msra.mxu0 0.0
    %842 = vmatprep.subr.mxu0 0.0
    %843 = vmatpush1.msra.mxu0 0.0
    %844 = vmatprep.subr.mxu0 0.0
    %845 = vmatpush1.msra.mxu0 0.0
    %846 = vmatprep.subr.mxu0 0.0
    %847 = vmatpush1.msra.mxu0 0.0
    %848 = vmatprep.subr.mxu0 0.0
    %849 = vmatpush1.msra.mxu0 0.0
    %850 = vmatprep.subr.mxu0 0.0
    %851 = vmatpush1.msra.mxu0 0.0
    %852 = vmatprep.subr.mxu0 0.0
    %853 = vmatpush1.msra.mxu0 0.0
    %854 = vmatprep.subr.mxu0 0.0
    %855 = vmatpush1.msra.mxu0 0.0
    %856 = vmatprep.subr.mxu0 0.0
    %857 = vmatpush1.msra.mxu0 0.0
    %858 = vmatprep.subr.mxu0 0.0
    %859 = vmatpush1.msra.mxu0 0.0
    %860 = vmatprep.subr.mxu0 0.0
    %861 = vmatpush1.msra.mxu0 0.0
    %862 = vmatprep.subr.mxu0 0.0
    %863 = vmatpush1.msra.mxu0 0.0
    %864 = vmatprep.subr.mxu0 0.0
    %865 = vmatpush1.msra.mxu0 0.0
    %866 = vmatprep.mubr.f32.mxu0 0.0
    %867 = vmatmul.mubr.f32.gmra.mrb[0].mxu0 %v484
    %v868 = vpop.f32.mrb[0].mxu0
    %v869 = vadd.f32 %v336, %v868
    %v870 = vpop.f32.mrb[0].mxu0
    %871 = vdwg.mxu0
    %s872 = scalar_lea.vmem %s3, 128
    %v873 = vld [vmem:[%s872] sm:$0xff]
    %v874 = vld [vmem:[%s872 + $0x8] sm:$0xff]
    %v875 = vld [vmem:[%s872 + $0x10] sm:$0xff]
    %v876 = vld [vmem:[%s872 + $0x18] sm:$0xff]
    %v877 = vld [vmem:[%s872 + $0x20] sm:$0xff]
    %v878 = vld [vmem:[%s872 + $0x28] sm:$0xff]
    %v879 = vld [vmem:[%s872 + $0x30] sm:$0xff]
    %v880 = vld [vmem:[%s872 + $0x38] sm:$0xff]
    %881 = vmatprep.subr.mxu0 0.0
    %882 = vmatpush1.msra.mxu0 %v873
    %883 = vmatprep.subr.mxu0 0.0
    %884 = vmatpush1.msra.mxu0 %v874
    %885 = vmatprep.subr.mxu0 0.0
    %886 = vmatpush1.msra.mxu0 %v875
    %887 = vmatprep.subr.mxu0 0.0
    %888 = vmatpush1.msra.mxu0 %v876
    %889 = vmatprep.subr.mxu0 0.0
    %890 = vmatpush1.msra.mxu0 %v877
    %891 = vmatprep.subr.mxu0 0.0
    %892 = vmatpush1.msra.mxu0 %v878
    %893 = vmatprep.subr.mxu0 0.0
    %894 = vmatpush1.msra.mxu0 %v879
    %895 = vmatprep.subr.mxu0 0.0
    %896 = vmatpush1.msra.mxu0 %v880
    %897 = vmatprep.subr.mxu0 0.0
    %898 = vmatpush1.msra.mxu0 0.0
    %899 = vmatprep.subr.mxu0 0.0
    %900 = vmatpush1.msra.mxu0 0.0
    %901 = vmatprep.subr.mxu0 0.0
    %902 = vmatpush1.msra.mxu0 0.0
    %903 = vmatprep.subr.mxu0 0.0
    %904 = vmatpush1.msra.mxu0 0.0
    %905 = vmatprep.subr.mxu0 0.0
    %906 = vmatpush1.msra.mxu0 0.0
    %907 = vmatprep.subr.mxu0 0.0
    %908 = vmatpush1.msra.mxu0 0.0
    %909 = vmatprep.subr.mxu0 0.0
    %910 = vmatpush1.msra.mxu0 0.0
    %911 = vmatprep.subr.mxu0 0.0
    %912 = vmatpush1.msra.mxu0 0.0
    %913 = vmatprep.subr.mxu0 0.0
    %914 = vmatpush1.msra.mxu0 0.0
    %915 = vmatprep.subr.mxu0 0.0
    %916 = vmatpush1.msra.mxu0 0.0
    %917 = vmatprep.subr.mxu0 0.0
    %918 = vmatpush1.msra.mxu0 0.0
    %919 = vmatprep.subr.mxu0 0.0
    %920 = vmatpush1.msra.mxu0 0.0
    %921 = vmatprep.subr.mxu0 0.0
    %922 = vmatpush1.msra.mxu0 0.0
    %923 = vmatprep.subr.mxu0 0.0
    %924 = vmatpush1.msra.mxu0 0.0
    %925 = vmatprep.subr.mxu0 0.0
    %926 = vmatpush1.msra.mxu0 0.0
    %927 = vmatprep.subr.mxu0 0.0
    %928 = vmatpush1.msra.mxu0 0.0
    %929 = vmatprep.subr.mxu0 0.0
    %930 = vmatpush1.msra.mxu0 0.0
    %931 = vmatprep.subr.mxu0 0.0
    %932 = vmatpush1.msra.mxu0 0.0
    %933 = vmatprep.subr.mxu0 0.0
    %934 = vmatpush1.msra.mxu0 0.0
    %935 = vmatprep.subr.mxu0 0.0
    %936 = vmatpush1.msra.mxu0 0.0
    %937 = vmatprep.subr.mxu0 0.0
    %938 = vmatpush1.msra.mxu0 0.0
    %939 = vmatprep.subr.mxu0 0.0
    %940 = vmatpush1.msra.mxu0 0.0
    %941 = vmatprep.subr.mxu0 0.0
    %942 = vmatpush1.msra.mxu0 0.0
    %943 = vmatprep.subr.mxu0 0.0
    %944 = vmatpush1.msra.mxu0 0.0
    %945 = vmatprep.mubr.f32.mxu0 0.0
    %946 = vmatmul.mubr.f32.gmra.mrb[0].mxu0 %v565
    %v947 = vpop.f32.mrb[0].mxu0
    %v948 = vadd.f32 0.0, %v947
    %v949 = vpop.f32.mrb[0].mxu0
    %950 = vdwg.mxu0
    %v951 = vadd.f32 %v869, %v948
    %v952 = vadd.f32 %v951, %v419
    %v953 = vtanh.pop %v952
    %v954 = vmul.f32 %v644, %v953
    %v955 = vld [vmem:[%s5] sm:$0xff]
    %v956 = vld [vmem:[%s5 + $0x8] sm:$0xff]
    %v957 = vld [vmem:[%s5 + $0x10] sm:$0xff]
    %v958 = vld [vmem:[%s5 + $0x18] sm:$0xff]
    %v959 = vld [vmem:[%s5 + $0x20] sm:$0xff]
    %v960 = vld [vmem:[%s5 + $0x28] sm:$0xff]
    %v961 = vld [vmem:[%s5 + $0x30] sm:$0xff]
    %v962 = vld [vmem:[%s5 + $0x38] sm:$0xff]
    %v963 = vld [vmem:[%s6] sm:$0x1]
    %v965 = vlaneseq
    %v966 = vshrl.u32 %v965, 7
    %v967 = vsub.s32 0, %v966
    %v968 = vrot.slane %v963, %v967
    %970 = vmatprep.subr.mxu0 0.0
    %971 = vmatpush1.msra.mxu0 %v955
    %972 = vmatprep.subr.mxu0 0.0
    %973 = vmatpush1.msra.mxu0 %v956
    %974 = vmatprep.subr.mxu0 0.0
    %975 = vmatpush1.msra.mxu0 %v957
    %976 = vmatprep.subr.mxu0 0.0
    %977 = vmatpush1.msra.mxu0 %v958
    %978 = vmatprep.subr.mxu0 0.0
    %979 = vmatpush1.msra.mxu0 %v959
    %980 = vmatprep.subr.mxu0 0.0
    %981 = vmatpush1.msra.mxu0 %v960
    %982 = vmatprep.subr.mxu0 0.0
    %983 = vmatpush1.msra.mxu0 %v961
    %984 = vmatprep.subr.mxu0 0.0
    %985 = vmatpush1.msra.mxu0 %v962
    %986 = vmatprep.subr.mxu0 0.0
    %987 = vmatpush1.msra.mxu0 0.0
    %988 = vmatprep.subr.mxu0 0.0
    %989 = vmatpush1.msra.mxu0 0.0
    %990 = vmatprep.subr.mxu0 0.0
    %991 = vmatpush1.msra.mxu0 0.0
    %992 = vmatprep.subr.mxu0 0.0
    %993 = vmatpush1.msra.mxu0 0.0
    %994 = vmatprep.subr.mxu0 0.0
    %995 = vmatpush1.msra.mxu0 0.0
    %996 = vmatprep.subr.mxu0 0.0
    %997 = vmatpush1.msra.mxu0 0.0
    %998 = vmatprep.subr.mxu0 0.0
    %999 = vmatpush1.msra.mxu0 0.0
    %1000 = vmatprep.subr.mxu0 0.0
    %1001 = vmatpush1.msra.mxu0 0.0
    %1002 = vmatprep.subr.mxu0 0.0
    %1003 = vmatpush1.msra.mxu0 0.0
    %1004 = vmatprep.subr.mxu0 0.0
    %1005 = vmatpush1.msra.mxu0 0.0
    %1006 = vmatprep.subr.mxu0 0.0
    %1007 = vmatpush1.msra.mxu0 0.0
    %1008 = vmatprep.subr.mxu0 0.0
    %1009 = vmatpush1.msra.mxu0 0.0
    %1010 = vmatprep.subr.mxu0 0.0
    %1011 = vmatpush1.msra.mxu0 0.0
    %1012 = vmatprep.subr.mxu0 0.0
    %1013 = vmatpush1.msra.mxu0 0.0
    %1014 = vmatprep.subr.mxu0 0.0
    %1015 = vmatpush1.msra.mxu0 0.0
    %1016 = vmatprep.subr.mxu0 0.0
    %1017 = vmatpush1.msra.mxu0 0.0
    %1018 = vmatprep.subr.mxu0 0.0
    %1019 = vmatpush1.msra.mxu0 0.0
    %1020 = vmatprep.subr.mxu0 0.0
    %1021 = vmatpush1.msra.mxu0 0.0
    %1022 = vmatprep.subr.mxu0 0.0
    %1023 = vmatpush1.msra.mxu0 0.0
    %1024 = vmatprep.subr.mxu0 0.0
    %1025 = vmatpush1.msra.mxu0 0.0
    %1026 = vmatprep.subr.mxu0 0.0
    %1027 = vmatpush1.msra.mxu0 0.0
    %1028 = vmatprep.subr.mxu0 0.0
    %1029 = vmatpush1.msra.mxu0 0.0
    %1030 = vmatprep.subr.mxu0 0.0
    %1031 = vmatpush1.msra.mxu0 0.0
    %1032 = vmatprep.subr.mxu0 0.0
    %1033 = vmatpush1.msra.mxu0 0.0
    %1034 = vmatprep.mubr.f32.mxu0 0.0
    %1035 = vmatmul.mubr.f32.gmra.mrb[0].mxu0 %v484
    %v1036 = vpop.f32.mrb[0].mxu0
    %v1037 = vadd.f32 %v968, %v1036
    %v1038 = vpop.f32.mrb[0].mxu0
    %1039 = vdwg.mxu0
    %v1040 = vld [vmem:[%s7] sm:$0xff]
    %v1041 = vld [vmem:[%s7 + $0x8] sm:$0xff]
    %v1042 = vld [vmem:[%s7 + $0x10] sm:$0xff]
    %v1043 = vld [vmem:[%s7 + $0x18] sm:$0xff]
    %v1044 = vld [vmem:[%s7 + $0x20] sm:$0xff]
    %v1045 = vld [vmem:[%s7 + $0x28] sm:$0xff]
    %v1046 = vld [vmem:[%s7 + $0x30] sm:$0xff]
    %v1047 = vld [vmem:[%s7 + $0x38] sm:$0xff]
    %v1048 = vld [vmem:[%s8] sm:$0x1]
    %v1050 = vlaneseq
    %v1051 = vshrl.u32 %v1050, 7
    %v1052 = vsub.s32 0, %v1051
    %v1053 = vrot.slane %v1048, %v1052
    %v1056 = vsel %vm104, %v470, 0
    %v1059 = vsel %vm104, %v437, 0
    %1061 = vmatprep.subr.mxu0 0.0
    %1062 = vmatpush1.msra.mxu0 %v1040
    %1063 = vmatprep.subr.mxu0 0.0
    %1064 = vmatpush1.msra.mxu0 %v1041
    %1065 = vmatprep.subr.mxu0 0.0
    %1066 = vmatpush1.msra.mxu0 %v1042
    %1067 = vmatprep.subr.mxu0 0.0
    %1068 = vmatpush1.msra.mxu0 %v1043
    %1069 = vmatprep.subr.mxu0 0.0
    %1070 = vmatpush1.msra.mxu0 %v1044
    %1071 = vmatprep.subr.mxu0 0.0
    %1072 = vmatpush1.msra.mxu0 %v1045
    %1073 = vmatprep.subr.mxu0 0.0
    %1074 = vmatpush1.msra.mxu0 %v1046
    %1075 = vmatprep.subr.mxu0 0.0
    %1076 = vmatpush1.msra.mxu0 %v1047
    %1077 = vmatprep.subr.mxu0 0.0
    %1078 = vmatpush1.msra.mxu0 0.0
    %1079 = vmatprep.subr.mxu0 0.0
    %1080 = vmatpush1.msra.mxu0 0.0
    %1081 = vmatprep.subr.mxu0 0.0
    %1082 = vmatpush1.msra.mxu0 0.0
    %1083 = vmatprep.subr.mxu0 0.0
    %1084 = vmatpush1.msra.mxu0 0.0
    %1085 = vmatprep.subr.mxu0 0.0
    %1086 = vmatpush1.msra.mxu0 0.0
    %1087 = vmatprep.subr.mxu0 0.0
    %1088 = vmatpush1.msra.mxu0 0.0
    %1089 = vmatprep.subr.mxu0 0.0
    %1090 = vmatpush1.msra.mxu0 0.0
    %1091 = vmatprep.subr.mxu0 0.0
    %1092 = vmatpush1.msra.mxu0 0.0
    %1093 = vmatprep.subr.mxu0 0.0
    %1094 = vmatpush1.msra.mxu0 0.0
    %1095 = vmatprep.subr.mxu0 0.0
    %1096 = vmatpush1.msra.mxu0 0.0
    %1097 = vmatprep.subr.mxu0 0.0
    %1098 = vmatpush1.msra.mxu0 0.0
    %1099 = vmatprep.subr.mxu0 0.0
    %1100 = vmatpush1.msra.mxu0 0.0
    %1101 = vmatprep.subr.mxu0 0.0
    %1102 = vmatpush1.msra.mxu0 0.0
    %1103 = vmatprep.subr.mxu0 0.0
    %1104 = vmatpush1.msra.mxu0 0.0
    %1105 = vmatprep.subr.mxu0 0.0
    %1106 = vmatpush1.msra.mxu0 0.0
    %1107 = vmatprep.subr.mxu0 0.0
    %1108 = vmatpush1.msra.mxu0 0.0
    %1109 = vmatprep.subr.mxu0 0.0
    %1110 = vmatpush1.msra.mxu0 0.0
    %1111 = vmatprep.subr.mxu0 0.0
    %1112 = vmatpush1.msra.mxu0 0.0
    %1113 = vmatprep.subr.mxu0 0.0
    %1114 = vmatpush1.msra.mxu0 0.0
    %1115 = vmatprep.subr.mxu0 0.0
    %1116 = vmatpush1.msra.mxu0 0.0
    %1117 = vmatprep.subr.mxu0 0.0
    %1118 = vmatpush1.msra.mxu0 0.0
    %1119 = vmatprep.subr.mxu0 0.0
    %1120 = vmatpush1.msra.mxu0 0.0
    %1121 = vmatprep.subr.mxu0 0.0
    %1122 = vmatpush1.msra.mxu0 0.0
    %1123 = vmatprep.subr.mxu0 0.0
    %1124 = vmatpush1.msra.mxu0 0.0
    %1125 = vmatprep.mubr.f32.mxu0 0.0
    %1126 = vmatmul.mubr.f32.gmra.mrb[0].mxu0 %v1056
    %v1127 = vpop.f32.mrb[0].mxu0
    %v1128 = vadd.f32 %v1053, %v1127
    %v1129 = vpop.f32.mrb[0].mxu0
    %1130 = vmatprep.mubr.f32.mxu0 0.0
    %1131 = vmatmul.mubr.f32.gmra.mrb[0].mxu0 %v1059
    %v1132 = vpop.f32.mrb[0].mxu0
    %v1133 = vadd.f32 %v1053, %v1132
    %v1134 = vpop.f32.mrb[0].mxu0
    %1135 = vdwg.mxu0
    %v1136 = vlaneseq
    %v1137 = vshrl.u32 %v1136, 7
    %v1138 = vsub.s32 0, %v1137
    %v1139 = vrot.slane %v1037, %v1138
    %v1140 = vadd.f32 %v1128, %v1139
    %v1141 = vxor.u32 %v1140, 2147483648
    %v1142 = vmul.f32 %v1141, 1.442695
    %v1143 = vpow.pop %v1142
    %v1144 = vadd.f32 %v1143, 1.0
    %v1145 = vrcp.pop %v1144
    %v1146 = vmul.f32 1.0, %v1145
    %v1147 = vmul.f32 %v1146, %v482
    %vm1148 = vcmask 517120
    %v1149 = vsel %vm1148, %v1147, 0.0
    %v1150 = vrot.slane %v1149, 4
    %v1151 = vadd.f32 %v1149, %v1150
    %v1152 = vrot.slane %v1151, 2
    %v1153 = vadd.f32 %v1151, %v1152
    %v1154 = vrot.slane %v1153, 1
    %v1155 = vadd.f32 %v1153, %v1154
    %v1156 = vadd.f32 %v954, %v1155
    %v1157 = vtanh.pop %v1156
    %v1158 = vmul.f32 %v801, %v1157
    %v1159 = vlaneseq
    %v1160 = vshrl.u32 %v1159, 7
    %v1161 = vsub.s32 1, %v1160
    %v1162 = vrot.slane %v1037, %v1161
    %v1163 = vadd.f32 %v1128, %v1162
    %v1164 = vxor.u32 %v1163, 2147483648
    %v1165 = vmul.f32 %v1164, 1.442695
    %v1166 = vpow.pop %v1165
    %v1167 = vadd.f32 %v1166, 1.0
    %v1168 = vrcp.pop %v1167
    %v1169 = vmul.f32 1.0, %v1168
    %v1170 = vmul.f32 %v1169, %v482
    %v1172 = vrot.slane %v1170, 2
    %v1174 = vsel %vm1148, %v1172, 0.0
    %v1175 = vrot.slane %v1174, 4
    %v1176 = vadd.f32 %v1174, %v1175
    %v1177 = vrot.slane %v1176, 2
    %v1178 = vadd.f32 %v1176, %v1177
    %v1179 = vrot.slane %v1178, 1
    %v1180 = vadd.f32 %v1178, %v1179
    %v1181 = vadd.f32 %v954, %v1180
    %v1182 = vlaneseq
    %v1183 = vshrl.u32 %v1182, 7
    %v1184 = vsub.s32 2, %v1183
    %v1185 = vrot.slane %v1037, %v1184
    %v1186 = vadd.f32 %v1128, %v1185
    %v1187 = vxor.u32 %v1186, 2147483648
    %v1188 = vmul.f32 %v1187, 1.442695
    %v1189 = vpow.pop %v1188
    %v1190 = vadd.f32 %v1189, 1.0
    %v1191 = vrcp.pop %v1190
    %v1192 = vmul.f32 1.0, %v1191
    %v1193 = vmul.f32 %v1192, %v482
    %v1195 = vrot.slane %v1193, 4
    %v1197 = vsel %vm1148, %v1195, 0.0
    %v1198 = vrot.slane %v1197, 4
    %v1199 = vadd.f32 %v1197, %v1198
    %v1200 = vrot.slane %v1199, 2
    %v1201 = vadd.f32 %v1199, %v1200
    %v1202 = vrot.slane %v1201, 1
    %v1203 = vadd.f32 %v1201, %v1202
    %v1204 = vadd.f32 %v954, %v1203
    %v1205 = vlaneseq
    %v1206 = vshrl.u32 %v1205, 7
    %v1207 = vsub.s32 3, %v1206
    %v1208 = vrot.slane %v1037, %v1207
    %v1209 = vadd.f32 %v1128, %v1208
    %v1210 = vxor.u32 %v1209, 2147483648
    %v1211 = vmul.f32 %v1210, 1.442695
    %v1212 = vpow.pop %v1211
    %v1213 = vadd.f32 %v1212, 1.0
    %v1214 = vrcp.pop %v1213
    %v1215 = vmul.f32 1.0, %v1214
    %v1216 = vmul.f32 %v1215, %v482
    %v1218 = vrot.slane %v1216, 6
    %v1220 = vsel %vm1148, %v1218, 0.0
    %v1221 = vrot.slane %v1220, 4
    %v1222 = vadd.f32 %v1220, %v1221
    %v1223 = vrot.slane %v1222, 2
    %v1224 = vadd.f32 %v1222, %v1223
    %v1225 = vrot.slane %v1224, 1
    %v1226 = vadd.f32 %v1224, %v1225
    %v1227 = vadd.f32 %v954, %v1226
    %v1228 = vlaneseq
    %v1229 = vshrl.u32 %v1228, 7
    %v1230 = vsub.s32 4, %v1229
    %v1231 = vrot.slane %v1037, %v1230
    %v1232 = vadd.f32 %v1133, %v1231
    %v1233 = vxor.u32 %v1232, 2147483648
    %v1234 = vmul.f32 %v1233, 1.442695
    %v1235 = vpow.pop %v1234
    %v1236 = vadd.f32 %v1235, 1.0
    %v1237 = vrcp.pop %v1236
    %v1238 = vmul.f32 1.0, %v1237
    %v1239 = vmul.f32 %v1238, %v475
    %v1240 = vsel %vm1148, %v1239, 0.0
    %v1241 = vrot.slane %v1240, 4
    %v1242 = vadd.f32 %v1240, %v1241
    %v1243 = vrot.slane %v1242, 2
    %v1244 = vadd.f32 %v1242, %v1243
    %v1245 = vrot.slane %v1244, 1
    %v1246 = vadd.f32 %v1244, %v1245
    %v1247 = vadd.f32 %v954, %v1246
    %v1248 = vld [vmem:[%s0 + $0x10] sm:$0x1]
    %v1249 = vadd.f32 %v1156, %v425
    %v1250 = vrot.slane %v425, 7
    %v1252 = vsel %vm454, %v1156, %v1250
    %v1253 = vrot.slane %v429, 7
    %v1255 = vsel %vm454, %v1158, %v1253
    %v1257 = vsel %vm104, %v1248, 0
    %1259 = vmatprep.subr.mxu0 0.0
    %1260 = vmatpush1.msra.mxu0 %v89
    %1261 = vmatprep.subr.mxu0 0.0
    %1262 = vmatpush1.msra.mxu0 %v90
    %1263 = vmatprep.subr.mxu0 0.0
    %1264 = vmatpush1.msra.mxu0 %v91
    %1265 = vmatprep.subr.mxu0 0.0
    %1266 = vmatpush1.msra.mxu0 %v92
    %1267 = vmatprep.subr.mxu0 0.0
    %1268 = vmatpush1.msra.mxu0 %v93
    %1269 = vmatprep.subr.mxu0 0.0
    %1270 = vmatpush1.msra.mxu0 %v94
    %1271 = vmatprep.subr.mxu0 0.0
    %1272 = vmatpush1.msra.mxu0 %v95
    %1273 = vmatprep.subr.mxu0 0.0
    %1274 = vmatpush1.msra.mxu0 %v96
    %1275 = vmatprep.subr.mxu0 0.0
    %1276 = vmatpush1.msra.mxu0 0.0
    %1277 = vmatprep.subr.mxu0 0.0
    %1278 = vmatpush1.msra.mxu0 0.0
    %1279 = vmatprep.subr.mxu0 0.0
    %1280 = vmatpush1.msra.mxu0 0.0
    %1281 = vmatprep.subr.mxu0 0.0
    %1282 = vmatpush1.msra.mxu0 0.0
    %1283 = vmatprep.subr.mxu0 0.0
    %1284 = vmatpush1.msra.mxu0 0.0
    %1285 = vmatprep.subr.mxu0 0.0
    %1286 = vmatpush1.msra.mxu0 0.0
    %1287 = vmatprep.subr.mxu0 0.0
    %1288 = vmatpush1.msra.mxu0 0.0
    %1289 = vmatprep.subr.mxu0 0.0
    %1290 = vmatpush1.msra.mxu0 0.0
    %1291 = vmatprep.subr.mxu0 0.0
    %1292 = vmatpush1.msra.mxu0 0.0
    %1293 = vmatprep.subr.mxu0 0.0
    %1294 = vmatpush1.msra.mxu0 0.0
    %1295 = vmatprep.subr.mxu0 0.0
    %1296 = vmatpush1.msra.mxu0 0.0
    %1297 = vmatprep.subr.mxu0 0.0
    %1298 = vmatpush1.msra.mxu0 0.0
    %1299 = vmatprep.subr.mxu0 0.0
    %1300 = vmatpush1.msra.mxu0 0.0
    %1301 = vmatprep.subr.mxu0 0.0
    %1302 = vmatpush1.msra.mxu0 0.0
    %1303 = vmatprep.subr.mxu0 0.0
    %1304 = vmatpush1.msra.mxu0 0.0
    %1305 = vmatprep.subr.mxu0 0.0
    %1306 = vmatpush1.msra.mxu0 0.0
    %1307 = vmatprep.subr.mxu0 0.0
    %1308 = vmatpush1.msra.mxu0 0.0
    %1309 = vmatprep.subr.mxu0 0.0
    %1310 = vmatpush1.msra.mxu0 0.0
    %1311 = vmatprep.subr.mxu0 0.0
    %1312 = vmatpush1.msra.mxu0 0.0
    %1313 = vmatprep.subr.mxu0 0.0
    %1314 = vmatpush1.msra.mxu0 0.0
    %1315 = vmatprep.subr.mxu0 0.0
    %1316 = vmatpush1.msra.mxu0 0.0
    %1317 = vmatprep.subr.mxu0 0.0
    %1318 = vmatpush1.msra.mxu0 0.0
    %1319 = vmatprep.subr.mxu0 0.0
    %1320 = vmatpush1.msra.mxu0 0.0
    %1321 = vmatprep.subr.mxu0 0.0
    %1322 = vmatpush1.msra.mxu0 0.0
    %1323 = vmatprep.mubr.f32.mxu0 0.0
    %1324 = vmatmul.mubr.f32.gmra.mrb[0].mxu0 %v1257
    %v1325 = vpop.f32.mrb[0].mxu0
    %v1326 = vadd.f32 %v97, %v1325
    %v1327 = vpop.f32.mrb[0].mxu0
    %1328 = vdwg.mxu0
    %v1330 = vsel %vm104, %v1249, 0
    %1332 = vmatprep.subr.mxu0 0.0
    %1333 = vmatpush1.msra.mxu0 %v556
    %1334 = vmatprep.subr.mxu0 0.0
    %1335 = vmatpush1.msra.mxu0 %v557
    %1336 = vmatprep.subr.mxu0 0.0
    %1337 = vmatpush1.msra.mxu0 %v558
    %1338 = vmatprep.subr.mxu0 0.0
    %1339 = vmatpush1.msra.mxu0 %v559
    %1340 = vmatprep.subr.mxu0 0.0
    %1341 = vmatpush1.msra.mxu0 %v560
    %1342 = vmatprep.subr.mxu0 0.0
    %1343 = vmatpush1.msra.mxu0 %v561
    %1344 = vmatprep.subr.mxu0 0.0
    %1345 = vmatpush1.msra.mxu0 %v562
    %1346 = vmatprep.subr.mxu0 0.0
    %1347 = vmatpush1.msra.mxu0 %v563
    %1348 = vmatprep.subr.mxu0 0.0
    %1349 = vmatpush1.msra.mxu0 0.0
    %1350 = vmatprep.subr.mxu0 0.0
    %1351 = vmatpush1.msra.mxu0 0.0
    %1352 = vmatprep.subr.mxu0 0.0
    %1353 = vmatpush1.msra.mxu0 0.0
    %1354 = vmatprep.subr.mxu0 0.0
    %1355 = vmatpush1.msra.mxu0 0.0
    %1356 = vmatprep.subr.mxu0 0.0
    %1357 = vmatpush1.msra.mxu0 0.0
    %1358 = vmatprep.subr.mxu0 0.0
    %1359 = vmatpush1.msra.mxu0 0.0
    %1360 = vmatprep.subr.mxu0 0.0
    %1361 = vmatpush1.msra.mxu0 0.0
    %1362 = vmatprep.subr.mxu0 0.0
    %1363 = vmatpush1.msra.mxu0 0.0
    %1364 = vmatprep.subr.mxu0 0.0
    %1365 = vmatpush1.msra.mxu0 0.0
    %1366 = vmatprep.subr.mxu0 0.0
    %1367 = vmatpush1.msra.mxu0 0.0
    %1368 = vmatprep.subr.mxu0 0.0
    %1369 = vmatpush1.msra.mxu0 0.0
    %1370 = vmatprep.subr.mxu0 0.0
    %1371 = vmatpush1.msra.mxu0 0.0
    %1372 = vmatprep.subr.mxu0 0.0
    %1373 = vmatpush1.msra.mxu0 0.0
    %1374 = vmatprep.subr.mxu0 0.0
    %1375 = vmatpush1.msra.mxu0 0.0
    %1376 = vmatprep.subr.mxu0 0.0
    %1377 = vmatpush1.msra.mxu0 0.0
    %1378 = vmatprep.subr.mxu0 0.0
    %1379 = vmatpush1.msra.mxu0 0.0
    %1380 = vmatprep.subr.mxu0 0.0
    %1381 = vmatpush1.msra.mxu0 0.0
    %1382 = vmatprep.subr.mxu0 0.0
    %1383 = vmatpush1.msra.mxu0 0.0
    %1384 = vmatprep.subr.mxu0 0.0
    %1385 = vmatpush1.msra.mxu0 0.0
    %1386 = vmatprep.subr.mxu0 0.0
    %1387 = vmatpush1.msra.mxu0 0.0
    %1388 = vmatprep.subr.mxu0 0.0
    %1389 = vmatpush1.msra.mxu0 0.0
    %1390 = vmatprep.subr.mxu0 0.0
    %1391 = vmatpush1.msra.mxu0 0.0
    %1392 = vmatprep.subr.mxu0 0.0
    %1393 = vmatpush1.msra.mxu0 0.0
    %1394 = vmatprep.subr.mxu0 0.0
    %1395 = vmatpush1.msra.mxu0 0.0
    %1396 = vmatprep.mubr.f32.mxu0 0.0
    %1397 = vmatmul.mubr.f32.gmra.mrb[0].mxu0 %v1330
    %v1398 = vpop.f32.mrb[0].mxu0
    %v1399 = vadd.f32 0.0, %v1398
    %v1400 = vpop.f32.mrb[0].mxu0
    %1401 = vdwg.mxu0
    %v1402 = vadd.f32 %v1326, %v1399
    %v1403 = vadd.f32 %v1402, %v186
    %v1404 = vxor.u32 %v1403, 2147483648
    %v1405 = vmul.f32 %v1404, 1.442695
    %v1406 = vpow.pop %v1405
    %v1407 = vadd.f32 %v1406, 1.0
    %v1408 = vrcp.pop %v1407
    %v1409 = vmul.f32 1.0, %v1408
    %1410 = vmatprep.subr.mxu0 0.0
    %1411 = vmatpush1.msra.mxu0 %v322
    %1412 = vmatprep.subr.mxu0 0.0
    %1413 = vmatpush1.msra.mxu0 %v323
    %1414 = vmatprep.subr.mxu0 0.0
    %1415 = vmatpush1.msra.mxu0 %v324
    %1416 = vmatprep.subr.mxu0 0.0
    %1417 = vmatpush1.msra.mxu0 %v325
    %1418 = vmatprep.subr.mxu0 0.0
    %1419 = vmatpush1.msra.mxu0 %v326
    %1420 = vmatprep.subr.mxu0 0.0
    %1421 = vmatpush1.msra.mxu0 %v327
    %1422 = vmatprep.subr.mxu0 0.0
    %1423 = vmatpush1.msra.mxu0 %v328
    %1424 = vmatprep.subr.mxu0 0.0
    %1425 = vmatpush1.msra.mxu0 %v329
    %1426 = vmatprep.subr.mxu0 0.0
    %1427 = vmatpush1.msra.mxu0 0.0
    %1428 = vmatprep.subr.mxu0 0.0
    %1429 = vmatpush1.msra.mxu0 0.0
    %1430 = vmatprep.subr.mxu0 0.0
    %1431 = vmatpush1.msra.mxu0 0.0
    %1432 = vmatprep.subr.mxu0 0.0
    %1433 = vmatpush1.msra.mxu0 0.0
    %1434 = vmatprep.subr.mxu0 0.0
    %1435 = vmatpush1.msra.mxu0 0.0
    %1436 = vmatprep.subr.mxu0 0.0
    %1437 = vmatpush1.msra.mxu0 0.0
    %1438 = vmatprep.subr.mxu0 0.0
    %1439 = vmatpush1.msra.mxu0 0.0
    %1440 = vmatprep.subr.mxu0 0.0
    %1441 = vmatpush1.msra.mxu0 0.0
    %1442 = vmatprep.subr.mxu0 0.0
    %1443 = vmatpush1.msra.mxu0 0.0
    %1444 = vmatprep.subr.mxu0 0.0
    %1445 = vmatpush1.msra.mxu0 0.0
    %1446 = vmatprep.subr.mxu0 0.0
    %1447 = vmatpush1.msra.mxu0 0.0
    %1448 = vmatprep.subr.mxu0 0.0
    %1449 = vmatpush1.msra.mxu0 0.0
    %1450 = vmatprep.subr.mxu0 0.0
    %1451 = vmatpush1.msra.mxu0 0.0
    %1452 = vmatprep.subr.mxu0 0.0
    %1453 = vmatpush1.msra.mxu0 0.0
    %1454 = vmatprep.subr.mxu0 0.0
    %1455 = vmatpush1.msra.mxu0 0.0
    %1456 = vmatprep.subr.mxu0 0.0
    %1457 = vmatpush1.msra.mxu0 0.0
    %1458 = vmatprep.subr.mxu0 0.0
    %1459 = vmatpush1.msra.mxu0 0.0
    %1460 = vmatprep.subr.mxu0 0.0
    %1461 = vmatpush1.msra.mxu0 0.0
    %1462 = vmatprep.subr.mxu0 0.0
    %1463 = vmatpush1.msra.mxu0 0.0
    %1464 = vmatprep.subr.mxu0 0.0
    %1465 = vmatpush1.msra.mxu0 0.0
    %1466 = vmatprep.subr.mxu0 0.0
    %1467 = vmatpush1.msra.mxu0 0.0
    %1468 = vmatprep.subr.mxu0 0.0
    %1469 = vmatpush1.msra.mxu0 0.0
    %1470 = vmatprep.subr.mxu0 0.0
    %1471 = vmatpush1.msra.mxu0 0.0
    %1472 = vmatprep.subr.mxu0 0.0
    %1473 = vmatpush1.msra.mxu0 0.0
    %1474 = vmatprep.mubr.f32.mxu0 0.0
    %1475 = vmatmul.mubr.f32.gmra.mrb[0].mxu0 %v1257
    %v1476 = vpop.f32.mrb[0].mxu0
    %v1477 = vadd.f32 %v331, %v1476
    %v1478 = vpop.f32.mrb[0].mxu0
    %1479 = vdwg.mxu0
    %1480 = vmatprep.subr.mxu0 0.0
    %1481 = vmatpush1.msra.mxu0 %v873
    %1482 = vmatprep.subr.mxu0 0.0
    %1483 = vmatpush1.msra.mxu0 %v874
    %1484 = vmatprep.subr.mxu0 0.0
    %1485 = vmatpush1.msra.mxu0 %v875
    %1486 = vmatprep.subr.mxu0 0.0
    %1487 = vmatpush1.msra.mxu0 %v876
    %1488 = vmatprep.subr.mxu0 0.0
    %1489 = vmatpush1.msra.mxu0 %v877
    %1490 = vmatprep.subr.mxu0 0.0
    %1491 = vmatpush1.msra.mxu0 %v878
    %1492 = vmatprep.subr.mxu0 0.0
    %1493 = vmatpush1.msra.mxu0 %v879
    %1494 = vmatprep.subr.mxu0 0.0
    %1495 = vmatpush1.msra.mxu0 %v880
    %1496 = vmatprep.subr.mxu0 0.0
    %1497 = vmatpush1.msra.mxu0 0.0
    %1498 = vmatprep.subr.mxu0 0.0
    %1499 = vmatpush1.msra.mxu0 0.0
    %1500 = vmatprep.subr.mxu0 0.0
    %1501 = vmatpush1.msra.mxu0 0.0
    %1502 = vmatprep.subr.mxu0 0.0
    %1503 = vmatpush1.msra.mxu0 0.0
    %1504 = vmatprep.subr.mxu0 0.0
    %1505 = vmatpush1.msra.mxu0 0.0
    %1506 = vmatprep.subr.mxu0 0.0
    %1507 = vmatpush1.msra.mxu0 0.0
    %1508 = vmatprep.subr.mxu0 0.0
    %1509 = vmatpush1.msra.mxu0 0.0
    %1510 = vmatprep.subr.mxu0 0.0
    %1511 = vmatpush1.msra.mxu0 0.0
    %1512 = vmatprep.subr.mxu0 0.0
    %1513 = vmatpush1.msra.mxu0 0.0
    %1514 = vmatprep.subr.mxu0 0.0
    %1515 = vmatpush1.msra.mxu0 0.0
    %1516 = vmatprep.subr.mxu0 0.0
    %1517 = vmatpush1.msra.mxu0 0.0
    %1518 = vmatprep.subr.mxu0 0.0
    %1519 = vmatpush1.msra.mxu0 0.0
    %1520 = vmatprep.subr.mxu0 0.0
    %1521 = vmatpush1.msra.mxu0 0.0
    %1522 = vmatprep.subr.mxu0 0.0
    %1523 = vmatpush1.msra.mxu0 0.0
    %1524 = vmatprep.subr.mxu0 0.0
    %1525 = vmatpush1.msra.mxu0 0.0
    %1526 = vmatprep.subr.mxu0 0.0
    %1527 = vmatpush1.msra.mxu0 0.0
    %1528 = vmatprep.subr.mxu0 0.0
    %1529 = vmatpush1.msra.mxu0 0.0
    %1530 = vmatprep.subr.mxu0 0.0
    %1531 = vmatpush1.msra.mxu0 0.0
    %1532 = vmatprep.subr.mxu0 0.0
    %1533 = vmatpush1.msra.mxu0 0.0
    %1534 = vmatprep.subr.mxu0 0.0
    %1535 = vmatpush1.msra.mxu0 0.0
    %1536 = vmatprep.subr.mxu0 0.0
    %1537 = vmatpush1.msra.mxu0 0.0
    %1538 = vmatprep.subr.mxu0 0.0
    %1539 = vmatpush1.msra.mxu0 0.0
    %1540 = vmatprep.subr.mxu0 0.0
    %1541 = vmatpush1.msra.mxu0 0.0
    %1542 = vmatprep.subr.mxu0 0.0
    %1543 = vmatpush1.msra.mxu0 0.0
    %1544 = vmatprep.mubr.f32.mxu0 0.0
    %1545 = vmatmul.mubr.f32.gmra.mrb[0].mxu0 %v1330
    %v1546 = vpop.f32.mrb[0].mxu0
    %v1547 = vadd.f32 0.0, %v1546
    %v1548 = vpop.f32.mrb[0].mxu0
    %1549 = vdwg.mxu0
    %v1550 = vadd.f32 %v1477, %v1547
    %v1551 = vadd.f32 %v1550, %v414
    %v1552 = vtanh.pop %v1551
    %v1553 = vmul.f32 %v1409, %v1552
    %1554 = vmatprep.subr.mxu0 0.0
    %1555 = vmatpush1.msra.mxu0 %v955
    %1556 = vmatprep.subr.mxu0 0.0
    %1557 = vmatpush1.msra.mxu0 %v956
    %1558 = vmatprep.subr.mxu0 0.0
    %1559 = vmatpush1.msra.mxu0 %v957
    %1560 = vmatprep.subr.mxu0 0.0
    %1561 = vmatpush1.msra.mxu0 %v958
    %1562 = vmatprep.subr.mxu0 0.0
    %1563 = vmatpush1.msra.mxu0 %v959
    %1564 = vmatprep.subr.mxu0 0.0
    %1565 = vmatpush1.msra.mxu0 %v960
    %1566 = vmatprep.subr.mxu0 0.0
    %1567 = vmatpush1.msra.mxu0 %v961
    %1568 = vmatprep.subr.mxu0 0.0
    %1569 = vmatpush1.msra.mxu0 %v962
    %1570 = vmatprep.subr.mxu0 0.0
    %1571 = vmatpush1.msra.mxu0 0.0
    %1572 = vmatprep.subr.mxu0 0.0
    %1573 = vmatpush1.msra.mxu0 0.0
    %1574 = vmatprep.subr.mxu0 0.0
    %1575 = vmatpush1.msra.mxu0 0.0
    %1576 = vmatprep.subr.mxu0 0.0
    %1577 = vmatpush1.msra.mxu0 0.0
    %1578 = vmatprep.subr.mxu0 0.0
    %1579 = vmatpush1.msra.mxu0 0.0
    %1580 = vmatprep.subr.mxu0 0.0
    %1581 = vmatpush1.msra.mxu0 0.0
    %1582 = vmatprep.subr.mxu0 0.0
    %1583 = vmatpush1.msra.mxu0 0.0
    %1584 = vmatprep.subr.mxu0 0.0
    %1585 = vmatpush1.msra.mxu0 0.0
    %1586 = vmatprep.subr.mxu0 0.0
    %1587 = vmatpush1.msra.mxu0 0.0
    %1588 = vmatprep.subr.mxu0 0.0
    %1589 = vmatpush1.msra.mxu0 0.0
    %1590 = vmatprep.subr.mxu0 0.0
    %1591 = vmatpush1.msra.mxu0 0.0
    %1592 = vmatprep.subr.mxu0 0.0
    %1593 = vmatpush1.msra.mxu0 0.0
    %1594 = vmatprep.subr.mxu0 0.0
    %1595 = vmatpush1.msra.mxu0 0.0
    %1596 = vmatprep.subr.mxu0 0.0
    %1597 = vmatpush1.msra.mxu0 0.0
    %1598 = vmatprep.subr.mxu0 0.0
    %1599 = vmatpush1.msra.mxu0 0.0
    %1600 = vmatprep.subr.mxu0 0.0
    %1601 = vmatpush1.msra.mxu0 0.0
    %1602 = vmatprep.subr.mxu0 0.0
    %1603 = vmatpush1.msra.mxu0 0.0
    %1604 = vmatprep.subr.mxu0 0.0
    %1605 = vmatpush1.msra.mxu0 0.0
    %1606 = vmatprep.subr.mxu0 0.0
    %1607 = vmatpush1.msra.mxu0 0.0
    %1608 = vmatprep.subr.mxu0 0.0
    %1609 = vmatpush1.msra.mxu0 0.0
    %1610 = vmatprep.subr.mxu0 0.0
    %1611 = vmatpush1.msra.mxu0 0.0
    %1612 = vmatprep.subr.mxu0 0.0
    %1613 = vmatpush1.msra.mxu0 0.0
    %1614 = vmatprep.subr.mxu0 0.0
    %1615 = vmatpush1.msra.mxu0 0.0
    %1616 = vmatprep.subr.mxu0 0.0
    %1617 = vmatpush1.msra.mxu0 0.0
    %1618 = vmatprep.mubr.f32.mxu0 0.0
    %1619 = vmatmul.mubr.f32.gmra.mrb[0].mxu0 %v1257
    %v1620 = vpop.f32.mrb[0].mxu0
    %v1621 = vadd.f32 %v963, %v1620
    %v1622 = vpop.f32.mrb[0].mxu0
    %1623 = vdwg.mxu0
    %v1625 = vsel %vm104, %v1252, 0
    %1627 = vmatprep.subr.mxu0 0.0
    %1628 = vmatpush1.msra.mxu0 %v1040
    %1629 = vmatprep.subr.mxu0 0.0
    %1630 = vmatpush1.msra.mxu0 %v1041
    %1631 = vmatprep.subr.mxu0 0.0
    %1632 = vmatpush1.msra.mxu0 %v1042
    %1633 = vmatprep.subr.mxu0 0.0
    %1634 = vmatpush1.msra.mxu0 %v1043
    %1635 = vmatprep.subr.mxu0 0.0
    %1636 = vmatpush1.msra.mxu0 %v1044
    %1637 = vmatprep.subr.mxu0 0.0
    %1638 = vmatpush1.msra.mxu0 %v1045
    %1639 = vmatprep.subr.mxu0 0.0
    %1640 = vmatpush1.msra.mxu0 %v1046
    %1641 = vmatprep.subr.mxu0 0.0
    %1642 = vmatpush1.msra.mxu0 %v1047
    %1643 = vmatprep.subr.mxu0 0.0
    %1644 = vmatpush1.msra.mxu0 0.0
    %1645 = vmatprep.subr.mxu0 0.0
    %1646 = vmatpush1.msra.mxu0 0.0
    %1647 = vmatprep.subr.mxu0 0.0
    %1648 = vmatpush1.msra.mxu0 0.0
    %1649 = vmatprep.subr.mxu0 0.0
    %1650 = vmatpush1.msra.mxu0 0.0
    %1651 = vmatprep.subr.mxu0 0.0
    %1652 = vmatpush1.msra.mxu0 0.0
    %1653 = vmatprep.subr.mxu0 0.0
    %1654 = vmatpush1.msra.mxu0 0.0
    %1655 = vmatprep.subr.mxu0 0.0
    %1656 = vmatpush1.msra.mxu0 0.0
    %1657 = vmatprep.subr.mxu0 0.0
    %1658 = vmatpush1.msra.mxu0 0.0
    %1659 = vmatprep.subr.mxu0 0.0
    %1660 = vmatpush1.msra.mxu0 0.0
    %1661 = vmatprep.subr.mxu0 0.0
    %1662 = vmatpush1.msra.mxu0 0.0
    %1663 = vmatprep.subr.mxu0 0.0
    %1664 = vmatpush1.msra.mxu0 0.0
    %1665 = vmatprep.subr.mxu0 0.0
    %1666 = vmatpush1.msra.mxu0 0.0
    %1667 = vmatprep.subr.mxu0 0.0
    %1668 = vmatpush1.msra.mxu0 0.0
    %1669 = vmatprep.subr.mxu0 0.0
    %1670 = vmatpush1.msra.mxu0 0.0
    %1671 = vmatprep.subr.mxu0 0.0
    %1672 = vmatpush1.msra.mxu0 0.0
    %1673 = vmatprep.subr.mxu0 0.0
    %1674 = vmatpush1.msra.mxu0 0.0
    %1675 = vmatprep.subr.mxu0 0.0
    %1676 = vmatpush1.msra.mxu0 0.0
    %1677 = vmatprep.subr.mxu0 0.0
    %1678 = vmatpush1.msra.mxu0 0.0
    %1679 = vmatprep.subr.mxu0 0.0
    %1680 = vmatpush1.msra.mxu0 0.0
    %1681 = vmatprep.subr.mxu0 0.0
    %1682 = vmatpush1.msra.mxu0 0.0
    %1683 = vmatprep.subr.mxu0 0.0
    %1684 = vmatpush1.msra.mxu0 0.0
    %1685 = vmatprep.subr.mxu0 0.0
    %1686 = vmatpush1.msra.mxu0 0.0
    %1687 = vmatprep.subr.mxu0 0.0
    %1688 = vmatpush1.msra.mxu0 0.0
    %1689 = vmatprep.subr.mxu0 0.0
    %1690 = vmatpush1.msra.mxu0 0.0
    %1691 = vmatprep.mubr.f32.mxu0 0.0
    %1692 = vmatmul.mubr.f32.gmra.mrb[0].mxu0 %v1625
    %v1693 = vpop.f32.mrb[0].mxu0
    %v1694 = vadd.f32 %v1053, %v1693
    %v1695 = vpop.f32.mrb[0].mxu0
    %1696 = vdwg.mxu0
    %v1697 = vlaneseq
    %v1698 = vshrl.u32 %v1697, 7
    %v1699 = vsub.s32 0, %v1698
    %v1700 = vrot.slane %v1621, %v1699
    %v1701 = vadd.f32 %v1694, %v1700
    %v1702 = vxor.u32 %v1701, 2147483648
    %v1703 = vmul.f32 %v1702, 1.442695
    %v1704 = vpow.pop %v1703
    %v1705 = vadd.f32 %v1704, 1.0
    %v1706 = vrcp.pop %v1705
    %v1707 = vmul.f32 1.0, %v1706
    %v1708 = vmul.f32 %v1707, %v1255
    %v1709 = vsel %vm1148, %v1708, 0.0
    %v1710 = vrot.slane %v1709, 4
    %v1711 = vadd.f32 %v1709, %v1710
    %v1712 = vrot.slane %v1711, 2
    %v1713 = vadd.f32 %v1711, %v1712
    %v1714 = vrot.slane %v1713, 1
    %v1715 = vadd.f32 %v1713, %v1714
    %v1716 = vadd.f32 %v1553, %v1715
    %v1717 = vld [vmem:[%s25] sm:$0x1]
    %v1719 = vrot.slane %v1181, 1
    %v1722 = vrot.slane %v1227, 2
    %v1724 = vsel %vm454, %v1719, %v1722
    %v1726 = vlaneseq
    %v1727 = vshrl.u32 %v1726, 7
    %v1728 = vsub.s32 0, %v1727
    %v1729 = vrot.slane %v1717, %v1728
    %v1731 = vsel %vm454, %v1717, %v1729
    %v1732 = vld [vmem:[%s9] sm:$0xff]
    %v1733 = vld [vmem:[%s9 + $0x8] sm:$0xff]
    %v1734 = vld [vmem:[%s9 + $0x10] sm:$0xff]
    %v1735 = vld [vmem:[%s9 + $0x18] sm:$0xff]
    %v1736 = vld [vmem:[%s9 + $0x20] sm:$0xff]
    %v1737 = vld [vmem:[%s9 + $0x28] sm:$0xff]
    %v1738 = vld [vmem:[%s9 + $0x30] sm:$0xff]
    %v1739 = vld [vmem:[%s9 + $0x38] sm:$0xff]
    %v1740 = vld [vmem:[%s10] sm:$0xff]
    %v1741 = vld [vmem:[%s10 + $0x8] sm:$0xff]
    %v1742 = vld [vmem:[%s10 + $0x10] sm:$0xff]
    %v1743 = vld [vmem:[%s10 + $0x18] sm:$0xff]
    %vm1744 = vcmask 261120
    %v1746 = vsel %vm1744, 0.0, 0
    %1748 = vmatprep.subr.mxu0 0.0
    %1749 = vmatpush1.msra.mxu0 %v1740
    %1750 = vmatprep.subr.mxu0 0.0
    %1751 = vmatpush1.msra.mxu0 %v1741
    %1752 = vmatprep.subr.mxu0 0.0
    %1753 = vmatpush1.msra.mxu0 %v1742
    %1754 = vmatprep.subr.mxu0 0.0
    %1755 = vmatpush1.msra.mxu0 %v1743
    %1756 = vmatprep.subr.mxu0 0.0
    %1757 = vmatpush1.msra.mxu0 0.0
    %1758 = vmatprep.subr.mxu0 0.0
    %1759 = vmatpush1.msra.mxu0 0.0
    %1760 = vmatprep.subr.mxu0 0.0
    %1761 = vmatpush1.msra.mxu0 0.0
    %1762 = vmatprep.subr.mxu0 0.0
    %1763 = vmatpush1.msra.mxu0 0.0
    %1764 = vmatprep.subr.mxu0 0.0
    %1765 = vmatpush1.msra.mxu0 0.0
    %1766 = vmatprep.subr.mxu0 0.0
    %1767 = vmatpush1.msra.mxu0 0.0
    %1768 = vmatprep.subr.mxu0 0.0
    %1769 = vmatpush1.msra.mxu0 0.0
    %1770 = vmatprep.subr.mxu0 0.0
    %1771 = vmatpush1.msra.mxu0 0.0
    %1772 = vmatprep.subr.mxu0 0.0
    %1773 = vmatpush1.msra.mxu0 0.0
    %1774 = vmatprep.subr.mxu0 0.0
    %1775 = vmatpush1.msra.mxu0 0.0
    %1776 = vmatprep.subr.mxu0 0.0
    %1777 = vmatpush1.msra.mxu0 0.0
    %1778 = vmatprep.subr.mxu0 0.0
    %1779 = vmatpush1.msra.mxu0 0.0
    %1780 = vmatprep.subr.mxu0 0.0
    %1781 = vmatpush1.msra.mxu0 0.0
    %1782 = vmatprep.subr.mxu0 0.0
    %1783 = vmatpush1.msra.mxu0 0.0
    %1784 = vmatprep.subr.mxu0 0.0
    %1785 = vmatpush1.msra.mxu0 0.0
    %1786 = vmatprep.subr.mxu0 0.0
    %1787 = vmatpush1.msra.mxu0 0.0
    %1788 = vmatprep.subr.mxu0 0.0
    %1789 = vmatpush1.msra.mxu0 0.0
    %1790 = vmatprep.subr.mxu0 0.0
    %1791 = vmatpush1.msra.mxu0 0.0
    %1792 = vmatprep.subr.mxu0 0.0
    %1793 = vmatpush1.msra.mxu0 0.0
    %1794 = vmatprep.subr.mxu0 0.0
    %1795 = vmatpush1.msra.mxu0 0.0
    %1796 = vmatprep.subr.mxu0 0.0
    %1797 = vmatpush1.msra.mxu0 0.0
    %1798 = vmatprep.subr.mxu0 0.0
    %1799 = vmatpush1.msra.mxu0 0.0
    %1800 = vmatprep.subr.mxu0 0.0
    %1801 = vmatpush1.msra.mxu0 0.0
    %1802 = vmatprep.subr.mxu0 0.0
    %1803 = vmatpush1.msra.mxu0 0.0
    %1804 = vmatprep.subr.mxu0 0.0
    %1805 = vmatpush1.msra.mxu0 0.0
    %1806 = vmatprep.subr.mxu0 0.0
    %1807 = vmatpush1.msra.mxu0 0.0
    %1808 = vmatprep.subr.mxu0 0.0
    %1809 = vmatpush1.msra.mxu0 0.0
    %1810 = vmatprep.subr.mxu0 0.0
    %1811 = vmatpush1.msra.mxu0 0.0
    %1812 = vmatprep.mubr.f32.mxu0 0.0
    %1813 = vmatmul.mubr.f32.gmra.mrb[0].mxu0 %v1746
    %v1814 = vpop.f32.mrb[0].mxu0
    %v1815 = vadd.f32 0.0, %v1814
    %v1816 = vpop.f32.mrb[0].mxu0
    %1817 = vdwg.mxu0
    %v1819 = vsel %vm104, %v1724, 0
    %1821 = vmatprep.subr.mxu0 0.0
    %1822 = vmatpush1.msra.mxu0 %v1732
    %1823 = vmatprep.subr.mxu0 0.0
    %1824 = vmatpush1.msra.mxu0 %v1733
    %1825 = vmatprep.subr.mxu0 0.0
    %1826 = vmatpush1.msra.mxu0 %v1734
    %1827 = vmatprep.subr.mxu0 0.0
    %1828 = vmatpush1.msra.mxu0 %v1735
    %1829 = vmatprep.subr.mxu0 0.0
    %1830 = vmatpush1.msra.mxu0 %v1736
    %1831 = vmatprep.subr.mxu0 0.0
    %1832 = vmatpush1.msra.mxu0 %v1737
    %1833 = vmatprep.subr.mxu0 0.0
    %1834 = vmatpush1.msra.mxu0 %v1738
    %1835 = vmatprep.subr.mxu0 0.0
    %1836 = vmatpush1.msra.mxu0 %v1739
    %1837 = vmatprep.subr.mxu0 0.0
    %1838 = vmatpush1.msra.mxu0 0.0
    %1839 = vmatprep.subr.mxu0 0.0
    %1840 = vmatpush1.msra.mxu0 0.0
    %1841 = vmatprep.subr.mxu0 0.0
    %1842 = vmatpush1.msra.mxu0 0.0
    %1843 = vmatprep.subr.mxu0 0.0
    %1844 = vmatpush1.msra.mxu0 0.0
    %1845 = vmatprep.subr.mxu0 0.0
    %1846 = vmatpush1.msra.mxu0 0.0
    %1847 = vmatprep.subr.mxu0 0.0
    %1848 = vmatpush1.msra.mxu0 0.0
    %1849 = vmatprep.subr.mxu0 0.0
    %1850 = vmatpush1.msra.mxu0 0.0
    %1851 = vmatprep.subr.mxu0 0.0
    %1852 = vmatpush1.msra.mxu0 0.0
    %1853 = vmatprep.subr.mxu0 0.0
    %1854 = vmatpush1.msra.mxu0 0.0
    %1855 = vmatprep.subr.mxu0 0.0
    %1856 = vmatpush1.msra.mxu0 0.0
    %1857 = vmatprep.subr.mxu0 0.0
    %1858 = vmatpush1.msra.mxu0 0.0
    %1859 = vmatprep.subr.mxu0 0.0
    %1860 = vmatpush1.msra.mxu0 0.0
    %1861 = vmatprep.subr.mxu0 0.0
    %1862 = vmatpush1.msra.mxu0 0.0
    %1863 = vmatprep.subr.mxu0 0.0
    %1864 = vmatpush1.msra.mxu0 0.0
    %1865 = vmatprep.subr.mxu0 0.0
    %1866 = vmatpush1.msra.mxu0 0.0
    %1867 = vmatprep.subr.mxu0 0.0
    %1868 = vmatpush1.msra.mxu0 0.0
    %1869 = vmatprep.subr.mxu0 0.0
    %1870 = vmatpush1.msra.mxu0 0.0
    %1871 = vmatprep.subr.mxu0 0.0
    %1872 = vmatpush1.msra.mxu0 0.0
    %1873 = vmatprep.subr.mxu0 0.0
    %1874 = vmatpush1.msra.mxu0 0.0
    %1875 = vmatprep.subr.mxu0 0.0
    %1876 = vmatpush1.msra.mxu0 0.0
    %1877 = vmatprep.subr.mxu0 0.0
    %1878 = vmatpush1.msra.mxu0 0.0
    %1879 = vmatprep.subr.mxu0 0.0
    %1880 = vmatpush1.msra.mxu0 0.0
    %1881 = vmatprep.subr.mxu0 0.0
    %1882 = vmatpush1.msra.mxu0 0.0
    %1883 = vmatprep.subr.mxu0 0.0
    %1884 = vmatpush1.msra.mxu0 0.0
    %1885 = vmatprep.mubr.f32.mxu0 0.0
    %1886 = vmatmul.mubr.f32.gmra.mrb[0].mxu0 %v1819
    %v1887 = vpop.f32.mrb[0].mxu0
    %v1888 = vadd.f32 %v1815, %v1887
    %v1889 = vpop.f32.mrb[0].mxu0
    %1890 = vdwg.mxu0
    %v1891 = vld [vmem:[%s11] sm:$0x1]
    %v1893 = vlaneseq
    %v1894 = vshrl.u32 %v1893, 7
    %v1895 = vsub.s32 0, %v1894
    %v1896 = vrot.slane %v1891, %v1895
    %v1898 = vadd.f32 %v1888, %v1896
    %v1899 = vxor.u32 %v1898, 2147483648
    %v1900 = vmul.f32 %v1899, 1.442695
    %v1901 = vpow.pop %v1900
    %v1902 = vadd.f32 %v1901, 1.0
    %v1903 = vrcp.pop %v1902
    %v1904 = vmul.f32 1.0, %v1903
    %s1905 = scalar_lea.vmem %s9, 64
    %v1906 = vld [vmem:[%s1905] sm:$0xff]
    %v1907 = vld [vmem:[%s1905 + $0x8] sm:$0xff]
    %v1908 = vld [vmem:[%s1905 + $0x10] sm:$0xff]
    %v1909 = vld [vmem:[%s1905 + $0x18] sm:$0xff]
    %v1910 = vld [vmem:[%s1905 + $0x20] sm:$0xff]
    %v1911 = vld [vmem:[%s1905 + $0x28] sm:$0xff]
    %v1912 = vld [vmem:[%s1905 + $0x30] sm:$0xff]
    %v1913 = vld [vmem:[%s1905 + $0x38] sm:$0xff]
    %s1914 = scalar_lea.vmem %s10, 32
    %v1915 = vld [vmem:[%s1914] sm:$0xff]
    %v1916 = vld [vmem:[%s1914 + $0x8] sm:$0xff]
    %v1917 = vld [vmem:[%s1914 + $0x10] sm:$0xff]
    %v1918 = vld [vmem:[%s1914 + $0x18] sm:$0xff]
    %1919 = vmatprep.subr.mxu0 0.0
    %1920 = vmatpush1.msra.mxu0 %v1915
    %1921 = vmatprep.subr.mxu0 0.0
    %1922 = vmatpush1.msra.mxu0 %v1916
    %1923 = vmatprep.subr.mxu0 0.0
    %1924 = vmatpush1.msra.mxu0 %v1917
    %1925 = vmatprep.subr.mxu0 0.0
    %1926 = vmatpush1.msra.mxu0 %v1918
    %1927 = vmatprep.subr.mxu0 0.0
    %1928 = vmatpush1.msra.mxu0 0.0
    %1929 = vmatprep.subr.mxu0 0.0
    %1930 = vmatpush1.msra.mxu0 0.0
    %1931 = vmatprep.subr.mxu0 0.0
    %1932 = vmatpush1.msra.mxu0 0.0
    %1933 = vmatprep.subr.mxu0 0.0
    %1934 = vmatpush1.msra.mxu0 0.0
    %1935 = vmatprep.subr.mxu0 0.0
    %1936 = vmatpush1.msra.mxu0 0.0
    %1937 = vmatprep.subr.mxu0 0.0
    %1938 = vmatpush1.msra.mxu0 0.0
    %1939 = vmatprep.subr.mxu0 0.0
    %1940 = vmatpush1.msra.mxu0 0.0
    %1941 = vmatprep.subr.mxu0 0.0
    %1942 = vmatpush1.msra.mxu0 0.0
    %1943 = vmatprep.subr.mxu0 0.0
    %1944 = vmatpush1.msra.mxu0 0.0
    %1945 = vmatprep.subr.mxu0 0.0
    %1946 = vmatpush1.msra.mxu0 0.0
    %1947 = vmatprep.subr.mxu0 0.0
    %1948 = vmatpush1.msra.mxu0 0.0
    %1949 = vmatprep.subr.mxu0 0.0
    %1950 = vmatpush1.msra.mxu0 0.0
    %1951 = vmatprep.subr.mxu0 0.0
    %1952 = vmatpush1.msra.mxu0 0.0
    %1953 = vmatprep.subr.mxu0 0.0
    %1954 = vmatpush1.msra.mxu0 0.0
    %1955 = vmatprep.subr.mxu0 0.0
    %1956 = vmatpush1.msra.mxu0 0.0
    %1957 = vmatprep.subr.mxu0 0.0
    %1958 = vmatpush1.msra.mxu0 0.0
    %1959 = vmatprep.subr.mxu0 0.0
    %1960 = vmatpush1.msra.mxu0 0.0
    %1961 = vmatprep.subr.mxu0 0.0
    %1962 = vmatpush1.msra.mxu0 0.0
    %1963 = vmatprep.subr.mxu0 0.0
    %1964 = vmatpush1.msra.mxu0 0.0
    %1965 = vmatprep.subr.mxu0 0.0
    %1966 = vmatpush1.msra.mxu0 0.0
    %1967 = vmatprep.subr.mxu0 0.0
    %1968 = vmatpush1.msra.mxu0 0.0
    %1969 = vmatprep.subr.mxu0 0.0
    %1970 = vmatpush1.msra.mxu0 0.0
    %1971 = vmatprep.subr.mxu0 0.0
    %1972 = vmatpush1.msra.mxu0 0.0
    %1973 = vmatprep.subr.mxu0 0.0
    %1974 = vmatpush1.msra.mxu0 0.0
    %1975 = vmatprep.subr.mxu0 0.0
    %1976 = vmatpush1.msra.mxu0 0.0
    %1977 = vmatprep.subr.mxu0 0.0
    %1978 = vmatpush1.msra.mxu0 0.0
    %1979 = vmatprep.subr.mxu0 0.0
    %1980 = vmatpush1.msra.mxu0 0.0
    %1981 = vmatprep.subr.mxu0 0.0
    %1982 = vmatpush1.msra.mxu0 0.0
    %1983 = vmatprep.mubr.f32.mxu0 0.0
    %1984 = vmatmul.mubr.f32.gmra.mrb[0].mxu0 %v1746
    %v1985 = vpop.f32.mrb[0].mxu0
    %v1986 = vadd.f32 0.0, %v1985
    %v1987 = vpop.f32.mrb[0].mxu0
    %1988 = vdwg.mxu0
    %1989 = vmatprep.subr.mxu0 0.0
    %1990 = vmatpush1.msra.mxu0 %v1906
    %1991 = vmatprep.subr.mxu0 0.0
    %1992 = vmatpush1.msra.mxu0 %v1907
    %1993 = vmatprep.subr.mxu0 0.0
    %1994 = vmatpush1.msra.mxu0 %v1908
    %1995 = vmatprep.subr.mxu0 0.0
    %1996 = vmatpush1.msra.mxu0 %v1909
    %1997 = vmatprep.subr.mxu0 0.0
    %1998 = vmatpush1.msra.mxu0 %v1910
    %1999 = vmatprep.subr.mxu0 0.0
    %2000 = vmatpush1.msra.mxu0 %v1911
    %2001 = vmatprep.subr.mxu0 0.0
    %2002 = vmatpush1.msra.mxu0 %v1912
    %2003 = vmatprep.subr.mxu0 0.0
    %2004 = vmatpush1.msra.mxu0 %v1913
    %2005 = vmatprep.subr.mxu0 0.0
    %2006 = vmatpush1.msra.mxu0 0.0
    %2007 = vmatprep.subr.mxu0 0.0
    %2008 = vmatpush1.msra.mxu0 0.0
    %2009 = vmatprep.subr.mxu0 0.0
    %2010 = vmatpush1.msra.mxu0 0.0
    %2011 = vmatprep.subr.mxu0 0.0
    %2012 = vmatpush1.msra.mxu0 0.0
    %2013 = vmatprep.subr.mxu0 0.0
    %2014 = vmatpush1.msra.mxu0 0.0
    %2015 = vmatprep.subr.mxu0 0.0
    %2016 = vmatpush1.msra.mxu0 0.0
    %2017 = vmatprep.subr.mxu0 0.0
    %2018 = vmatpush1.msra.mxu0 0.0
    %2019 = vmatprep.subr.mxu0 0.0
    %2020 = vmatpush1.msra.mxu0 0.0
    %2021 = vmatprep.subr.mxu0 0.0
    %2022 = vmatpush1.msra.mxu0 0.0
    %2023 = vmatprep.subr.mxu0 0.0
    %2024 = vmatpush1.msra.mxu0 0.0
    %2025 = vmatprep.subr.mxu0 0.0
    %2026 = vmatpush1.msra.mxu0 0.0
    %2027 = vmatprep.subr.mxu0 0.0
    %2028 = vmatpush1.msra.mxu0 0.0
    %2029 = vmatprep.subr.mxu0 0.0
    %2030 = vmatpush1.msra.mxu0 0.0
    %2031 = vmatprep.subr.mxu0 0.0
    %2032 = vmatpush1.msra.mxu0 0.0
    %2033 = vmatprep.subr.mxu0 0.0
    %2034 = vmatpush1.msra.mxu0 0.0
    %2035 = vmatprep.subr.mxu0 0.0
    %2036 = vmatpush1.msra.mxu0 0.0
    %2037 = vmatprep.subr.mxu0 0.0
    %2038 = vmatpush1.msra.mxu0 0.0
    %2039 = vmatprep.subr.mxu0 0.0
    %2040 = vmatpush1.msra.mxu0 0.0
    %2041 = vmatprep.subr.mxu0 0.0
    %2042 = vmatpush1.msra.mxu0 0.0
    %2043 = vmatprep.subr.mxu0 0.0
    %2044 = vmatpush1.msra.mxu0 0.0
    %2045 = vmatprep.subr.mxu0 0.0
    %2046 = vmatpush1.msra.mxu0 0.0
    %2047 = vmatprep.subr.mxu0 0.0
    %2048 = vmatpush1.msra.mxu0 0.0
    %2049 = vmatprep.subr.mxu0 0.0
    %2050 = vmatpush1.msra.mxu0 0.0
    %2051 = vmatprep.subr.mxu0 0.0
    %2052 = vmatpush1.msra.mxu0 0.0
    %2053 = vmatprep.mubr.f32.mxu0 0.0
    %2054 = vmatmul.mubr.f32.gmra.mrb[0].mxu0 %v1819
    %v2055 = vpop.f32.mrb[0].mxu0
    %v2056 = vadd.f32 %v1986, %v2055
    %v2057 = vpop.f32.mrb[0].mxu0
    %2058 = vdwg.mxu0
    %s2059 = scalar_lea.vmem %s11, 1
    %v2060 = vld [vmem:[%s2059] sm:$0x1]
    %v2062 = vlaneseq
    %v2063 = vshrl.u32 %v2062, 7
    %v2064 = vsub.s32 0, %v2063
    %v2065 = vrot.slane %v2060, %v2064
    %v2067 = vadd.f32 %v2056, %v2065
    %v2068 = vxor.u32 %v2067, 2147483648
    %v2069 = vmul.f32 %v2068, 1.442695
    %v2070 = vpow.pop %v2069
    %v2071 = vadd.f32 %v2070, 1.0
    %v2072 = vrcp.pop %v2071
    %v2073 = vmul.f32 1.0, %v2072
    %s2074 = scalar_lea.vmem %s9, 128
    %v2075 = vld [vmem:[%s2074] sm:$0xff]
    %v2076 = vld [vmem:[%s2074 + $0x8] sm:$0xff]
    %v2077 = vld [vmem:[%s2074 + $0x10] sm:$0xff]
    %v2078 = vld [vmem:[%s2074 + $0x18] sm:$0xff]
    %v2079 = vld [vmem:[%s2074 + $0x20] sm:$0xff]
    %v2080 = vld [vmem:[%s2074 + $0x28] sm:$0xff]
    %v2081 = vld [vmem:[%s2074 + $0x30] sm:$0xff]
    %v2082 = vld [vmem:[%s2074 + $0x38] sm:$0xff]
    %s2083 = scalar_lea.vmem %s10, 64
    %v2084 = vld [vmem:[%s2083] sm:$0xff]
    %v2085 = vld [vmem:[%s2083 + $0x8] sm:$0xff]
    %v2086 = vld [vmem:[%s2083 + $0x10] sm:$0xff]
    %v2087 = vld [vmem:[%s2083 + $0x18] sm:$0xff]
    %2088 = vmatprep.subr.mxu0 0.0
    %2089 = vmatpush1.msra.mxu0 %v2084
    %2090 = vmatprep.subr.mxu0 0.0
    %2091 = vmatpush1.msra.mxu0 %v2085
    %2092 = vmatprep.subr.mxu0 0.0
    %2093 = vmatpush1.msra.mxu0 %v2086
    %2094 = vmatprep.subr.mxu0 0.0
    %2095 = vmatpush1.msra.mxu0 %v2087
    %2096 = vmatprep.subr.mxu0 0.0
    %2097 = vmatpush1.msra.mxu0 0.0
    %2098 = vmatprep.subr.mxu0 0.0
    %2099 = vmatpush1.msra.mxu0 0.0
    %2100 = vmatprep.subr.mxu0 0.0
    %2101 = vmatpush1.msra.mxu0 0.0
    %2102 = vmatprep.subr.mxu0 0.0
    %2103 = vmatpush1.msra.mxu0 0.0
    %2104 = vmatprep.subr.mxu0 0.0
    %2105 = vmatpush1.msra.mxu0 0.0
    %2106 = vmatprep.subr.mxu0 0.0
    %2107 = vmatpush1.msra.mxu0 0.0
    %2108 = vmatprep.subr.mxu0 0.0
    %2109 = vmatpush1.msra.mxu0 0.0
    %2110 = vmatprep.subr.mxu0 0.0
    %2111 = vmatpush1.msra.mxu0 0.0
    %2112 = vmatprep.subr.mxu0 0.0
    %2113 = vmatpush1.msra.mxu0 0.0
    %2114 = vmatprep.subr.mxu0 0.0
    %2115 = vmatpush1.msra.mxu0 0.0
    %2116 = vmatprep.subr.mxu0 0.0
    %2117 = vmatpush1.msra.mxu0 0.0
    %2118 = vmatprep.subr.mxu0 0.0
    %2119 = vmatpush1.msra.mxu0 0.0
    %2120 = vmatprep.subr.mxu0 0.0
    %2121 = vmatpush1.msra.mxu0 0.0
    %2122 = vmatprep.subr.mxu0 0.0
    %2123 = vmatpush1.msra.mxu0 0.0
    %2124 = vmatprep.subr.mxu0 0.0
    %2125 = vmatpush1.msra.mxu0 0.0
    %2126 = vmatprep.subr.mxu0 0.0
    %2127 = vmatpush1.msra.mxu0 0.0
    %2128 = vmatprep.subr.mxu0 0.0
    %2129 = vmatpush1.msra.mxu0 0.0
    %2130 = vmatprep.subr.mxu0 0.0
    %2131 = vmatpush1.msra.mxu0 0.0
    %2132 = vmatprep.subr.mxu0 0.0
    %2133 = vmatpush1.msra.mxu0 0.0
    %2134 = vmatprep.subr.mxu0 0.0
    %2135 = vmatpush1.msra.mxu0 0.0
    %2136 = vmatprep.subr.mxu0 0.0
    %2137 = vmatpush1.msra.mxu0 0.0
    %2138 = vmatprep.subr.mxu0 0.0
    %2139 = vmatpush1.msra.mxu0 0.0
    %2140 = vmatprep.subr.mxu0 0.0
    %2141 = vmatpush1.msra.mxu0 0.0
    %2142 = vmatprep.subr.mxu0 0.0
    %2143 = vmatpush1.msra.mxu0 0.0
    %2144 = vmatprep.subr.mxu0 0.0
    %2145 = vmatpush1.msra.mxu0 0.0
    %2146 = vmatprep.subr.mxu0 0.0
    %2147 = vmatpush1.msra.mxu0 0.0
    %2148 = vmatprep.subr.mxu0 0.0
    %2149 = vmatpush1.msra.mxu0 0.0
    %2150 = vmatprep.subr.mxu0 0.0
    %2151 = vmatpush1.msra.mxu0 0.0
    %2152 = vmatprep.mubr.f32.mxu0 0.0
    %2153 = vmatmul.mubr.f32.gmra.mrb[0].mxu0 %v1746
    %v2154 = vpop.f32.mrb[0].mxu0
    %v2155 = vadd.f32 0.0, %v2154
    %v2156 = vpop.f32.mrb[0].mxu0
    %2157 = vdwg.mxu0
    %2158 = vmatprep.subr.mxu0 0.0
    %2159 = vmatpush1.msra.mxu0 %v2075
    %2160 = vmatprep.subr.mxu0 0.0
    %2161 = vmatpush1.msra.mxu0 %v2076
    %2162 = vmatprep.subr.mxu0 0.0
    %2163 = vmatpush1.msra.mxu0 %v2077
    %2164 = vmatprep.subr.mxu0 0.0
    %2165 = vmatpush1.msra.mxu0 %v2078
    %2166 = vmatprep.subr.mxu0 0.0
    %2167 = vmatpush1.msra.mxu0 %v2079
    %2168 = vmatprep.subr.mxu0 0.0
    %2169 = vmatpush1.msra.mxu0 %v2080
    %2170 = vmatprep.subr.mxu0 0.0
    %2171 = vmatpush1.msra.mxu0 %v2081
    %2172 = vmatprep.subr.mxu0 0.0
    %2173 = vmatpush1.msra.mxu0 %v2082
    %2174 = vmatprep.subr.mxu0 0.0
    %2175 = vmatpush1.msra.mxu0 0.0
    %2176 = vmatprep.subr.mxu0 0.0
    %2177 = vmatpush1.msra.mxu0 0.0
    %2178 = vmatprep.subr.mxu0 0.0
    %2179 = vmatpush1.msra.mxu0 0.0
    %2180 = vmatprep.subr.mxu0 0.0
    %2181 = vmatpush1.msra.mxu0 0.0
    %2182 = vmatprep.subr.mxu0 0.0
    %2183 = vmatpush1.msra.mxu0 0.0
    %2184 = vmatprep.subr.mxu0 0.0
    %2185 = vmatpush1.msra.mxu0 0.0
    %2186 = vmatprep.subr.mxu0 0.0
    %2187 = vmatpush1.msra.mxu0 0.0
    %2188 = vmatprep.subr.mxu0 0.0
    %2189 = vmatpush1.msra.mxu0 0.0
    %2190 = vmatprep.subr.mxu0 0.0
    %2191 = vmatpush1.msra.mxu0 0.0
    %2192 = vmatprep.subr.mxu0 0.0
    %2193 = vmatpush1.msra.mxu0 0.0
    %2194 = vmatprep.subr.mxu0 0.0
    %2195 = vmatpush1.msra.mxu0 0.0
    %2196 = vmatprep.subr.mxu0 0.0
    %2197 = vmatpush1.msra.mxu0 0.0
    %2198 = vmatprep.subr.mxu0 0.0
    %2199 = vmatpush1.msra.mxu0 0.0
    %2200 = vmatprep.subr.mxu0 0.0
    %2201 = vmatpush1.msra.mxu0 0.0
    %2202 = vmatprep.subr.mxu0 0.0
    %2203 = vmatpush1.msra.mxu0 0.0
    %2204 = vmatprep.subr.mxu0 0.0
    %2205 = vmatpush1.msra.mxu0 0.0
    %2206 = vmatprep.subr.mxu0 0.0
    %2207 = vmatpush1.msra.mxu0 0.0
    %2208 = vmatprep.subr.mxu0 0.0
    %2209 = vmatpush1.msra.mxu0 0.0
    %2210 = vmatprep.subr.mxu0 0.0
    %2211 = vmatpush1.msra.mxu0 0.0
    %2212 = vmatprep.subr.mxu0 0.0
    %2213 = vmatpush1.msra.mxu0 0.0
    %2214 = vmatprep.subr.mxu0 0.0
    %2215 = vmatpush1.msra.mxu0 0.0
    %2216 = vmatprep.subr.mxu0 0.0
    %2217 = vmatpush1.msra.mxu0 0.0
    %2218 = vmatprep.subr.mxu0 0.0
    %2219 = vmatpush1.msra.mxu0 0.0
    %2220 = vmatprep.subr.mxu0 0.0
    %2221 = vmatpush1.msra.mxu0 0.0
    %2222 = vmatprep.mubr.f32.mxu0 0.0
    %2223 = vmatmul.mubr.f32.gmra.mrb[0].mxu0 %v1819
    %v2224 = vpop.f32.mrb[0].mxu0
    %v2225 = vadd.f32 %v2155, %v2224
    %v2226 = vpop.f32.mrb[0].mxu0
    %2227 = vdwg.mxu0
    %s2228 = scalar_lea.vmem %s11, 2
    %v2229 = vld [vmem:[%s2228] sm:$0x1]
    %v2231 = vlaneseq
    %v2232 = vshrl.u32 %v2231, 7
    %v2233 = vsub.s32 0, %v2232
    %v2234 = vrot.slane %v2229, %v2233
    %v2236 = vadd.f32 %v2225, %v2234
    %v2237 = vtanh.pop %v2236
    %s2238 = scalar_lea.vmem %s9, 192
    %v2239 = vld [vmem:[%s2238] sm:$0xff]
    %v2240 = vld [vmem:[%s2238 + $0x8] sm:$0xff]
    %v2241 = vld [vmem:[%s2238 + $0x10] sm:$0xff]
    %v2242 = vld [vmem:[%s2238 + $0x18] sm:$0xff]
    %v2243 = vld [vmem:[%s2238 + $0x20] sm:$0xff]
    %v2244 = vld [vmem:[%s2238 + $0x28] sm:$0xff]
    %v2245 = vld [vmem:[%s2238 + $0x30] sm:$0xff]
    %v2246 = vld [vmem:[%s2238 + $0x38] sm:$0xff]
    %s2247 = scalar_lea.vmem %s10, 96
    %v2248 = vld [vmem:[%s2247] sm:$0xff]
    %v2249 = vld [vmem:[%s2247 + $0x8] sm:$0xff]
    %v2250 = vld [vmem:[%s2247 + $0x10] sm:$0xff]
    %v2251 = vld [vmem:[%s2247 + $0x18] sm:$0xff]
    %2252 = vmatprep.subr.mxu0 0.0
    %2253 = vmatpush1.msra.mxu0 %v2248
    %2254 = vmatprep.subr.mxu0 0.0
    %2255 = vmatpush1.msra.mxu0 %v2249
    %2256 = vmatprep.subr.mxu0 0.0
    %2257 = vmatpush1.msra.mxu0 %v2250
    %2258 = vmatprep.subr.mxu0 0.0
    %2259 = vmatpush1.msra.mxu0 %v2251
    %2260 = vmatprep.subr.mxu0 0.0
    %2261 = vmatpush1.msra.mxu0 0.0
    %2262 = vmatprep.subr.mxu0 0.0
    %2263 = vmatpush1.msra.mxu0 0.0
    %2264 = vmatprep.subr.mxu0 0.0
    %2265 = vmatpush1.msra.mxu0 0.0
    %2266 = vmatprep.subr.mxu0 0.0
    %2267 = vmatpush1.msra.mxu0 0.0
    %2268 = vmatprep.subr.mxu0 0.0
    %2269 = vmatpush1.msra.mxu0 0.0
    %2270 = vmatprep.subr.mxu0 0.0
    %2271 = vmatpush1.msra.mxu0 0.0
    %2272 = vmatprep.subr.mxu0 0.0
    %2273 = vmatpush1.msra.mxu0 0.0
    %2274 = vmatprep.subr.mxu0 0.0
    %2275 = vmatpush1.msra.mxu0 0.0
    %2276 = vmatprep.subr.mxu0 0.0
    %2277 = vmatpush1.msra.mxu0 0.0
    %2278 = vmatprep.subr.mxu0 0.0
    %2279 = vmatpush1.msra.mxu0 0.0
    %2280 = vmatprep.subr.mxu0 0.0
    %2281 = vmatpush1.msra.mxu0 0.0
    %2282 = vmatprep.subr.mxu0 0.0
    %2283 = vmatpush1.msra.mxu0 0.0
    %2284 = vmatprep.subr.mxu0 0.0
    %2285 = vmatpush1.msra.mxu0 0.0
    %2286 = vmatprep.subr.mxu0 0.0
    %2287 = vmatpush1.msra.mxu0 0.0
    %2288 = vmatprep.subr.mxu0 0.0
    %2289 = vmatpush1.msra.mxu0 0.0
    %2290 = vmatprep.subr.mxu0 0.0
    %2291 = vmatpush1.msra.mxu0 0.0
    %2292 = vmatprep.subr.mxu0 0.0
    %2293 = vmatpush1.msra.mxu0 0.0
    %2294 = vmatprep.subr.mxu0 0.0
    %2295 = vmatpush1.msra.mxu0 0.0
    %2296 = vmatprep.subr.mxu0 0.0
    %2297 = vmatpush1.msra.mxu0 0.0
    %2298 = vmatprep.subr.mxu0 0.0
    %2299 = vmatpush1.msra.mxu0 0.0
    %2300 = vmatprep.subr.mxu0 0.0
    %2301 = vmatpush1.msra.mxu0 0.0
    %2302 = vmatprep.subr.mxu0 0.0
    %2303 = vmatpush1.msra.mxu0 0.0
    %2304 = vmatprep.subr.mxu0 0.0
    %2305 = vmatpush1.msra.mxu0 0.0
    %2306 = vmatprep.subr.mxu0 0.0
    %2307 = vmatpush1.msra.mxu0 0.0
    %2308 = vmatprep.subr.mxu0 0.0
    %2309 = vmatpush1.msra.mxu0 0.0
    %2310 = vmatprep.subr.mxu0 0.0
    %2311 = vmatpush1.msra.mxu0 0.0
    %2312 = vmatprep.subr.mxu0 0.0
    %2313 = vmatpush1.msra.mxu0 0.0
    %2314 = vmatprep.subr.mxu0 0.0
    %2315 = vmatpush1.msra.mxu0 0.0
    %2316 = vmatprep.mubr.f32.mxu0 0.0
    %2317 = vmatmul.mubr.f32.gmra.mrb[0].mxu0 %v1746
    %v2318 = vpop.f32.mrb[0].mxu0
    %v2319 = vadd.f32 0.0, %v2318
    %v2320 = vpop.f32.mrb[0].mxu0
    %2321 = vdwg.mxu0
    %2322 = vmatprep.subr.mxu0 0.0
    %2323 = vmatpush1.msra.mxu0 %v2239
    %2324 = vmatprep.subr.mxu0 0.0
    %2325 = vmatpush1.msra.mxu0 %v2240
    %2326 = vmatprep.subr.mxu0 0.0
    %2327 = vmatpush1.msra.mxu0 %v2241
    %2328 = vmatprep.subr.mxu0 0.0
    %2329 = vmatpush1.msra.mxu0 %v2242
    %2330 = vmatprep.subr.mxu0 0.0
    %2331 = vmatpush1.msra.mxu0 %v2243
    %2332 = vmatprep.subr.mxu0 0.0
    %2333 = vmatpush1.msra.mxu0 %v2244
    %2334 = vmatprep.subr.mxu0 0.0
    %2335 = vmatpush1.msra.mxu0 %v2245
    %2336 = vmatprep.subr.mxu0 0.0
    %2337 = vmatpush1.msra.mxu0 %v2246
    %2338 = vmatprep.subr.mxu0 0.0
    %2339 = vmatpush1.msra.mxu0 0.0
    %2340 = vmatprep.subr.mxu0 0.0
    %2341 = vmatpush1.msra.mxu0 0.0
    %2342 = vmatprep.subr.mxu0 0.0
    %2343 = vmatpush1.msra.mxu0 0.0
    %2344 = vmatprep.subr.mxu0 0.0
    %2345 = vmatpush1.msra.mxu0 0.0
    %2346 = vmatprep.subr.mxu0 0.0
    %2347 = vmatpush1.msra.mxu0 0.0
    %2348 = vmatprep.subr.mxu0 0.0
    %2349 = vmatpush1.msra.mxu0 0.0
    %2350 = vmatprep.subr.mxu0 0.0
    %2351 = vmatpush1.msra.mxu0 0.0
    %2352 = vmatprep.subr.mxu0 0.0
    %2353 = vmatpush1.msra.mxu0 0.0
    %2354 = vmatprep.subr.mxu0 0.0
    %2355 = vmatpush1.msra.mxu0 0.0
    %2356 = vmatprep.subr.mxu0 0.0
    %2357 = vmatpush1.msra.mxu0 0.0
    %2358 = vmatprep.subr.mxu0 0.0
    %2359 = vmatpush1.msra.mxu0 0.0
    %2360 = vmatprep.subr.mxu0 0.0
    %2361 = vmatpush1.msra.mxu0 0.0
    %2362 = vmatprep.subr.mxu0 0.0
    %2363 = vmatpush1.msra.mxu0 0.0
    %2364 = vmatprep.subr.mxu0 0.0
    %2365 = vmatpush1.msra.mxu0 0.0
    %2366 = vmatprep.subr.mxu0 0.0
    %2367 = vmatpush1.msra.mxu0 0.0
    %2368 = vmatprep.subr.mxu0 0.0
    %2369 = vmatpush1.msra.mxu0 0.0
    %2370 = vmatprep.subr.mxu0 0.0
    %2371 = vmatpush1.msra.mxu0 0.0
    %2372 = vmatprep.subr.mxu0 0.0
    %2373 = vmatpush1.msra.mxu0 0.0
    %2374 = vmatprep.subr.mxu0 0.0
    %2375 = vmatpush1.msra.mxu0 0.0
    %2376 = vmatprep.subr.mxu0 0.0
    %2377 = vmatpush1.msra.mxu0 0.0
    %2378 = vmatprep.subr.mxu0 0.0
    %2379 = vmatpush1.msra.mxu0 0.0
    %2380 = vmatprep.subr.mxu0 0.0
    %2381 = vmatpush1.msra.mxu0 0.0
    %2382 = vmatprep.subr.mxu0 0.0
    %2383 = vmatpush1.msra.mxu0 0.0
    %2384 = vmatprep.subr.mxu0 0.0
    %2385 = vmatpush1.msra.mxu0 0.0
    %2386 = vmatprep.mubr.f32.mxu0 0.0
    %2387 = vmatmul.mubr.f32.gmra.mrb[0].mxu0 %v1819
    %v2388 = vpop.f32.mrb[0].mxu0
    %v2389 = vadd.f32 %v2319, %v2388
    %v2390 = vpop.f32.mrb[0].mxu0
    %2391 = vdwg.mxu0
    %s2392 = scalar_lea.vmem %s11, 3
    %v2393 = vld [vmem:[%s2392] sm:$0x1]
    %v2395 = vlaneseq
    %v2396 = vshrl.u32 %v2395, 7
    %v2397 = vsub.s32 0, %v2396
    %v2398 = vrot.slane %v2393, %v2397
    %v2400 = vadd.f32 %v2389, %v2398
    %v2401 = vxor.u32 %v2400, 2147483648
    %v2402 = vmul.f32 %v2401, 1.442695
    %v2403 = vpow.pop %v2402
    %v2404 = vadd.f32 %v2403, 1.0
    %v2405 = vrcp.pop %v2404
    %v2406 = vmul.f32 1.0, %v2405
    %v2407 = vmul.f32 %v2073, 0.0
    %v2408 = vmul.f32 %v1904, %v2237
    %v2409 = vadd.f32 %v2407, %v2408
    %v2410 = vtanh.pop %v2409
    %v2411 = vmul.f32 %v2406, %v2410
    %v2412 = vld [vmem:[%s12] sm:$0xff]
    %v2413 = vld [vmem:[%s12 + $0x8] sm:$0xff]
    %v2414 = vld [vmem:[%s12 + $0x10] sm:$0xff]
    %v2415 = vld [vmem:[%s12 + $0x18] sm:$0xff]
    %v2416 = vld [vmem:[%s12 + $0x20] sm:$0xff]
    %v2417 = vld [vmem:[%s12 + $0x28] sm:$0xff]
    %v2418 = vld [vmem:[%s12 + $0x30] sm:$0xff]
    %v2419 = vld [vmem:[%s12 + $0x38] sm:$0xff]
    %v2420 = vld [vmem:[%s13] sm:$0xff]
    %v2421 = vld [vmem:[%s13 + $0x8] sm:$0xff]
    %v2422 = vld [vmem:[%s13 + $0x10] sm:$0xff]
    %v2423 = vld [vmem:[%s13 + $0x18] sm:$0xff]
    %2424 = vmatprep.subr.mxu0 0.0
    %2425 = vmatpush1.msra.mxu0 %v2420
    %2426 = vmatprep.subr.mxu0 0.0
    %2427 = vmatpush1.msra.mxu0 %v2421
    %2428 = vmatprep.subr.mxu0 0.0
    %2429 = vmatpush1.msra.mxu0 %v2422
    %2430 = vmatprep.subr.mxu0 0.0
    %2431 = vmatpush1.msra.mxu0 %v2423
    %2432 = vmatprep.subr.mxu0 0.0
    %2433 = vmatpush1.msra.mxu0 0.0
    %2434 = vmatprep.subr.mxu0 0.0
    %2435 = vmatpush1.msra.mxu0 0.0
    %2436 = vmatprep.subr.mxu0 0.0
    %2437 = vmatpush1.msra.mxu0 0.0
    %2438 = vmatprep.subr.mxu0 0.0
    %2439 = vmatpush1.msra.mxu0 0.0
    %2440 = vmatprep.subr.mxu0 0.0
    %2441 = vmatpush1.msra.mxu0 0.0
    %2442 = vmatprep.subr.mxu0 0.0
    %2443 = vmatpush1.msra.mxu0 0.0
    %2444 = vmatprep.subr.mxu0 0.0
    %2445 = vmatpush1.msra.mxu0 0.0
    %2446 = vmatprep.subr.mxu0 0.0
    %2447 = vmatpush1.msra.mxu0 0.0
    %2448 = vmatprep.subr.mxu0 0.0
    %2449 = vmatpush1.msra.mxu0 0.0
    %2450 = vmatprep.subr.mxu0 0.0
    %2451 = vmatpush1.msra.mxu0 0.0
    %2452 = vmatprep.subr.mxu0 0.0
    %2453 = vmatpush1.msra.mxu0 0.0
    %2454 = vmatprep.subr.mxu0 0.0
    %2455 = vmatpush1.msra.mxu0 0.0
    %2456 = vmatprep.subr.mxu0 0.0
    %2457 = vmatpush1.msra.mxu0 0.0
    %2458 = vmatprep.subr.mxu0 0.0
    %2459 = vmatpush1.msra.mxu0 0.0
    %2460 = vmatprep.subr.mxu0 0.0
    %2461 = vmatpush1.msra.mxu0 0.0
    %2462 = vmatprep.subr.mxu0 0.0
    %2463 = vmatpush1.msra.mxu0 0.0
    %2464 = vmatprep.subr.mxu0 0.0
    %2465 = vmatpush1.msra.mxu0 0.0
    %2466 = vmatprep.subr.mxu0 0.0
    %2467 = vmatpush1.msra.mxu0 0.0
    %2468 = vmatprep.subr.mxu0 0.0
    %2469 = vmatpush1.msra.mxu0 0.0
    %2470 = vmatprep.subr.mxu0 0.0
    %2471 = vmatpush1.msra.mxu0 0.0
    %2472 = vmatprep.subr.mxu0 0.0
    %2473 = vmatpush1.msra.mxu0 0.0
    %2474 = vmatprep.subr.mxu0 0.0
    %2475 = vmatpush1.msra.mxu0 0.0
    %2476 = vmatprep.subr.mxu0 0.0
    %2477 = vmatpush1.msra.mxu0 0.0
    %2478 = vmatprep.subr.mxu0 0.0
    %2479 = vmatpush1.msra.mxu0 0.0
    %2480 = vmatprep.subr.mxu0 0.0
    %2481 = vmatpush1.msra.mxu0 0.0
    %2482 = vmatprep.subr.mxu0 0.0
    %2483 = vmatpush1.msra.mxu0 0.0
    %2484 = vmatprep.subr.mxu0 0.0
    %2485 = vmatpush1.msra.mxu0 0.0
    %2486 = vmatprep.subr.mxu0 0.0
    %2487 = vmatpush1.msra.mxu0 0.0
    %2488 = vmatprep.mubr.f32.mxu0 0.0
    %2489 = vmatmul.mubr.f32.gmra.mrb[0].mxu0 %v1746
    %v2490 = vpop.f32.mrb[0].mxu0
    %v2491 = vadd.f32 0.0, %v2490
    %v2492 = vpop.f32.mrb[0].mxu0
    %2493 = vdwg.mxu0
    %v2495 = vsel %vm104, %v1731, 0
    %2497 = vmatprep.subr.mxu0 0.0
    %2498 = vmatpush1.msra.mxu0 %v2412
    %2499 = vmatprep.subr.mxu0 0.0
    %2500 = vmatpush1.msra.mxu0 %v2413
    %2501 = vmatprep.subr.mxu0 0.0
    %2502 = vmatpush1.msra.mxu0 %v2414
    %2503 = vmatprep.subr.mxu0 0.0
    %2504 = vmatpush1.msra.mxu0 %v2415
    %2505 = vmatprep.subr.mxu0 0.0
    %2506 = vmatpush1.msra.mxu0 %v2416
    %2507 = vmatprep.subr.mxu0 0.0
    %2508 = vmatpush1.msra.mxu0 %v2417
    %2509 = vmatprep.subr.mxu0 0.0
    %2510 = vmatpush1.msra.mxu0 %v2418
    %2511 = vmatprep.subr.mxu0 0.0
    %2512 = vmatpush1.msra.mxu0 %v2419
    %2513 = vmatprep.subr.mxu0 0.0
    %2514 = vmatpush1.msra.mxu0 0.0
    %2515 = vmatprep.subr.mxu0 0.0
    %2516 = vmatpush1.msra.mxu0 0.0
    %2517 = vmatprep.subr.mxu0 0.0
    %2518 = vmatpush1.msra.mxu0 0.0
    %2519 = vmatprep.subr.mxu0 0.0
    %2520 = vmatpush1.msra.mxu0 0.0
    %2521 = vmatprep.subr.mxu0 0.0
    %2522 = vmatpush1.msra.mxu0 0.0
    %2523 = vmatprep.subr.mxu0 0.0
    %2524 = vmatpush1.msra.mxu0 0.0
    %2525 = vmatprep.subr.mxu0 0.0
    %2526 = vmatpush1.msra.mxu0 0.0
    %2527 = vmatprep.subr.mxu0 0.0
    %2528 = vmatpush1.msra.mxu0 0.0
    %2529 = vmatprep.subr.mxu0 0.0
    %2530 = vmatpush1.msra.mxu0 0.0
    %2531 = vmatprep.subr.mxu0 0.0
    %2532 = vmatpush1.msra.mxu0 0.0
    %2533 = vmatprep.subr.mxu0 0.0
    %2534 = vmatpush1.msra.mxu0 0.0
    %2535 = vmatprep.subr.mxu0 0.0
    %2536 = vmatpush1.msra.mxu0 0.0
    %2537 = vmatprep.subr.mxu0 0.0
    %2538 = vmatpush1.msra.mxu0 0.0
    %2539 = vmatprep.subr.mxu0 0.0
    %2540 = vmatpush1.msra.mxu0 0.0
    %2541 = vmatprep.subr.mxu0 0.0
    %2542 = vmatpush1.msra.mxu0 0.0
    %2543 = vmatprep.subr.mxu0 0.0
    %2544 = vmatpush1.msra.mxu0 0.0
    %2545 = vmatprep.subr.mxu0 0.0
    %2546 = vmatpush1.msra.mxu0 0.0
    %2547 = vmatprep.subr.mxu0 0.0
    %2548 = vmatpush1.msra.mxu0 0.0
    %2549 = vmatprep.subr.mxu0 0.0
    %2550 = vmatpush1.msra.mxu0 0.0
    %2551 = vmatprep.subr.mxu0 0.0
    %2552 = vmatpush1.msra.mxu0 0.0
    %2553 = vmatprep.subr.mxu0 0.0
    %2554 = vmatpush1.msra.mxu0 0.0
    %2555 = vmatprep.subr.mxu0 0.0
    %2556 = vmatpush1.msra.mxu0 0.0
    %2557 = vmatprep.subr.mxu0 0.0
    %2558 = vmatpush1.msra.mxu0 0.0
    %2559 = vmatprep.subr.mxu0 0.0
    %2560 = vmatpush1.msra.mxu0 0.0
    %2561 = vmatprep.mubr.f32.mxu0 0.0
    %2562 = vmatmul.mubr.f32.gmra.mrb[0].mxu0 %v2495
    %v2563 = vpop.f32.mrb[0].mxu0
    %v2564 = vadd.f32 %v2491, %v2563
    %v2565 = vpop.f32.mrb[0].mxu0
    %2566 = vdwg.mxu0
    %v2567 = vld [vmem:[%s14] sm:$0x1]
    %v2569 = vlaneseq
    %v2570 = vshrl.u32 %v2569, 7
    %v2571 = vsub.s32 0, %v2570
    %v2572 = vrot.slane %v2567, %v2571
    %v2574 = vadd.f32 %v2564, %v2572
    %v2575 = vxor.u32 %v2574, 2147483648
    %v2576 = vmul.f32 %v2575, 1.442695
    %v2577 = vpow.pop %v2576
    %v2578 = vadd.f32 %v2577, 1.0
    %v2579 = vrcp.pop %v2578
    %v2580 = vmul.f32 1.0, %v2579
    %s2581 = scalar_lea.vmem %s12, 64
    %v2582 = vld [vmem:[%s2581] sm:$0xff]
    %v2583 = vld [vmem:[%s2581 + $0x8] sm:$0xff]
    %v2584 = vld [vmem:[%s2581 + $0x10] sm:$0xff]
    %v2585 = vld [vmem:[%s2581 + $0x18] sm:$0xff]
    %v2586 = vld [vmem:[%s2581 + $0x20] sm:$0xff]
    %v2587 = vld [vmem:[%s2581 + $0x28] sm:$0xff]
    %v2588 = vld [vmem:[%s2581 + $0x30] sm:$0xff]
    %v2589 = vld [vmem:[%s2581 + $0x38] sm:$0xff]
    %s2590 = scalar_lea.vmem %s13, 32
    %v2591 = vld [vmem:[%s2590] sm:$0xff]
    %v2592 = vld [vmem:[%s2590 + $0x8] sm:$0xff]
    %v2593 = vld [vmem:[%s2590 + $0x10] sm:$0xff]
    %v2594 = vld [vmem:[%s2590 + $0x18] sm:$0xff]
    %2595 = vmatprep.subr.mxu0 0.0
    %2596 = vmatpush1.msra.mxu0 %v2591
    %2597 = vmatprep.subr.mxu0 0.0
    %2598 = vmatpush1.msra.mxu0 %v2592
    %2599 = vmatprep.subr.mxu0 0.0
    %2600 = vmatpush1.msra.mxu0 %v2593
    %2601 = vmatprep.subr.mxu0 0.0
    %2602 = vmatpush1.msra.mxu0 %v2594
    %2603 = vmatprep.subr.mxu0 0.0
    %2604 = vmatpush1.msra.mxu0 0.0
    %2605 = vmatprep.subr.mxu0 0.0
    %2606 = vmatpush1.msra.mxu0 0.0
    %2607 = vmatprep.subr.mxu0 0.0
    %2608 = vmatpush1.msra.mxu0 0.0
    %2609 = vmatprep.subr.mxu0 0.0
    %2610 = vmatpush1.msra.mxu0 0.0
    %2611 = vmatprep.subr.mxu0 0.0
    %2612 = vmatpush1.msra.mxu0 0.0
    %2613 = vmatprep.subr.mxu0 0.0
    %2614 = vmatpush1.msra.mxu0 0.0
    %2615 = vmatprep.subr.mxu0 0.0
    %2616 = vmatpush1.msra.mxu0 0.0
    %2617 = vmatprep.subr.mxu0 0.0
    %2618 = vmatpush1.msra.mxu0 0.0
    %2619 = vmatprep.subr.mxu0 0.0
    %2620 = vmatpush1.msra.mxu0 0.0
    %2621 = vmatprep.subr.mxu0 0.0
    %2622 = vmatpush1.msra.mxu0 0.0
    %2623 = vmatprep.subr.mxu0 0.0
    %2624 = vmatpush1.msra.mxu0 0.0
    %2625 = vmatprep.subr.mxu0 0.0
    %2626 = vmatpush1.msra.mxu0 0.0
    %2627 = vmatprep.subr.mxu0 0.0
    %2628 = vmatpush1.msra.mxu0 0.0
    %2629 = vmatprep.subr.mxu0 0.0
    %2630 = vmatpush1.msra.mxu0 0.0
    %2631 = vmatprep.subr.mxu0 0.0
    %2632 = vmatpush1.msra.mxu0 0.0
    %2633 = vmatprep.subr.mxu0 0.0
    %2634 = vmatpush1.msra.mxu0 0.0
    %2635 = vmatprep.subr.mxu0 0.0
    %2636 = vmatpush1.msra.mxu0 0.0
    %2637 = vmatprep.subr.mxu0 0.0
    %2638 = vmatpush1.msra.mxu0 0.0
    %2639 = vmatprep.subr.mxu0 0.0
    %2640 = vmatpush1.msra.mxu0 0.0
    %2641 = vmatprep.subr.mxu0 0.0
    %2642 = vmatpush1.msra.mxu0 0.0
    %2643 = vmatprep.subr.mxu0 0.0
    %2644 = vmatpush1.msra.mxu0 0.0
    %2645 = vmatprep.subr.mxu0 0.0
    %2646 = vmatpush1.msra.mxu0 0.0
    %2647 = vmatprep.subr.mxu0 0.0
    %2648 = vmatpush1.msra.mxu0 0.0
    %2649 = vmatprep.subr.mxu0 0.0
    %2650 = vmatpush1.msra.mxu0 0.0
    %2651 = vmatprep.subr.mxu0 0.0
    %2652 = vmatpush1.msra.mxu0 0.0
    %2653 = vmatprep.subr.mxu0 0.0
    %2654 = vmatpush1.msra.mxu0 0.0
    %2655 = vmatprep.subr.mxu0 0.0
    %2656 = vmatpush1.msra.mxu0 0.0
    %2657 = vmatprep.subr.mxu0 0.0
    %2658 = vmatpush1.msra.mxu0 0.0
    %2659 = vmatprep.mubr.f32.mxu0 0.0
    %2660 = vmatmul.mubr.f32.gmra.mrb[0].mxu0 %v1746
    %v2661 = vpop.f32.mrb[0].mxu0
    %v2662 = vadd.f32 0.0, %v2661
    %v2663 = vpop.f32.mrb[0].mxu0
    %2664 = vdwg.mxu0
    %2665 = vmatprep.subr.mxu0 0.0
    %2666 = vmatpush1.msra.mxu0 %v2582
    %2667 = vmatprep.subr.mxu0 0.0
    %2668 = vmatpush1.msra.mxu0 %v2583
    %2669 = vmatprep.subr.mxu0 0.0
    %2670 = vmatpush1.msra.mxu0 %v2584
    %2671 = vmatprep.subr.mxu0 0.0
    %2672 = vmatpush1.msra.mxu0 %v2585
    %2673 = vmatprep.subr.mxu0 0.0
    %2674 = vmatpush1.msra.mxu0 %v2586
    %2675 = vmatprep.subr.mxu0 0.0
    %2676 = vmatpush1.msra.mxu0 %v2587
    %2677 = vmatprep.subr.mxu0 0.0
    %2678 = vmatpush1.msra.mxu0 %v2588
    %2679 = vmatprep.subr.mxu0 0.0
    %2680 = vmatpush1.msra.mxu0 %v2589
    %2681 = vmatprep.subr.mxu0 0.0
    %2682 = vmatpush1.msra.mxu0 0.0
    %2683 = vmatprep.subr.mxu0 0.0
    %2684 = vmatpush1.msra.mxu0 0.0
    %2685 = vmatprep.subr.mxu0 0.0
    %2686 = vmatpush1.msra.mxu0 0.0
    %2687 = vmatprep.subr.mxu0 0.0
    %2688 = vmatpush1.msra.mxu0 0.0
    %2689 = vmatprep.subr.mxu0 0.0
    %2690 = vmatpush1.msra.mxu0 0.0
    %2691 = vmatprep.subr.mxu0 0.0
    %2692 = vmatpush1.msra.mxu0 0.0
    %2693 = vmatprep.subr.mxu0 0.0
    %2694 = vmatpush1.msra.mxu0 0.0
    %2695 = vmatprep.subr.mxu0 0.0
    %2696 = vmatpush1.msra.mxu0 0.0
    %2697 = vmatprep.subr.mxu0 0.0
    %2698 = vmatpush1.msra.mxu0 0.0
    %2699 = vmatprep.subr.mxu0 0.0
    %2700 = vmatpush1.msra.mxu0 0.0
    %2701 = vmatprep.subr.mxu0 0.0
    %2702 = vmatpush1.msra.mxu0 0.0
    %2703 = vmatprep.subr.mxu0 0.0
    %2704 = vmatpush1.msra.mxu0 0.0
    %2705 = vmatprep.subr.mxu0 0.0
    %2706 = vmatpush1.msra.mxu0 0.0
    %2707 = vmatprep.subr.mxu0 0.0
    %2708 = vmatpush1.msra.mxu0 0.0
    %2709 = vmatprep.subr.mxu0 0.0
    %2710 = vmatpush1.msra.mxu0 0.0
    %2711 = vmatprep.subr.mxu0 0.0
    %2712 = vmatpush1.msra.mxu0 0.0
    %2713 = vmatprep.subr.mxu0 0.0
    %2714 = vmatpush1.msra.mxu0 0.0
    %2715 = vmatprep.subr.mxu0 0.0
    %2716 = vmatpush1.msra.mxu0 0.0
    %2717 = vmatprep.subr.mxu0 0.0
    %2718 = vmatpush1.msra.mxu0 0.0
    %2719 = vmatprep.subr.mxu0 0.0
    %2720 = vmatpush1.msra.mxu0 0.0
    %2721 = vmatprep.subr.mxu0 0.0
    %2722 = vmatpush1.msra.mxu0 0.0
    %2723 = vmatprep.subr.mxu0 0.0
    %2724 = vmatpush1.msra.mxu0 0.0
    %2725 = vmatprep.subr.mxu0 0.0
    %2726 = vmatpush1.msra.mxu0 0.0
    %2727 = vmatprep.subr.mxu0 0.0
    %2728 = vmatpush1.msra.mxu0 0.0
    %2729 = vmatprep.mubr.f32.mxu0 0.0
    %2730 = vmatmul.mubr.f32.gmra.mrb[0].mxu0 %v2495
    %v2731 = vpop.f32.mrb[0].mxu0
    %v2732 = vadd.f32 %v2662, %v2731
    %v2733 = vpop.f32.mrb[0].mxu0
    %2734 = vdwg.mxu0
    %s2735 = scalar_lea.vmem %s14, 1
    %v2736 = vld [vmem:[%s2735] sm:$0x1]
    %v2738 = vlaneseq
    %v2739 = vshrl.u32 %v2738, 7
    %v2740 = vsub.s32 0, %v2739
    %v2741 = vrot.slane %v2736, %v2740
    %v2743 = vadd.f32 %v2732, %v2741
    %v2744 = vxor.u32 %v2743, 2147483648
    %v2745 = vmul.f32 %v2744, 1.442695
    %v2746 = vpow.pop %v2745
    %v2747 = vadd.f32 %v2746, 1.0
    %v2748 = vrcp.pop %v2747
    %v2749 = vmul.f32 1.0, %v2748
    %s2750 = scalar_lea.vmem %s12, 128
    %v2751 = vld [vmem:[%s2750] sm:$0xff]
    %v2752 = vld [vmem:[%s2750 + $0x8] sm:$0xff]
    %v2753 = vld [vmem:[%s2750 + $0x10] sm:$0xff]
    %v2754 = vld [vmem:[%s2750 + $0x18] sm:$0xff]
    %v2755 = vld [vmem:[%s2750 + $0x20] sm:$0xff]
    %v2756 = vld [vmem:[%s2750 + $0x28] sm:$0xff]
    %v2757 = vld [vmem:[%s2750 + $0x30] sm:$0xff]
    %v2758 = vld [vmem:[%s2750 + $0x38] sm:$0xff]
    %s2759 = scalar_lea.vmem %s13, 64
    %v2760 = vld [vmem:[%s2759] sm:$0xff]
    %v2761 = vld [vmem:[%s2759 + $0x8] sm:$0xff]
    %v2762 = vld [vmem:[%s2759 + $0x10] sm:$0xff]
    %v2763 = vld [vmem:[%s2759 + $0x18] sm:$0xff]
    %2764 = vmatprep.subr.mxu0 0.0
    %2765 = vmatpush1.msra.mxu0 %v2760
    %2766 = vmatprep.subr.mxu0 0.0
    %2767 = vmatpush1.msra.mxu0 %v2761
    %2768 = vmatprep.subr.mxu0 0.0
    %2769 = vmatpush1.msra.mxu0 %v2762
    %2770 = vmatprep.subr.mxu0 0.0
    %2771 = vmatpush1.msra.mxu0 %v2763
    %2772 = vmatprep.subr.mxu0 0.0
    %2773 = vmatpush1.msra.mxu0 0.0
    %2774 = vmatprep.subr.mxu0 0.0
    %2775 = vmatpush1.msra.mxu0 0.0
    %2776 = vmatprep.subr.mxu0 0.0
    %2777 = vmatpush1.msra.mxu0 0.0
    %2778 = vmatprep.subr.mxu0 0.0
    %2779 = vmatpush1.msra.mxu0 0.0
    %2780 = vmatprep.subr.mxu0 0.0
    %2781 = vmatpush1.msra.mxu0 0.0
    %2782 = vmatprep.subr.mxu0 0.0
    %2783 = vmatpush1.msra.mxu0 0.0
    %2784 = vmatprep.subr.mxu0 0.0
    %2785 = vmatpush1.msra.mxu0 0.0
    %2786 = vmatprep.subr.mxu0 0.0
    %2787 = vmatpush1.msra.mxu0 0.0
    %2788 = vmatprep.subr.mxu0 0.0
    %2789 = vmatpush1.msra.mxu0 0.0
    %2790 = vmatprep.subr.mxu0 0.0
    %2791 = vmatpush1.msra.mxu0 0.0
    %2792 = vmatprep.subr.mxu0 0.0
    %2793 = vmatpush1.msra.mxu0 0.0
    %2794 = vmatprep.subr.mxu0 0.0
    %2795 = vmatpush1.msra.mxu0 0.0
    %2796 = vmatprep.subr.mxu0 0.0
    %2797 = vmatpush1.msra.mxu0 0.0
    %2798 = vmatprep.subr.mxu0 0.0
    %2799 = vmatpush1.msra.mxu0 0.0
    %2800 = vmatprep.subr.mxu0 0.0
    %2801 = vmatpush1.msra.mxu0 0.0
    %2802 = vmatprep.subr.mxu0 0.0
    %2803 = vmatpush1.msra.mxu0 0.0
    %2804 = vmatprep.subr.mxu0 0.0
    %2805 = vmatpush1.msra.mxu0 0.0
    %2806 = vmatprep.subr.mxu0 0.0
    %2807 = vmatpush1.msra.mxu0 0.0
    %2808 = vmatprep.subr.mxu0 0.0
    %2809 = vmatpush1.msra.mxu0 0.0
    %2810 = vmatprep.subr.mxu0 0.0
    %2811 = vmatpush1.msra.mxu0 0.0
    %2812 = vmatprep.subr.mxu0 0.0
    %2813 = vmatpush1.msra.mxu0 0.0
    %2814 = vmatprep.subr.mxu0 0.0
    %2815 = vmatpush1.msra.mxu0 0.0
    %2816 = vmatprep.subr.mxu0 0.0
    %2817 = vmatpush1.msra.mxu0 0.0
    %2818 = vmatprep.subr.mxu0 0.0
    %2819 = vmatpush1.msra.mxu0 0.0
    %2820 = vmatprep.subr.mxu0 0.0
    %2821 = vmatpush1.msra.mxu0 0.0
    %2822 = vmatprep.subr.mxu0 0.0
    %2823 = vmatpush1.msra.mxu0 0.0
    %2824 = vmatprep.subr.mxu0 0.0
    %2825 = vmatpush1.msra.mxu0 0.0
    %2826 = vmatprep.subr.mxu0 0.0
    %2827 = vmatpush1.msra.mxu0 0.0
    %2828 = vmatprep.mubr.f32.mxu0 0.0
    %2829 = vmatmul.mubr.f32.gmra.mrb[0].mxu0 %v1746
    %v2830 = vpop.f32.mrb[0].mxu0
    %v2831 = vadd.f32 0.0, %v2830
    %v2832 = vpop.f32.mrb[0].mxu0
    %2833 = vdwg.mxu0
    %2834 = vmatprep.subr.mxu0 0.0
    %2835 = vmatpush1.msra.mxu0 %v2751
    %2836 = vmatprep.subr.mxu0 0.0
    %2837 = vmatpush1.msra.mxu0 %v2752
    %2838 = vmatprep.subr.mxu0 0.0
    %2839 = vmatpush1.msra.mxu0 %v2753
    %2840 = vmatprep.subr.mxu0 0.0
    %2841 = vmatpush1.msra.mxu0 %v2754
    %2842 = vmatprep.subr.mxu0 0.0
    %2843 = vmatpush1.msra.mxu0 %v2755
    %2844 = vmatprep.subr.mxu0 0.0
    %2845 = vmatpush1.msra.mxu0 %v2756
    %2846 = vmatprep.subr.mxu0 0.0
    %2847 = vmatpush1.msra.mxu0 %v2757
    %2848 = vmatprep.subr.mxu0 0.0
    %2849 = vmatpush1.msra.mxu0 %v2758
    %2850 = vmatprep.subr.mxu0 0.0
    %2851 = vmatpush1.msra.mxu0 0.0
    %2852 = vmatprep.subr.mxu0 0.0
    %2853 = vmatpush1.msra.mxu0 0.0
    %2854 = vmatprep.subr.mxu0 0.0
    %2855 = vmatpush1.msra.mxu0 0.0
    %2856 = vmatprep.subr.mxu0 0.0
    %2857 = vmatpush1.msra.mxu0 0.0
    %2858 = vmatprep.subr.mxu0 0.0
    %2859 = vmatpush1.msra.mxu0 0.0
    %2860 = vmatprep.subr.mxu0 0.0
    %2861 = vmatpush1.msra.mxu0 0.0
    %2862 = vmatprep.subr.mxu0 0.0
    %2863 = vmatpush1.msra.mxu0 0.0
    %2864 = vmatprep.subr.mxu0 0.0
    %2865 = vmatpush1.msra.mxu0 0.0
    %2866 = vmatprep.subr.mxu0 0.0
    %2867 = vmatpush1.msra.mxu0 0.0
    %2868 = vmatprep.subr.mxu0 0.0
    %2869 = vmatpush1.msra.mxu0 0.0
    %2870 = vmatprep.subr.mxu0 0.0
    %2871 = vmatpush1.msra.mxu0 0.0
    %2872 = vmatprep.subr.mxu0 0.0
    %2873 = vmatpush1.msra.mxu0 0.0
    %2874 = vmatprep.subr.mxu0 0.0
    %2875 = vmatpush1.msra.mxu0 0.0
    %2876 = vmatprep.subr.mxu0 0.0
    %2877 = vmatpush1.msra.mxu0 0.0
    %2878 = vmatprep.subr.mxu0 0.0
    %2879 = vmatpush1.msra.mxu0 0.0
    %2880 = vmatprep.subr.mxu0 0.0
    %2881 = vmatpush1.msra.mxu0 0.0
    %2882 = vmatprep.subr.mxu0 0.0
    %2883 = vmatpush1.msra.mxu0 0.0
    %2884 = vmatprep.subr.mxu0 0.0
    %2885 = vmatpush1.msra.mxu0 0.0
    %2886 = vmatprep.subr.mxu0 0.0
    %2887 = vmatpush1.msra.mxu0 0.0
    %2888 = vmatprep.subr.mxu0 0.0
    %2889 = vmatpush1.msra.mxu0 0.0
    %2890 = vmatprep.subr.mxu0 0.0
    %2891 = vmatpush1.msra.mxu0 0.0
    %2892 = vmatprep.subr.mxu0 0.0
    %2893 = vmatpush1.msra.mxu0 0.0
    %2894 = vmatprep.subr.mxu0 0.0
    %2895 = vmatpush1.msra.mxu0 0.0
    %2896 = vmatprep.subr.mxu0 0.0
    %2897 = vmatpush1.msra.mxu0 0.0
    %2898 = vmatprep.mubr.f32.mxu0 0.0
    %2899 = vmatmul.mubr.f32.gmra.mrb[0].mxu0 %v2495
    %v2900 = vpop.f32.mrb[0].mxu0
    %v2901 = vadd.f32 %v2831, %v2900
    %v2902 = vpop.f32.mrb[0].mxu0
    %2903 = vdwg.mxu0
    %s2904 = scalar_lea.vmem %s14, 2
    %v2905 = vld [vmem:[%s2904] sm:$0x1]
    %v2907 = vlaneseq
    %v2908 = vshrl.u32 %v2907, 7
    %v2909 = vsub.s32 0, %v2908
    %v2910 = vrot.slane %v2905, %v2909
    %v2912 = vadd.f32 %v2901, %v2910
    %v2913 = vtanh.pop %v2912
    %s2914 = scalar_lea.vmem %s12, 192
    %v2915 = vld [vmem:[%s2914] sm:$0xff]
    %v2916 = vld [vmem:[%s2914 + $0x8] sm:$0xff]
    %v2917 = vld [vmem:[%s2914 + $0x10] sm:$0xff]
    %v2918 = vld [vmem:[%s2914 + $0x18] sm:$0xff]
    %v2919 = vld [vmem:[%s2914 + $0x20] sm:$0xff]
    %v2920 = vld [vmem:[%s2914 + $0x28] sm:$0xff]
    %v2921 = vld [vmem:[%s2914 + $0x30] sm:$0xff]
    %v2922 = vld [vmem:[%s2914 + $0x38] sm:$0xff]
    %s2923 = scalar_lea.vmem %s13, 96
    %v2924 = vld [vmem:[%s2923] sm:$0xff]
    %v2925 = vld [vmem:[%s2923 + $0x8] sm:$0xff]
    %v2926 = vld [vmem:[%s2923 + $0x10] sm:$0xff]
    %v2927 = vld [vmem:[%s2923 + $0x18] sm:$0xff]
    %2928 = vmatprep.subr.mxu0 0.0
    %2929 = vmatpush1.msra.mxu0 %v2924
    %2930 = vmatprep.subr.mxu0 0.0
    %2931 = vmatpush1.msra.mxu0 %v2925
    %2932 = vmatprep.subr.mxu0 0.0
    %2933 = vmatpush1.msra.mxu0 %v2926
    %2934 = vmatprep.subr.mxu0 0.0
    %2935 = vmatpush1.msra.mxu0 %v2927
    %2936 = vmatprep.subr.mxu0 0.0
    %2937 = vmatpush1.msra.mxu0 0.0
    %2938 = vmatprep.subr.mxu0 0.0
    %2939 = vmatpush1.msra.mxu0 0.0
    %2940 = vmatprep.subr.mxu0 0.0
    %2941 = vmatpush1.msra.mxu0 0.0
    %2942 = vmatprep.subr.mxu0 0.0
    %2943 = vmatpush1.msra.mxu0 0.0
    %2944 = vmatprep.subr.mxu0 0.0
    %2945 = vmatpush1.msra.mxu0 0.0
    %2946 = vmatprep.subr.mxu0 0.0
    %2947 = vmatpush1.msra.mxu0 0.0
    %2948 = vmatprep.subr.mxu0 0.0
    %2949 = vmatpush1.msra.mxu0 0.0
    %2950 = vmatprep.subr.mxu0 0.0
    %2951 = vmatpush1.msra.mxu0 0.0
    %2952 = vmatprep.subr.mxu0 0.0
    %2953 = vmatpush1.msra.mxu0 0.0
    %2954 = vmatprep.subr.mxu0 0.0
    %2955 = vmatpush1.msra.mxu0 0.0
    %2956 = vmatprep.subr.mxu0 0.0
    %2957 = vmatpush1.msra.mxu0 0.0
    %2958 = vmatprep.subr.mxu0 0.0
    %2959 = vmatpush1.msra.mxu0 0.0
    %2960 = vmatprep.subr.mxu0 0.0
    %2961 = vmatpush1.msra.mxu0 0.0
    %2962 = vmatprep.subr.mxu0 0.0
    %2963 = vmatpush1.msra.mxu0 0.0
    %2964 = vmatprep.subr.mxu0 0.0
    %2965 = vmatpush1.msra.mxu0 0.0
    %2966 = vmatprep.subr.mxu0 0.0
    %2967 = vmatpush1.msra.mxu0 0.0
    %2968 = vmatprep.subr.mxu0 0.0
    %2969 = vmatpush1.msra.mxu0 0.0
    %2970 = vmatprep.subr.mxu0 0.0
    %2971 = vmatpush1.msra.mxu0 0.0
    %2972 = vmatprep.subr.mxu0 0.0
    %2973 = vmatpush1.msra.mxu0 0.0
    %2974 = vmatprep.subr.mxu0 0.0
    %2975 = vmatpush1.msra.mxu0 0.0
    %2976 = vmatprep.subr.mxu0 0.0
    %2977 = vmatpush1.msra.mxu0 0.0
    %2978 = vmatprep.subr.mxu0 0.0
    %2979 = vmatpush1.msra.mxu0 0.0
    %2980 = vmatprep.subr.mxu0 0.0
    %2981 = vmatpush1.msra.mxu0 0.0
    %2982 = vmatprep.subr.mxu0 0.0
    %2983 = vmatpush1.msra.mxu0 0.0
    %2984 = vmatprep.subr.mxu0 0.0
    %2985 = vmatpush1.msra.mxu0 0.0
    %2986 = vmatprep.subr.mxu0 0.0
    %2987 = vmatpush1.msra.mxu0 0.0
    %2988 = vmatprep.subr.mxu0 0.0
    %2989 = vmatpush1.msra.mxu0 0.0
    %2990 = vmatprep.subr.mxu0 0.0
    %2991 = vmatpush1.msra.mxu0 0.0
    %2992 = vmatprep.mubr.f32.mxu0 0.0
    %2993 = vmatmul.mubr.f32.gmra.mrb[0].mxu0 %v1746
    %v2994 = vpop.f32.mrb[0].mxu0
    %v2995 = vadd.f32 0.0, %v2994
    %v2996 = vpop.f32.mrb[0].mxu0
    %2997 = vdwg.mxu0
    %2998 = vmatprep.subr.mxu0 0.0
    %2999 = vmatpush1.msra.mxu0 %v2915
    %3000 = vmatprep.subr.mxu0 0.0
    %3001 = vmatpush1.msra.mxu0 %v2916
    %3002 = vmatprep.subr.mxu0 0.0
    %3003 = vmatpush1.msra.mxu0 %v2917
    %3004 = vmatprep.subr.mxu0 0.0
    %3005 = vmatpush1.msra.mxu0 %v2918
    %3006 = vmatprep.subr.mxu0 0.0
    %3007 = vmatpush1.msra.mxu0 %v2919
    %3008 = vmatprep.subr.mxu0 0.0
    %3009 = vmatpush1.msra.mxu0 %v2920
    %3010 = vmatprep.subr.mxu0 0.0
    %3011 = vmatpush1.msra.mxu0 %v2921
    %3012 = vmatprep.subr.mxu0 0.0
    %3013 = vmatpush1.msra.mxu0 %v2922
    %3014 = vmatprep.subr.mxu0 0.0
    %3015 = vmatpush1.msra.mxu0 0.0
    %3016 = vmatprep.subr.mxu0 0.0
    %3017 = vmatpush1.msra.mxu0 0.0
    %3018 = vmatprep.subr.mxu0 0.0
    %3019 = vmatpush1.msra.mxu0 0.0
    %3020 = vmatprep.subr.mxu0 0.0
    %3021 = vmatpush1.msra.mxu0 0.0
    %3022 = vmatprep.subr.mxu0 0.0
    %3023 = vmatpush1.msra.mxu0 0.0
    %3024 = vmatprep.subr.mxu0 0.0
    %3025 = vmatpush1.msra.mxu0 0.0
    %3026 = vmatprep.subr.mxu0 0.0
    %3027 = vmatpush1.msra.mxu0 0.0
    %3028 = vmatprep.subr.mxu0 0.0
    %3029 = vmatpush1.msra.mxu0 0.0
    %3030 = vmatprep.subr.mxu0 0.0
    %3031 = vmatpush1.msra.mxu0 0.0
    %3032 = vmatprep.subr.mxu0 0.0
    %3033 = vmatpush1.msra.mxu0 0.0
    %3034 = vmatprep.subr.mxu0 0.0
    %3035 = vmatpush1.msra.mxu0 0.0
    %3036 = vmatprep.subr.mxu0 0.0
    %3037 = vmatpush1.msra.mxu0 0.0
    %3038 = vmatprep.subr.mxu0 0.0
    %3039 = vmatpush1.msra.mxu0 0.0
    %3040 = vmatprep.subr.mxu0 0.0
    %3041 = vmatpush1.msra.mxu0 0.0
    %3042 = vmatprep.subr.mxu0 0.0
    %3043 = vmatpush1.msra.mxu0 0.0
    %3044 = vmatprep.subr.mxu0 0.0
    %3045 = vmatpush1.msra.mxu0 0.0
    %3046 = vmatprep.subr.mxu0 0.0
    %3047 = vmatpush1.msra.mxu0 0.0
    %3048 = vmatprep.subr.mxu0 0.0
    %3049 = vmatpush1.msra.mxu0 0.0
    %3050 = vmatprep.subr.mxu0 0.0
    %3051 = vmatpush1.msra.mxu0 0.0
    %3052 = vmatprep.subr.mxu0 0.0
    %3053 = vmatpush1.msra.mxu0 0.0
    %3054 = vmatprep.subr.mxu0 0.0
    %3055 = vmatpush1.msra.mxu0 0.0
    %3056 = vmatprep.subr.mxu0 0.0
    %3057 = vmatpush1.msra.mxu0 0.0
    %3058 = vmatprep.subr.mxu0 0.0
    %3059 = vmatpush1.msra.mxu0 0.0
    %3060 = vmatprep.subr.mxu0 0.0
    %3061 = vmatpush1.msra.mxu0 0.0
    %3062 = vmatprep.mubr.f32.mxu0 0.0
    %3063 = vmatmul.mubr.f32.gmra.mrb[0].mxu0 %v2495
    %v3064 = vpop.f32.mrb[0].mxu0
    %v3065 = vadd.f32 %v2995, %v3064
    %v3066 = vpop.f32.mrb[0].mxu0
    %3067 = vdwg.mxu0
    %s3068 = scalar_lea.vmem %s14, 3
    %v3069 = vld [vmem:[%s3068] sm:$0x1]
    %v3071 = vlaneseq
    %v3072 = vshrl.u32 %v3071, 7
    %v3073 = vsub.s32 0, %v3072
    %v3074 = vrot.slane %v3069, %v3073
    %v3076 = vadd.f32 %v3065, %v3074
    %v3077 = vxor.u32 %v3076, 2147483648
    %v3078 = vmul.f32 %v3077, 1.442695
    %v3079 = vpow.pop %v3078
    %v3080 = vadd.f32 %v3079, 1.0
    %v3081 = vrcp.pop %v3080
    %v3082 = vmul.f32 1.0, %v3081
    %v3083 = vmul.f32 %v2749, 0.0
    %v3084 = vmul.f32 %v2580, %v2913
    %v3085 = vadd.f32 %v3083, %v3084
    %v3086 = vtanh.pop %v3085
    %v3087 = vmul.f32 %v3082, %v3086
    %v3089 = vrot.slane %v1204, 2
    %v3092 = vrot.slane %v1247, 3
    %v3094 = vsel %vm454, %v3089, %v3092
    %v3096 = vsel %vm1744, %v2411, 0
    %3098 = vmatprep.subr.mxu0 0.0
    %3099 = vmatpush1.msra.mxu0 %v1740
    %3100 = vmatprep.subr.mxu0 0.0
    %3101 = vmatpush1.msra.mxu0 %v1741
    %3102 = vmatprep.subr.mxu0 0.0
    %3103 = vmatpush1.msra.mxu0 %v1742
    %3104 = vmatprep.subr.mxu0 0.0
    %3105 = vmatpush1.msra.mxu0 %v1743
    %3106 = vmatprep.subr.mxu0 0.0
    %3107 = vmatpush1.msra.mxu0 0.0
    %3108 = vmatprep.subr.mxu0 0.0
    %3109 = vmatpush1.msra.mxu0 0.0
    %3110 = vmatprep.subr.mxu0 0.0
    %3111 = vmatpush1.msra.mxu0 0.0
    %3112 = vmatprep.subr.mxu0 0.0
    %3113 = vmatpush1.msra.mxu0 0.0
    %3114 = vmatprep.subr.mxu0 0.0
    %3115 = vmatpush1.msra.mxu0 0.0
    %3116 = vmatprep.subr.mxu0 0.0
    %3117 = vmatpush1.msra.mxu0 0.0
    %3118 = vmatprep.subr.mxu0 0.0
    %3119 = vmatpush1.msra.mxu0 0.0
    %3120 = vmatprep.subr.mxu0 0.0
    %3121 = vmatpush1.msra.mxu0 0.0
    %3122 = vmatprep.subr.mxu0 0.0
    %3123 = vmatpush1.msra.mxu0 0.0
    %3124 = vmatprep.subr.mxu0 0.0
    %3125 = vmatpush1.msra.mxu0 0.0
    %3126 = vmatprep.subr.mxu0 0.0
    %3127 = vmatpush1.msra.mxu0 0.0
    %3128 = vmatprep.subr.mxu0 0.0
    %3129 = vmatpush1.msra.mxu0 0.0
    %3130 = vmatprep.subr.mxu0 0.0
    %3131 = vmatpush1.msra.mxu0 0.0
    %3132 = vmatprep.subr.mxu0 0.0
    %3133 = vmatpush1.msra.mxu0 0.0
    %3134 = vmatprep.subr.mxu0 0.0
    %3135 = vmatpush1.msra.mxu0 0.0
    %3136 = vmatprep.subr.mxu0 0.0
    %3137 = vmatpush1.msra.mxu0 0.0
    %3138 = vmatprep.subr.mxu0 0.0
    %3139 = vmatpush1.msra.mxu0 0.0
    %3140 = vmatprep.subr.mxu0 0.0
    %3141 = vmatpush1.msra.mxu0 0.0
    %3142 = vmatprep.subr.mxu0 0.0
    %3143 = vmatpush1.msra.mxu0 0.0
    %3144 = vmatprep.subr.mxu0 0.0
    %3145 = vmatpush1.msra.mxu0 0.0
    %3146 = vmatprep.subr.mxu0 0.0
    %3147 = vmatpush1.msra.mxu0 0.0
    %3148 = vmatprep.subr.mxu0 0.0
    %3149 = vmatpush1.msra.mxu0 0.0
    %3150 = vmatprep.subr.mxu0 0.0
    %3151 = vmatpush1.msra.mxu0 0.0
    %3152 = vmatprep.subr.mxu0 0.0
    %3153 = vmatpush1.msra.mxu0 0.0
    %3154 = vmatprep.subr.mxu0 0.0
    %3155 = vmatpush1.msra.mxu0 0.0
    %3156 = vmatprep.subr.mxu0 0.0
    %3157 = vmatpush1.msra.mxu0 0.0
    %3158 = vmatprep.subr.mxu0 0.0
    %3159 = vmatpush1.msra.mxu0 0.0
    %3160 = vmatprep.subr.mxu0 0.0
    %3161 = vmatpush1.msra.mxu0 0.0
    %3162 = vmatprep.mubr.f32.mxu0 0.0
    %3163 = vmatmul.mubr.f32.gmra.mrb[0].mxu0 %v3096
    %v3164 = vpop.f32.mrb[0].mxu0
    %v3165 = vadd.f32 0.0, %v3164
    %v3166 = vpop.f32.mrb[0].mxu0
    %3167 = vdwg.mxu0
    %v3169 = vsel %vm104, %v3094, 0
    %3171 = vmatprep.subr.mxu0 0.0
    %3172 = vmatpush1.msra.mxu0 %v1732
    %3173 = vmatprep.subr.mxu0 0.0
    %3174 = vmatpush1.msra.mxu0 %v1733
    %3175 = vmatprep.subr.mxu0 0.0
    %3176 = vmatpush1.msra.mxu0 %v1734
    %3177 = vmatprep.subr.mxu0 0.0
    %3178 = vmatpush1.msra.mxu0 %v1735
    %3179 = vmatprep.subr.mxu0 0.0
    %3180 = vmatpush1.msra.mxu0 %v1736
    %3181 = vmatprep.subr.mxu0 0.0
    %3182 = vmatpush1.msra.mxu0 %v1737
    %3183 = vmatprep.subr.mxu0 0.0
    %3184 = vmatpush1.msra.mxu0 %v1738
    %3185 = vmatprep.subr.mxu0 0.0
    %3186 = vmatpush1.msra.mxu0 %v1739
    %3187 = vmatprep.subr.mxu0 0.0
    %3188 = vmatpush1.msra.mxu0 0.0
    %3189 = vmatprep.subr.mxu0 0.0
    %3190 = vmatpush1.msra.mxu0 0.0
    %3191 = vmatprep.subr.mxu0 0.0
    %3192 = vmatpush1.msra.mxu0 0.0
    %3193 = vmatprep.subr.mxu0 0.0
    %3194 = vmatpush1.msra.mxu0 0.0
    %3195 = vmatprep.subr.mxu0 0.0
    %3196 = vmatpush1.msra.mxu0 0.0
    %3197 = vmatprep.subr.mxu0 0.0
    %3198 = vmatpush1.msra.mxu0 0.0
    %3199 = vmatprep.subr.mxu0 0.0
    %3200 = vmatpush1.msra.mxu0 0.0
    %3201 = vmatprep.subr.mxu0 0.0
    %3202 = vmatpush1.msra.mxu0 0.0
    %3203 = vmatprep.subr.mxu0 0.0
    %3204 = vmatpush1.msra.mxu0 0.0
    %3205 = vmatprep.subr.mxu0 0.0
    %3206 = vmatpush1.msra.mxu0 0.0
    %3207 = vmatprep.subr.mxu0 0.0
    %3208 = vmatpush1.msra.mxu0 0.0
    %3209 = vmatprep.subr.mxu0 0.0
    %3210 = vmatpush1.msra.mxu0 0.0
    %3211 = vmatprep.subr.mxu0 0.0
    %3212 = vmatpush1.msra.mxu0 0.0
    %3213 = vmatprep.subr.mxu0 0.0
    %3214 = vmatpush1.msra.mxu0 0.0
    %3215 = vmatprep.subr.mxu0 0.0
    %3216 = vmatpush1.msra.mxu0 0.0
    %3217 = vmatprep.subr.mxu0 0.0
    %3218 = vmatpush1.msra.mxu0 0.0
    %3219 = vmatprep.subr.mxu0 0.0
    %3220 = vmatpush1.msra.mxu0 0.0
    %3221 = vmatprep.subr.mxu0 0.0
    %3222 = vmatpush1.msra.mxu0 0.0
    %3223 = vmatprep.subr.mxu0 0.0
    %3224 = vmatpush1.msra.mxu0 0.0
    %3225 = vmatprep.subr.mxu0 0.0
    %3226 = vmatpush1.msra.mxu0 0.0
    %3227 = vmatprep.subr.mxu0 0.0
    %3228 = vmatpush1.msra.mxu0 0.0
    %3229 = vmatprep.subr.mxu0 0.0
    %3230 = vmatpush1.msra.mxu0 0.0
    %3231 = vmatprep.subr.mxu0 0.0
    %3232 = vmatpush1.msra.mxu0 0.0
    %3233 = vmatprep.subr.mxu0 0.0
    %3234 = vmatpush1.msra.mxu0 0.0
    %3235 = vmatprep.mubr.f32.mxu0 0.0
    %3236 = vmatmul.mubr.f32.gmra.mrb[0].mxu0 %v3169
    %v3237 = vpop.f32.mrb[0].mxu0
    %v3238 = vadd.f32 %v3165, %v3237
    %v3239 = vpop.f32.mrb[0].mxu0
    %3240 = vdwg.mxu0
    %v3241 = vadd.f32 %v3238, %v1896
    %v3242 = vxor.u32 %v3241, 2147483648
    %v3243 = vmul.f32 %v3242, 1.442695
    %v3244 = vpow.pop %v3243
    %v3245 = vadd.f32 %v3244, 1.0
    %v3246 = vrcp.pop %v3245
    %v3247 = vmul.f32 1.0, %v3246
    %3248 = vmatprep.subr.mxu0 0.0
    %3249 = vmatpush1.msra.mxu0 %v1915
    %3250 = vmatprep.subr.mxu0 0.0
    %3251 = vmatpush1.msra.mxu0 %v1916
    %3252 = vmatprep.subr.mxu0 0.0
    %3253 = vmatpush1.msra.mxu0 %v1917
    %3254 = vmatprep.subr.mxu0 0.0
    %3255 = vmatpush1.msra.mxu0 %v1918
    %3256 = vmatprep.subr.mxu0 0.0
    %3257 = vmatpush1.msra.mxu0 0.0
    %3258 = vmatprep.subr.mxu0 0.0
    %3259 = vmatpush1.msra.mxu0 0.0
    %3260 = vmatprep.subr.mxu0 0.0
    %3261 = vmatpush1.msra.mxu0 0.0
    %3262 = vmatprep.subr.mxu0 0.0
    %3263 = vmatpush1.msra.mxu0 0.0
    %3264 = vmatprep.subr.mxu0 0.0
    %3265 = vmatpush1.msra.mxu0 0.0
    %3266 = vmatprep.subr.mxu0 0.0
    %3267 = vmatpush1.msra.mxu0 0.0
    %3268 = vmatprep.subr.mxu0 0.0
    %3269 = vmatpush1.msra.mxu0 0.0
    %3270 = vmatprep.subr.mxu0 0.0
    %3271 = vmatpush1.msra.mxu0 0.0
    %3272 = vmatprep.subr.mxu0 0.0
    %3273 = vmatpush1.msra.mxu0 0.0
    %3274 = vmatprep.subr.mxu0 0.0
    %3275 = vmatpush1.msra.mxu0 0.0
    %3276 = vmatprep.subr.mxu0 0.0
    %3277 = vmatpush1.msra.mxu0 0.0
    %3278 = vmatprep.subr.mxu0 0.0
    %3279 = vmatpush1.msra.mxu0 0.0
    %3280 = vmatprep.subr.mxu0 0.0
    %3281 = vmatpush1.msra.mxu0 0.0
    %3282 = vmatprep.subr.mxu0 0.0
    %3283 = vmatpush1.msra.mxu0 0.0
    %3284 = vmatprep.subr.mxu0 0.0
    %3285 = vmatpush1.msra.mxu0 0.0
    %3286 = vmatprep.subr.mxu0 0.0
    %3287 = vmatpush1.msra.mxu0 0.0
    %3288 = vmatprep.subr.mxu0 0.0
    %3289 = vmatpush1.msra.mxu0 0.0
    %3290 = vmatprep.subr.mxu0 0.0
    %3291 = vmatpush1.msra.mxu0 0.0
    %3292 = vmatprep.subr.mxu0 0.0
    %3293 = vmatpush1.msra.mxu0 0.0
    %3294 = vmatprep.subr.mxu0 0.0
    %3295 = vmatpush1.msra.mxu0 0.0
    %3296 = vmatprep.subr.mxu0 0.0
    %3297 = vmatpush1.msra.mxu0 0.0
    %3298 = vmatprep.subr.mxu0 0.0
    %3299 = vmatpush1.msra.mxu0 0.0
    %3300 = vmatprep.subr.mxu0 0.0
    %3301 = vmatpush1.msra.mxu0 0.0
    %3302 = vmatprep.subr.mxu0 0.0
    %3303 = vmatpush1.msra.mxu0 0.0
    %3304 = vmatprep.subr.mxu0 0.0
    %3305 = vmatpush1.msra.mxu0 0.0
    %3306 = vmatprep.subr.mxu0 0.0
    %3307 = vmatpush1.msra.mxu0 0.0
    %3308 = vmatprep.subr.mxu0 0.0
    %3309 = vmatpush1.msra.mxu0 0.0
    %3310 = vmatprep.subr.mxu0 0.0
    %3311 = vmatpush1.msra.mxu0 0.0
    %3312 = vmatprep.mubr.f32.mxu0 0.0
    %3313 = vmatmul.mubr.f32.gmra.mrb[0].mxu0 %v3096
    %v3314 = vpop.f32.mrb[0].mxu0
    %v3315 = vadd.f32 0.0, %v3314
    %v3316 = vpop.f32.mrb[0].mxu0
    %3317 = vdwg.mxu0
    %3318 = vmatprep.subr.mxu0 0.0
    %3319 = vmatpush1.msra.mxu0 %v1906
    %3320 = vmatprep.subr.mxu0 0.0
    %3321 = vmatpush1.msra.mxu0 %v1907
    %3322 = vmatprep.subr.mxu0 0.0
    %3323 = vmatpush1.msra.mxu0 %v1908
    %3324 = vmatprep.subr.mxu0 0.0
    %3325 = vmatpush1.msra.mxu0 %v1909
    %3326 = vmatprep.subr.mxu0 0.0
    %3327 = vmatpush1.msra.mxu0 %v1910
    %3328 = vmatprep.subr.mxu0 0.0
    %3329 = vmatpush1.msra.mxu0 %v1911
    %3330 = vmatprep.subr.mxu0 0.0
    %3331 = vmatpush1.msra.mxu0 %v1912
    %3332 = vmatprep.subr.mxu0 0.0
    %3333 = vmatpush1.msra.mxu0 %v1913
    %3334 = vmatprep.subr.mxu0 0.0
    %3335 = vmatpush1.msra.mxu0 0.0
    %3336 = vmatprep.subr.mxu0 0.0
    %3337 = vmatpush1.msra.mxu0 0.0
    %3338 = vmatprep.subr.mxu0 0.0
    %3339 = vmatpush1.msra.mxu0 0.0
    %3340 = vmatprep.subr.mxu0 0.0
    %3341 = vmatpush1.msra.mxu0 0.0
    %3342 = vmatprep.subr.mxu0 0.0
    %3343 = vmatpush1.msra.mxu0 0.0
    %3344 = vmatprep.subr.mxu0 0.0
    %3345 = vmatpush1.msra.mxu0 0.0
    %3346 = vmatprep.subr.mxu0 0.0
    %3347 = vmatpush1.msra.mxu0 0.0
    %3348 = vmatprep.subr.mxu0 0.0
    %3349 = vmatpush1.msra.mxu0 0.0
    %3350 = vmatprep.subr.mxu0 0.0
    %3351 = vmatpush1.msra.mxu0 0.0
    %3352 = vmatprep.subr.mxu0 0.0
    %3353 = vmatpush1.msra.mxu0 0.0
    %3354 = vmatprep.subr.mxu0 0.0
    %3355 = vmatpush1.msra.mxu0 0.0
    %3356 = vmatprep.subr.mxu0 0.0
    %3357 = vmatpush1.msra.mxu0 0.0
    %3358 = vmatprep.subr.mxu0 0.0
    %3359 = vmatpush1.msra.mxu0 0.0
    %3360 = vmatprep.subr.mxu0 0.0
    %3361 = vmatpush1.msra.mxu0 0.0
    %3362 = vmatprep.subr.mxu0 0.0
    %3363 = vmatpush1.msra.mxu0 0.0
    %3364 = vmatprep.subr.mxu0 0.0
    %3365 = vmatpush1.msra.mxu0 0.0
    %3366 = vmatprep.subr.mxu0 0.0
    %3367 = vmatpush1.msra.mxu0 0.0
    %3368 = vmatprep.subr.mxu0 0.0
    %3369 = vmatpush1.msra.mxu0 0.0
    %3370 = vmatprep.subr.mxu0 0.0
    %3371 = vmatpush1.msra.mxu0 0.0
    %3372 = vmatprep.subr.mxu0 0.0
    %3373 = vmatpush1.msra.mxu0 0.0
    %3374 = vmatprep.subr.mxu0 0.0
    %3375 = vmatpush1.msra.mxu0 0.0
    %3376 = vmatprep.subr.mxu0 0.0
    %3377 = vmatpush1.msra.mxu0 0.0
    %3378 = vmatprep.subr.mxu0 0.0
    %3379 = vmatpush1.msra.mxu0 0.0
    %3380 = vmatprep.subr.mxu0 0.0
    %3381 = vmatpush1.msra.mxu0 0.0
    %3382 = vmatprep.mubr.f32.mxu0 0.0
    %3383 = vmatmul.mubr.f32.gmra.mrb[0].mxu0 %v3169
    %v3384 = vpop.f32.mrb[0].mxu0
    %v3385 = vadd.f32 %v3315, %v3384
    %v3386 = vpop.f32.mrb[0].mxu0
    %3387 = vdwg.mxu0
    %v3388 = vadd.f32 %v3385, %v2065
    %v3389 = vxor.u32 %v3388, 2147483648
    %v3390 = vmul.f32 %v3389, 1.442695
    %v3391 = vpow.pop %v3390
    %v3392 = vadd.f32 %v3391, 1.0
    %v3393 = vrcp.pop %v3392
    %v3394 = vmul.f32 1.0, %v3393
    %3395 = vmatprep.subr.mxu0 0.0
    %3396 = vmatpush1.msra.mxu0 %v2084
    %3397 = vmatprep.subr.mxu0 0.0
    %3398 = vmatpush1.msra.mxu0 %v2085
    %3399 = vmatprep.subr.mxu0 0.0
    %3400 = vmatpush1.msra.mxu0 %v2086
    %3401 = vmatprep.subr.mxu0 0.0
    %3402 = vmatpush1.msra.mxu0 %v2087
    %3403 = vmatprep.subr.mxu0 0.0
    %3404 = vmatpush1.msra.mxu0 0.0
    %3405 = vmatprep.subr.mxu0 0.0
    %3406 = vmatpush1.msra.mxu0 0.0
    %3407 = vmatprep.subr.mxu0 0.0
    %3408 = vmatpush1.msra.mxu0 0.0
    %3409 = vmatprep.subr.mxu0 0.0
    %3410 = vmatpush1.msra.mxu0 0.0
    %3411 = vmatprep.subr.mxu0 0.0
    %3412 = vmatpush1.msra.mxu0 0.0
    %3413 = vmatprep.subr.mxu0 0.0
    %3414 = vmatpush1.msra.mxu0 0.0
    %3415 = vmatprep.subr.mxu0 0.0
    %3416 = vmatpush1.msra.mxu0 0.0
    %3417 = vmatprep.subr.mxu0 0.0
    %3418 = vmatpush1.msra.mxu0 0.0
    %3419 = vmatprep.subr.mxu0 0.0
    %3420 = vmatpush1.msra.mxu0 0.0
    %3421 = vmatprep.subr.mxu0 0.0
    %3422 = vmatpush1.msra.mxu0 0.0
    %3423 = vmatprep.subr.mxu0 0.0
    %3424 = vmatpush1.msra.mxu0 0.0
    %3425 = vmatprep.subr.mxu0 0.0
    %3426 = vmatpush1.msra.mxu0 0.0
    %3427 = vmatprep.subr.mxu0 0.0
    %3428 = vmatpush1.msra.mxu0 0.0
    %3429 = vmatprep.subr.mxu0 0.0
    %3430 = vmatpush1.msra.mxu0 0.0
    %3431 = vmatprep.subr.mxu0 0.0
    %3432 = vmatpush1.msra.mxu0 0.0
    %3433 = vmatprep.subr.mxu0 0.0
    %3434 = vmatpush1.msra.mxu0 0.0
    %3435 = vmatprep.subr.mxu0 0.0
    %3436 = vmatpush1.msra.mxu0 0.0
    %3437 = vmatprep.subr.mxu0 0.0
    %3438 = vmatpush1.msra.mxu0 0.0
    %3439 = vmatprep.subr.mxu0 0.0
    %3440 = vmatpush1.msra.mxu0 0.0
    %3441 = vmatprep.subr.mxu0 0.0
    %3442 = vmatpush1.msra.mxu0 0.0
    %3443 = vmatprep.subr.mxu0 0.0
    %3444 = vmatpush1.msra.mxu0 0.0
    %3445 = vmatprep.subr.mxu0 0.0
    %3446 = vmatpush1.msra.mxu0 0.0
    %3447 = vmatprep.subr.mxu0 0.0
    %3448 = vmatpush1.msra.mxu0 0.0
    %3449 = vmatprep.subr.mxu0 0.0
    %3450 = vmatpush1.msra.mxu0 0.0
    %3451 = vmatprep.subr.mxu0 0.0
    %3452 = vmatpush1.msra.mxu0 0.0
    %3453 = vmatprep.subr.mxu0 0.0
    %3454 = vmatpush1.msra.mxu0 0.0
    %3455 = vmatprep.subr.mxu0 0.0
    %3456 = vmatpush1.msra.mxu0 0.0
    %3457 = vmatprep.subr.mxu0 0.0
    %3458 = vmatpush1.msra.mxu0 0.0
    %3459 = vmatprep.mubr.f32.mxu0 0.0
    %3460 = vmatmul.mubr.f32.gmra.mrb[0].mxu0 %v3096
    %v3461 = vpop.f32.mrb[0].mxu0
    %v3462 = vadd.f32 0.0, %v3461
    %v3463 = vpop.f32.mrb[0].mxu0
    %3464 = vdwg.mxu0
    %3465 = vmatprep.subr.mxu0 0.0
    %3466 = vmatpush1.msra.mxu0 %v2075
    %3467 = vmatprep.subr.mxu0 0.0
    %3468 = vmatpush1.msra.mxu0 %v2076
    %3469 = vmatprep.subr.mxu0 0.0
    %3470 = vmatpush1.msra.mxu0 %v2077
    %3471 = vmatprep.subr.mxu0 0.0
    %3472 = vmatpush1.msra.mxu0 %v2078
    %3473 = vmatprep.subr.mxu0 0.0
    %3474 = vmatpush1.msra.mxu0 %v2079
    %3475 = vmatprep.subr.mxu0 0.0
    %3476 = vmatpush1.msra.mxu0 %v2080
    %3477 = vmatprep.subr.mxu0 0.0
    %3478 = vmatpush1.msra.mxu0 %v2081
    %3479 = vmatprep.subr.mxu0 0.0
    %3480 = vmatpush1.msra.mxu0 %v2082
    %3481 = vmatprep.subr.mxu0 0.0
    %3482 = vmatpush1.msra.mxu0 0.0
    %3483 = vmatprep.subr.mxu0 0.0
    %3484 = vmatpush1.msra.mxu0 0.0
    %3485 = vmatprep.subr.mxu0 0.0
    %3486 = vmatpush1.msra.mxu0 0.0
    %3487 = vmatprep.subr.mxu0 0.0
    %3488 = vmatpush1.msra.mxu0 0.0
    %3489 = vmatprep.subr.mxu0 0.0
    %3490 = vmatpush1.msra.mxu0 0.0
    %3491 = vmatprep.subr.mxu0 0.0
    %3492 = vmatpush1.msra.mxu0 0.0
    %3493 = vmatprep.subr.mxu0 0.0
    %3494 = vmatpush1.msra.mxu0 0.0
    %3495 = vmatprep.subr.mxu0 0.0
    %3496 = vmatpush1.msra.mxu0 0.0
    %3497 = vmatprep.subr.mxu0 0.0
    %3498 = vmatpush1.msra.mxu0 0.0
    %3499 = vmatprep.subr.mxu0 0.0
    %3500 = vmatpush1.msra.mxu0 0.0
    %3501 = vmatprep.subr.mxu0 0.0
    %3502 = vmatpush1.msra.mxu0 0.0
    %3503 = vmatprep.subr.mxu0 0.0
    %3504 = vmatpush1.msra.mxu0 0.0
    %3505 = vmatprep.subr.mxu0 0.0
    %3506 = vmatpush1.msra.mxu0 0.0
    %3507 = vmatprep.subr.mxu0 0.0
    %3508 = vmatpush1.msra.mxu0 0.0
    %3509 = vmatprep.subr.mxu0 0.0
    %3510 = vmatpush1.msra.mxu0 0.0
    %3511 = vmatprep.subr.mxu0 0.0
    %3512 = vmatpush1.msra.mxu0 0.0
    %3513 = vmatprep.subr.mxu0 0.0
    %3514 = vmatpush1.msra.mxu0 0.0
    %3515 = vmatprep.subr.mxu0 0.0
    %3516 = vmatpush1.msra.mxu0 0.0
    %3517 = vmatprep.subr.mxu0 0.0
    %3518 = vmatpush1.msra.mxu0 0.0
    %3519 = vmatprep.subr.mxu0 0.0
    %3520 = vmatpush1.msra.mxu0 0.0
    %3521 = vmatprep.subr.mxu0 0.0
    %3522 = vmatpush1.msra.mxu0 0.0
    %3523 = vmatprep.subr.mxu0 0.0
    %3524 = vmatpush1.msra.mxu0 0.0
    %3525 = vmatprep.subr.mxu0 0.0
    %3526 = vmatpush1.msra.mxu0 0.0
    %3527 = vmatprep.subr.mxu0 0.0
    %3528 = vmatpush1.msra.mxu0 0.0
    %3529 = vmatprep.mubr.f32.mxu0 0.0
    %3530 = vmatmul.mubr.f32.gmra.mrb[0].mxu0 %v3169
    %v3531 = vpop.f32.mrb[0].mxu0
    %v3532 = vadd.f32 %v3462, %v3531
    %v3533 = vpop.f32.mrb[0].mxu0
    %3534 = vdwg.mxu0
    %v3535 = vadd.f32 %v3532, %v2234
    %v3536 = vtanh.pop %v3535
    %3537 = vmatprep.subr.mxu0 0.0
    %3538 = vmatpush1.msra.mxu0 %v2248
    %3539 = vmatprep.subr.mxu0 0.0
    %3540 = vmatpush1.msra.mxu0 %v2249
    %3541 = vmatprep.subr.mxu0 0.0
    %3542 = vmatpush1.msra.mxu0 %v2250
    %3543 = vmatprep.subr.mxu0 0.0
    %3544 = vmatpush1.msra.mxu0 %v2251
    %3545 = vmatprep.subr.mxu0 0.0
    %3546 = vmatpush1.msra.mxu0 0.0
    %3547 = vmatprep.subr.mxu0 0.0
    %3548 = vmatpush1.msra.mxu0 0.0
    %3549 = vmatprep.subr.mxu0 0.0
    %3550 = vmatpush1.msra.mxu0 0.0
    %3551 = vmatprep.subr.mxu0 0.0
    %3552 = vmatpush1.msra.mxu0 0.0
    %3553 = vmatprep.subr.mxu0 0.0
    %3554 = vmatpush1.msra.mxu0 0.0
    %3555 = vmatprep.subr.mxu0 0.0
    %3556 = vmatpush1.msra.mxu0 0.0
    %3557 = vmatprep.subr.mxu0 0.0
    %3558 = vmatpush1.msra.mxu0 0.0
    %3559 = vmatprep.subr.mxu0 0.0
    %3560 = vmatpush1.msra.mxu0 0.0
    %3561 = vmatprep.subr.mxu0 0.0
    %3562 = vmatpush1.msra.mxu0 0.0
    %3563 = vmatprep.subr.mxu0 0.0
    %3564 = vmatpush1.msra.mxu0 0.0
    %3565 = vmatprep.subr.mxu0 0.0
    %3566 = vmatpush1.msra.mxu0 0.0
    %3567 = vmatprep.subr.mxu0 0.0
    %3568 = vmatpush1.msra.mxu0 0.0
    %3569 = vmatprep.subr.mxu0 0.0
    %3570 = vmatpush1.msra.mxu0 0.0
    %3571 = vmatprep.subr.mxu0 0.0
    %3572 = vmatpush1.msra.mxu0 0.0
    %3573 = vmatprep.subr.mxu0 0.0
    %3574 = vmatpush1.msra.mxu0 0.0
    %3575 = vmatprep.subr.mxu0 0.0
    %3576 = vmatpush1.msra.mxu0 0.0
    %3577 = vmatprep.subr.mxu0 0.0
    %3578 = vmatpush1.msra.mxu0 0.0
    %3579 = vmatprep.subr.mxu0 0.0
    %3580 = vmatpush1.msra.mxu0 0.0
    %3581 = vmatprep.subr.mxu0 0.0
    %3582 = vmatpush1.msra.mxu0 0.0
    %3583 = vmatprep.subr.mxu0 0.0
    %3584 = vmatpush1.msra.mxu0 0.0
    %3585 = vmatprep.subr.mxu0 0.0
    %3586 = vmatpush1.msra.mxu0 0.0
    %3587 = vmatprep.subr.mxu0 0.0
    %3588 = vmatpush1.msra.mxu0 0.0
    %3589 = vmatprep.subr.mxu0 0.0
    %3590 = vmatpush1.msra.mxu0 0.0
    %3591 = vmatprep.subr.mxu0 0.0
    %3592 = vmatpush1.msra.mxu0 0.0
    %3593 = vmatprep.subr.mxu0 0.0
    %3594 = vmatpush1.msra.mxu0 0.0
    %3595 = vmatprep.subr.mxu0 0.0
    %3596 = vmatpush1.msra.mxu0 0.0
    %3597 = vmatprep.subr.mxu0 0.0
    %3598 = vmatpush1.msra.mxu0 0.0
    %3599 = vmatprep.subr.mxu0 0.0
    %3600 = vmatpush1.msra.mxu0 0.0
    %3601 = vmatprep.mubr.f32.mxu0 0.0
    %3602 = vmatmul.mubr.f32.gmra.mrb[0].mxu0 %v3096
    %v3603 = vpop.f32.mrb[0].mxu0
    %v3604 = vadd.f32 0.0, %v3603
    %v3605 = vpop.f32.mrb[0].mxu0
    %3606 = vdwg.mxu0
    %3607 = vmatprep.subr.mxu0 0.0
    %3608 = vmatpush1.msra.mxu0 %v2239
    %3609 = vmatprep.subr.mxu0 0.0
    %3610 = vmatpush1.msra.mxu0 %v2240
    %3611 = vmatprep.subr.mxu0 0.0
    %3612 = vmatpush1.msra.mxu0 %v2241
    %3613 = vmatprep.subr.mxu0 0.0
    %3614 = vmatpush1.msra.mxu0 %v2242
    %3615 = vmatprep.subr.mxu0 0.0
    %3616 = vmatpush1.msra.mxu0 %v2243
    %3617 = vmatprep.subr.mxu0 0.0
    %3618 = vmatpush1.msra.mxu0 %v2244
    %3619 = vmatprep.subr.mxu0 0.0
    %3620 = vmatpush1.msra.mxu0 %v2245
    %3621 = vmatprep.subr.mxu0 0.0
    %3622 = vmatpush1.msra.mxu0 %v2246
    %3623 = vmatprep.subr.mxu0 0.0
    %3624 = vmatpush1.msra.mxu0 0.0
    %3625 = vmatprep.subr.mxu0 0.0
    %3626 = vmatpush1.msra.mxu0 0.0
    %3627 = vmatprep.subr.mxu0 0.0
    %3628 = vmatpush1.msra.mxu0 0.0
    %3629 = vmatprep.subr.mxu0 0.0
    %3630 = vmatpush1.msra.mxu0 0.0
    %3631 = vmatprep.subr.mxu0 0.0
    %3632 = vmatpush1.msra.mxu0 0.0
    %3633 = vmatprep.subr.mxu0 0.0
    %3634 = vmatpush1.msra.mxu0 0.0
    %3635 = vmatprep.subr.mxu0 0.0
    %3636 = vmatpush1.msra.mxu0 0.0
    %3637 = vmatprep.subr.mxu0 0.0
    %3638 = vmatpush1.msra.mxu0 0.0
    %3639 = vmatprep.subr.mxu0 0.0
    %3640 = vmatpush1.msra.mxu0 0.0
    %3641 = vmatprep.subr.mxu0 0.0
    %3642 = vmatpush1.msra.mxu0 0.0
    %3643 = vmatprep.subr.mxu0 0.0
    %3644 = vmatpush1.msra.mxu0 0.0
    %3645 = vmatprep.subr.mxu0 0.0
    %3646 = vmatpush1.msra.mxu0 0.0
    %3647 = vmatprep.subr.mxu0 0.0
    %3648 = vmatpush1.msra.mxu0 0.0
    %3649 = vmatprep.subr.mxu0 0.0
    %3650 = vmatpush1.msra.mxu0 0.0
    %3651 = vmatprep.subr.mxu0 0.0
    %3652 = vmatpush1.msra.mxu0 0.0
    %3653 = vmatprep.subr.mxu0 0.0
    %3654 = vmatpush1.msra.mxu0 0.0
    %3655 = vmatprep.subr.mxu0 0.0
    %3656 = vmatpush1.msra.mxu0 0.0
    %3657 = vmatprep.subr.mxu0 0.0
    %3658 = vmatpush1.msra.mxu0 0.0
    %3659 = vmatprep.subr.mxu0 0.0
    %3660 = vmatpush1.msra.mxu0 0.0
    %3661 = vmatprep.subr.mxu0 0.0
    %3662 = vmatpush1.msra.mxu0 0.0
    %3663 = vmatprep.subr.mxu0 0.0
    %3664 = vmatpush1.msra.mxu0 0.0
    %3665 = vmatprep.subr.mxu0 0.0
    %3666 = vmatpush1.msra.mxu0 0.0
    %3667 = vmatprep.subr.mxu0 0.0
    %3668 = vmatpush1.msra.mxu0 0.0
    %3669 = vmatprep.subr.mxu0 0.0
    %3670 = vmatpush1.msra.mxu0 0.0
    %3671 = vmatprep.mubr.f32.mxu0 0.0
    %3672 = vmatmul.mubr.f32.gmra.mrb[0].mxu0 %v3169
    %v3673 = vpop.f32.mrb[0].mxu0
    %v3674 = vadd.f32 %v3604, %v3673
    %v3675 = vpop.f32.mrb[0].mxu0
    %3676 = vdwg.mxu0
    %v3677 = vadd.f32 %v3674, %v2398
    %v3678 = vxor.u32 %v3677, 2147483648
    %v3679 = vmul.f32 %v3678, 1.442695
    %v3680 = vpow.pop %v3679
    %v3681 = vadd.f32 %v3680, 1.0
    %v3682 = vrcp.pop %v3681
    %v3683 = vmul.f32 1.0, %v3682
    %v3684 = vmul.f32 %v3394, %v2409
    %v3685 = vmul.f32 %v3247, %v3536
    %v3686 = vadd.f32 %v3684, %v3685
    %v3687 = vtanh.pop %v3686
    %v3688 = vmul.f32 %v3683, %v3687
    %v3690 = vsel %vm1744, %v3087, 0
    %3692 = vmatprep.subr.mxu0 0.0
    %3693 = vmatpush1.msra.mxu0 %v2420
    %3694 = vmatprep.subr.mxu0 0.0
    %3695 = vmatpush1.msra.mxu0 %v2421
    %3696 = vmatprep.subr.mxu0 0.0
    %3697 = vmatpush1.msra.mxu0 %v2422
    %3698 = vmatprep.subr.mxu0 0.0
    %3699 = vmatpush1.msra.mxu0 %v2423
    %3700 = vmatprep.subr.mxu0 0.0
    %3701 = vmatpush1.msra.mxu0 0.0
    %3702 = vmatprep.subr.mxu0 0.0
    %3703 = vmatpush1.msra.mxu0 0.0
    %3704 = vmatprep.subr.mxu0 0.0
    %3705 = vmatpush1.msra.mxu0 0.0
    %3706 = vmatprep.subr.mxu0 0.0
    %3707 = vmatpush1.msra.mxu0 0.0
    %3708 = vmatprep.subr.mxu0 0.0
    %3709 = vmatpush1.msra.mxu0 0.0
    %3710 = vmatprep.subr.mxu0 0.0
    %3711 = vmatpush1.msra.mxu0 0.0
    %3712 = vmatprep.subr.mxu0 0.0
    %3713 = vmatpush1.msra.mxu0 0.0
    %3714 = vmatprep.subr.mxu0 0.0
    %3715 = vmatpush1.msra.mxu0 0.0
    %3716 = vmatprep.subr.mxu0 0.0
    %3717 = vmatpush1.msra.mxu0 0.0
    %3718 = vmatprep.subr.mxu0 0.0
    %3719 = vmatpush1.msra.mxu0 0.0
    %3720 = vmatprep.subr.mxu0 0.0
    %3721 = vmatpush1.msra.mxu0 0.0
    %3722 = vmatprep.subr.mxu0 0.0
    %3723 = vmatpush1.msra.mxu0 0.0
    %3724 = vmatprep.subr.mxu0 0.0
    %3725 = vmatpush1.msra.mxu0 0.0
    %3726 = vmatprep.subr.mxu0 0.0
    %3727 = vmatpush1.msra.mxu0 0.0
    %3728 = vmatprep.subr.mxu0 0.0
    %3729 = vmatpush1.msra.mxu0 0.0
    %3730 = vmatprep.subr.mxu0 0.0
    %3731 = vmatpush1.msra.mxu0 0.0
    %3732 = vmatprep.subr.mxu0 0.0
    %3733 = vmatpush1.msra.mxu0 0.0
    %3734 = vmatprep.subr.mxu0 0.0
    %3735 = vmatpush1.msra.mxu0 0.0
    %3736 = vmatprep.subr.mxu0 0.0
    %3737 = vmatpush1.msra.mxu0 0.0
    %3738 = vmatprep.subr.mxu0 0.0
    %3739 = vmatpush1.msra.mxu0 0.0
    %3740 = vmatprep.subr.mxu0 0.0
    %3741 = vmatpush1.msra.mxu0 0.0
    %3742 = vmatprep.subr.mxu0 0.0
    %3743 = vmatpush1.msra.mxu0 0.0
    %3744 = vmatprep.subr.mxu0 0.0
    %3745 = vmatpush1.msra.mxu0 0.0
    %3746 = vmatprep.subr.mxu0 0.0
    %3747 = vmatpush1.msra.mxu0 0.0
    %3748 = vmatprep.subr.mxu0 0.0
    %3749 = vmatpush1.msra.mxu0 0.0
    %3750 = vmatprep.subr.mxu0 0.0
    %3751 = vmatpush1.msra.mxu0 0.0
    %3752 = vmatprep.subr.mxu0 0.0
    %3753 = vmatpush1.msra.mxu0 0.0
    %3754 = vmatprep.subr.mxu0 0.0
    %3755 = vmatpush1.msra.mxu0 0.0
    %3756 = vmatprep.mubr.f32.mxu0 0.0
    %3757 = vmatmul.mubr.f32.gmra.mrb[0].mxu0 %v3690
    %v3758 = vpop.f32.mrb[0].mxu0
    %v3759 = vadd.f32 0.0, %v3758
    %v3760 = vpop.f32.mrb[0].mxu0
    %3761 = vdwg.mxu0
    %3762 = vmatprep.subr.mxu0 0.0
    %3763 = vmatpush1.msra.mxu0 %v2412
    %3764 = vmatprep.subr.mxu0 0.0
    %3765 = vmatpush1.msra.mxu0 %v2413
    %3766 = vmatprep.subr.mxu0 0.0
    %3767 = vmatpush1.msra.mxu0 %v2414
    %3768 = vmatprep.subr.mxu0 0.0
    %3769 = vmatpush1.msra.mxu0 %v2415
    %3770 = vmatprep.subr.mxu0 0.0
    %3771 = vmatpush1.msra.mxu0 %v2416
    %3772 = vmatprep.subr.mxu0 0.0
    %3773 = vmatpush1.msra.mxu0 %v2417
    %3774 = vmatprep.subr.mxu0 0.0
    %3775 = vmatpush1.msra.mxu0 %v2418
    %3776 = vmatprep.subr.mxu0 0.0
    %3777 = vmatpush1.msra.mxu0 %v2419
    %3778 = vmatprep.subr.mxu0 0.0
    %3779 = vmatpush1.msra.mxu0 0.0
    %3780 = vmatprep.subr.mxu0 0.0
    %3781 = vmatpush1.msra.mxu0 0.0
    %3782 = vmatprep.subr.mxu0 0.0
    %3783 = vmatpush1.msra.mxu0 0.0
    %3784 = vmatprep.subr.mxu0 0.0
    %3785 = vmatpush1.msra.mxu0 0.0
    %3786 = vmatprep.subr.mxu0 0.0
    %3787 = vmatpush1.msra.mxu0 0.0
    %3788 = vmatprep.subr.mxu0 0.0
    %3789 = vmatpush1.msra.mxu0 0.0
    %3790 = vmatprep.subr.mxu0 0.0
    %3791 = vmatpush1.msra.mxu0 0.0
    %3792 = vmatprep.subr.mxu0 0.0
    %3793 = vmatpush1.msra.mxu0 0.0
    %3794 = vmatprep.subr.mxu0 0.0
    %3795 = vmatpush1.msra.mxu0 0.0
    %3796 = vmatprep.subr.mxu0 0.0
    %3797 = vmatpush1.msra.mxu0 0.0
    %3798 = vmatprep.subr.mxu0 0.0
    %3799 = vmatpush1.msra.mxu0 0.0
    %3800 = vmatprep.subr.mxu0 0.0
    %3801 = vmatpush1.msra.mxu0 0.0
    %3802 = vmatprep.subr.mxu0 0.0
    %3803 = vmatpush1.msra.mxu0 0.0
    %3804 = vmatprep.subr.mxu0 0.0
    %3805 = vmatpush1.msra.mxu0 0.0
    %3806 = vmatprep.subr.mxu0 0.0
    %3807 = vmatpush1.msra.mxu0 0.0
    %3808 = vmatprep.subr.mxu0 0.0
    %3809 = vmatpush1.msra.mxu0 0.0
    %3810 = vmatprep.subr.mxu0 0.0
    %3811 = vmatpush1.msra.mxu0 0.0
    %3812 = vmatprep.subr.mxu0 0.0
    %3813 = vmatpush1.msra.mxu0 0.0
    %3814 = vmatprep.subr.mxu0 0.0
    %3815 = vmatpush1.msra.mxu0 0.0
    %3816 = vmatprep.subr.mxu0 0.0
    %3817 = vmatpush1.msra.mxu0 0.0
    %3818 = vmatprep.subr.mxu0 0.0
    %3819 = vmatpush1.msra.mxu0 0.0
    %3820 = vmatprep.subr.mxu0 0.0
    %3821 = vmatpush1.msra.mxu0 0.0
    %3822 = vmatprep.subr.mxu0 0.0
    %3823 = vmatpush1.msra.mxu0 0.0
    %3824 = vmatprep.subr.mxu0 0.0
    %3825 = vmatpush1.msra.mxu0 0.0
    %3826 = vmatprep.mubr.f32.mxu0 0.0
    %3827 = vmatmul.mubr.f32.gmra.mrb[0].mxu0 %v3169
    %v3828 = vpop.f32.mrb[0].mxu0
    %v3829 = vadd.f32 %v3759, %v3828
    %v3830 = vpop.f32.mrb[0].mxu0
    %3831 = vdwg.mxu0
    %v3832 = vadd.f32 %v3829, %v2572
    %v3833 = vxor.u32 %v3832, 2147483648
    %v3834 = vmul.f32 %v3833, 1.442695
    %v3835 = vpow.pop %v3834
    %v3836 = vadd.f32 %v3835, 1.0
    %v3837 = vrcp.pop %v3836
    %v3838 = vmul.f32 1.0, %v3837
    %3839 = vmatprep.subr.mxu0 0.0
    %3840 = vmatpush1.msra.mxu0 %v2591
    %3841 = vmatprep.subr.mxu0 0.0
    %3842 = vmatpush1.msra.mxu0 %v2592
    %3843 = vmatprep.subr.mxu0 0.0
    %3844 = vmatpush1.msra.mxu0 %v2593
    %3845 = vmatprep.subr.mxu0 0.0
    %3846 = vmatpush1.msra.mxu0 %v2594
    %3847 = vmatprep.subr.mxu0 0.0
    %3848 = vmatpush1.msra.mxu0 0.0
    %3849 = vmatprep.subr.mxu0 0.0
    %3850 = vmatpush1.msra.mxu0 0.0
    %3851 = vmatprep.subr.mxu0 0.0
    %3852 = vmatpush1.msra.mxu0 0.0
    %3853 = vmatprep.subr.mxu0 0.0
    %3854 = vmatpush1.msra.mxu0 0.0
    %3855 = vmatprep.subr.mxu0 0.0
    %3856 = vmatpush1.msra.mxu0 0.0
    %3857 = vmatprep.subr.mxu0 0.0
    %3858 = vmatpush1.msra.mxu0 0.0
    %3859 = vmatprep.subr.mxu0 0.0
    %3860 = vmatpush1.msra.mxu0 0.0
    %3861 = vmatprep.subr.mxu0 0.0
    %3862 = vmatpush1.msra.mxu0 0.0
    %3863 = vmatprep.subr.mxu0 0.0
    %3864 = vmatpush1.msra.mxu0 0.0
    %3865 = vmatprep.subr.mxu0 0.0
    %3866 = vmatpush1.msra.mxu0 0.0
    %3867 = vmatprep.subr.mxu0 0.0
    %3868 = vmatpush1.msra.mxu0 0.0
    %3869 = vmatprep.subr.mxu0 0.0
    %3870 = vmatpush1.msra.mxu0 0.0
    %3871 = vmatprep.subr.mxu0 0.0
    %3872 = vmatpush1.msra.mxu0 0.0
    %3873 = vmatprep.subr.mxu0 0.0
    %3874 = vmatpush1.msra.mxu0 0.0
    %3875 = vmatprep.subr.mxu0 0.0
    %3876 = vmatpush1.msra.mxu0 0.0
    %3877 = vmatprep.subr.mxu0 0.0
    %3878 = vmatpush1.msra.mxu0 0.0
    %3879 = vmatprep.subr.mxu0 0.0
    %3880 = vmatpush1.msra.mxu0 0.0
    %3881 = vmatprep.subr.mxu0 0.0
    %3882 = vmatpush1.msra.mxu0 0.0
    %3883 = vmatprep.subr.mxu0 0.0
    %3884 = vmatpush1.msra.mxu0 0.0
    %3885 = vmatprep.subr.mxu0 0.0
    %3886 = vmatpush1.msra.mxu0 0.0
    %3887 = vmatprep.subr.mxu0 0.0
    %3888 = vmatpush1.msra.mxu0 0.0
    %3889 = vmatprep.subr.mxu0 0.0
    %3890 = vmatpush1.msra.mxu0 0.0
    %3891 = vmatprep.subr.mxu0 0.0
    %3892 = vmatpush1.msra.mxu0 0.0
    %3893 = vmatprep.subr.mxu0 0.0
    %3894 = vmatpush1.msra.mxu0 0.0
    %3895 = vmatprep.subr.mxu0 0.0
    %3896 = vmatpush1.msra.mxu0 0.0
    %3897 = vmatprep.subr.mxu0 0.0
    %3898 = vmatpush1.msra.mxu0 0.0
    %3899 = vmatprep.subr.mxu0 0.0
    %3900 = vmatpush1.msra.mxu0 0.0
    %3901 = vmatprep.subr.mxu0 0.0
    %3902 = vmatpush1.msra.mxu0 0.0
    %3903 = vmatprep.mubr.f32.mxu0 0.0
    %3904 = vmatmul.mubr.f32.gmra.mrb[0].mxu0 %v3690
    %v3905 = vpop.f32.mrb[0].mxu0
    %v3906 = vadd.f32 0.0, %v3905
    %v3907 = vpop.f32.mrb[0].mxu0
    %3908 = vdwg.mxu0
    %3909 = vmatprep.subr.mxu0 0.0
    %3910 = vmatpush1.msra.mxu0 %v2582
    %3911 = vmatprep.subr.mxu0 0.0
    %3912 = vmatpush1.msra.mxu0 %v2583
    %3913 = vmatprep.subr.mxu0 0.0
    %3914 = vmatpush1.msra.mxu0 %v2584
    %3915 = vmatprep.subr.mxu0 0.0
    %3916 = vmatpush1.msra.mxu0 %v2585
    %3917 = vmatprep.subr.mxu0 0.0
    %3918 = vmatpush1.msra.mxu0 %v2586
    %3919 = vmatprep.subr.mxu0 0.0
    %3920 = vmatpush1.msra.mxu0 %v2587
    %3921 = vmatprep.subr.mxu0 0.0
    %3922 = vmatpush1.msra.mxu0 %v2588
    %3923 = vmatprep.subr.mxu0 0.0
    %3924 = vmatpush1.msra.mxu0 %v2589
    %3925 = vmatprep.subr.mxu0 0.0
    %3926 = vmatpush1.msra.mxu0 0.0
    %3927 = vmatprep.subr.mxu0 0.0
    %3928 = vmatpush1.msra.mxu0 0.0
    %3929 = vmatprep.subr.mxu0 0.0
    %3930 = vmatpush1.msra.mxu0 0.0
    %3931 = vmatprep.subr.mxu0 0.0
    %3932 = vmatpush1.msra.mxu0 0.0
    %3933 = vmatprep.subr.mxu0 0.0
    %3934 = vmatpush1.msra.mxu0 0.0
    %3935 = vmatprep.subr.mxu0 0.0
    %3936 = vmatpush1.msra.mxu0 0.0
    %3937 = vmatprep.subr.mxu0 0.0
    %3938 = vmatpush1.msra.mxu0 0.0
    %3939 = vmatprep.subr.mxu0 0.0
    %3940 = vmatpush1.msra.mxu0 0.0
    %3941 = vmatprep.subr.mxu0 0.0
    %3942 = vmatpush1.msra.mxu0 0.0
    %3943 = vmatprep.subr.mxu0 0.0
    %3944 = vmatpush1.msra.mxu0 0.0
    %3945 = vmatprep.subr.mxu0 0.0
    %3946 = vmatpush1.msra.mxu0 0.0
    %3947 = vmatprep.subr.mxu0 0.0
    %3948 = vmatpush1.msra.mxu0 0.0
    %3949 = vmatprep.subr.mxu0 0.0
    %3950 = vmatpush1.msra.mxu0 0.0
    %3951 = vmatprep.subr.mxu0 0.0
    %3952 = vmatpush1.msra.mxu0 0.0
    %3953 = vmatprep.subr.mxu0 0.0
    %3954 = vmatpush1.msra.mxu0 0.0
    %3955 = vmatprep.subr.mxu0 0.0
    %3956 = vmatpush1.msra.mxu0 0.0
    %3957 = vmatprep.subr.mxu0 0.0
    %3958 = vmatpush1.msra.mxu0 0.0
    %3959 = vmatprep.subr.mxu0 0.0
    %3960 = vmatpush1.msra.mxu0 0.0
    %3961 = vmatprep.subr.mxu0 0.0
    %3962 = vmatpush1.msra.mxu0 0.0
    %3963 = vmatprep.subr.mxu0 0.0
    %3964 = vmatpush1.msra.mxu0 0.0
    %3965 = vmatprep.subr.mxu0 0.0
    %3966 = vmatpush1.msra.mxu0 0.0
    %3967 = vmatprep.subr.mxu0 0.0
    %3968 = vmatpush1.msra.mxu0 0.0
    %3969 = vmatprep.subr.mxu0 0.0
    %3970 = vmatpush1.msra.mxu0 0.0
    %3971 = vmatprep.subr.mxu0 0.0
    %3972 = vmatpush1.msra.mxu0 0.0
    %3973 = vmatprep.mubr.f32.mxu0 0.0
    %3974 = vmatmul.mubr.f32.gmra.mrb[0].mxu0 %v3169
    %v3975 = vpop.f32.mrb[0].mxu0
    %v3976 = vadd.f32 %v3906, %v3975
    %v3977 = vpop.f32.mrb[0].mxu0
    %3978 = vdwg.mxu0
    %v3979 = vadd.f32 %v3976, %v2741
    %v3980 = vxor.u32 %v3979, 2147483648
    %v3981 = vmul.f32 %v3980, 1.442695
    %v3982 = vpow.pop %v3981
    %v3983 = vadd.f32 %v3982, 1.0
    %v3984 = vrcp.pop %v3983
    %v3985 = vmul.f32 1.0, %v3984
    %3986 = vmatprep.subr.mxu0 0.0
    %3987 = vmatpush1.msra.mxu0 %v2760
    %3988 = vmatprep.subr.mxu0 0.0
    %3989 = vmatpush1.msra.mxu0 %v2761
    %3990 = vmatprep.subr.mxu0 0.0
    %3991 = vmatpush1.msra.mxu0 %v2762
    %3992 = vmatprep.subr.mxu0 0.0
    %3993 = vmatpush1.msra.mxu0 %v2763
    %3994 = vmatprep.subr.mxu0 0.0
    %3995 = vmatpush1.msra.mxu0 0.0
    %3996 = vmatprep.subr.mxu0 0.0
    %3997 = vmatpush1.msra.mxu0 0.0
    %3998 = vmatprep.subr.mxu0 0.0
    %3999 = vmatpush1.msra.mxu0 0.0
    %4000 = vmatprep.subr.mxu0 0.0
    %4001 = vmatpush1.msra.mxu0 0.0
    %4002 = vmatprep.subr.mxu0 0.0
    %4003 = vmatpush1.msra.mxu0 0.0
    %4004 = vmatprep.subr.mxu0 0.0
    %4005 = vmatpush1.msra.mxu0 0.0
    %4006 = vmatprep.subr.mxu0 0.0
    %4007 = vmatpush1.msra.mxu0 0.0
    %4008 = vmatprep.subr.mxu0 0.0
    %4009 = vmatpush1.msra.mxu0 0.0
    %4010 = vmatprep.subr.mxu0 0.0
    %4011 = vmatpush1.msra.mxu0 0.0
    %4012 = vmatprep.subr.mxu0 0.0
    %4013 = vmatpush1.msra.mxu0 0.0
    %4014 = vmatprep.subr.mxu0 0.0
    %4015 = vmatpush1.msra.mxu0 0.0
    %4016 = vmatprep.subr.mxu0 0.0
    %4017 = vmatpush1.msra.mxu0 0.0
    %4018 = vmatprep.subr.mxu0 0.0
    %4019 = vmatpush1.msra.mxu0 0.0
    %4020 = vmatprep.subr.mxu0 0.0
    %4021 = vmatpush1.msra.mxu0 0.0
    %4022 = vmatprep.subr.mxu0 0.0
    %4023 = vmatpush1.msra.mxu0 0.0
    %4024 = vmatprep.subr.mxu0 0.0
    %4025 = vmatpush1.msra.mxu0 0.0
    %4026 = vmatprep.subr.mxu0 0.0
    %4027 = vmatpush1.msra.mxu0 0.0
    %4028 = vmatprep.subr.mxu0 0.0
    %4029 = vmatpush1.msra.mxu0 0.0
    %4030 = vmatprep.subr.mxu0 0.0
    %4031 = vmatpush1.msra.mxu0 0.0
    %4032 = vmatprep.subr.mxu0 0.0
    %4033 = vmatpush1.msra.mxu0 0.0
    %4034 = vmatprep.subr.mxu0 0.0
    %4035 = vmatpush1.msra.mxu0 0.0
    %4036 = vmatprep.subr.mxu0 0.0
    %4037 = vmatpush1.msra.mxu0 0.0
    %4038 = vmatprep.subr.mxu0 0.0
    %4039 = vmatpush1.msra.mxu0 0.0
    %4040 = vmatprep.subr.mxu0 0.0
    %4041 = vmatpush1.msra.mxu0 0.0
    %4042 = vmatprep.subr.mxu0 0.0
    %4043 = vmatpush1.msra.mxu0 0.0
    %4044 = vmatprep.subr.mxu0 0.0
    %4045 = vmatpush1.msra.mxu0 0.0
    %4046 = vmatprep.subr.mxu0 0.0
    %4047 = vmatpush1.msra.mxu0 0.0
    %4048 = vmatprep.subr.mxu0 0.0
    %4049 = vmatpush1.msra.mxu0 0.0
    %4050 = vmatprep.mubr.f32.mxu0 0.0
    %4051 = vmatmul.mubr.f32.gmra.mrb[0].mxu0 %v3690
    %v4052 = vpop.f32.mrb[0].mxu0
    %v4053 = vadd.f32 0.0, %v4052
    %v4054 = vpop.f32.mrb[0].mxu0
    %4055 = vdwg.mxu0
    %4056 = vmatprep.subr.mxu0 0.0
    %4057 = vmatpush1.msra.mxu0 %v2751
    %4058 = vmatprep.subr.mxu0 0.0
    %4059 = vmatpush1.msra.mxu0 %v2752
    %4060 = vmatprep.subr.mxu0 0.0
    %4061 = vmatpush1.msra.mxu0 %v2753
    %4062 = vmatprep.subr.mxu0 0.0
    %4063 = vmatpush1.msra.mxu0 %v2754
    %4064 = vmatprep.subr.mxu0 0.0
    %4065 = vmatpush1.msra.mxu0 %v2755
    %4066 = vmatprep.subr.mxu0 0.0
    %4067 = vmatpush1.msra.mxu0 %v2756
    %4068 = vmatprep.subr.mxu0 0.0
    %4069 = vmatpush1.msra.mxu0 %v2757
    %4070 = vmatprep.subr.mxu0 0.0
    %4071 = vmatpush1.msra.mxu0 %v2758
    %4072 = vmatprep.subr.mxu0 0.0
    %4073 = vmatpush1.msra.mxu0 0.0
    %4074 = vmatprep.subr.mxu0 0.0
    %4075 = vmatpush1.msra.mxu0 0.0
    %4076 = vmatprep.subr.mxu0 0.0
    %4077 = vmatpush1.msra.mxu0 0.0
    %4078 = vmatprep.subr.mxu0 0.0
    %4079 = vmatpush1.msra.mxu0 0.0
    %4080 = vmatprep.subr.mxu0 0.0
    %4081 = vmatpush1.msra.mxu0 0.0
    %4082 = vmatprep.subr.mxu0 0.0
    %4083 = vmatpush1.msra.mxu0 0.0
    %4084 = vmatprep.subr.mxu0 0.0
    %4085 = vmatpush1.msra.mxu0 0.0
    %4086 = vmatprep.subr.mxu0 0.0
    %4087 = vmatpush1.msra.mxu0 0.0
    %4088 = vmatprep.subr.mxu0 0.0
    %4089 = vmatpush1.msra.mxu0 0.0
    %4090 = vmatprep.subr.mxu0 0.0
    %4091 = vmatpush1.msra.mxu0 0.0
    %4092 = vmatprep.subr.mxu0 0.0
    %4093 = vmatpush1.msra.mxu0 0.0
    %4094 = vmatprep.subr.mxu0 0.0
    %4095 = vmatpush1.msra.mxu0 0.0
    %4096 = vmatprep.subr.mxu0 0.0
    %4097 = vmatpush1.msra.mxu0 0.0
    %4098 = vmatprep.subr.mxu0 0.0
    %4099 = vmatpush1.msra.mxu0 0.0
    %4100 = vmatprep.subr.mxu0 0.0
    %4101 = vmatpush1.msra.mxu0 0.0
    %4102 = vmatprep.subr.mxu0 0.0
    %4103 = vmatpush1.msra.mxu0 0.0
    %4104 = vmatprep.subr.mxu0 0.0
    %4105 = vmatpush1.msra.mxu0 0.0
    %4106 = vmatprep.subr.mxu0 0.0
    %4107 = vmatpush1.msra.mxu0 0.0
    %4108 = vmatprep.subr.mxu0 0.0
    %4109 = vmatpush1.msra.mxu0 0.0
    %4110 = vmatprep.subr.mxu0 0.0
    %4111 = vmatpush1.msra.mxu0 0.0
    %4112 = vmatprep.subr.mxu0 0.0
    %4113 = vmatpush1.msra.mxu0 0.0
    %4114 = vmatprep.subr.mxu0 0.0
    %4115 = vmatpush1.msra.mxu0 0.0
    %4116 = vmatprep.subr.mxu0 0.0
    %4117 = vmatpush1.msra.mxu0 0.0
    %4118 = vmatprep.subr.mxu0 0.0
    %4119 = vmatpush1.msra.mxu0 0.0
    %4120 = vmatprep.mubr.f32.mxu0 0.0
    %4121 = vmatmul.mubr.f32.gmra.mrb[0].mxu0 %v3169
    %v4122 = vpop.f32.mrb[0].mxu0
    %v4123 = vadd.f32 %v4053, %v4122
    %v4124 = vpop.f32.mrb[0].mxu0
    %4125 = vdwg.mxu0
    %v4126 = vadd.f32 %v4123, %v2910
    %v4127 = vtanh.pop %v4126
    %4128 = vmatprep.subr.mxu0 0.0
    %4129 = vmatpush1.msra.mxu0 %v2924
    %4130 = vmatprep.subr.mxu0 0.0
    %4131 = vmatpush1.msra.mxu0 %v2925
    %4132 = vmatprep.subr.mxu0 0.0
    %4133 = vmatpush1.msra.mxu0 %v2926
    %4134 = vmatprep.subr.mxu0 0.0
    %4135 = vmatpush1.msra.mxu0 %v2927
    %4136 = vmatprep.subr.mxu0 0.0
    %4137 = vmatpush1.msra.mxu0 0.0
    %4138 = vmatprep.subr.mxu0 0.0
    %4139 = vmatpush1.msra.mxu0 0.0
    %4140 = vmatprep.subr.mxu0 0.0
    %4141 = vmatpush1.msra.mxu0 0.0
    %4142 = vmatprep.subr.mxu0 0.0
    %4143 = vmatpush1.msra.mxu0 0.0
    %4144 = vmatprep.subr.mxu0 0.0
    %4145 = vmatpush1.msra.mxu0 0.0
    %4146 = vmatprep.subr.mxu0 0.0
    %4147 = vmatpush1.msra.mxu0 0.0
    %4148 = vmatprep.subr.mxu0 0.0
    %4149 = vmatpush1.msra.mxu0 0.0
    %4150 = vmatprep.subr.mxu0 0.0
    %4151 = vmatpush1.msra.mxu0 0.0
    %4152 = vmatprep.subr.mxu0 0.0
    %4153 = vmatpush1.msra.mxu0 0.0
    %4154 = vmatprep.subr.mxu0 0.0
    %4155 = vmatpush1.msra.mxu0 0.0
    %4156 = vmatprep.subr.mxu0 0.0
    %4157 = vmatpush1.msra.mxu0 0.0
    %4158 = vmatprep.subr.mxu0 0.0
    %4159 = vmatpush1.msra.mxu0 0.0
    %4160 = vmatprep.subr.mxu0 0.0
    %4161 = vmatpush1.msra.mxu0 0.0
    %4162 = vmatprep.subr.mxu0 0.0
    %4163 = vmatpush1.msra.mxu0 0.0
    %4164 = vmatprep.subr.mxu0 0.0
    %4165 = vmatpush1.msra.mxu0 0.0
    %4166 = vmatprep.subr.mxu0 0.0
    %4167 = vmatpush1.msra.mxu0 0.0
    %4168 = vmatprep.subr.mxu0 0.0
    %4169 = vmatpush1.msra.mxu0 0.0
    %4170 = vmatprep.subr.mxu0 0.0
    %4171 = vmatpush1.msra.mxu0 0.0
    %4172 = vmatprep.subr.mxu0 0.0
    %4173 = vmatpush1.msra.mxu0 0.0
    %4174 = vmatprep.subr.mxu0 0.0
    %4175 = vmatpush1.msra.mxu0 0.0
    %4176 = vmatprep.subr.mxu0 0.0
    %4177 = vmatpush1.msra.mxu0 0.0
    %4178 = vmatprep.subr.mxu0 0.0
    %4179 = vmatpush1.msra.mxu0 0.0
    %4180 = vmatprep.subr.mxu0 0.0
    %4181 = vmatpush1.msra.mxu0 0.0
    %4182 = vmatprep.subr.mxu0 0.0
    %4183 = vmatpush1.msra.mxu0 0.0
    %4184 = vmatprep.subr.mxu0 0.0
    %4185 = vmatpush1.msra.mxu0 0.0
    %4186 = vmatprep.subr.mxu0 0.0
    %4187 = vmatpush1.msra.mxu0 0.0
    %4188 = vmatprep.subr.mxu0 0.0
    %4189 = vmatpush1.msra.mxu0 0.0
    %4190 = vmatprep.subr.mxu0 0.0
    %4191 = vmatpush1.msra.mxu0 0.0
    %4192 = vmatprep.mubr.f32.mxu0 0.0
    %4193 = vmatmul.mubr.f32.gmra.mrb[0].mxu0 %v3690
    %v4194 = vpop.f32.mrb[0].mxu0
    %v4195 = vadd.f32 0.0, %v4194
    %v4196 = vpop.f32.mrb[0].mxu0
    %4197 = vdwg.mxu0
    %4198 = vmatprep.subr.mxu0 0.0
    %4199 = vmatpush1.msra.mxu0 %v2915
    %4200 = vmatprep.subr.mxu0 0.0
    %4201 = vmatpush1.msra.mxu0 %v2916
    %4202 = vmatprep.subr.mxu0 0.0
    %4203 = vmatpush1.msra.mxu0 %v2917
    %4204 = vmatprep.subr.mxu0 0.0
    %4205 = vmatpush1.msra.mxu0 %v2918
    %4206 = vmatprep.subr.mxu0 0.0
    %4207 = vmatpush1.msra.mxu0 %v2919
    %4208 = vmatprep.subr.mxu0 0.0
    %4209 = vmatpush1.msra.mxu0 %v2920
    %4210 = vmatprep.subr.mxu0 0.0
    %4211 = vmatpush1.msra.mxu0 %v2921
    %4212 = vmatprep.subr.mxu0 0.0
    %4213 = vmatpush1.msra.mxu0 %v2922
    %4214 = vmatprep.subr.mxu0 0.0
    %4215 = vmatpush1.msra.mxu0 0.0
    %4216 = vmatprep.subr.mxu0 0.0
    %4217 = vmatpush1.msra.mxu0 0.0
    %4218 = vmatprep.subr.mxu0 0.0
    %4219 = vmatpush1.msra.mxu0 0.0
    %4220 = vmatprep.subr.mxu0 0.0
    %4221 = vmatpush1.msra.mxu0 0.0
    %4222 = vmatprep.subr.mxu0 0.0
    %4223 = vmatpush1.msra.mxu0 0.0
    %4224 = vmatprep.subr.mxu0 0.0
    %4225 = vmatpush1.msra.mxu0 0.0
    %4226 = vmatprep.subr.mxu0 0.0
    %4227 = vmatpush1.msra.mxu0 0.0
    %4228 = vmatprep.subr.mxu0 0.0
    %4229 = vmatpush1.msra.mxu0 0.0
    %4230 = vmatprep.subr.mxu0 0.0
    %4231 = vmatpush1.msra.mxu0 0.0
    %4232 = vmatprep.subr.mxu0 0.0
    %4233 = vmatpush1.msra.mxu0 0.0
    %4234 = vmatprep.subr.mxu0 0.0
    %4235 = vmatpush1.msra.mxu0 0.0
    %4236 = vmatprep.subr.mxu0 0.0
    %4237 = vmatpush1.msra.mxu0 0.0
    %4238 = vmatprep.subr.mxu0 0.0
    %4239 = vmatpush1.msra.mxu0 0.0
    %4240 = vmatprep.subr.mxu0 0.0
    %4241 = vmatpush1.msra.mxu0 0.0
    %4242 = vmatprep.subr.mxu0 0.0
    %4243 = vmatpush1.msra.mxu0 0.0
    %4244 = vmatprep.subr.mxu0 0.0
    %4245 = vmatpush1.msra.mxu0 0.0
    %4246 = vmatprep.subr.mxu0 0.0
    %4247 = vmatpush1.msra.mxu0 0.0
    %4248 = vmatprep.subr.mxu0 0.0
    %4249 = vmatpush1.msra.mxu0 0.0
    %4250 = vmatprep.subr.mxu0 0.0
    %4251 = vmatpush1.msra.mxu0 0.0
    %4252 = vmatprep.subr.mxu0 0.0
    %4253 = vmatpush1.msra.mxu0 0.0
    %4254 = vmatprep.subr.mxu0 0.0
    %4255 = vmatpush1.msra.mxu0 0.0
    %4256 = vmatprep.subr.mxu0 0.0
    %4257 = vmatpush1.msra.mxu0 0.0
    %4258 = vmatprep.subr.mxu0 0.0
    %4259 = vmatpush1.msra.mxu0 0.0
    %4260 = vmatprep.subr.mxu0 0.0
    %4261 = vmatpush1.msra.mxu0 0.0
    %4262 = vmatprep.mubr.f32.mxu0 0.0
    %4263 = vmatmul.mubr.f32.gmra.mrb[0].mxu0 %v3169
    %v4264 = vpop.f32.mrb[0].mxu0
    %v4265 = vadd.f32 %v4195, %v4264
    %v4266 = vpop.f32.mrb[0].mxu0
    %4267 = vdwg.mxu0
    %v4268 = vadd.f32 %v4265, %v3074
    %v4269 = vxor.u32 %v4268, 2147483648
    %v4270 = vmul.f32 %v4269, 1.442695
    %v4271 = vpow.pop %v4270
    %v4272 = vadd.f32 %v4271, 1.0
    %v4273 = vrcp.pop %v4272
    %v4274 = vmul.f32 1.0, %v4273
    %v4275 = vmul.f32 %v3985, %v3085
    %v4276 = vmul.f32 %v3838, %v4127
    %v4277 = vadd.f32 %v4275, %v4276
    %v4278 = vtanh.pop %v4277
    %v4279 = vmul.f32 %v4274, %v4278
    %v4281 = vsel %vm1744, %v3688, 0
    %4283 = vmatprep.subr.mxu0 0.0
    %4284 = vmatpush1.msra.mxu0 %v1740
    %4285 = vmatprep.subr.mxu0 0.0
    %4286 = vmatpush1.msra.mxu0 %v1741
    %4287 = vmatprep.subr.mxu0 0.0
    %4288 = vmatpush1.msra.mxu0 %v1742
    %4289 = vmatprep.subr.mxu0 0.0
    %4290 = vmatpush1.msra.mxu0 %v1743
    %4291 = vmatprep.subr.mxu0 0.0
    %4292 = vmatpush1.msra.mxu0 0.0
    %4293 = vmatprep.subr.mxu0 0.0
    %4294 = vmatpush1.msra.mxu0 0.0
    %4295 = vmatprep.subr.mxu0 0.0
    %4296 = vmatpush1.msra.mxu0 0.0
    %4297 = vmatprep.subr.mxu0 0.0
    %4298 = vmatpush1.msra.mxu0 0.0
    %4299 = vmatprep.subr.mxu0 0.0
    %4300 = vmatpush1.msra.mxu0 0.0
    %4301 = vmatprep.subr.mxu0 0.0
    %4302 = vmatpush1.msra.mxu0 0.0
    %4303 = vmatprep.subr.mxu0 0.0
    %4304 = vmatpush1.msra.mxu0 0.0
    %4305 = vmatprep.subr.mxu0 0.0
    %4306 = vmatpush1.msra.mxu0 0.0
    %4307 = vmatprep.subr.mxu0 0.0
    %4308 = vmatpush1.msra.mxu0 0.0
    %4309 = vmatprep.subr.mxu0 0.0
    %4310 = vmatpush1.msra.mxu0 0.0
    %4311 = vmatprep.subr.mxu0 0.0
    %4312 = vmatpush1.msra.mxu0 0.0
    %4313 = vmatprep.subr.mxu0 0.0
    %4314 = vmatpush1.msra.mxu0 0.0
    %4315 = vmatprep.subr.mxu0 0.0
    %4316 = vmatpush1.msra.mxu0 0.0
    %4317 = vmatprep.subr.mxu0 0.0
    %4318 = vmatpush1.msra.mxu0 0.0
    %4319 = vmatprep.subr.mxu0 0.0
    %4320 = vmatpush1.msra.mxu0 0.0
    %4321 = vmatprep.subr.mxu0 0.0
    %4322 = vmatpush1.msra.mxu0 0.0
    %4323 = vmatprep.subr.mxu0 0.0
    %4324 = vmatpush1.msra.mxu0 0.0
    %4325 = vmatprep.subr.mxu0 0.0
    %4326 = vmatpush1.msra.mxu0 0.0
    %4327 = vmatprep.subr.mxu0 0.0
    %4328 = vmatpush1.msra.mxu0 0.0
    %4329 = vmatprep.subr.mxu0 0.0
    %4330 = vmatpush1.msra.mxu0 0.0
    %4331 = vmatprep.subr.mxu0 0.0
    %4332 = vmatpush1.msra.mxu0 0.0
    %4333 = vmatprep.subr.mxu0 0.0
    %4334 = vmatpush1.msra.mxu0 0.0
    %4335 = vmatprep.subr.mxu0 0.0
    %4336 = vmatpush1.msra.mxu0 0.0
    %4337 = vmatprep.subr.mxu0 0.0
    %4338 = vmatpush1.msra.mxu0 0.0
    %4339 = vmatprep.subr.mxu0 0.0
    %4340 = vmatpush1.msra.mxu0 0.0
    %4341 = vmatprep.subr.mxu0 0.0
    %4342 = vmatpush1.msra.mxu0 0.0
    %4343 = vmatprep.subr.mxu0 0.0
    %4344 = vmatpush1.msra.mxu0 0.0
    %4345 = vmatprep.subr.mxu0 0.0
    %4346 = vmatpush1.msra.mxu0 0.0
    %4347 = vmatprep.mubr.f32.mxu0 0.0
    %4348 = vmatmul.mubr.f32.gmra.mrb[0].mxu0 %v4281
    %v4349 = vpop.f32.mrb[0].mxu0
    %v4350 = vadd.f32 0.0, %v4349
    %v4351 = vpop.f32.mrb[0].mxu0
    %4352 = vdwg.mxu0
    %4353 = vmatprep.subr.mxu0 0.0
    %4354 = vmatpush1.msra.mxu0 %v1732
    %4355 = vmatprep.subr.mxu0 0.0
    %4356 = vmatpush1.msra.mxu0 %v1733
    %4357 = vmatprep.subr.mxu0 0.0
    %4358 = vmatpush1.msra.mxu0 %v1734
    %4359 = vmatprep.subr.mxu0 0.0
    %4360 = vmatpush1.msra.mxu0 %v1735
    %4361 = vmatprep.subr.mxu0 0.0
    %4362 = vmatpush1.msra.mxu0 %v1736
    %4363 = vmatprep.subr.mxu0 0.0
    %4364 = vmatpush1.msra.mxu0 %v1737
    %4365 = vmatprep.subr.mxu0 0.0
    %4366 = vmatpush1.msra.mxu0 %v1738
    %4367 = vmatprep.subr.mxu0 0.0
    %4368 = vmatpush1.msra.mxu0 %v1739
    %4369 = vmatprep.subr.mxu0 0.0
    %4370 = vmatpush1.msra.mxu0 0.0
    %4371 = vmatprep.subr.mxu0 0.0
    %4372 = vmatpush1.msra.mxu0 0.0
    %4373 = vmatprep.subr.mxu0 0.0
    %4374 = vmatpush1.msra.mxu0 0.0
    %4375 = vmatprep.subr.mxu0 0.0
    %4376 = vmatpush1.msra.mxu0 0.0
    %4377 = vmatprep.subr.mxu0 0.0
    %4378 = vmatpush1.msra.mxu0 0.0
    %4379 = vmatprep.subr.mxu0 0.0
    %4380 = vmatpush1.msra.mxu0 0.0
    %4381 = vmatprep.subr.mxu0 0.0
    %4382 = vmatpush1.msra.mxu0 0.0
    %4383 = vmatprep.subr.mxu0 0.0
    %4384 = vmatpush1.msra.mxu0 0.0
    %4385 = vmatprep.subr.mxu0 0.0
    %4386 = vmatpush1.msra.mxu0 0.0
    %4387 = vmatprep.subr.mxu0 0.0
    %4388 = vmatpush1.msra.mxu0 0.0
    %4389 = vmatprep.subr.mxu0 0.0
    %4390 = vmatpush1.msra.mxu0 0.0
    %4391 = vmatprep.subr.mxu0 0.0
    %4392 = vmatpush1.msra.mxu0 0.0
    %4393 = vmatprep.subr.mxu0 0.0
    %4394 = vmatpush1.msra.mxu0 0.0
    %4395 = vmatprep.subr.mxu0 0.0
    %4396 = vmatpush1.msra.mxu0 0.0
    %4397 = vmatprep.subr.mxu0 0.0
    %4398 = vmatpush1.msra.mxu0 0.0
    %4399 = vmatprep.subr.mxu0 0.0
    %4400 = vmatpush1.msra.mxu0 0.0
    %4401 = vmatprep.subr.mxu0 0.0
    %4402 = vmatpush1.msra.mxu0 0.0
    %4403 = vmatprep.subr.mxu0 0.0
    %4404 = vmatpush1.msra.mxu0 0.0
    %4405 = vmatprep.subr.mxu0 0.0
    %4406 = vmatpush1.msra.mxu0 0.0
    %4407 = vmatprep.subr.mxu0 0.0
    %4408 = vmatpush1.msra.mxu0 0.0
    %4409 = vmatprep.subr.mxu0 0.0
    %4410 = vmatpush1.msra.mxu0 0.0
    %4411 = vmatprep.subr.mxu0 0.0
    %4412 = vmatpush1.msra.mxu0 0.0
    %4413 = vmatprep.subr.mxu0 0.0
    %4414 = vmatpush1.msra.mxu0 0.0
    %4415 = vmatprep.subr.mxu0 0.0
    %4416 = vmatpush1.msra.mxu0 0.0
    %4417 = vmatprep.mubr.f32.mxu0 0.0
    %4418 = vmatmul.mubr.f32.gmra.mrb[0].mxu0 %v2495
    %v4419 = vpop.f32.mrb[0].mxu0
    %v4420 = vadd.f32 %v4350, %v4419
    %v4421 = vpop.f32.mrb[0].mxu0
    %4422 = vdwg.mxu0
    %v4423 = vadd.f32 %v4420, %v1896
    %v4424 = vxor.u32 %v4423, 2147483648
    %v4425 = vmul.f32 %v4424, 1.442695
    %v4426 = vpow.pop %v4425
    %v4427 = vadd.f32 %v4426, 1.0
    %v4428 = vrcp.pop %v4427
    %v4429 = vmul.f32 1.0, %v4428
    %4430 = vmatprep.subr.mxu0 0.0
    %4431 = vmatpush1.msra.mxu0 %v1915
    %4432 = vmatprep.subr.mxu0 0.0
    %4433 = vmatpush1.msra.mxu0 %v1916
    %4434 = vmatprep.subr.mxu0 0.0
    %4435 = vmatpush1.msra.mxu0 %v1917
    %4436 = vmatprep.subr.mxu0 0.0
    %4437 = vmatpush1.msra.mxu0 %v1918
    %4438 = vmatprep.subr.mxu0 0.0
    %4439 = vmatpush1.msra.mxu0 0.0
    %4440 = vmatprep.subr.mxu0 0.0
    %4441 = vmatpush1.msra.mxu0 0.0
    %4442 = vmatprep.subr.mxu0 0.0
    %4443 = vmatpush1.msra.mxu0 0.0
    %4444 = vmatprep.subr.mxu0 0.0
    %4445 = vmatpush1.msra.mxu0 0.0
    %4446 = vmatprep.subr.mxu0 0.0
    %4447 = vmatpush1.msra.mxu0 0.0
    %4448 = vmatprep.subr.mxu0 0.0
    %4449 = vmatpush1.msra.mxu0 0.0
    %4450 = vmatprep.subr.mxu0 0.0
    %4451 = vmatpush1.msra.mxu0 0.0
    %4452 = vmatprep.subr.mxu0 0.0
    %4453 = vmatpush1.msra.mxu0 0.0
    %4454 = vmatprep.subr.mxu0 0.0
    %4455 = vmatpush1.msra.mxu0 0.0
    %4456 = vmatprep.subr.mxu0 0.0
    %4457 = vmatpush1.msra.mxu0 0.0
    %4458 = vmatprep.subr.mxu0 0.0
    %4459 = vmatpush1.msra.mxu0 0.0
    %4460 = vmatprep.subr.mxu0 0.0
    %4461 = vmatpush1.msra.mxu0 0.0
    %4462 = vmatprep.subr.mxu0 0.0
    %4463 = vmatpush1.msra.mxu0 0.0
    %4464 = vmatprep.subr.mxu0 0.0
    %4465 = vmatpush1.msra.mxu0 0.0
    %4466 = vmatprep.subr.mxu0 0.0
    %4467 = vmatpush1.msra.mxu0 0.0
    %4468 = vmatprep.subr.mxu0 0.0
    %4469 = vmatpush1.msra.mxu0 0.0
    %4470 = vmatprep.subr.mxu0 0.0
    %4471 = vmatpush1.msra.mxu0 0.0
    %4472 = vmatprep.subr.mxu0 0.0
    %4473 = vmatpush1.msra.mxu0 0.0
    %4474 = vmatprep.subr.mxu0 0.0
    %4475 = vmatpush1.msra.mxu0 0.0
    %4476 = vmatprep.subr.mxu0 0.0
    %4477 = vmatpush1.msra.mxu0 0.0
    %4478 = vmatprep.subr.mxu0 0.0
    %4479 = vmatpush1.msra.mxu0 0.0
    %4480 = vmatprep.subr.mxu0 0.0
    %4481 = vmatpush1.msra.mxu0 0.0
    %4482 = vmatprep.subr.mxu0 0.0
    %4483 = vmatpush1.msra.mxu0 0.0
    %4484 = vmatprep.subr.mxu0 0.0
    %4485 = vmatpush1.msra.mxu0 0.0
    %4486 = vmatprep.subr.mxu0 0.0
    %4487 = vmatpush1.msra.mxu0 0.0
    %4488 = vmatprep.subr.mxu0 0.0
    %4489 = vmatpush1.msra.mxu0 0.0
    %4490 = vmatprep.subr.mxu0 0.0
    %4491 = vmatpush1.msra.mxu0 0.0
    %4492 = vmatprep.subr.mxu0 0.0
    %4493 = vmatpush1.msra.mxu0 0.0
    %4494 = vmatprep.mubr.f32.mxu0 0.0
    %4495 = vmatmul.mubr.f32.gmra.mrb[0].mxu0 %v4281
    %v4496 = vpop.f32.mrb[0].mxu0
    %v4497 = vadd.f32 0.0, %v4496
    %v4498 = vpop.f32.mrb[0].mxu0
    %4499 = vdwg.mxu0
    %4500 = vmatprep.subr.mxu0 0.0
    %4501 = vmatpush1.msra.mxu0 %v1906
    %4502 = vmatprep.subr.mxu0 0.0
    %4503 = vmatpush1.msra.mxu0 %v1907
    %4504 = vmatprep.subr.mxu0 0.0
    %4505 = vmatpush1.msra.mxu0 %v1908
    %4506 = vmatprep.subr.mxu0 0.0
    %4507 = vmatpush1.msra.mxu0 %v1909
    %4508 = vmatprep.subr.mxu0 0.0
    %4509 = vmatpush1.msra.mxu0 %v1910
    %4510 = vmatprep.subr.mxu0 0.0
    %4511 = vmatpush1.msra.mxu0 %v1911
    %4512 = vmatprep.subr.mxu0 0.0
    %4513 = vmatpush1.msra.mxu0 %v1912
    %4514 = vmatprep.subr.mxu0 0.0
    %4515 = vmatpush1.msra.mxu0 %v1913
    %4516 = vmatprep.subr.mxu0 0.0
    %4517 = vmatpush1.msra.mxu0 0.0
    %4518 = vmatprep.subr.mxu0 0.0
    %4519 = vmatpush1.msra.mxu0 0.0
    %4520 = vmatprep.subr.mxu0 0.0
    %4521 = vmatpush1.msra.mxu0 0.0
    %4522 = vmatprep.subr.mxu0 0.0
    %4523 = vmatpush1.msra.mxu0 0.0
    %4524 = vmatprep.subr.mxu0 0.0
    %4525 = vmatpush1.msra.mxu0 0.0
    %4526 = vmatprep.subr.mxu0 0.0
    %4527 = vmatpush1.msra.mxu0 0.0
    %4528 = vmatprep.subr.mxu0 0.0
    %4529 = vmatpush1.msra.mxu0 0.0
    %4530 = vmatprep.subr.mxu0 0.0
    %4531 = vmatpush1.msra.mxu0 0.0
    %4532 = vmatprep.subr.mxu0 0.0
    %4533 = vmatpush1.msra.mxu0 0.0
    %4534 = vmatprep.subr.mxu0 0.0
    %4535 = vmatpush1.msra.mxu0 0.0
    %4536 = vmatprep.subr.mxu0 0.0
    %4537 = vmatpush1.msra.mxu0 0.0
    %4538 = vmatprep.subr.mxu0 0.0
    %4539 = vmatpush1.msra.mxu0 0.0
    %4540 = vmatprep.subr.mxu0 0.0
    %4541 = vmatpush1.msra.mxu0 0.0
    %4542 = vmatprep.subr.mxu0 0.0
    %4543 = vmatpush1.msra.mxu0 0.0
    %4544 = vmatprep.subr.mxu0 0.0
    %4545 = vmatpush1.msra.mxu0 0.0
    %4546 = vmatprep.subr.mxu0 0.0
    %4547 = vmatpush1.msra.mxu0 0.0
    %4548 = vmatprep.subr.mxu0 0.0
    %4549 = vmatpush1.msra.mxu0 0.0
    %4550 = vmatprep.subr.mxu0 0.0
    %4551 = vmatpush1.msra.mxu0 0.0
    %4552 = vmatprep.subr.mxu0 0.0
    %4553 = vmatpush1.msra.mxu0 0.0
    %4554 = vmatprep.subr.mxu0 0.0
    %4555 = vmatpush1.msra.mxu0 0.0
    %4556 = vmatprep.subr.mxu0 0.0
    %4557 = vmatpush1.msra.mxu0 0.0
    %4558 = vmatprep.subr.mxu0 0.0
    %4559 = vmatpush1.msra.mxu0 0.0
    %4560 = vmatprep.subr.mxu0 0.0
    %4561 = vmatpush1.msra.mxu0 0.0
    %4562 = vmatprep.subr.mxu0 0.0
    %4563 = vmatpush1.msra.mxu0 0.0
    %4564 = vmatprep.mubr.f32.mxu0 0.0
    %4565 = vmatmul.mubr.f32.gmra.mrb[0].mxu0 %v2495
    %v4566 = vpop.f32.mrb[0].mxu0
    %v4567 = vadd.f32 %v4497, %v4566
    %v4568 = vpop.f32.mrb[0].mxu0
    %4569 = vdwg.mxu0
    %v4570 = vadd.f32 %v4567, %v2065
    %v4571 = vxor.u32 %v4570, 2147483648
    %v4572 = vmul.f32 %v4571, 1.442695
    %v4573 = vpow.pop %v4572
    %v4574 = vadd.f32 %v4573, 1.0
    %v4575 = vrcp.pop %v4574
    %v4576 = vmul.f32 1.0, %v4575
    %4577 = vmatprep.subr.mxu0 0.0
    %4578 = vmatpush1.msra.mxu0 %v2084
    %4579 = vmatprep.subr.mxu0 0.0
    %4580 = vmatpush1.msra.mxu0 %v2085
    %4581 = vmatprep.subr.mxu0 0.0
    %4582 = vmatpush1.msra.mxu0 %v2086
    %4583 = vmatprep.subr.mxu0 0.0
    %4584 = vmatpush1.msra.mxu0 %v2087
    %4585 = vmatprep.subr.mxu0 0.0
    %4586 = vmatpush1.msra.mxu0 0.0
    %4587 = vmatprep.subr.mxu0 0.0
    %4588 = vmatpush1.msra.mxu0 0.0
    %4589 = vmatprep.subr.mxu0 0.0
    %4590 = vmatpush1.msra.mxu0 0.0
    %4591 = vmatprep.subr.mxu0 0.0
    %4592 = vmatpush1.msra.mxu0 0.0
    %4593 = vmatprep.subr.mxu0 0.0
    %4594 = vmatpush1.msra.mxu0 0.0
    %4595 = vmatprep.subr.mxu0 0.0
    %4596 = vmatpush1.msra.mxu0 0.0
    %4597 = vmatprep.subr.mxu0 0.0
    %4598 = vmatpush1.msra.mxu0 0.0
    %4599 = vmatprep.subr.mxu0 0.0
    %4600 = vmatpush1.msra.mxu0 0.0
    %4601 = vmatprep.subr.mxu0 0.0
    %4602 = vmatpush1.msra.mxu0 0.0
    %4603 = vmatprep.subr.mxu0 0.0
    %4604 = vmatpush1.msra.mxu0 0.0
    %4605 = vmatprep.subr.mxu0 0.0
    %4606 = vmatpush1.msra.mxu0 0.0
    %4607 = vmatprep.subr.mxu0 0.0
    %4608 = vmatpush1.msra.mxu0 0.0
    %4609 = vmatprep.subr.mxu0 0.0
    %4610 = vmatpush1.msra.mxu0 0.0
    %4611 = vmatprep.subr.mxu0 0.0
    %4612 = vmatpush1.msra.mxu0 0.0
    %4613 = vmatprep.subr.mxu0 0.0
    %4614 = vmatpush1.msra.mxu0 0.0
    %4615 = vmatprep.subr.mxu0 0.0
    %4616 = vmatpush1.msra.mxu0 0.0
    %4617 = vmatprep.subr.mxu0 0.0
    %4618 = vmatpush1.msra.mxu0 0.0
    %4619 = vmatprep.subr.mxu0 0.0
    %4620 = vmatpush1.msra.mxu0 0.0
    %4621 = vmatprep.subr.mxu0 0.0
    %4622 = vmatpush1.msra.mxu0 0.0
    %4623 = vmatprep.subr.mxu0 0.0
    %4624 = vmatpush1.msra.mxu0 0.0
    %4625 = vmatprep.subr.mxu0 0.0
    %4626 = vmatpush1.msra.mxu0 0.0
    %4627 = vmatprep.subr.mxu0 0.0
    %4628 = vmatpush1.msra.mxu0 0.0
    %4629 = vmatprep.subr.mxu0 0.0
    %4630 = vmatpush1.msra.mxu0 0.0
    %4631 = vmatprep.subr.mxu0 0.0
    %4632 = vmatpush1.msra.mxu0 0.0
    %4633 = vmatprep.subr.mxu0 0.0
    %4634 = vmatpush1.msra.mxu0 0.0
    %4635 = vmatprep.subr.mxu0 0.0
    %4636 = vmatpush1.msra.mxu0 0.0
    %4637 = vmatprep.subr.mxu0 0.0
    %4638 = vmatpush1.msra.mxu0 0.0
    %4639 = vmatprep.subr.mxu0 0.0
    %4640 = vmatpush1.msra.mxu0 0.0
    %4641 = vmatprep.mubr.f32.mxu0 0.0
    %4642 = vmatmul.mubr.f32.gmra.mrb[0].mxu0 %v4281
    %v4643 = vpop.f32.mrb[0].mxu0
    %v4644 = vadd.f32 0.0, %v4643
    %v4645 = vpop.f32.mrb[0].mxu0
    %4646 = vdwg.mxu0
    %4647 = vmatprep.subr.mxu0 0.0
    %4648 = vmatpush1.msra.mxu0 %v2075
    %4649 = vmatprep.subr.mxu0 0.0
    %4650 = vmatpush1.msra.mxu0 %v2076
    %4651 = vmatprep.subr.mxu0 0.0
    %4652 = vmatpush1.msra.mxu0 %v2077
    %4653 = vmatprep.subr.mxu0 0.0
    %4654 = vmatpush1.msra.mxu0 %v2078
    %4655 = vmatprep.subr.mxu0 0.0
    %4656 = vmatpush1.msra.mxu0 %v2079
    %4657 = vmatprep.subr.mxu0 0.0
    %4658 = vmatpush1.msra.mxu0 %v2080
    %4659 = vmatprep.subr.mxu0 0.0
    %4660 = vmatpush1.msra.mxu0 %v2081
    %4661 = vmatprep.subr.mxu0 0.0
    %4662 = vmatpush1.msra.mxu0 %v2082
    %4663 = vmatprep.subr.mxu0 0.0
    %4664 = vmatpush1.msra.mxu0 0.0
    %4665 = vmatprep.subr.mxu0 0.0
    %4666 = vmatpush1.msra.mxu0 0.0
    %4667 = vmatprep.subr.mxu0 0.0
    %4668 = vmatpush1.msra.mxu0 0.0
    %4669 = vmatprep.subr.mxu0 0.0
    %4670 = vmatpush1.msra.mxu0 0.0
    %4671 = vmatprep.subr.mxu0 0.0
    %4672 = vmatpush1.msra.mxu0 0.0
    %4673 = vmatprep.subr.mxu0 0.0
    %4674 = vmatpush1.msra.mxu0 0.0
    %4675 = vmatprep.subr.mxu0 0.0
    %4676 = vmatpush1.msra.mxu0 0.0
    %4677 = vmatprep.subr.mxu0 0.0
    %4678 = vmatpush1.msra.mxu0 0.0
    %4679 = vmatprep.subr.mxu0 0.0
    %4680 = vmatpush1.msra.mxu0 0.0
    %4681 = vmatprep.subr.mxu0 0.0
    %4682 = vmatpush1.msra.mxu0 0.0
    %4683 = vmatprep.subr.mxu0 0.0
    %4684 = vmatpush1.msra.mxu0 0.0
    %4685 = vmatprep.subr.mxu0 0.0
    %4686 = vmatpush1.msra.mxu0 0.0
    %4687 = vmatprep.subr.mxu0 0.0
    %4688 = vmatpush1.msra.mxu0 0.0
    %4689 = vmatprep.subr.mxu0 0.0
    %4690 = vmatpush1.msra.mxu0 0.0
    %4691 = vmatprep.subr.mxu0 0.0
    %4692 = vmatpush1.msra.mxu0 0.0
    %4693 = vmatprep.subr.mxu0 0.0
    %4694 = vmatpush1.msra.mxu0 0.0
    %4695 = vmatprep.subr.mxu0 0.0
    %4696 = vmatpush1.msra.mxu0 0.0
    %4697 = vmatprep.subr.mxu0 0.0
    %4698 = vmatpush1.msra.mxu0 0.0
    %4699 = vmatprep.subr.mxu0 0.0
    %4700 = vmatpush1.msra.mxu0 0.0
    %4701 = vmatprep.subr.mxu0 0.0
    %4702 = vmatpush1.msra.mxu0 0.0
    %4703 = vmatprep.subr.mxu0 0.0
    %4704 = vmatpush1.msra.mxu0 0.0
    %4705 = vmatprep.subr.mxu0 0.0
    %4706 = vmatpush1.msra.mxu0 0.0
    %4707 = vmatprep.subr.mxu0 0.0
    %4708 = vmatpush1.msra.mxu0 0.0
    %4709 = vmatprep.subr.mxu0 0.0
    %4710 = vmatpush1.msra.mxu0 0.0
    %4711 = vmatprep.mubr.f32.mxu0 0.0
    %4712 = vmatmul.mubr.f32.gmra.mrb[0].mxu0 %v2495
    %v4713 = vpop.f32.mrb[0].mxu0
    %v4714 = vadd.f32 %v4644, %v4713
    %v4715 = vpop.f32.mrb[0].mxu0
    %4716 = vdwg.mxu0
    %v4717 = vadd.f32 %v4714, %v2234
    %v4718 = vtanh.pop %v4717
    %4719 = vmatprep.subr.mxu0 0.0
    %4720 = vmatpush1.msra.mxu0 %v2248
    %4721 = vmatprep.subr.mxu0 0.0
    %4722 = vmatpush1.msra.mxu0 %v2249
    %4723 = vmatprep.subr.mxu0 0.0
    %4724 = vmatpush1.msra.mxu0 %v2250
    %4725 = vmatprep.subr.mxu0 0.0
    %4726 = vmatpush1.msra.mxu0 %v2251
    %4727 = vmatprep.subr.mxu0 0.0
    %4728 = vmatpush1.msra.mxu0 0.0
    %4729 = vmatprep.subr.mxu0 0.0
    %4730 = vmatpush1.msra.mxu0 0.0
    %4731 = vmatprep.subr.mxu0 0.0
    %4732 = vmatpush1.msra.mxu0 0.0
    %4733 = vmatprep.subr.mxu0 0.0
    %4734 = vmatpush1.msra.mxu0 0.0
    %4735 = vmatprep.subr.mxu0 0.0
    %4736 = vmatpush1.msra.mxu0 0.0
    %4737 = vmatprep.subr.mxu0 0.0
    %4738 = vmatpush1.msra.mxu0 0.0
    %4739 = vmatprep.subr.mxu0 0.0
    %4740 = vmatpush1.msra.mxu0 0.0
    %4741 = vmatprep.subr.mxu0 0.0
    %4742 = vmatpush1.msra.mxu0 0.0
    %4743 = vmatprep.subr.mxu0 0.0
    %4744 = vmatpush1.msra.mxu0 0.0
    %4745 = vmatprep.subr.mxu0 0.0
    %4746 = vmatpush1.msra.mxu0 0.0
    %4747 = vmatprep.subr.mxu0 0.0
    %4748 = vmatpush1.msra.mxu0 0.0
    %4749 = vmatprep.subr.mxu0 0.0
    %4750 = vmatpush1.msra.mxu0 0.0
    %4751 = vmatprep.subr.mxu0 0.0
    %4752 = vmatpush1.msra.mxu0 0.0
    %4753 = vmatprep.subr.mxu0 0.0
    %4754 = vmatpush1.msra.mxu0 0.0
    %4755 = vmatprep.subr.mxu0 0.0
    %4756 = vmatpush1.msra.mxu0 0.0
    %4757 = vmatprep.subr.mxu0 0.0
    %4758 = vmatpush1.msra.mxu0 0.0
    %4759 = vmatprep.subr.mxu0 0.0
    %4760 = vmatpush1.msra.mxu0 0.0
    %4761 = vmatprep.subr.mxu0 0.0
    %4762 = vmatpush1.msra.mxu0 0.0
    %4763 = vmatprep.subr.mxu0 0.0
    %4764 = vmatpush1.msra.mxu0 0.0
    %4765 = vmatprep.subr.mxu0 0.0
    %4766 = vmatpush1.msra.mxu0 0.0
    %4767 = vmatprep.subr.mxu0 0.0
    %4768 = vmatpush1.msra.mxu0 0.0
    %4769 = vmatprep.subr.mxu0 0.0
    %4770 = vmatpush1.msra.mxu0 0.0
    %4771 = vmatprep.subr.mxu0 0.0
    %4772 = vmatpush1.msra.mxu0 0.0
    %4773 = vmatprep.subr.mxu0 0.0
    %4774 = vmatpush1.msra.mxu0 0.0
    %4775 = vmatprep.subr.mxu0 0.0
    %4776 = vmatpush1.msra.mxu0 0.0
    %4777 = vmatprep.subr.mxu0 0.0
    %4778 = vmatpush1.msra.mxu0 0.0
    %4779 = vmatprep.subr.mxu0 0.0
    %4780 = vmatpush1.msra.mxu0 0.0
    %4781 = vmatprep.subr.mxu0 0.0
    %4782 = vmatpush1.msra.mxu0 0.0
    %4783 = vmatprep.mubr.f32.mxu0 0.0
    %4784 = vmatmul.mubr.f32.gmra.mrb[0].mxu0 %v4281
    %v4785 = vpop.f32.mrb[0].mxu0
    %v4786 = vadd.f32 0.0, %v4785
    %v4787 = vpop.f32.mrb[0].mxu0
    %4788 = vdwg.mxu0
    %4789 = vmatprep.subr.mxu0 0.0
    %4790 = vmatpush1.msra.mxu0 %v2239
    %4791 = vmatprep.subr.mxu0 0.0
    %4792 = vmatpush1.msra.mxu0 %v2240
    %4793 = vmatprep.subr.mxu0 0.0
    %4794 = vmatpush1.msra.mxu0 %v2241
    %4795 = vmatprep.subr.mxu0 0.0
    %4796 = vmatpush1.msra.mxu0 %v2242
    %4797 = vmatprep.subr.mxu0 0.0
    %4798 = vmatpush1.msra.mxu0 %v2243
    %4799 = vmatprep.subr.mxu0 0.0
    %4800 = vmatpush1.msra.mxu0 %v2244
    %4801 = vmatprep.subr.mxu0 0.0
    %4802 = vmatpush1.msra.mxu0 %v2245
    %4803 = vmatprep.subr.mxu0 0.0
    %4804 = vmatpush1.msra.mxu0 %v2246
    %4805 = vmatprep.subr.mxu0 0.0
    %4806 = vmatpush1.msra.mxu0 0.0
    %4807 = vmatprep.subr.mxu0 0.0
    %4808 = vmatpush1.msra.mxu0 0.0
    %4809 = vmatprep.subr.mxu0 0.0
    %4810 = vmatpush1.msra.mxu0 0.0
    %4811 = vmatprep.subr.mxu0 0.0
    %4812 = vmatpush1.msra.mxu0 0.0
    %4813 = vmatprep.subr.mxu0 0.0
    %4814 = vmatpush1.msra.mxu0 0.0
    %4815 = vmatprep.subr.mxu0 0.0
    %4816 = vmatpush1.msra.mxu0 0.0
    %4817 = vmatprep.subr.mxu0 0.0
    %4818 = vmatpush1.msra.mxu0 0.0
    %4819 = vmatprep.subr.mxu0 0.0
    %4820 = vmatpush1.msra.mxu0 0.0
    %4821 = vmatprep.subr.mxu0 0.0
    %4822 = vmatpush1.msra.mxu0 0.0
    %4823 = vmatprep.subr.mxu0 0.0
    %4824 = vmatpush1.msra.mxu0 0.0
    %4825 = vmatprep.subr.mxu0 0.0
    %4826 = vmatpush1.msra.mxu0 0.0
    %4827 = vmatprep.subr.mxu0 0.0
    %4828 = vmatpush1.msra.mxu0 0.0
    %4829 = vmatprep.subr.mxu0 0.0
    %4830 = vmatpush1.msra.mxu0 0.0
    %4831 = vmatprep.subr.mxu0 0.0
    %4832 = vmatpush1.msra.mxu0 0.0
    %4833 = vmatprep.subr.mxu0 0.0
    %4834 = vmatpush1.msra.mxu0 0.0
    %4835 = vmatprep.subr.mxu0 0.0
    %4836 = vmatpush1.msra.mxu0 0.0
    %4837 = vmatprep.subr.mxu0 0.0
    %4838 = vmatpush1.msra.mxu0 0.0
    %4839 = vmatprep.subr.mxu0 0.0
    %4840 = vmatpush1.msra.mxu0 0.0
    %4841 = vmatprep.subr.mxu0 0.0
    %4842 = vmatpush1.msra.mxu0 0.0
    %4843 = vmatprep.subr.mxu0 0.0
    %4844 = vmatpush1.msra.mxu0 0.0
    %4845 = vmatprep.subr.mxu0 0.0
    %4846 = vmatpush1.msra.mxu0 0.0
    %4847 = vmatprep.subr.mxu0 0.0
    %4848 = vmatpush1.msra.mxu0 0.0
    %4849 = vmatprep.subr.mxu0 0.0
    %4850 = vmatpush1.msra.mxu0 0.0
    %4851 = vmatprep.subr.mxu0 0.0
    %4852 = vmatpush1.msra.mxu0 0.0
    %4853 = vmatprep.mubr.f32.mxu0 0.0
    %4854 = vmatmul.mubr.f32.gmra.mrb[0].mxu0 %v2495
    %v4855 = vpop.f32.mrb[0].mxu0
    %v4856 = vadd.f32 %v4786, %v4855
    %v4857 = vpop.f32.mrb[0].mxu0
    %4858 = vdwg.mxu0
    %v4859 = vadd.f32 %v4856, %v2398
    %v4860 = vxor.u32 %v4859, 2147483648
    %v4861 = vmul.f32 %v4860, 1.442695
    %v4862 = vpow.pop %v4861
    %v4863 = vadd.f32 %v4862, 1.0
    %v4864 = vrcp.pop %v4863
    %v4865 = vmul.f32 1.0, %v4864
    %v4866 = vmul.f32 %v4576, %v3686
    %v4867 = vmul.f32 %v4429, %v4718
    %v4868 = vadd.f32 %v4866, %v4867
    %v4869 = vtanh.pop %v4868
    %v4870 = vmul.f32 %v4865, %v4869
    %v4872 = vsel %vm1744, %v4279, 0
    %4874 = vmatprep.subr.mxu0 0.0
    %4875 = vmatpush1.msra.mxu0 %v2420
    %4876 = vmatprep.subr.mxu0 0.0
    %4877 = vmatpush1.msra.mxu0 %v2421
    %4878 = vmatprep.subr.mxu0 0.0
    %4879 = vmatpush1.msra.mxu0 %v2422
    %4880 = vmatprep.subr.mxu0 0.0
    %4881 = vmatpush1.msra.mxu0 %v2423
    %4882 = vmatprep.subr.mxu0 0.0
    %4883 = vmatpush1.msra.mxu0 0.0
    %4884 = vmatprep.subr.mxu0 0.0
    %4885 = vmatpush1.msra.mxu0 0.0
    %4886 = vmatprep.subr.mxu0 0.0
    %4887 = vmatpush1.msra.mxu0 0.0
    %4888 = vmatprep.subr.mxu0 0.0
    %4889 = vmatpush1.msra.mxu0 0.0
    %4890 = vmatprep.subr.mxu0 0.0
    %4891 = vmatpush1.msra.mxu0 0.0
    %4892 = vmatprep.subr.mxu0 0.0
    %4893 = vmatpush1.msra.mxu0 0.0
    %4894 = vmatprep.subr.mxu0 0.0
    %4895 = vmatpush1.msra.mxu0 0.0
    %4896 = vmatprep.subr.mxu0 0.0
    %4897 = vmatpush1.msra.mxu0 0.0
    %4898 = vmatprep.subr.mxu0 0.0
    %4899 = vmatpush1.msra.mxu0 0.0
    %4900 = vmatprep.subr.mxu0 0.0
    %4901 = vmatpush1.msra.mxu0 0.0
    %4902 = vmatprep.subr.mxu0 0.0
    %4903 = vmatpush1.msra.mxu0 0.0
    %4904 = vmatprep.subr.mxu0 0.0
    %4905 = vmatpush1.msra.mxu0 0.0
    %4906 = vmatprep.subr.mxu0 0.0
    %4907 = vmatpush1.msra.mxu0 0.0
    %4908 = vmatprep.subr.mxu0 0.0
    %4909 = vmatpush1.msra.mxu0 0.0
    %4910 = vmatprep.subr.mxu0 0.0
    %4911 = vmatpush1.msra.mxu0 0.0
    %4912 = vmatprep.subr.mxu0 0.0
    %4913 = vmatpush1.msra.mxu0 0.0
    %4914 = vmatprep.subr.mxu0 0.0
    %4915 = vmatpush1.msra.mxu0 0.0
    %4916 = vmatprep.subr.mxu0 0.0
    %4917 = vmatpush1.msra.mxu0 0.0
    %4918 = vmatprep.subr.mxu0 0.0
    %4919 = vmatpush1.msra.mxu0 0.0
    %4920 = vmatprep.subr.mxu0 0.0
    %4921 = vmatpush1.msra.mxu0 0.0
    %4922 = vmatprep.subr.mxu0 0.0
    %4923 = vmatpush1.msra.mxu0 0.0
    %4924 = vmatprep.subr.mxu0 0.0
    %4925 = vmatpush1.msra.mxu0 0.0
    %4926 = vmatprep.subr.mxu0 0.0
    %4927 = vmatpush1.msra.mxu0 0.0
    %4928 = vmatprep.subr.mxu0 0.0
    %4929 = vmatpush1.msra.mxu0 0.0
    %4930 = vmatprep.subr.mxu0 0.0
    %4931 = vmatpush1.msra.mxu0 0.0
    %4932 = vmatprep.subr.mxu0 0.0
    %4933 = vmatpush1.msra.mxu0 0.0
    %4934 = vmatprep.subr.mxu0 0.0
    %4935 = vmatpush1.msra.mxu0 0.0
    %4936 = vmatprep.subr.mxu0 0.0
    %4937 = vmatpush1.msra.mxu0 0.0
    %4938 = vmatprep.mubr.f32.mxu0 0.0
    %4939 = vmatmul.mubr.f32.gmra.mrb[0].mxu0 %v4872
    %v4940 = vpop.f32.mrb[0].mxu0
    %v4941 = vadd.f32 0.0, %v4940
    %v4942 = vpop.f32.mrb[0].mxu0
    %4943 = vdwg.mxu0
    %4944 = vmatprep.subr.mxu0 0.0
    %4945 = vmatpush1.msra.mxu0 %v2412
    %4946 = vmatprep.subr.mxu0 0.0
    %4947 = vmatpush1.msra.mxu0 %v2413
    %4948 = vmatprep.subr.mxu0 0.0
    %4949 = vmatpush1.msra.mxu0 %v2414
    %4950 = vmatprep.subr.mxu0 0.0
    %4951 = vmatpush1.msra.mxu0 %v2415
    %4952 = vmatprep.subr.mxu0 0.0
    %4953 = vmatpush1.msra.mxu0 %v2416
    %4954 = vmatprep.subr.mxu0 0.0
    %4955 = vmatpush1.msra.mxu0 %v2417
    %4956 = vmatprep.subr.mxu0 0.0
    %4957 = vmatpush1.msra.mxu0 %v2418
    %4958 = vmatprep.subr.mxu0 0.0
    %4959 = vmatpush1.msra.mxu0 %v2419
    %4960 = vmatprep.subr.mxu0 0.0
    %4961 = vmatpush1.msra.mxu0 0.0
    %4962 = vmatprep.subr.mxu0 0.0
    %4963 = vmatpush1.msra.mxu0 0.0
    %4964 = vmatprep.subr.mxu0 0.0
    %4965 = vmatpush1.msra.mxu0 0.0
    %4966 = vmatprep.subr.mxu0 0.0
    %4967 = vmatpush1.msra.mxu0 0.0
    %4968 = vmatprep.subr.mxu0 0.0
    %4969 = vmatpush1.msra.mxu0 0.0
    %4970 = vmatprep.subr.mxu0 0.0
    %4971 = vmatpush1.msra.mxu0 0.0
    %4972 = vmatprep.subr.mxu0 0.0
    %4973 = vmatpush1.msra.mxu0 0.0
    %4974 = vmatprep.subr.mxu0 0.0
    %4975 = vmatpush1.msra.mxu0 0.0
    %4976 = vmatprep.subr.mxu0 0.0
    %4977 = vmatpush1.msra.mxu0 0.0
    %4978 = vmatprep.subr.mxu0 0.0
    %4979 = vmatpush1.msra.mxu0 0.0
    %4980 = vmatprep.subr.mxu0 0.0
    %4981 = vmatpush1.msra.mxu0 0.0
    %4982 = vmatprep.subr.mxu0 0.0
    %4983 = vmatpush1.msra.mxu0 0.0
    %4984 = vmatprep.subr.mxu0 0.0
    %4985 = vmatpush1.msra.mxu0 0.0
    %4986 = vmatprep.subr.mxu0 0.0
    %4987 = vmatpush1.msra.mxu0 0.0
    %4988 = vmatprep.subr.mxu0 0.0
    %4989 = vmatpush1.msra.mxu0 0.0
    %4990 = vmatprep.subr.mxu0 0.0
    %4991 = vmatpush1.msra.mxu0 0.0
    %4992 = vmatprep.subr.mxu0 0.0
    %4993 = vmatpush1.msra.mxu0 0.0
    %4994 = vmatprep.subr.mxu0 0.0
    %4995 = vmatpush1.msra.mxu0 0.0
    %4996 = vmatprep.subr.mxu0 0.0
    %4997 = vmatpush1.msra.mxu0 0.0
    %4998 = vmatprep.subr.mxu0 0.0
    %4999 = vmatpush1.msra.mxu0 0.0
    %5000 = vmatprep.subr.mxu0 0.0
    %5001 = vmatpush1.msra.mxu0 0.0
    %5002 = vmatprep.subr.mxu0 0.0
    %5003 = vmatpush1.msra.mxu0 0.0
    %5004 = vmatprep.subr.mxu0 0.0
    %5005 = vmatpush1.msra.mxu0 0.0
    %5006 = vmatprep.subr.mxu0 0.0
    %5007 = vmatpush1.msra.mxu0 0.0
    %5008 = vmatprep.mubr.f32.mxu0 0.0
    %5009 = vmatmul.mubr.f32.gmra.mrb[0].mxu0 %v1819
    %v5010 = vpop.f32.mrb[0].mxu0
    %v5011 = vadd.f32 %v4941, %v5010
    %v5012 = vpop.f32.mrb[0].mxu0
    %5013 = vdwg.mxu0
    %v5014 = vadd.f32 %v5011, %v2572
    %v5015 = vxor.u32 %v5014, 2147483648
    %v5016 = vmul.f32 %v5015, 1.442695
    %v5017 = vpow.pop %v5016
    %v5018 = vadd.f32 %v5017, 1.0
    %v5019 = vrcp.pop %v5018
    %v5020 = vmul.f32 1.0, %v5019
    %5021 = vmatprep.subr.mxu0 0.0
    %5022 = vmatpush1.msra.mxu0 %v2591
    %5023 = vmatprep.subr.mxu0 0.0
    %5024 = vmatpush1.msra.mxu0 %v2592
    %5025 = vmatprep.subr.mxu0 0.0
    %5026 = vmatpush1.msra.mxu0 %v2593
    %5027 = vmatprep.subr.mxu0 0.0
    %5028 = vmatpush1.msra.mxu0 %v2594
    %5029 = vmatprep.subr.mxu0 0.0
    %5030 = vmatpush1.msra.mxu0 0.0
    %5031 = vmatprep.subr.mxu0 0.0
    %5032 = vmatpush1.msra.mxu0 0.0
    %5033 = vmatprep.subr.mxu0 0.0
    %5034 = vmatpush1.msra.mxu0 0.0
    %5035 = vmatprep.subr.mxu0 0.0
    %5036 = vmatpush1.msra.mxu0 0.0
    %5037 = vmatprep.subr.mxu0 0.0
    %5038 = vmatpush1.msra.mxu0 0.0
    %5039 = vmatprep.subr.mxu0 0.0
    %5040 = vmatpush1.msra.mxu0 0.0
    %5041 = vmatprep.subr.mxu0 0.0
    %5042 = vmatpush1.msra.mxu0 0.0
    %5043 = vmatprep.subr.mxu0 0.0
    %5044 = vmatpush1.msra.mxu0 0.0
    %5045 = vmatprep.subr.mxu0 0.0
    %5046 = vmatpush1.msra.mxu0 0.0
    %5047 = vmatprep.subr.mxu0 0.0
    %5048 = vmatpush1.msra.mxu0 0.0
    %5049 = vmatprep.subr.mxu0 0.0
    %5050 = vmatpush1.msra.mxu0 0.0
    %5051 = vmatprep.subr.mxu0 0.0
    %5052 = vmatpush1.msra.mxu0 0.0
    %5053 = vmatprep.subr.mxu0 0.0
    %5054 = vmatpush1.msra.mxu0 0.0
    %5055 = vmatprep.subr.mxu0 0.0
    %5056 = vmatpush1.msra.mxu0 0.0
    %5057 = vmatprep.subr.mxu0 0.0
    %5058 = vmatpush1.msra.mxu0 0.0
    %5059 = vmatprep.subr.mxu0 0.0
    %5060 = vmatpush1.msra.mxu0 0.0
    %5061 = vmatprep.subr.mxu0 0.0
    %5062 = vmatpush1.msra.mxu0 0.0
    %5063 = vmatprep.subr.mxu0 0.0
    %5064 = vmatpush1.msra.mxu0 0.0
    %5065 = vmatprep.subr.mxu0 0.0
    %5066 = vmatpush1.msra.mxu0 0.0
    %5067 = vmatprep.subr.mxu0 0.0
    %5068 = vmatpush1.msra.mxu0 0.0
    %5069 = vmatprep.subr.mxu0 0.0
    %5070 = vmatpush1.msra.mxu0 0.0
    %5071 = vmatprep.subr.mxu0 0.0
    %5072 = vmatpush1.msra.mxu0 0.0
    %5073 = vmatprep.subr.mxu0 0.0
    %5074 = vmatpush1.msra.mxu0 0.0
    %5075 = vmatprep.subr.mxu0 0.0
    %5076 = vmatpush1.msra.mxu0 0.0
    %5077 = vmatprep.subr.mxu0 0.0
    %5078 = vmatpush1.msra.mxu0 0.0
    %5079 = vmatprep.subr.mxu0 0.0
    %5080 = vmatpush1.msra.mxu0 0.0
    %5081 = vmatprep.subr.mxu0 0.0
    %5082 = vmatpush1.msra.mxu0 0.0
    %5083 = vmatprep.subr.mxu0 0.0
    %5084 = vmatpush1.msra.mxu0 0.0
    %5085 = vmatprep.mubr.f32.mxu0 0.0
    %5086 = vmatmul.mubr.f32.gmra.mrb[0].mxu0 %v4872
    %v5087 = vpop.f32.mrb[0].mxu0
    %v5088 = vadd.f32 0.0, %v5087
    %v5089 = vpop.f32.mrb[0].mxu0
    %5090 = vdwg.mxu0
    %5091 = vmatprep.subr.mxu0 0.0
    %5092 = vmatpush1.msra.mxu0 %v2582
    %5093 = vmatprep.subr.mxu0 0.0
    %5094 = vmatpush1.msra.mxu0 %v2583
    %5095 = vmatprep.subr.mxu0 0.0
    %5096 = vmatpush1.msra.mxu0 %v2584
    %5097 = vmatprep.subr.mxu0 0.0
    %5098 = vmatpush1.msra.mxu0 %v2585
    %5099 = vmatprep.subr.mxu0 0.0
    %5100 = vmatpush1.msra.mxu0 %v2586
    %5101 = vmatprep.subr.mxu0 0.0
    %5102 = vmatpush1.msra.mxu0 %v2587
    %5103 = vmatprep.subr.mxu0 0.0
    %5104 = vmatpush1.msra.mxu0 %v2588
    %5105 = vmatprep.subr.mxu0 0.0
    %5106 = vmatpush1.msra.mxu0 %v2589
    %5107 = vmatprep.subr.mxu0 0.0
    %5108 = vmatpush1.msra.mxu0 0.0
    %5109 = vmatprep.subr.mxu0 0.0
    %5110 = vmatpush1.msra.mxu0 0.0
    %5111 = vmatprep.subr.mxu0 0.0
    %5112 = vmatpush1.msra.mxu0 0.0
    %5113 = vmatprep.subr.mxu0 0.0
    %5114 = vmatpush1.msra.mxu0 0.0
    %5115 = vmatprep.subr.mxu0 0.0
    %5116 = vmatpush1.msra.mxu0 0.0
    %5117 = vmatprep.subr.mxu0 0.0
    %5118 = vmatpush1.msra.mxu0 0.0
    %5119 = vmatprep.subr.mxu0 0.0
    %5120 = vmatpush1.msra.mxu0 0.0
    %5121 = vmatprep.subr.mxu0 0.0
    %5122 = vmatpush1.msra.mxu0 0.0
    %5123 = vmatprep.subr.mxu0 0.0
    %5124 = vmatpush1.msra.mxu0 0.0
    %5125 = vmatprep.subr.mxu0 0.0
    %5126 = vmatpush1.msra.mxu0 0.0
    %5127 = vmatprep.subr.mxu0 0.0
    %5128 = vmatpush1.msra.mxu0 0.0
    %5129 = vmatprep.subr.mxu0 0.0
    %5130 = vmatpush1.msra.mxu0 0.0
    %5131 = vmatprep.subr.mxu0 0.0
    %5132 = vmatpush1.msra.mxu0 0.0
    %5133 = vmatprep.subr.mxu0 0.0
    %5134 = vmatpush1.msra.mxu0 0.0
    %5135 = vmatprep.subr.mxu0 0.0
    %5136 = vmatpush1.msra.mxu0 0.0
    %5137 = vmatprep.subr.mxu0 0.0
    %5138 = vmatpush1.msra.mxu0 0.0
    %5139 = vmatprep.subr.mxu0 0.0
    %5140 = vmatpush1.msra.mxu0 0.0
    %5141 = vmatprep.subr.mxu0 0.0
    %5142 = vmatpush1.msra.mxu0 0.0
    %5143 = vmatprep.subr.mxu0 0.0
    %5144 = vmatpush1.msra.mxu0 0.0
    %5145 = vmatprep.subr.mxu0 0.0
    %5146 = vmatpush1.msra.mxu0 0.0
    %5147 = vmatprep.subr.mxu0 0.0
    %5148 = vmatpush1.msra.mxu0 0.0
    %5149 = vmatprep.subr.mxu0 0.0
    %5150 = vmatpush1.msra.mxu0 0.0
    %5151 = vmatprep.subr.mxu0 0.0
    %5152 = vmatpush1.msra.mxu0 0.0
    %5153 = vmatprep.subr.mxu0 0.0
    %5154 = vmatpush1.msra.mxu0 0.0
    %5155 = vmatprep.mubr.f32.mxu0 0.0
    %5156 = vmatmul.mubr.f32.gmra.mrb[0].mxu0 %v1819
    %v5157 = vpop.f32.mrb[0].mxu0
    %v5158 = vadd.f32 %v5088, %v5157
    %v5159 = vpop.f32.mrb[0].mxu0
    %5160 = vdwg.mxu0
    %v5161 = vadd.f32 %v5158, %v2741
    %v5162 = vxor.u32 %v5161, 2147483648
    %v5163 = vmul.f32 %v5162, 1.442695
    %v5164 = vpow.pop %v5163
    %v5165 = vadd.f32 %v5164, 1.0
    %v5166 = vrcp.pop %v5165
    %v5167 = vmul.f32 1.0, %v5166
    %5168 = vmatprep.subr.mxu0 0.0
    %5169 = vmatpush1.msra.mxu0 %v2760
    %5170 = vmatprep.subr.mxu0 0.0
    %5171 = vmatpush1.msra.mxu0 %v2761
    %5172 = vmatprep.subr.mxu0 0.0
    %5173 = vmatpush1.msra.mxu0 %v2762
    %5174 = vmatprep.subr.mxu0 0.0
    %5175 = vmatpush1.msra.mxu0 %v2763
    %5176 = vmatprep.subr.mxu0 0.0
    %5177 = vmatpush1.msra.mxu0 0.0
    %5178 = vmatprep.subr.mxu0 0.0
    %5179 = vmatpush1.msra.mxu0 0.0
    %5180 = vmatprep.subr.mxu0 0.0
    %5181 = vmatpush1.msra.mxu0 0.0
    %5182 = vmatprep.subr.mxu0 0.0
    %5183 = vmatpush1.msra.mxu0 0.0
    %5184 = vmatprep.subr.mxu0 0.0
    %5185 = vmatpush1.msra.mxu0 0.0
    %5186 = vmatprep.subr.mxu0 0.0
    %5187 = vmatpush1.msra.mxu0 0.0
    %5188 = vmatprep.subr.mxu0 0.0
    %5189 = vmatpush1.msra.mxu0 0.0
    %5190 = vmatprep.subr.mxu0 0.0
    %5191 = vmatpush1.msra.mxu0 0.0
    %5192 = vmatprep.subr.mxu0 0.0
    %5193 = vmatpush1.msra.mxu0 0.0
    %5194 = vmatprep.subr.mxu0 0.0
    %5195 = vmatpush1.msra.mxu0 0.0
    %5196 = vmatprep.subr.mxu0 0.0
    %5197 = vmatpush1.msra.mxu0 0.0
    %5198 = vmatprep.subr.mxu0 0.0
    %5199 = vmatpush1.msra.mxu0 0.0
    %5200 = vmatprep.subr.mxu0 0.0
    %5201 = vmatpush1.msra.mxu0 0.0
    %5202 = vmatprep.subr.mxu0 0.0
    %5203 = vmatpush1.msra.mxu0 0.0
    %5204 = vmatprep.subr.mxu0 0.0
    %5205 = vmatpush1.msra.mxu0 0.0
    %5206 = vmatprep.subr.mxu0 0.0
    %5207 = vmatpush1.msra.mxu0 0.0
    %5208 = vmatprep.subr.mxu0 0.0
    %5209 = vmatpush1.msra.mxu0 0.0
    %5210 = vmatprep.subr.mxu0 0.0
    %5211 = vmatpush1.msra.mxu0 0.0
    %5212 = vmatprep.subr.mxu0 0.0
    %5213 = vmatpush1.msra.mxu0 0.0
    %5214 = vmatprep.subr.mxu0 0.0
    %5215 = vmatpush1.msra.mxu0 0.0
    %5216 = vmatprep.subr.mxu0 0.0
    %5217 = vmatpush1.msra.mxu0 0.0
    %5218 = vmatprep.subr.mxu0 0.0
    %5219 = vmatpush1.msra.mxu0 0.0
    %5220 = vmatprep.subr.mxu0 0.0
    %5221 = vmatpush1.msra.mxu0 0.0
    %5222 = vmatprep.subr.mxu0 0.0
    %5223 = vmatpush1.msra.mxu0 0.0
    %5224 = vmatprep.subr.mxu0 0.0
    %5225 = vmatpush1.msra.mxu0 0.0
    %5226 = vmatprep.subr.mxu0 0.0
    %5227 = vmatpush1.msra.mxu0 0.0
    %5228 = vmatprep.subr.mxu0 0.0
    %5229 = vmatpush1.msra.mxu0 0.0
    %5230 = vmatprep.subr.mxu0 0.0
    %5231 = vmatpush1.msra.mxu0 0.0
    %5232 = vmatprep.mubr.f32.mxu0 0.0
    %5233 = vmatmul.mubr.f32.gmra.mrb[0].mxu0 %v4872
    %v5234 = vpop.f32.mrb[0].mxu0
    %v5235 = vadd.f32 0.0, %v5234
    %v5236 = vpop.f32.mrb[0].mxu0
    %5237 = vdwg.mxu0
    %5238 = vmatprep.subr.mxu0 0.0
    %5239 = vmatpush1.msra.mxu0 %v2751
    %5240 = vmatprep.subr.mxu0 0.0
    %5241 = vmatpush1.msra.mxu0 %v2752
    %5242 = vmatprep.subr.mxu0 0.0
    %5243 = vmatpush1.msra.mxu0 %v2753
    %5244 = vmatprep.subr.mxu0 0.0
    %5245 = vmatpush1.msra.mxu0 %v2754
    %5246 = vmatprep.subr.mxu0 0.0
    %5247 = vmatpush1.msra.mxu0 %v2755
    %5248 = vmatprep.subr.mxu0 0.0
    %5249 = vmatpush1.msra.mxu0 %v2756
    %5250 = vmatprep.subr.mxu0 0.0
    %5251 = vmatpush1.msra.mxu0 %v2757
    %5252 = vmatprep.subr.mxu0 0.0
    %5253 = vmatpush1.msra.mxu0 %v2758
    %5254 = vmatprep.subr.mxu0 0.0
    %5255 = vmatpush1.msra.mxu0 0.0
    %5256 = vmatprep.subr.mxu0 0.0
    %5257 = vmatpush1.msra.mxu0 0.0
    %5258 = vmatprep.subr.mxu0 0.0
    %5259 = vmatpush1.msra.mxu0 0.0
    %5260 = vmatprep.subr.mxu0 0.0
    %5261 = vmatpush1.msra.mxu0 0.0
    %5262 = vmatprep.subr.mxu0 0.0
    %5263 = vmatpush1.msra.mxu0 0.0
    %5264 = vmatprep.subr.mxu0 0.0
    %5265 = vmatpush1.msra.mxu0 0.0
    %5266 = vmatprep.subr.mxu0 0.0
    %5267 = vmatpush1.msra.mxu0 0.0
    %5268 = vmatprep.subr.mxu0 0.0
    %5269 = vmatpush1.msra.mxu0 0.0
    %5270 = vmatprep.subr.mxu0 0.0
    %5271 = vmatpush1.msra.mxu0 0.0
    %5272 = vmatprep.subr.mxu0 0.0
    %5273 = vmatpush1.msra.mxu0 0.0
    %5274 = vmatprep.subr.mxu0 0.0
    %5275 = vmatpush1.msra.mxu0 0.0
    %5276 = vmatprep.subr.mxu0 0.0
    %5277 = vmatpush1.msra.mxu0 0.0
    %5278 = vmatprep.subr.mxu0 0.0
    %5279 = vmatpush1.msra.mxu0 0.0
    %5280 = vmatprep.subr.mxu0 0.0
    %5281 = vmatpush1.msra.mxu0 0.0
    %5282 = vmatprep.subr.mxu0 0.0
    %5283 = vmatpush1.msra.mxu0 0.0
    %5284 = vmatprep.subr.mxu0 0.0
    %5285 = vmatpush1.msra.mxu0 0.0
    %5286 = vmatprep.subr.mxu0 0.0
    %5287 = vmatpush1.msra.mxu0 0.0
    %5288 = vmatprep.subr.mxu0 0.0
    %5289 = vmatpush1.msra.mxu0 0.0
    %5290 = vmatprep.subr.mxu0 0.0
    %5291 = vmatpush1.msra.mxu0 0.0
    %5292 = vmatprep.subr.mxu0 0.0
    %5293 = vmatpush1.msra.mxu0 0.0
    %5294 = vmatprep.subr.mxu0 0.0
    %5295 = vmatpush1.msra.mxu0 0.0
    %5296 = vmatprep.subr.mxu0 0.0
    %5297 = vmatpush1.msra.mxu0 0.0
    %5298 = vmatprep.subr.mxu0 0.0
    %5299 = vmatpush1.msra.mxu0 0.0
    %5300 = vmatprep.subr.mxu0 0.0
    %5301 = vmatpush1.msra.mxu0 0.0
    %5302 = vmatprep.mubr.f32.mxu0 0.0
    %5303 = vmatmul.mubr.f32.gmra.mrb[0].mxu0 %v1819
    %v5304 = vpop.f32.mrb[0].mxu0
    %v5305 = vadd.f32 %v5235, %v5304
    %v5306 = vpop.f32.mrb[0].mxu0
    %5307 = vdwg.mxu0
    %v5308 = vadd.f32 %v5305, %v2910
    %v5309 = vtanh.pop %v5308
    %5310 = vmatprep.subr.mxu0 0.0
    %5311 = vmatpush1.msra.mxu0 %v2924
    %5312 = vmatprep.subr.mxu0 0.0
    %5313 = vmatpush1.msra.mxu0 %v2925
    %5314 = vmatprep.subr.mxu0 0.0
    %5315 = vmatpush1.msra.mxu0 %v2926
    %5316 = vmatprep.subr.mxu0 0.0
    %5317 = vmatpush1.msra.mxu0 %v2927
    %5318 = vmatprep.subr.mxu0 0.0
    %5319 = vmatpush1.msra.mxu0 0.0
    %5320 = vmatprep.subr.mxu0 0.0
    %5321 = vmatpush1.msra.mxu0 0.0
    %5322 = vmatprep.subr.mxu0 0.0
    %5323 = vmatpush1.msra.mxu0 0.0
    %5324 = vmatprep.subr.mxu0 0.0
    %5325 = vmatpush1.msra.mxu0 0.0
    %5326 = vmatprep.subr.mxu0 0.0
    %5327 = vmatpush1.msra.mxu0 0.0
    %5328 = vmatprep.subr.mxu0 0.0
    %5329 = vmatpush1.msra.mxu0 0.0
    %5330 = vmatprep.subr.mxu0 0.0
    %5331 = vmatpush1.msra.mxu0 0.0
    %5332 = vmatprep.subr.mxu0 0.0
    %5333 = vmatpush1.msra.mxu0 0.0
    %5334 = vmatprep.subr.mxu0 0.0
    %5335 = vmatpush1.msra.mxu0 0.0
    %5336 = vmatprep.subr.mxu0 0.0
    %5337 = vmatpush1.msra.mxu0 0.0
    %5338 = vmatprep.subr.mxu0 0.0
    %5339 = vmatpush1.msra.mxu0 0.0
    %5340 = vmatprep.subr.mxu0 0.0
    %5341 = vmatpush1.msra.mxu0 0.0
    %5342 = vmatprep.subr.mxu0 0.0
    %5343 = vmatpush1.msra.mxu0 0.0
    %5344 = vmatprep.subr.mxu0 0.0
    %5345 = vmatpush1.msra.mxu0 0.0
    %5346 = vmatprep.subr.mxu0 0.0
    %5347 = vmatpush1.msra.mxu0 0.0
    %5348 = vmatprep.subr.mxu0 0.0
    %5349 = vmatpush1.msra.mxu0 0.0
    %5350 = vmatprep.subr.mxu0 0.0
    %5351 = vmatpush1.msra.mxu0 0.0
    %5352 = vmatprep.subr.mxu0 0.0
    %5353 = vmatpush1.msra.mxu0 0.0
    %5354 = vmatprep.subr.mxu0 0.0
    %5355 = vmatpush1.msra.mxu0 0.0
    %5356 = vmatprep.subr.mxu0 0.0
    %5357 = vmatpush1.msra.mxu0 0.0
    %5358 = vmatprep.subr.mxu0 0.0
    %5359 = vmatpush1.msra.mxu0 0.0
    %5360 = vmatprep.subr.mxu0 0.0
    %5361 = vmatpush1.msra.mxu0 0.0
    %5362 = vmatprep.subr.mxu0 0.0
    %5363 = vmatpush1.msra.mxu0 0.0
    %5364 = vmatprep.subr.mxu0 0.0
    %5365 = vmatpush1.msra.mxu0 0.0
    %5366 = vmatprep.subr.mxu0 0.0
    %5367 = vmatpush1.msra.mxu0 0.0
    %5368 = vmatprep.subr.mxu0 0.0
    %5369 = vmatpush1.msra.mxu0 0.0
    %5370 = vmatprep.subr.mxu0 0.0
    %5371 = vmatpush1.msra.mxu0 0.0
    %5372 = vmatprep.subr.mxu0 0.0
    %5373 = vmatpush1.msra.mxu0 0.0
    %5374 = vmatprep.mubr.f32.mxu0 0.0
    %5375 = vmatmul.mubr.f32.gmra.mrb[0].mxu0 %v4872
    %v5376 = vpop.f32.mrb[0].mxu0
    %v5377 = vadd.f32 0.0, %v5376
    %v5378 = vpop.f32.mrb[0].mxu0
    %5379 = vdwg.mxu0
    %5380 = vmatprep.subr.mxu0 0.0
    %5381 = vmatpush1.msra.mxu0 %v2915
    %5382 = vmatprep.subr.mxu0 0.0
    %5383 = vmatpush1.msra.mxu0 %v2916
    %5384 = vmatprep.subr.mxu0 0.0
    %5385 = vmatpush1.msra.mxu0 %v2917
    %5386 = vmatprep.subr.mxu0 0.0
    %5387 = vmatpush1.msra.mxu0 %v2918
    %5388 = vmatprep.subr.mxu0 0.0
    %5389 = vmatpush1.msra.mxu0 %v2919
    %5390 = vmatprep.subr.mxu0 0.0
    %5391 = vmatpush1.msra.mxu0 %v2920
    %5392 = vmatprep.subr.mxu0 0.0
    %5393 = vmatpush1.msra.mxu0 %v2921
    %5394 = vmatprep.subr.mxu0 0.0
    %5395 = vmatpush1.msra.mxu0 %v2922
    %5396 = vmatprep.subr.mxu0 0.0
    %5397 = vmatpush1.msra.mxu0 0.0
    %5398 = vmatprep.subr.mxu0 0.0
    %5399 = vmatpush1.msra.mxu0 0.0
    %5400 = vmatprep.subr.mxu0 0.0
    %5401 = vmatpush1.msra.mxu0 0.0
    %5402 = vmatprep.subr.mxu0 0.0
    %5403 = vmatpush1.msra.mxu0 0.0
    %5404 = vmatprep.subr.mxu0 0.0
    %5405 = vmatpush1.msra.mxu0 0.0
    %5406 = vmatprep.subr.mxu0 0.0
    %5407 = vmatpush1.msra.mxu0 0.0
    %5408 = vmatprep.subr.mxu0 0.0
    %5409 = vmatpush1.msra.mxu0 0.0
    %5410 = vmatprep.subr.mxu0 0.0
    %5411 = vmatpush1.msra.mxu0 0.0
    %5412 = vmatprep.subr.mxu0 0.0
    %5413 = vmatpush1.msra.mxu0 0.0
    %5414 = vmatprep.subr.mxu0 0.0
    %5415 = vmatpush1.msra.mxu0 0.0
    %5416 = vmatprep.subr.mxu0 0.0
    %5417 = vmatpush1.msra.mxu0 0.0
    %5418 = vmatprep.subr.mxu0 0.0
    %5419 = vmatpush1.msra.mxu0 0.0
    %5420 = vmatprep.subr.mxu0 0.0
    %5421 = vmatpush1.msra.mxu0 0.0
    %5422 = vmatprep.subr.mxu0 0.0
    %5423 = vmatpush1.msra.mxu0 0.0
    %5424 = vmatprep.subr.mxu0 0.0
    %5425 = vmatpush1.msra.mxu0 0.0
    %5426 = vmatprep.subr.mxu0 0.0
    %5427 = vmatpush1.msra.mxu0 0.0
    %5428 = vmatprep.subr.mxu0 0.0
    %5429 = vmatpush1.msra.mxu0 0.0
    %5430 = vmatprep.subr.mxu0 0.0
    %5431 = vmatpush1.msra.mxu0 0.0
    %5432 = vmatprep.subr.mxu0 0.0
    %5433 = vmatpush1.msra.mxu0 0.0
    %5434 = vmatprep.subr.mxu0 0.0
    %5435 = vmatpush1.msra.mxu0 0.0
    %5436 = vmatprep.subr.mxu0 0.0
    %5437 = vmatpush1.msra.mxu0 0.0
    %5438 = vmatprep.subr.mxu0 0.0
    %5439 = vmatpush1.msra.mxu0 0.0
    %5440 = vmatprep.subr.mxu0 0.0
    %5441 = vmatpush1.msra.mxu0 0.0
    %5442 = vmatprep.subr.mxu0 0.0
    %5443 = vmatpush1.msra.mxu0 0.0
    %5444 = vmatprep.mubr.f32.mxu0 0.0
    %5445 = vmatmul.mubr.f32.gmra.mrb[0].mxu0 %v1819
    %v5446 = vpop.f32.mrb[0].mxu0
    %v5447 = vadd.f32 %v5377, %v5446
    %v5448 = vpop.f32.mrb[0].mxu0
    %5449 = vdwg.mxu0
    %v5450 = vadd.f32 %v5447, %v3074
    %v5451 = vxor.u32 %v5450, 2147483648
    %v5452 = vmul.f32 %v5451, 1.442695
    %v5453 = vpow.pop %v5452
    %v5454 = vadd.f32 %v5453, 1.0
    %v5455 = vrcp.pop %v5454
    %v5456 = vmul.f32 1.0, %v5455
    %v5457 = vmul.f32 %v5167, %v4277
    %v5458 = vmul.f32 %v5020, %v5309
    %v5459 = vadd.f32 %v5457, %v5458
    %v5460 = vtanh.pop %v5459
    %v5461 = vmul.f32 %v5456, %v5460
    %5463 = vrot.lane.b32.xlu0 %v5461, 32
    %v5464 = vpop.permute.xlu0 %5463
    %v5466 = vsel %vm1744, %v4870, %v5464
    %v5467 = vld [vmem:[%s15] sm:$0xff]
    %v5468 = vld [vmem:[%s15 + $0x8] sm:$0xff]
    %v5469 = vld [vmem:[%s15 + $0x10] sm:$0xff]
    %v5470 = vld [vmem:[%s15 + $0x18] sm:$0xff]
    %v5471 = vld [vmem:[%s15 + $0x20] sm:$0xff]
    %v5472 = vld [vmem:[%s15 + $0x28] sm:$0xff]
    %v5473 = vld [vmem:[%s15 + $0x30] sm:$0xff]
    %v5474 = vld [vmem:[%s15 + $0x38] sm:$0xff]
    %v5475 = vld [vmem:[%s16] sm:$0xff]
    %v5476 = vld [vmem:[%s16 + $0x8] sm:$0xff]
    %v5477 = vld [vmem:[%s16 + $0x10] sm:$0xff]
    %v5478 = vld [vmem:[%s16 + $0x18] sm:$0xff]
    %5479 = vmatprep.subr.mxu0 0.0
    %5480 = vmatpush1.msra.mxu0 %v5475
    %5481 = vmatprep.subr.mxu0 0.0
    %5482 = vmatpush1.msra.mxu0 %v5476
    %5483 = vmatprep.subr.mxu0 0.0
    %5484 = vmatpush1.msra.mxu0 %v5477
    %5485 = vmatprep.subr.mxu0 0.0
    %5486 = vmatpush1.msra.mxu0 %v5478
    %5487 = vmatprep.subr.mxu0 0.0
    %5488 = vmatpush1.msra.mxu0 0.0
    %5489 = vmatprep.subr.mxu0 0.0
    %5490 = vmatpush1.msra.mxu0 0.0
    %5491 = vmatprep.subr.mxu0 0.0
    %5492 = vmatpush1.msra.mxu0 0.0
    %5493 = vmatprep.subr.mxu0 0.0
    %5494 = vmatpush1.msra.mxu0 0.0
    %5495 = vmatprep.subr.mxu0 0.0
    %5496 = vmatpush1.msra.mxu0 0.0
    %5497 = vmatprep.subr.mxu0 0.0
    %5498 = vmatpush1.msra.mxu0 0.0
    %5499 = vmatprep.subr.mxu0 0.0
    %5500 = vmatpush1.msra.mxu0 0.0
    %5501 = vmatprep.subr.mxu0 0.0
    %5502 = vmatpush1.msra.mxu0 0.0
    %5503 = vmatprep.subr.mxu0 0.0
    %5504 = vmatpush1.msra.mxu0 0.0
    %5505 = vmatprep.subr.mxu0 0.0
    %5506 = vmatpush1.msra.mxu0 0.0
    %5507 = vmatprep.subr.mxu0 0.0
    %5508 = vmatpush1.msra.mxu0 0.0
    %5509 = vmatprep.subr.mxu0 0.0
    %5510 = vmatpush1.msra.mxu0 0.0
    %5511 = vmatprep.subr.mxu0 0.0
    %5512 = vmatpush1.msra.mxu0 0.0
    %5513 = vmatprep.subr.mxu0 0.0
    %5514 = vmatpush1.msra.mxu0 0.0
    %5515 = vmatprep.subr.mxu0 0.0
    %5516 = vmatpush1.msra.mxu0 0.0
    %5517 = vmatprep.subr.mxu0 0.0
    %5518 = vmatpush1.msra.mxu0 0.0
    %5519 = vmatprep.subr.mxu0 0.0
    %5520 = vmatpush1.msra.mxu0 0.0
    %5521 = vmatprep.subr.mxu0 0.0
    %5522 = vmatpush1.msra.mxu0 0.0
    %5523 = vmatprep.subr.mxu0 0.0
    %5524 = vmatpush1.msra.mxu0 0.0
    %5525 = vmatprep.subr.mxu0 0.0
    %5526 = vmatpush1.msra.mxu0 0.0
    %5527 = vmatprep.subr.mxu0 0.0
    %5528 = vmatpush1.msra.mxu0 0.0
    %5529 = vmatprep.subr.mxu0 0.0
    %5530 = vmatpush1.msra.mxu0 0.0
    %5531 = vmatprep.subr.mxu0 0.0
    %5532 = vmatpush1.msra.mxu0 0.0
    %5533 = vmatprep.subr.mxu0 0.0
    %5534 = vmatpush1.msra.mxu0 0.0
    %5535 = vmatprep.subr.mxu0 0.0
    %5536 = vmatpush1.msra.mxu0 0.0
    %5537 = vmatprep.subr.mxu0 0.0
    %5538 = vmatpush1.msra.mxu0 0.0
    %5539 = vmatprep.subr.mxu0 0.0
    %5540 = vmatpush1.msra.mxu0 0.0
    %5541 = vmatprep.subr.mxu0 0.0
    %5542 = vmatpush1.msra.mxu0 0.0
    %5543 = vmatprep.mubr.f32.mxu0 0.0
    %5544 = vmatmul.mubr.f32.gmra.mrb[0].mxu0 %v1746
    %v5545 = vpop.f32.mrb[0].mxu0
    %v5546 = vadd.f32 0.0, %v5545
    %v5547 = vpop.f32.mrb[0].mxu0
    %5548 = vdwg.mxu0
    %v5550 = vsel %vm104, %v5466, 0
    %5552 = vmatprep.subr.mxu0 0.0
    %5553 = vmatpush1.msra.mxu0 %v5467
    %5554 = vmatprep.subr.mxu0 0.0
    %5555 = vmatpush1.msra.mxu0 %v5468
    %5556 = vmatprep.subr.mxu0 0.0
    %5557 = vmatpush1.msra.mxu0 %v5469
    %5558 = vmatprep.subr.mxu0 0.0
    %5559 = vmatpush1.msra.mxu0 %v5470
    %5560 = vmatprep.subr.mxu0 0.0
    %5561 = vmatpush1.msra.mxu0 %v5471
    %5562 = vmatprep.subr.mxu0 0.0
    %5563 = vmatpush1.msra.mxu0 %v5472
    %5564 = vmatprep.subr.mxu0 0.0
    %5565 = vmatpush1.msra.mxu0 %v5473
    %5566 = vmatprep.subr.mxu0 0.0
    %5567 = vmatpush1.msra.mxu0 %v5474
    %5568 = vmatprep.subr.mxu0 0.0
    %5569 = vmatpush1.msra.mxu0 0.0
    %5570 = vmatprep.subr.mxu0 0.0
    %5571 = vmatpush1.msra.mxu0 0.0
    %5572 = vmatprep.subr.mxu0 0.0
    %5573 = vmatpush1.msra.mxu0 0.0
    %5574 = vmatprep.subr.mxu0 0.0
    %5575 = vmatpush1.msra.mxu0 0.0
    %5576 = vmatprep.subr.mxu0 0.0
    %5577 = vmatpush1.msra.mxu0 0.0
    %5578 = vmatprep.subr.mxu0 0.0
    %5579 = vmatpush1.msra.mxu0 0.0
    %5580 = vmatprep.subr.mxu0 0.0
    %5581 = vmatpush1.msra.mxu0 0.0
    %5582 = vmatprep.subr.mxu0 0.0
    %5583 = vmatpush1.msra.mxu0 0.0
    %5584 = vmatprep.subr.mxu0 0.0
    %5585 = vmatpush1.msra.mxu0 0.0
    %5586 = vmatprep.subr.mxu0 0.0
    %5587 = vmatpush1.msra.mxu0 0.0
    %5588 = vmatprep.subr.mxu0 0.0
    %5589 = vmatpush1.msra.mxu0 0.0
    %5590 = vmatprep.subr.mxu0 0.0
    %5591 = vmatpush1.msra.mxu0 0.0
    %5592 = vmatprep.subr.mxu0 0.0
    %5593 = vmatpush1.msra.mxu0 0.0
    %5594 = vmatprep.subr.mxu0 0.0
    %5595 = vmatpush1.msra.mxu0 0.0
    %5596 = vmatprep.subr.mxu0 0.0
    %5597 = vmatpush1.msra.mxu0 0.0
    %5598 = vmatprep.subr.mxu0 0.0
    %5599 = vmatpush1.msra.mxu0 0.0
    %5600 = vmatprep.subr.mxu0 0.0
    %5601 = vmatpush1.msra.mxu0 0.0
    %5602 = vmatprep.subr.mxu0 0.0
    %5603 = vmatpush1.msra.mxu0 0.0
    %5604 = vmatprep.subr.mxu0 0.0
    %5605 = vmatpush1.msra.mxu0 0.0
    %5606 = vmatprep.subr.mxu0 0.0
    %5607 = vmatpush1.msra.mxu0 0.0
    %5608 = vmatprep.subr.mxu0 0.0
    %5609 = vmatpush1.msra.mxu0 0.0
    %5610 = vmatprep.subr.mxu0 0.0
    %5611 = vmatpush1.msra.mxu0 0.0
    %5612 = vmatprep.subr.mxu0 0.0
    %5613 = vmatpush1.msra.mxu0 0.0
    %5614 = vmatprep.subr.mxu0 0.0
    %5615 = vmatpush1.msra.mxu0 0.0
    %5616 = vmatprep.mubr.f32.mxu0 0.0
    %5617 = vmatmul.mubr.f32.gmra.mrb[0].mxu0 %v5550
    %v5618 = vpop.f32.mrb[0].mxu0
    %v5619 = vadd.f32 %v5546, %v5618
    %v5620 = vpop.f32.mrb[0].mxu0
    %5621 = vdwg.mxu0
    %v5622 = vld [vmem:[%s17] sm:$0x1]
    %v5623 = vadd.f32 %v5619, %v5622
    %v5624 = vxor.u32 %v5623, 2147483648
    %v5625 = vmul.f32 %v5624, 1.442695
    %v5626 = vpow.pop %v5625
    %v5627 = vadd.f32 %v5626, 1.0
    %v5628 = vrcp.pop %v5627
    %v5629 = vmul.f32 1.0, %v5628
    %s5630 = scalar_lea.vmem %s15, 64
    %v5631 = vld [vmem:[%s5630] sm:$0xff]
    %v5632 = vld [vmem:[%s5630 + $0x8] sm:$0xff]
    %v5633 = vld [vmem:[%s5630 + $0x10] sm:$0xff]
    %v5634 = vld [vmem:[%s5630 + $0x18] sm:$0xff]
    %v5635 = vld [vmem:[%s5630 + $0x20] sm:$0xff]
    %v5636 = vld [vmem:[%s5630 + $0x28] sm:$0xff]
    %v5637 = vld [vmem:[%s5630 + $0x30] sm:$0xff]
    %v5638 = vld [vmem:[%s5630 + $0x38] sm:$0xff]
    %s5639 = scalar_lea.vmem %s16, 32
    %v5640 = vld [vmem:[%s5639] sm:$0xff]
    %v5641 = vld [vmem:[%s5639 + $0x8] sm:$0xff]
    %v5642 = vld [vmem:[%s5639 + $0x10] sm:$0xff]
    %v5643 = vld [vmem:[%s5639 + $0x18] sm:$0xff]
    %5644 = vmatprep.subr.mxu0 0.0
    %5645 = vmatpush1.msra.mxu0 %v5640
    %5646 = vmatprep.subr.mxu0 0.0
    %5647 = vmatpush1.msra.mxu0 %v5641
    %5648 = vmatprep.subr.mxu0 0.0
    %5649 = vmatpush1.msra.mxu0 %v5642
    %5650 = vmatprep.subr.mxu0 0.0
    %5651 = vmatpush1.msra.mxu0 %v5643
    %5652 = vmatprep.subr.mxu0 0.0
    %5653 = vmatpush1.msra.mxu0 0.0
    %5654 = vmatprep.subr.mxu0 0.0
    %5655 = vmatpush1.msra.mxu0 0.0
    %5656 = vmatprep.subr.mxu0 0.0
    %5657 = vmatpush1.msra.mxu0 0.0
    %5658 = vmatprep.subr.mxu0 0.0
    %5659 = vmatpush1.msra.mxu0 0.0
    %5660 = vmatprep.subr.mxu0 0.0
    %5661 = vmatpush1.msra.mxu0 0.0
    %5662 = vmatprep.subr.mxu0 0.0
    %5663 = vmatpush1.msra.mxu0 0.0
    %5664 = vmatprep.subr.mxu0 0.0
    %5665 = vmatpush1.msra.mxu0 0.0
    %5666 = vmatprep.subr.mxu0 0.0
    %5667 = vmatpush1.msra.mxu0 0.0
    %5668 = vmatprep.subr.mxu0 0.0
    %5669 = vmatpush1.msra.mxu0 0.0
    %5670 = vmatprep.subr.mxu0 0.0
    %5671 = vmatpush1.msra.mxu0 0.0
    %5672 = vmatprep.subr.mxu0 0.0
    %5673 = vmatpush1.msra.mxu0 0.0
    %5674 = vmatprep.subr.mxu0 0.0
    %5675 = vmatpush1.msra.mxu0 0.0
    %5676 = vmatprep.subr.mxu0 0.0
    %5677 = vmatpush1.msra.mxu0 0.0
    %5678 = vmatprep.subr.mxu0 0.0
    %5679 = vmatpush1.msra.mxu0 0.0
    %5680 = vmatprep.subr.mxu0 0.0
    %5681 = vmatpush1.msra.mxu0 0.0
    %5682 = vmatprep.subr.mxu0 0.0
    %5683 = vmatpush1.msra.mxu0 0.0
    %5684 = vmatprep.subr.mxu0 0.0
    %5685 = vmatpush1.msra.mxu0 0.0
    %5686 = vmatprep.subr.mxu0 0.0
    %5687 = vmatpush1.msra.mxu0 0.0
    %5688 = vmatprep.subr.mxu0 0.0
    %5689 = vmatpush1.msra.mxu0 0.0
    %5690 = vmatprep.subr.mxu0 0.0
    %5691 = vmatpush1.msra.mxu0 0.0
    %5692 = vmatprep.subr.mxu0 0.0
    %5693 = vmatpush1.msra.mxu0 0.0
    %5694 = vmatprep.subr.mxu0 0.0
    %5695 = vmatpush1.msra.mxu0 0.0
    %5696 = vmatprep.subr.mxu0 0.0
    %5697 = vmatpush1.msra.mxu0 0.0
    %5698 = vmatprep.subr.mxu0 0.0
    %5699 = vmatpush1.msra.mxu0 0.0
    %5700 = vmatprep.subr.mxu0 0.0
    %5701 = vmatpush1.msra.mxu0 0.0
    %5702 = vmatprep.subr.mxu0 0.0
    %5703 = vmatpush1.msra.mxu0 0.0
    %5704 = vmatprep.subr.mxu0 0.0
    %5705 = vmatpush1.msra.mxu0 0.0
    %5706 = vmatprep.subr.mxu0 0.0
    %5707 = vmatpush1.msra.mxu0 0.0
    %5708 = vmatprep.mubr.f32.mxu0 0.0
    %5709 = vmatmul.mubr.f32.gmra.mrb[0].mxu0 %v1746
    %v5710 = vpop.f32.mrb[0].mxu0
    %v5711 = vadd.f32 0.0, %v5710
    %v5712 = vpop.f32.mrb[0].mxu0
    %5713 = vdwg.mxu0
    %5714 = vmatprep.subr.mxu0 0.0
    %5715 = vmatpush1.msra.mxu0 %v5631
    %5716 = vmatprep.subr.mxu0 0.0
    %5717 = vmatpush1.msra.mxu0 %v5632
    %5718 = vmatprep.subr.mxu0 0.0
    %5719 = vmatpush1.msra.mxu0 %v5633
    %5720 = vmatprep.subr.mxu0 0.0
    %5721 = vmatpush1.msra.mxu0 %v5634
    %5722 = vmatprep.subr.mxu0 0.0
    %5723 = vmatpush1.msra.mxu0 %v5635
    %5724 = vmatprep.subr.mxu0 0.0
    %5725 = vmatpush1.msra.mxu0 %v5636
    %5726 = vmatprep.subr.mxu0 0.0
    %5727 = vmatpush1.msra.mxu0 %v5637
    %5728 = vmatprep.subr.mxu0 0.0
    %5729 = vmatpush1.msra.mxu0 %v5638
    %5730 = vmatprep.subr.mxu0 0.0
    %5731 = vmatpush1.msra.mxu0 0.0
    %5732 = vmatprep.subr.mxu0 0.0
    %5733 = vmatpush1.msra.mxu0 0.0
    %5734 = vmatprep.subr.mxu0 0.0
    %5735 = vmatpush1.msra.mxu0 0.0
    %5736 = vmatprep.subr.mxu0 0.0
    %5737 = vmatpush1.msra.mxu0 0.0
    %5738 = vmatprep.subr.mxu0 0.0
    %5739 = vmatpush1.msra.mxu0 0.0
    %5740 = vmatprep.subr.mxu0 0.0
    %5741 = vmatpush1.msra.mxu0 0.0
    %5742 = vmatprep.subr.mxu0 0.0
    %5743 = vmatpush1.msra.mxu0 0.0
    %5744 = vmatprep.subr.mxu0 0.0
    %5745 = vmatpush1.msra.mxu0 0.0
    %5746 = vmatprep.subr.mxu0 0.0
    %5747 = vmatpush1.msra.mxu0 0.0
    %5748 = vmatprep.subr.mxu0 0.0
    %5749 = vmatpush1.msra.mxu0 0.0
    %5750 = vmatprep.subr.mxu0 0.0
    %5751 = vmatpush1.msra.mxu0 0.0
    %5752 = vmatprep.subr.mxu0 0.0
    %5753 = vmatpush1.msra.mxu0 0.0
    %5754 = vmatprep.subr.mxu0 0.0
    %5755 = vmatpush1.msra.mxu0 0.0
    %5756 = vmatprep.subr.mxu0 0.0
    %5757 = vmatpush1.msra.mxu0 0.0
    %5758 = vmatprep.subr.mxu0 0.0
    %5759 = vmatpush1.msra.mxu0 0.0
    %5760 = vmatprep.subr.mxu0 0.0
    %5761 = vmatpush1.msra.mxu0 0.0
    %5762 = vmatprep.subr.mxu0 0.0
    %5763 = vmatpush1.msra.mxu0 0.0
    %5764 = vmatprep.subr.mxu0 0.0
    %5765 = vmatpush1.msra.mxu0 0.0
    %5766 = vmatprep.subr.mxu0 0.0
    %5767 = vmatpush1.msra.mxu0 0.0
    %5768 = vmatprep.subr.mxu0 0.0
    %5769 = vmatpush1.msra.mxu0 0.0
    %5770 = vmatprep.subr.mxu0 0.0
    %5771 = vmatpush1.msra.mxu0 0.0
    %5772 = vmatprep.subr.mxu0 0.0
    %5773 = vmatpush1.msra.mxu0 0.0
    %5774 = vmatprep.subr.mxu0 0.0
    %5775 = vmatpush1.msra.mxu0 0.0
    %5776 = vmatprep.subr.mxu0 0.0
    %5777 = vmatpush1.msra.mxu0 0.0
    %5778 = vmatprep.mubr.f32.mxu0 0.0
    %5779 = vmatmul.mubr.f32.gmra.mrb[0].mxu0 %v5550
    %v5780 = vpop.f32.mrb[0].mxu0
    %v5781 = vadd.f32 %v5711, %v5780
    %v5782 = vpop.f32.mrb[0].mxu0
    %5783 = vdwg.mxu0
    %s5784 = scalar_lea.vmem %s17, 1
    %v5785 = vld [vmem:[%s5784] sm:$0x1]
    %v5786 = vadd.f32 %v5781, %v5785
    %v5787 = vxor.u32 %v5786, 2147483648
    %v5788 = vmul.f32 %v5787, 1.442695
    %v5789 = vpow.pop %v5788
    %v5790 = vadd.f32 %v5789, 1.0
    %v5791 = vrcp.pop %v5790
    %v5792 = vmul.f32 1.0, %v5791
    %s5793 = scalar_lea.vmem %s15, 128
    %v5794 = vld [vmem:[%s5793] sm:$0xff]
    %v5795 = vld [vmem:[%s5793 + $0x8] sm:$0xff]
    %v5796 = vld [vmem:[%s5793 + $0x10] sm:$0xff]
    %v5797 = vld [vmem:[%s5793 + $0x18] sm:$0xff]
    %v5798 = vld [vmem:[%s5793 + $0x20] sm:$0xff]
    %v5799 = vld [vmem:[%s5793 + $0x28] sm:$0xff]
    %v5800 = vld [vmem:[%s5793 + $0x30] sm:$0xff]
    %v5801 = vld [vmem:[%s5793 + $0x38] sm:$0xff]
    %s5802 = scalar_lea.vmem %s16, 64
    %v5803 = vld [vmem:[%s5802] sm:$0xff]
    %v5804 = vld [vmem:[%s5802 + $0x8] sm:$0xff]
    %v5805 = vld [vmem:[%s5802 + $0x10] sm:$0xff]
    %v5806 = vld [vmem:[%s5802 + $0x18] sm:$0xff]
    %5807 = vmatprep.subr.mxu0 0.0
    %5808 = vmatpush1.msra.mxu0 %v5803
    %5809 = vmatprep.subr.mxu0 0.0
    %5810 = vmatpush1.msra.mxu0 %v5804
    %5811 = vmatprep.subr.mxu0 0.0
    %5812 = vmatpush1.msra.mxu0 %v5805
    %5813 = vmatprep.subr.mxu0 0.0
    %5814 = vmatpush1.msra.mxu0 %v5806
    %5815 = vmatprep.subr.mxu0 0.0
    %5816 = vmatpush1.msra.mxu0 0.0
    %5817 = vmatprep.subr.mxu0 0.0
    %5818 = vmatpush1.msra.mxu0 0.0
    %5819 = vmatprep.subr.mxu0 0.0
    %5820 = vmatpush1.msra.mxu0 0.0
    %5821 = vmatprep.subr.mxu0 0.0
    %5822 = vmatpush1.msra.mxu0 0.0
    %5823 = vmatprep.subr.mxu0 0.0
    %5824 = vmatpush1.msra.mxu0 0.0
    %5825 = vmatprep.subr.mxu0 0.0
    %5826 = vmatpush1.msra.mxu0 0.0
    %5827 = vmatprep.subr.mxu0 0.0
    %5828 = vmatpush1.msra.mxu0 0.0
    %5829 = vmatprep.subr.mxu0 0.0
    %5830 = vmatpush1.msra.mxu0 0.0
    %5831 = vmatprep.subr.mxu0 0.0
    %5832 = vmatpush1.msra.mxu0 0.0
    %5833 = vmatprep.subr.mxu0 0.0
    %5834 = vmatpush1.msra.mxu0 0.0
    %5835 = vmatprep.subr.mxu0 0.0
    %5836 = vmatpush1.msra.mxu0 0.0
    %5837 = vmatprep.subr.mxu0 0.0
    %5838 = vmatpush1.msra.mxu0 0.0
    %5839 = vmatprep.subr.mxu0 0.0
    %5840 = vmatpush1.msra.mxu0 0.0
    %5841 = vmatprep.subr.mxu0 0.0
    %5842 = vmatpush1.msra.mxu0 0.0
    %5843 = vmatprep.subr.mxu0 0.0
    %5844 = vmatpush1.msra.mxu0 0.0
    %5845 = vmatprep.subr.mxu0 0.0
    %5846 = vmatpush1.msra.mxu0 0.0
    %5847 = vmatprep.subr.mxu0 0.0
    %5848 = vmatpush1.msra.mxu0 0.0
    %5849 = vmatprep.subr.mxu0 0.0
    %5850 = vmatpush1.msra.mxu0 0.0
    %5851 = vmatprep.subr.mxu0 0.0
    %5852 = vmatpush1.msra.mxu0 0.0
    %5853 = vmatprep.subr.mxu0 0.0
    %5854 = vmatpush1.msra.mxu0 0.0
    %5855 = vmatprep.subr.mxu0 0.0
    %5856 = vmatpush1.msra.mxu0 0.0
    %5857 = vmatprep.subr.mxu0 0.0
    %5858 = vmatpush1.msra.mxu0 0.0
    %5859 = vmatprep.subr.mxu0 0.0
    %5860 = vmatpush1.msra.mxu0 0.0
    %5861 = vmatprep.subr.mxu0 0.0
    %5862 = vmatpush1.msra.mxu0 0.0
    %5863 = vmatprep.subr.mxu0 0.0
    %5864 = vmatpush1.msra.mxu0 0.0
    %5865 = vmatprep.subr.mxu0 0.0
    %5866 = vmatpush1.msra.mxu0 0.0
    %5867 = vmatprep.subr.mxu0 0.0
    %5868 = vmatpush1.msra.mxu0 0.0
    %5869 = vmatprep.subr.mxu0 0.0
    %5870 = vmatpush1.msra.mxu0 0.0
    %5871 = vmatprep.mubr.f32.mxu0 0.0
    %5872 = vmatmul.mubr.f32.gmra.mrb[0].mxu0 %v1746
    %v5873 = vpop.f32.mrb[0].mxu0
    %v5874 = vadd.f32 0.0, %v5873
    %v5875 = vpop.f32.mrb[0].mxu0
    %5876 = vdwg.mxu0
    %5877 = vmatprep.subr.mxu0 0.0
    %5878 = vmatpush1.msra.mxu0 %v5794
    %5879 = vmatprep.subr.mxu0 0.0
    %5880 = vmatpush1.msra.mxu0 %v5795
    %5881 = vmatprep.subr.mxu0 0.0
    %5882 = vmatpush1.msra.mxu0 %v5796
    %5883 = vmatprep.subr.mxu0 0.0
    %5884 = vmatpush1.msra.mxu0 %v5797
    %5885 = vmatprep.subr.mxu0 0.0
    %5886 = vmatpush1.msra.mxu0 %v5798
    %5887 = vmatprep.subr.mxu0 0.0
    %5888 = vmatpush1.msra.mxu0 %v5799
    %5889 = vmatprep.subr.mxu0 0.0
    %5890 = vmatpush1.msra.mxu0 %v5800
    %5891 = vmatprep.subr.mxu0 0.0
    %5892 = vmatpush1.msra.mxu0 %v5801
    %5893 = vmatprep.subr.mxu0 0.0
    %5894 = vmatpush1.msra.mxu0 0.0
    %5895 = vmatprep.subr.mxu0 0.0
    %5896 = vmatpush1.msra.mxu0 0.0
    %5897 = vmatprep.subr.mxu0 0.0
    %5898 = vmatpush1.msra.mxu0 0.0
    %5899 = vmatprep.subr.mxu0 0.0
    %5900 = vmatpush1.msra.mxu0 0.0
    %5901 = vmatprep.subr.mxu0 0.0
    %5902 = vmatpush1.msra.mxu0 0.0
    %5903 = vmatprep.subr.mxu0 0.0
    %5904 = vmatpush1.msra.mxu0 0.0
    %5905 = vmatprep.subr.mxu0 0.0
    %5906 = vmatpush1.msra.mxu0 0.0
    %5907 = vmatprep.subr.mxu0 0.0
    %5908 = vmatpush1.msra.mxu0 0.0
    %5909 = vmatprep.subr.mxu0 0.0
    %5910 = vmatpush1.msra.mxu0 0.0
    %5911 = vmatprep.subr.mxu0 0.0
    %5912 = vmatpush1.msra.mxu0 0.0
    %5913 = vmatprep.subr.mxu0 0.0
    %5914 = vmatpush1.msra.mxu0 0.0
    %5915 = vmatprep.subr.mxu0 0.0
    %5916 = vmatpush1.msra.mxu0 0.0
    %5917 = vmatprep.subr.mxu0 0.0
    %5918 = vmatpush1.msra.mxu0 0.0
    %5919 = vmatprep.subr.mxu0 0.0
    %5920 = vmatpush1.msra.mxu0 0.0
    %5921 = vmatprep.subr.mxu0 0.0
    %5922 = vmatpush1.msra.mxu0 0.0
    %5923 = vmatprep.subr.mxu0 0.0
    %5924 = vmatpush1.msra.mxu0 0.0
    %5925 = vmatprep.subr.mxu0 0.0
    %5926 = vmatpush1.msra.mxu0 0.0
    %5927 = vmatprep.subr.mxu0 0.0
    %5928 = vmatpush1.msra.mxu0 0.0
    %5929 = vmatprep.subr.mxu0 0.0
    %5930 = vmatpush1.msra.mxu0 0.0
    %5931 = vmatprep.subr.mxu0 0.0
    %5932 = vmatpush1.msra.mxu0 0.0
    %5933 = vmatprep.subr.mxu0 0.0
    %5934 = vmatpush1.msra.mxu0 0.0
    %5935 = vmatprep.subr.mxu0 0.0
    %5936 = vmatpush1.msra.mxu0 0.0
    %5937 = vmatprep.subr.mxu0 0.0
    %5938 = vmatpush1.msra.mxu0 0.0
    %5939 = vmatprep.subr.mxu0 0.0
    %5940 = vmatpush1.msra.mxu0 0.0
    %5941 = vmatprep.mubr.f32.mxu0 0.0
    %5942 = vmatmul.mubr.f32.gmra.mrb[0].mxu0 %v5550
    %v5943 = vpop.f32.mrb[0].mxu0
    %v5944 = vadd.f32 %v5874, %v5943
    %v5945 = vpop.f32.mrb[0].mxu0
    %5946 = vdwg.mxu0
    %s5947 = scalar_lea.vmem %s17, 2
    %v5948 = vld [vmem:[%s5947] sm:$0x1]
    %v5949 = vadd.f32 %v5944, %v5948
    %v5950 = vtanh.pop %v5949
    %s5951 = scalar_lea.vmem %s15, 192
    %v5952 = vld [vmem:[%s5951] sm:$0xff]
    %v5953 = vld [vmem:[%s5951 + $0x8] sm:$0xff]
    %v5954 = vld [vmem:[%s5951 + $0x10] sm:$0xff]
    %v5955 = vld [vmem:[%s5951 + $0x18] sm:$0xff]
    %v5956 = vld [vmem:[%s5951 + $0x20] sm:$0xff]
    %v5957 = vld [vmem:[%s5951 + $0x28] sm:$0xff]
    %v5958 = vld [vmem:[%s5951 + $0x30] sm:$0xff]
    %v5959 = vld [vmem:[%s5951 + $0x38] sm:$0xff]
    %s5960 = scalar_lea.vmem %s16, 96
    %v5961 = vld [vmem:[%s5960] sm:$0xff]
    %v5962 = vld [vmem:[%s5960 + $0x8] sm:$0xff]
    %v5963 = vld [vmem:[%s5960 + $0x10] sm:$0xff]
    %v5964 = vld [vmem:[%s5960 + $0x18] sm:$0xff]
    %5965 = vmatprep.subr.mxu0 0.0
    %5966 = vmatpush1.msra.mxu0 %v5961
    %5967 = vmatprep.subr.mxu0 0.0
    %5968 = vmatpush1.msra.mxu0 %v5962
    %5969 = vmatprep.subr.mxu0 0.0
    %5970 = vmatpush1.msra.mxu0 %v5963
    %5971 = vmatprep.subr.mxu0 0.0
    %5972 = vmatpush1.msra.mxu0 %v5964
    %5973 = vmatprep.subr.mxu0 0.0
    %5974 = vmatpush1.msra.mxu0 0.0
    %5975 = vmatprep.subr.mxu0 0.0
    %5976 = vmatpush1.msra.mxu0 0.0
    %5977 = vmatprep.subr.mxu0 0.0
    %5978 = vmatpush1.msra.mxu0 0.0
    %5979 = vmatprep.subr.mxu0 0.0
    %5980 = vmatpush1.msra.mxu0 0.0
    %5981 = vmatprep.subr.mxu0 0.0
    %5982 = vmatpush1.msra.mxu0 0.0
    %5983 = vmatprep.subr.mxu0 0.0
    %5984 = vmatpush1.msra.mxu0 0.0
    %5985 = vmatprep.subr.mxu0 0.0
    %5986 = vmatpush1.msra.mxu0 0.0
    %5987 = vmatprep.subr.mxu0 0.0
    %5988 = vmatpush1.msra.mxu0 0.0
    %5989 = vmatprep.subr.mxu0 0.0
    %5990 = vmatpush1.msra.mxu0 0.0
    %5991 = vmatprep.subr.mxu0 0.0
    %5992 = vmatpush1.msra.mxu0 0.0
    %5993 = vmatprep.subr.mxu0 0.0
    %5994 = vmatpush1.msra.mxu0 0.0
    %5995 = vmatprep.subr.mxu0 0.0
    %5996 = vmatpush1.msra.mxu0 0.0
    %5997 = vmatprep.subr.mxu0 0.0
    %5998 = vmatpush1.msra.mxu0 0.0
    %5999 = vmatprep.subr.mxu0 0.0
    %6000 = vmatpush1.msra.mxu0 0.0
    %6001 = vmatprep.subr.mxu0 0.0
    %6002 = vmatpush1.msra.mxu0 0.0
    %6003 = vmatprep.subr.mxu0 0.0
    %6004 = vmatpush1.msra.mxu0 0.0
    %6005 = vmatprep.subr.mxu0 0.0
    %6006 = vmatpush1.msra.mxu0 0.0
    %6007 = vmatprep.subr.mxu0 0.0
    %6008 = vmatpush1.msra.mxu0 0.0
    %6009 = vmatprep.subr.mxu0 0.0
    %6010 = vmatpush1.msra.mxu0 0.0
    %6011 = vmatprep.subr.mxu0 0.0
    %6012 = vmatpush1.msra.mxu0 0.0
    %6013 = vmatprep.subr.mxu0 0.0
    %6014 = vmatpush1.msra.mxu0 0.0
    %6015 = vmatprep.subr.mxu0 0.0
    %6016 = vmatpush1.msra.mxu0 0.0
    %6017 = vmatprep.subr.mxu0 0.0
    %6018 = vmatpush1.msra.mxu0 0.0
    %6019 = vmatprep.subr.mxu0 0.0
    %6020 = vmatpush1.msra.mxu0 0.0
    %6021 = vmatprep.subr.mxu0 0.0
    %6022 = vmatpush1.msra.mxu0 0.0
    %6023 = vmatprep.subr.mxu0 0.0
    %6024 = vmatpush1.msra.mxu0 0.0
    %6025 = vmatprep.subr.mxu0 0.0
    %6026 = vmatpush1.msra.mxu0 0.0
    %6027 = vmatprep.subr.mxu0 0.0
    %6028 = vmatpush1.msra.mxu0 0.0
    %6029 = vmatprep.mubr.f32.mxu0 0.0
    %6030 = vmatmul.mubr.f32.gmra.mrb[0].mxu0 %v1746
    %v6031 = vpop.f32.mrb[0].mxu0
    %v6032 = vadd.f32 0.0, %v6031
    %v6033 = vpop.f32.mrb[0].mxu0
    %6034 = vdwg.mxu0
    %6035 = vmatprep.subr.mxu0 0.0
    %6036 = vmatpush1.msra.mxu0 %v5952
    %6037 = vmatprep.subr.mxu0 0.0
    %6038 = vmatpush1.msra.mxu0 %v5953
    %6039 = vmatprep.subr.mxu0 0.0
    %6040 = vmatpush1.msra.mxu0 %v5954
    %6041 = vmatprep.subr.mxu0 0.0
    %6042 = vmatpush1.msra.mxu0 %v5955
    %6043 = vmatprep.subr.mxu0 0.0
    %6044 = vmatpush1.msra.mxu0 %v5956
    %6045 = vmatprep.subr.mxu0 0.0
    %6046 = vmatpush1.msra.mxu0 %v5957
    %6047 = vmatprep.subr.mxu0 0.0
    %6048 = vmatpush1.msra.mxu0 %v5958
    %6049 = vmatprep.subr.mxu0 0.0
    %6050 = vmatpush1.msra.mxu0 %v5959
    %6051 = vmatprep.subr.mxu0 0.0
    %6052 = vmatpush1.msra.mxu0 0.0
    %6053 = vmatprep.subr.mxu0 0.0
    %6054 = vmatpush1.msra.mxu0 0.0
    %6055 = vmatprep.subr.mxu0 0.0
    %6056 = vmatpush1.msra.mxu0 0.0
    %6057 = vmatprep.subr.mxu0 0.0
    %6058 = vmatpush1.msra.mxu0 0.0
    %6059 = vmatprep.subr.mxu0 0.0
    %6060 = vmatpush1.msra.mxu0 0.0
    %6061 = vmatprep.subr.mxu0 0.0
    %6062 = vmatpush1.msra.mxu0 0.0
    %6063 = vmatprep.subr.mxu0 0.0
    %6064 = vmatpush1.msra.mxu0 0.0
    %6065 = vmatprep.subr.mxu0 0.0
    %6066 = vmatpush1.msra.mxu0 0.0
    %6067 = vmatprep.subr.mxu0 0.0
    %6068 = vmatpush1.msra.mxu0 0.0
    %6069 = vmatprep.subr.mxu0 0.0
    %6070 = vmatpush1.msra.mxu0 0.0
    %6071 = vmatprep.subr.mxu0 0.0
    %6072 = vmatpush1.msra.mxu0 0.0
    %6073 = vmatprep.subr.mxu0 0.0
    %6074 = vmatpush1.msra.mxu0 0.0
    %6075 = vmatprep.subr.mxu0 0.0
    %6076 = vmatpush1.msra.mxu0 0.0
    %6077 = vmatprep.subr.mxu0 0.0
    %6078 = vmatpush1.msra.mxu0 0.0
    %6079 = vmatprep.subr.mxu0 0.0
    %6080 = vmatpush1.msra.mxu0 0.0
    %6081 = vmatprep.subr.mxu0 0.0
    %6082 = vmatpush1.msra.mxu0 0.0
    %6083 = vmatprep.subr.mxu0 0.0
    %6084 = vmatpush1.msra.mxu0 0.0
    %6085 = vmatprep.subr.mxu0 0.0
    %6086 = vmatpush1.msra.mxu0 0.0
    %6087 = vmatprep.subr.mxu0 0.0
    %6088 = vmatpush1.msra.mxu0 0.0
    %6089 = vmatprep.subr.mxu0 0.0
    %6090 = vmatpush1.msra.mxu0 0.0
    %6091 = vmatprep.subr.mxu0 0.0
    %6092 = vmatpush1.msra.mxu0 0.0
    %6093 = vmatprep.subr.mxu0 0.0
    %6094 = vmatpush1.msra.mxu0 0.0
    %6095 = vmatprep.subr.mxu0 0.0
    %6096 = vmatpush1.msra.mxu0 0.0
    %6097 = vmatprep.subr.mxu0 0.0
    %6098 = vmatpush1.msra.mxu0 0.0
    %6099 = vmatprep.mubr.f32.mxu0 0.0
    %6100 = vmatmul.mubr.f32.gmra.mrb[0].mxu0 %v5550
    %v6101 = vpop.f32.mrb[0].mxu0
    %v6102 = vadd.f32 %v6032, %v6101
    %v6103 = vpop.f32.mrb[0].mxu0
    %6104 = vdwg.mxu0
    %s6105 = scalar_lea.vmem %s17, 3
    %v6106 = vld [vmem:[%s6105] sm:$0x1]
    %v6107 = vadd.f32 %v6102, %v6106
    %v6108 = vxor.u32 %v6107, 2147483648
    %v6109 = vmul.f32 %v6108, 1.442695
    %v6110 = vpow.pop %v6109
    %v6111 = vadd.f32 %v6110, 1.0
    %v6112 = vrcp.pop %v6111
    %v6113 = vmul.f32 1.0, %v6112
    %v6114 = vmul.f32 %v5792, 0.0
    %v6115 = vmul.f32 %v5629, %v5950
    %v6116 = vadd.f32 %v6114, %v6115
    %v6117 = vtanh.pop %v6116
    %v6118 = vmul.f32 %v6113, %v6117
    %v6120 = vsel %vm1744, %v6118, 0
    %6122 = vmatprep.subr.mxu0 0.0
    %6123 = vmatpush1.msra.mxu0 %v5475
    %6124 = vmatprep.subr.mxu0 0.0
    %6125 = vmatpush1.msra.mxu0 %v5476
    %6126 = vmatprep.subr.mxu0 0.0
    %6127 = vmatpush1.msra.mxu0 %v5477
    %6128 = vmatprep.subr.mxu0 0.0
    %6129 = vmatpush1.msra.mxu0 %v5478
    %6130 = vmatprep.subr.mxu0 0.0
    %6131 = vmatpush1.msra.mxu0 0.0
    %6132 = vmatprep.subr.mxu0 0.0
    %6133 = vmatpush1.msra.mxu0 0.0
    %6134 = vmatprep.subr.mxu0 0.0
    %6135 = vmatpush1.msra.mxu0 0.0
    %6136 = vmatprep.subr.mxu0 0.0
    %6137 = vmatpush1.msra.mxu0 0.0
    %6138 = vmatprep.subr.mxu0 0.0
    %6139 = vmatpush1.msra.mxu0 0.0
    %6140 = vmatprep.subr.mxu0 0.0
    %6141 = vmatpush1.msra.mxu0 0.0
    %6142 = vmatprep.subr.mxu0 0.0
    %6143 = vmatpush1.msra.mxu0 0.0
    %6144 = vmatprep.subr.mxu0 0.0
    %6145 = vmatpush1.msra.mxu0 0.0
    %6146 = vmatprep.subr.mxu0 0.0
    %6147 = vmatpush1.msra.mxu0 0.0
    %6148 = vmatprep.subr.mxu0 0.0
    %6149 = vmatpush1.msra.mxu0 0.0
    %6150 = vmatprep.subr.mxu0 0.0
    %6151 = vmatpush1.msra.mxu0 0.0
    %6152 = vmatprep.subr.mxu0 0.0
    %6153 = vmatpush1.msra.mxu0 0.0
    %6154 = vmatprep.subr.mxu0 0.0
    %6155 = vmatpush1.msra.mxu0 0.0
    %6156 = vmatprep.subr.mxu0 0.0
    %6157 = vmatpush1.msra.mxu0 0.0
    %6158 = vmatprep.subr.mxu0 0.0
    %6159 = vmatpush1.msra.mxu0 0.0
    %6160 = vmatprep.subr.mxu0 0.0
    %6161 = vmatpush1.msra.mxu0 0.0
    %6162 = vmatprep.subr.mxu0 0.0
    %6163 = vmatpush1.msra.mxu0 0.0
    %6164 = vmatprep.subr.mxu0 0.0
    %6165 = vmatpush1.msra.mxu0 0.0
    %6166 = vmatprep.subr.mxu0 0.0
    %6167 = vmatpush1.msra.mxu0 0.0
    %6168 = vmatprep.subr.mxu0 0.0
    %6169 = vmatpush1.msra.mxu0 0.0
    %6170 = vmatprep.subr.mxu0 0.0
    %6171 = vmatpush1.msra.mxu0 0.0
    %6172 = vmatprep.subr.mxu0 0.0
    %6173 = vmatpush1.msra.mxu0 0.0
    %6174 = vmatprep.subr.mxu0 0.0
    %6175 = vmatpush1.msra.mxu0 0.0
    %6176 = vmatprep.subr.mxu0 0.0
    %6177 = vmatpush1.msra.mxu0 0.0
    %6178 = vmatprep.subr.mxu0 0.0
    %6179 = vmatpush1.msra.mxu0 0.0
    %6180 = vmatprep.subr.mxu0 0.0
    %6181 = vmatpush1.msra.mxu0 0.0
    %6182 = vmatprep.subr.mxu0 0.0
    %6183 = vmatpush1.msra.mxu0 0.0
    %6184 = vmatprep.subr.mxu0 0.0
    %6185 = vmatpush1.msra.mxu0 0.0
    %6186 = vmatprep.mubr.f32.mxu0 0.0
    %6187 = vmatmul.mubr.f32.gmra.mrb[0].mxu0 %v6120
    %v6188 = vpop.f32.mrb[0].mxu0
    %v6189 = vadd.f32 0.0, %v6188
    %v6190 = vpop.f32.mrb[0].mxu0
    %6191 = vdwg.mxu0
    %v6192 = vrot.slane %v5466, 1
    %v6193 = vsel %vm104, %v6192, 0
    %6195 = vmatprep.subr.mxu0 0.0
    %6196 = vmatpush1.msra.mxu0 %v5467
    %6197 = vmatprep.subr.mxu0 0.0
    %6198 = vmatpush1.msra.mxu0 %v5468
    %6199 = vmatprep.subr.mxu0 0.0
    %6200 = vmatpush1.msra.mxu0 %v5469
    %6201 = vmatprep.subr.mxu0 0.0
    %6202 = vmatpush1.msra.mxu0 %v5470
    %6203 = vmatprep.subr.mxu0 0.0
    %6204 = vmatpush1.msra.mxu0 %v5471
    %6205 = vmatprep.subr.mxu0 0.0
    %6206 = vmatpush1.msra.mxu0 %v5472
    %6207 = vmatprep.subr.mxu0 0.0
    %6208 = vmatpush1.msra.mxu0 %v5473
    %6209 = vmatprep.subr.mxu0 0.0
    %6210 = vmatpush1.msra.mxu0 %v5474
    %6211 = vmatprep.subr.mxu0 0.0
    %6212 = vmatpush1.msra.mxu0 0.0
    %6213 = vmatprep.subr.mxu0 0.0
    %6214 = vmatpush1.msra.mxu0 0.0
    %6215 = vmatprep.subr.mxu0 0.0
    %6216 = vmatpush1.msra.mxu0 0.0
    %6217 = vmatprep.subr.mxu0 0.0
    %6218 = vmatpush1.msra.mxu0 0.0
    %6219 = vmatprep.subr.mxu0 0.0
    %6220 = vmatpush1.msra.mxu0 0.0
    %6221 = vmatprep.subr.mxu0 0.0
    %6222 = vmatpush1.msra.mxu0 0.0
    %6223 = vmatprep.subr.mxu0 0.0
    %6224 = vmatpush1.msra.mxu0 0.0
    %6225 = vmatprep.subr.mxu0 0.0
    %6226 = vmatpush1.msra.mxu0 0.0
    %6227 = vmatprep.subr.mxu0 0.0
    %6228 = vmatpush1.msra.mxu0 0.0
    %6229 = vmatprep.subr.mxu0 0.0
    %6230 = vmatpush1.msra.mxu0 0.0
    %6231 = vmatprep.subr.mxu0 0.0
    %6232 = vmatpush1.msra.mxu0 0.0
    %6233 = vmatprep.subr.mxu0 0.0
    %6234 = vmatpush1.msra.mxu0 0.0
    %6235 = vmatprep.subr.mxu0 0.0
    %6236 = vmatpush1.msra.mxu0 0.0
    %6237 = vmatprep.subr.mxu0 0.0
    %6238 = vmatpush1.msra.mxu0 0.0
    %6239 = vmatprep.subr.mxu0 0.0
    %6240 = vmatpush1.msra.mxu0 0.0
    %6241 = vmatprep.subr.mxu0 0.0
    %6242 = vmatpush1.msra.mxu0 0.0
    %6243 = vmatprep.subr.mxu0 0.0
    %6244 = vmatpush1.msra.mxu0 0.0
    %6245 = vmatprep.subr.mxu0 0.0
    %6246 = vmatpush1.msra.mxu0 0.0
    %6247 = vmatprep.subr.mxu0 0.0
    %6248 = vmatpush1.msra.mxu0 0.0
    %6249 = vmatprep.subr.mxu0 0.0
    %6250 = vmatpush1.msra.mxu0 0.0
    %6251 = vmatprep.subr.mxu0 0.0
    %6252 = vmatpush1.msra.mxu0 0.0
    %6253 = vmatprep.subr.mxu0 0.0
    %6254 = vmatpush1.msra.mxu0 0.0
    %6255 = vmatprep.subr.mxu0 0.0
    %6256 = vmatpush1.msra.mxu0 0.0
    %6257 = vmatprep.subr.mxu0 0.0
    %6258 = vmatpush1.msra.mxu0 0.0
    %6259 = vmatprep.mubr.f32.mxu0 0.0
    %6260 = vmatmul.mubr.f32.gmra.mrb[0].mxu0 %v6193
    %v6261 = vpop.f32.mrb[0].mxu0
    %v6262 = vadd.f32 %v6189, %v6261
    %v6263 = vpop.f32.mrb[0].mxu0
    %6264 = vdwg.mxu0
    %v6265 = vadd.f32 %v6262, %v5622
    %v6266 = vxor.u32 %v6265, 2147483648
    %v6267 = vmul.f32 %v6266, 1.442695
    %v6268 = vpow.pop %v6267
    %v6269 = vadd.f32 %v6268, 1.0
    %v6270 = vrcp.pop %v6269
    %v6271 = vmul.f32 1.0, %v6270
    %6272 = vmatprep.subr.mxu0 0.0
    %6273 = vmatpush1.msra.mxu0 %v5640
    %6274 = vmatprep.subr.mxu0 0.0
    %6275 = vmatpush1.msra.mxu0 %v5641
    %6276 = vmatprep.subr.mxu0 0.0
    %6277 = vmatpush1.msra.mxu0 %v5642
    %6278 = vmatprep.subr.mxu0 0.0
    %6279 = vmatpush1.msra.mxu0 %v5643
    %6280 = vmatprep.subr.mxu0 0.0
    %6281 = vmatpush1.msra.mxu0 0.0
    %6282 = vmatprep.subr.mxu0 0.0
    %6283 = vmatpush1.msra.mxu0 0.0
    %6284 = vmatprep.subr.mxu0 0.0
    %6285 = vmatpush1.msra.mxu0 0.0
    %6286 = vmatprep.subr.mxu0 0.0
    %6287 = vmatpush1.msra.mxu0 0.0
    %6288 = vmatprep.subr.mxu0 0.0
    %6289 = vmatpush1.msra.mxu0 0.0
    %6290 = vmatprep.subr.mxu0 0.0
    %6291 = vmatpush1.msra.mxu0 0.0
    %6292 = vmatprep.subr.mxu0 0.0
    %6293 = vmatpush1.msra.mxu0 0.0
    %6294 = vmatprep.subr.mxu0 0.0
    %6295 = vmatpush1.msra.mxu0 0.0
    %6296 = vmatprep.subr.mxu0 0.0
    %6297 = vmatpush1.msra.mxu0 0.0
    %6298 = vmatprep.subr.mxu0 0.0
    %6299 = vmatpush1.msra.mxu0 0.0
    %6300 = vmatprep.subr.mxu0 0.0
    %6301 = vmatpush1.msra.mxu0 0.0
    %6302 = vmatprep.subr.mxu0 0.0
    %6303 = vmatpush1.msra.mxu0 0.0
    %6304 = vmatprep.subr.mxu0 0.0
    %6305 = vmatpush1.msra.mxu0 0.0
    %6306 = vmatprep.subr.mxu0 0.0
    %6307 = vmatpush1.msra.mxu0 0.0
    %6308 = vmatprep.subr.mxu0 0.0
    %6309 = vmatpush1.msra.mxu0 0.0
    %6310 = vmatprep.subr.mxu0 0.0
    %6311 = vmatpush1.msra.mxu0 0.0
    %6312 = vmatprep.subr.mxu0 0.0
    %6313 = vmatpush1.msra.mxu0 0.0
    %6314 = vmatprep.subr.mxu0 0.0
    %6315 = vmatpush1.msra.mxu0 0.0
    %6316 = vmatprep.subr.mxu0 0.0
    %6317 = vmatpush1.msra.mxu0 0.0
    %6318 = vmatprep.subr.mxu0 0.0
    %6319 = vmatpush1.msra.mxu0 0.0
    %6320 = vmatprep.subr.mxu0 0.0
    %6321 = vmatpush1.msra.mxu0 0.0
    %6322 = vmatprep.subr.mxu0 0.0
    %6323 = vmatpush1.msra.mxu0 0.0
    %6324 = vmatprep.subr.mxu0 0.0
    %6325 = vmatpush1.msra.mxu0 0.0
    %6326 = vmatprep.subr.mxu0 0.0
    %6327 = vmatpush1.msra.mxu0 0.0
    %6328 = vmatprep.subr.mxu0 0.0
    %6329 = vmatpush1.msra.mxu0 0.0
    %6330 = vmatprep.subr.mxu0 0.0
    %6331 = vmatpush1.msra.mxu0 0.0
    %6332 = vmatprep.subr.mxu0 0.0
    %6333 = vmatpush1.msra.mxu0 0.0
    %6334 = vmatprep.subr.mxu0 0.0
    %6335 = vmatpush1.msra.mxu0 0.0
    %6336 = vmatprep.mubr.f32.mxu0 0.0
    %6337 = vmatmul.mubr.f32.gmra.mrb[0].mxu0 %v6120
    %v6338 = vpop.f32.mrb[0].mxu0
    %v6339 = vadd.f32 0.0, %v6338
    %v6340 = vpop.f32.mrb[0].mxu0
    %6341 = vdwg.mxu0
    %6342 = vmatprep.subr.mxu0 0.0
    %6343 = vmatpush1.msra.mxu0 %v5631
    %6344 = vmatprep.subr.mxu0 0.0
    %6345 = vmatpush1.msra.mxu0 %v5632
    %6346 = vmatprep.subr.mxu0 0.0
    %6347 = vmatpush1.msra.mxu0 %v5633
    %6348 = vmatprep.subr.mxu0 0.0
    %6349 = vmatpush1.msra.mxu0 %v5634
    %6350 = vmatprep.subr.mxu0 0.0
    %6351 = vmatpush1.msra.mxu0 %v5635
    %6352 = vmatprep.subr.mxu0 0.0
    %6353 = vmatpush1.msra.mxu0 %v5636
    %6354 = vmatprep.subr.mxu0 0.0
    %6355 = vmatpush1.msra.mxu0 %v5637
    %6356 = vmatprep.subr.mxu0 0.0
    %6357 = vmatpush1.msra.mxu0 %v5638
    %6358 = vmatprep.subr.mxu0 0.0
    %6359 = vmatpush1.msra.mxu0 0.0
    %6360 = vmatprep.subr.mxu0 0.0
    %6361 = vmatpush1.msra.mxu0 0.0
    %6362 = vmatprep.subr.mxu0 0.0
    %6363 = vmatpush1.msra.mxu0 0.0
    %6364 = vmatprep.subr.mxu0 0.0
    %6365 = vmatpush1.msra.mxu0 0.0
    %6366 = vmatprep.subr.mxu0 0.0
    %6367 = vmatpush1.msra.mxu0 0.0
    %6368 = vmatprep.subr.mxu0 0.0
    %6369 = vmatpush1.msra.mxu0 0.0
    %6370 = vmatprep.subr.mxu0 0.0
    %6371 = vmatpush1.msra.mxu0 0.0
    %6372 = vmatprep.subr.mxu0 0.0
    %6373 = vmatpush1.msra.mxu0 0.0
    %6374 = vmatprep.subr.mxu0 0.0
    %6375 = vmatpush1.msra.mxu0 0.0
    %6376 = vmatprep.subr.mxu0 0.0
    %6377 = vmatpush1.msra.mxu0 0.0
    %6378 = vmatprep.subr.mxu0 0.0
    %6379 = vmatpush1.msra.mxu0 0.0
    %6380 = vmatprep.subr.mxu0 0.0
    %6381 = vmatpush1.msra.mxu0 0.0
    %6382 = vmatprep.subr.mxu0 0.0
    %6383 = vmatpush1.msra.mxu0 0.0
    %6384 = vmatprep.subr.mxu0 0.0
    %6385 = vmatpush1.msra.mxu0 0.0
    %6386 = vmatprep.subr.mxu0 0.0
    %6387 = vmatpush1.msra.mxu0 0.0
    %6388 = vmatprep.subr.mxu0 0.0
    %6389 = vmatpush1.msra.mxu0 0.0
    %6390 = vmatprep.subr.mxu0 0.0
    %6391 = vmatpush1.msra.mxu0 0.0
    %6392 = vmatprep.subr.mxu0 0.0
    %6393 = vmatpush1.msra.mxu0 0.0
    %6394 = vmatprep.subr.mxu0 0.0
    %6395 = vmatpush1.msra.mxu0 0.0
    %6396 = vmatprep.subr.mxu0 0.0
    %6397 = vmatpush1.msra.mxu0 0.0
    %6398 = vmatprep.subr.mxu0 0.0
    %6399 = vmatpush1.msra.mxu0 0.0
    %6400 = vmatprep.subr.mxu0 0.0
    %6401 = vmatpush1.msra.mxu0 0.0
    %6402 = vmatprep.subr.mxu0 0.0
    %6403 = vmatpush1.msra.mxu0 0.0
    %6404 = vmatprep.subr.mxu0 0.0
    %6405 = vmatpush1.msra.mxu0 0.0
    %6406 = vmatprep.mubr.f32.mxu0 0.0
    %6407 = vmatmul.mubr.f32.gmra.mrb[0].mxu0 %v6193
    %v6408 = vpop.f32.mrb[0].mxu0
    %v6409 = vadd.f32 %v6339, %v6408
    %v6410 = vpop.f32.mrb[0].mxu0
    %6411 = vdwg.mxu0
    %v6412 = vadd.f32 %v6409, %v5785
    %v6413 = vxor.u32 %v6412, 2147483648
    %v6414 = vmul.f32 %v6413, 1.442695
    %v6415 = vpow.pop %v6414
    %v6416 = vadd.f32 %v6415, 1.0
    %v6417 = vrcp.pop %v6416
    %v6418 = vmul.f32 1.0, %v6417
    %6419 = vmatprep.subr.mxu0 0.0
    %6420 = vmatpush1.msra.mxu0 %v5803
    %6421 = vmatprep.subr.mxu0 0.0
    %6422 = vmatpush1.msra.mxu0 %v5804
    %6423 = vmatprep.subr.mxu0 0.0
    %6424 = vmatpush1.msra.mxu0 %v5805
    %6425 = vmatprep.subr.mxu0 0.0
    %6426 = vmatpush1.msra.mxu0 %v5806
    %6427 = vmatprep.subr.mxu0 0.0
    %6428 = vmatpush1.msra.mxu0 0.0
    %6429 = vmatprep.subr.mxu0 0.0
    %6430 = vmatpush1.msra.mxu0 0.0
    %6431 = vmatprep.subr.mxu0 0.0
    %6432 = vmatpush1.msra.mxu0 0.0
    %6433 = vmatprep.subr.mxu0 0.0
    %6434 = vmatpush1.msra.mxu0 0.0
    %6435 = vmatprep.subr.mxu0 0.0
    %6436 = vmatpush1.msra.mxu0 0.0
    %6437 = vmatprep.subr.mxu0 0.0
    %6438 = vmatpush1.msra.mxu0 0.0
    %6439 = vmatprep.subr.mxu0 0.0
    %6440 = vmatpush1.msra.mxu0 0.0
    %6441 = vmatprep.subr.mxu0 0.0
    %6442 = vmatpush1.msra.mxu0 0.0
    %6443 = vmatprep.subr.mxu0 0.0
    %6444 = vmatpush1.msra.mxu0 0.0
    %6445 = vmatprep.subr.mxu0 0.0
    %6446 = vmatpush1.msra.mxu0 0.0
    %6447 = vmatprep.subr.mxu0 0.0
    %6448 = vmatpush1.msra.mxu0 0.0
    %6449 = vmatprep.subr.mxu0 0.0
    %6450 = vmatpush1.msra.mxu0 0.0
    %6451 = vmatprep.subr.mxu0 0.0
    %6452 = vmatpush1.msra.mxu0 0.0
    %6453 = vmatprep.subr.mxu0 0.0
    %6454 = vmatpush1.msra.mxu0 0.0
    %6455 = vmatprep.subr.mxu0 0.0
    %6456 = vmatpush1.msra.mxu0 0.0
    %6457 = vmatprep.subr.mxu0 0.0
    %6458 = vmatpush1.msra.mxu0 0.0
    %6459 = vmatprep.subr.mxu0 0.0
    %6460 = vmatpush1.msra.mxu0 0.0
    %6461 = vmatprep.subr.mxu0 0.0
    %6462 = vmatpush1.msra.mxu0 0.0
    %6463 = vmatprep.subr.mxu0 0.0
    %6464 = vmatpush1.msra.mxu0 0.0
    %6465 = vmatprep.subr.mxu0 0.0
    %6466 = vmatpush1.msra.mxu0 0.0
    %6467 = vmatprep.subr.mxu0 0.0
    %6468 = vmatpush1.msra.mxu0 0.0
    %6469 = vmatprep.subr.mxu0 0.0
    %6470 = vmatpush1.msra.mxu0 0.0
    %6471 = vmatprep.subr.mxu0 0.0
    %6472 = vmatpush1.msra.mxu0 0.0
    %6473 = vmatprep.subr.mxu0 0.0
    %6474 = vmatpush1.msra.mxu0 0.0
    %6475 = vmatprep.subr.mxu0 0.0
    %6476 = vmatpush1.msra.mxu0 0.0
    %6477 = vmatprep.subr.mxu0 0.0
    %6478 = vmatpush1.msra.mxu0 0.0
    %6479 = vmatprep.subr.mxu0 0.0
    %6480 = vmatpush1.msra.mxu0 0.0
    %6481 = vmatprep.subr.mxu0 0.0
    %6482 = vmatpush1.msra.mxu0 0.0
    %6483 = vmatprep.mubr.f32.mxu0 0.0
    %6484 = vmatmul.mubr.f32.gmra.mrb[0].mxu0 %v6120
    %v6485 = vpop.f32.mrb[0].mxu0
    %v6486 = vadd.f32 0.0, %v6485
    %v6487 = vpop.f32.mrb[0].mxu0
    %6488 = vdwg.mxu0
    %6489 = vmatprep.subr.mxu0 0.0
    %6490 = vmatpush1.msra.mxu0 %v5794
    %6491 = vmatprep.subr.mxu0 0.0
    %6492 = vmatpush1.msra.mxu0 %v5795
    %6493 = vmatprep.subr.mxu0 0.0
    %6494 = vmatpush1.msra.mxu0 %v5796
    %6495 = vmatprep.subr.mxu0 0.0
    %6496 = vmatpush1.msra.mxu0 %v5797
    %6497 = vmatprep.subr.mxu0 0.0
    %6498 = vmatpush1.msra.mxu0 %v5798
    %6499 = vmatprep.subr.mxu0 0.0
    %6500 = vmatpush1.msra.mxu0 %v5799
    %6501 = vmatprep.subr.mxu0 0.0
    %6502 = vmatpush1.msra.mxu0 %v5800
    %6503 = vmatprep.subr.mxu0 0.0
    %6504 = vmatpush1.msra.mxu0 %v5801
    %6505 = vmatprep.subr.mxu0 0.0
    %6506 = vmatpush1.msra.mxu0 0.0
    %6507 = vmatprep.subr.mxu0 0.0
    %6508 = vmatpush1.msra.mxu0 0.0
    %6509 = vmatprep.subr.mxu0 0.0
    %6510 = vmatpush1.msra.mxu0 0.0
    %6511 = vmatprep.subr.mxu0 0.0
    %6512 = vmatpush1.msra.mxu0 0.0
    %6513 = vmatprep.subr.mxu0 0.0
    %6514 = vmatpush1.msra.mxu0 0.0
    %6515 = vmatprep.subr.mxu0 0.0
    %6516 = vmatpush1.msra.mxu0 0.0
    %6517 = vmatprep.subr.mxu0 0.0
    %6518 = vmatpush1.msra.mxu0 0.0
    %6519 = vmatprep.subr.mxu0 0.0
    %6520 = vmatpush1.msra.mxu0 0.0
    %6521 = vmatprep.subr.mxu0 0.0
    %6522 = vmatpush1.msra.mxu0 0.0
    %6523 = vmatprep.subr.mxu0 0.0
    %6524 = vmatpush1.msra.mxu0 0.0
    %6525 = vmatprep.subr.mxu0 0.0
    %6526 = vmatpush1.msra.mxu0 0.0
    %6527 = vmatprep.subr.mxu0 0.0
    %6528 = vmatpush1.msra.mxu0 0.0
    %6529 = vmatprep.subr.mxu0 0.0
    %6530 = vmatpush1.msra.mxu0 0.0
    %6531 = vmatprep.subr.mxu0 0.0
    %6532 = vmatpush1.msra.mxu0 0.0
    %6533 = vmatprep.subr.mxu0 0.0
    %6534 = vmatpush1.msra.mxu0 0.0
    %6535 = vmatprep.subr.mxu0 0.0
    %6536 = vmatpush1.msra.mxu0 0.0
    %6537 = vmatprep.subr.mxu0 0.0
    %6538 = vmatpush1.msra.mxu0 0.0
    %6539 = vmatprep.subr.mxu0 0.0
    %6540 = vmatpush1.msra.mxu0 0.0
    %6541 = vmatprep.subr.mxu0 0.0
    %6542 = vmatpush1.msra.mxu0 0.0
    %6543 = vmatprep.subr.mxu0 0.0
    %6544 = vmatpush1.msra.mxu0 0.0
    %6545 = vmatprep.subr.mxu0 0.0
    %6546 = vmatpush1.msra.mxu0 0.0
    %6547 = vmatprep.subr.mxu0 0.0
    %6548 = vmatpush1.msra.mxu0 0.0
    %6549 = vmatprep.subr.mxu0 0.0
    %6550 = vmatpush1.msra.mxu0 0.0
    %6551 = vmatprep.subr.mxu0 0.0
    %6552 = vmatpush1.msra.mxu0 0.0
    %6553 = vmatprep.mubr.f32.mxu0 0.0
    %6554 = vmatmul.mubr.f32.gmra.mrb[0].mxu0 %v6193
    %v6555 = vpop.f32.mrb[0].mxu0
    %v6556 = vadd.f32 %v6486, %v6555
    %v6557 = vpop.f32.mrb[0].mxu0
    %6558 = vdwg.mxu0
    %v6559 = vadd.f32 %v6556, %v5948
    %v6560 = vtanh.pop %v6559
    %6561 = vmatprep.subr.mxu0 0.0
    %6562 = vmatpush1.msra.mxu0 %v5961
    %6563 = vmatprep.subr.mxu0 0.0
    %6564 = vmatpush1.msra.mxu0 %v5962
    %6565 = vmatprep.subr.mxu0 0.0
    %6566 = vmatpush1.msra.mxu0 %v5963
    %6567 = vmatprep.subr.mxu0 0.0
    %6568 = vmatpush1.msra.mxu0 %v5964
    %6569 = vmatprep.subr.mxu0 0.0
    %6570 = vmatpush1.msra.mxu0 0.0
    %6571 = vmatprep.subr.mxu0 0.0
    %6572 = vmatpush1.msra.mxu0 0.0
    %6573 = vmatprep.subr.mxu0 0.0
    %6574 = vmatpush1.msra.mxu0 0.0
    %6575 = vmatprep.subr.mxu0 0.0
    %6576 = vmatpush1.msra.mxu0 0.0
    %6577 = vmatprep.subr.mxu0 0.0
    %6578 = vmatpush1.msra.mxu0 0.0
    %6579 = vmatprep.subr.mxu0 0.0
    %6580 = vmatpush1.msra.mxu0 0.0
    %6581 = vmatprep.subr.mxu0 0.0
    %6582 = vmatpush1.msra.mxu0 0.0
    %6583 = vmatprep.subr.mxu0 0.0
    %6584 = vmatpush1.msra.mxu0 0.0
    %6585 = vmatprep.subr.mxu0 0.0
    %6586 = vmatpush1.msra.mxu0 0.0
    %6587 = vmatprep.subr.mxu0 0.0
    %6588 = vmatpush1.msra.mxu0 0.0
    %6589 = vmatprep.subr.mxu0 0.0
    %6590 = vmatpush1.msra.mxu0 0.0
    %6591 = vmatprep.subr.mxu0 0.0
    %6592 = vmatpush1.msra.mxu0 0.0
    %6593 = vmatprep.subr.mxu0 0.0
    %6594 = vmatpush1.msra.mxu0 0.0
    %6595 = vmatprep.subr.mxu0 0.0
    %6596 = vmatpush1.msra.mxu0 0.0
    %6597 = vmatprep.subr.mxu0 0.0
    %6598 = vmatpush1.msra.mxu0 0.0
    %6599 = vmatprep.subr.mxu0 0.0
    %6600 = vmatpush1.msra.mxu0 0.0
    %6601 = vmatprep.subr.mxu0 0.0
    %6602 = vmatpush1.msra.mxu0 0.0
    %6603 = vmatprep.subr.mxu0 0.0
    %6604 = vmatpush1.msra.mxu0 0.0
    %6605 = vmatprep.subr.mxu0 0.0
    %6606 = vmatpush1.msra.mxu0 0.0
    %6607 = vmatprep.subr.mxu0 0.0
    %6608 = vmatpush1.msra.mxu0 0.0
    %6609 = vmatprep.subr.mxu0 0.0
    %6610 = vmatpush1.msra.mxu0 0.0
    %6611 = vmatprep.subr.mxu0 0.0
    %6612 = vmatpush1.msra.mxu0 0.0
    %6613 = vmatprep.subr.mxu0 0.0
    %6614 = vmatpush1.msra.mxu0 0.0
    %6615 = vmatprep.subr.mxu0 0.0
    %6616 = vmatpush1.msra.mxu0 0.0
    %6617 = vmatprep.subr.mxu0 0.0
    %6618 = vmatpush1.msra.mxu0 0.0
    %6619 = vmatprep.subr.mxu0 0.0
    %6620 = vmatpush1.msra.mxu0 0.0
    %6621 = vmatprep.subr.mxu0 0.0
    %6622 = vmatpush1.msra.mxu0 0.0
    %6623 = vmatprep.subr.mxu0 0.0
    %6624 = vmatpush1.msra.mxu0 0.0
    %6625 = vmatprep.mubr.f32.mxu0 0.0
    %6626 = vmatmul.mubr.f32.gmra.mrb[0].mxu0 %v6120
    %v6627 = vpop.f32.mrb[0].mxu0
    %v6628 = vadd.f32 0.0, %v6627
    %v6629 = vpop.f32.mrb[0].mxu0
    %6630 = vdwg.mxu0
    %6631 = vmatprep.subr.mxu0 0.0
    %6632 = vmatpush1.msra.mxu0 %v5952
    %6633 = vmatprep.subr.mxu0 0.0
    %6634 = vmatpush1.msra.mxu0 %v5953
    %6635 = vmatprep.subr.mxu0 0.0
    %6636 = vmatpush1.msra.mxu0 %v5954
    %6637 = vmatprep.subr.mxu0 0.0
    %6638 = vmatpush1.msra.mxu0 %v5955
    %6639 = vmatprep.subr.mxu0 0.0
    %6640 = vmatpush1.msra.mxu0 %v5956
    %6641 = vmatprep.subr.mxu0 0.0
    %6642 = vmatpush1.msra.mxu0 %v5957
    %6643 = vmatprep.subr.mxu0 0.0
    %6644 = vmatpush1.msra.mxu0 %v5958
    %6645 = vmatprep.subr.mxu0 0.0
    %6646 = vmatpush1.msra.mxu0 %v5959
    %6647 = vmatprep.subr.mxu0 0.0
    %6648 = vmatpush1.msra.mxu0 0.0
    %6649 = vmatprep.subr.mxu0 0.0
    %6650 = vmatpush1.msra.mxu0 0.0
    %6651 = vmatprep.subr.mxu0 0.0
    %6652 = vmatpush1.msra.mxu0 0.0
    %6653 = vmatprep.subr.mxu0 0.0
    %6654 = vmatpush1.msra.mxu0 0.0
    %6655 = vmatprep.subr.mxu0 0.0
    %6656 = vmatpush1.msra.mxu0 0.0
    %6657 = vmatprep.subr.mxu0 0.0
    %6658 = vmatpush1.msra.mxu0 0.0
    %6659 = vmatprep.subr.mxu0 0.0
    %6660 = vmatpush1.msra.mxu0 0.0
    %6661 = vmatprep.subr.mxu0 0.0
    %6662 = vmatpush1.msra.mxu0 0.0
    %6663 = vmatprep.subr.mxu0 0.0
    %6664 = vmatpush1.msra.mxu0 0.0
    %6665 = vmatprep.subr.mxu0 0.0
    %6666 = vmatpush1.msra.mxu0 0.0
    %6667 = vmatprep.subr.mxu0 0.0
    %6668 = vmatpush1.msra.mxu0 0.0
    %6669 = vmatprep.subr.mxu0 0.0
    %6670 = vmatpush1.msra.mxu0 0.0
    %6671 = vmatprep.subr.mxu0 0.0
    %6672 = vmatpush1.msra.mxu0 0.0
    %6673 = vmatprep.subr.mxu0 0.0
    %6674 = vmatpush1.msra.mxu0 0.0
    %6675 = vmatprep.subr.mxu0 0.0
    %6676 = vmatpush1.msra.mxu0 0.0
    %6677 = vmatprep.subr.mxu0 0.0
    %6678 = vmatpush1.msra.mxu0 0.0
    %6679 = vmatprep.subr.mxu0 0.0
    %6680 = vmatpush1.msra.mxu0 0.0
    %6681 = vmatprep.subr.mxu0 0.0
    %6682 = vmatpush1.msra.mxu0 0.0
    %6683 = vmatprep.subr.mxu0 0.0
    %6684 = vmatpush1.msra.mxu0 0.0
    %6685 = vmatprep.subr.mxu0 0.0
    %6686 = vmatpush1.msra.mxu0 0.0
    %6687 = vmatprep.subr.mxu0 0.0
    %6688 = vmatpush1.msra.mxu0 0.0
    %6689 = vmatprep.subr.mxu0 0.0
    %6690 = vmatpush1.msra.mxu0 0.0
    %6691 = vmatprep.subr.mxu0 0.0
    %6692 = vmatpush1.msra.mxu0 0.0
    %6693 = vmatprep.subr.mxu0 0.0
    %6694 = vmatpush1.msra.mxu0 0.0
    %6695 = vmatprep.mubr.f32.mxu0 0.0
    %6696 = vmatmul.mubr.f32.gmra.mrb[0].mxu0 %v6193
    %v6697 = vpop.f32.mrb[0].mxu0
    %v6698 = vadd.f32 %v6628, %v6697
    %v6699 = vpop.f32.mrb[0].mxu0
    %6700 = vdwg.mxu0
    %v6701 = vadd.f32 %v6698, %v6106
    %v6702 = vxor.u32 %v6701, 2147483648
    %v6703 = vmul.f32 %v6702, 1.442695
    %v6704 = vpow.pop %v6703
    %v6705 = vadd.f32 %v6704, 1.0
    %v6706 = vrcp.pop %v6705
    %v6707 = vmul.f32 1.0, %v6706
    %v6708 = vmul.f32 %v6418, 0.0
    %v6709 = vmul.f32 %v6271, %v6560
    %v6710 = vadd.f32 %v6708, %v6709
    %v6711 = vtanh.pop %v6710
    %v6712 = vmul.f32 %v6707, %v6711
    %v6713 = vmul.f32 %v6418, %v6116
    %v6714 = vadd.f32 %v6713, %v6709
    %v6715 = vtanh.pop %v6714
    %v6716 = vmul.f32 %v6707, %v6715
    %v6718 = vsel %vm1744, %v6716, 0
    %6720 = vmatprep.subr.mxu0 0.0
    %6721 = vmatpush1.msra.mxu0 %v5475
    %6722 = vmatprep.subr.mxu0 0.0
    %6723 = vmatpush1.msra.mxu0 %v5476
    %6724 = vmatprep.subr.mxu0 0.0
    %6725 = vmatpush1.msra.mxu0 %v5477
    %6726 = vmatprep.subr.mxu0 0.0
    %6727 = vmatpush1.msra.mxu0 %v5478
    %6728 = vmatprep.subr.mxu0 0.0
    %6729 = vmatpush1.msra.mxu0 0.0
    %6730 = vmatprep.subr.mxu0 0.0
    %6731 = vmatpush1.msra.mxu0 0.0
    %6732 = vmatprep.subr.mxu0 0.0
    %6733 = vmatpush1.msra.mxu0 0.0
    %6734 = vmatprep.subr.mxu0 0.0
    %6735 = vmatpush1.msra.mxu0 0.0
    %6736 = vmatprep.subr.mxu0 0.0
    %6737 = vmatpush1.msra.mxu0 0.0
    %6738 = vmatprep.subr.mxu0 0.0
    %6739 = vmatpush1.msra.mxu0 0.0
    %6740 = vmatprep.subr.mxu0 0.0
    %6741 = vmatpush1.msra.mxu0 0.0
    %6742 = vmatprep.subr.mxu0 0.0
    %6743 = vmatpush1.msra.mxu0 0.0
    %6744 = vmatprep.subr.mxu0 0.0
    %6745 = vmatpush1.msra.mxu0 0.0
    %6746 = vmatprep.subr.mxu0 0.0
    %6747 = vmatpush1.msra.mxu0 0.0
    %6748 = vmatprep.subr.mxu0 0.0
    %6749 = vmatpush1.msra.mxu0 0.0
    %6750 = vmatprep.subr.mxu0 0.0
    %6751 = vmatpush1.msra.mxu0 0.0
    %6752 = vmatprep.subr.mxu0 0.0
    %6753 = vmatpush1.msra.mxu0 0.0
    %6754 = vmatprep.subr.mxu0 0.0
    %6755 = vmatpush1.msra.mxu0 0.0
    %6756 = vmatprep.subr.mxu0 0.0
    %6757 = vmatpush1.msra.mxu0 0.0
    %6758 = vmatprep.subr.mxu0 0.0
    %6759 = vmatpush1.msra.mxu0 0.0
    %6760 = vmatprep.subr.mxu0 0.0
    %6761 = vmatpush1.msra.mxu0 0.0
    %6762 = vmatprep.subr.mxu0 0.0
    %6763 = vmatpush1.msra.mxu0 0.0
    %6764 = vmatprep.subr.mxu0 0.0
    %6765 = vmatpush1.msra.mxu0 0.0
    %6766 = vmatprep.subr.mxu0 0.0
    %6767 = vmatpush1.msra.mxu0 0.0
    %6768 = vmatprep.subr.mxu0 0.0
    %6769 = vmatpush1.msra.mxu0 0.0
    %6770 = vmatprep.subr.mxu0 0.0
    %6771 = vmatpush1.msra.mxu0 0.0
    %6772 = vmatprep.subr.mxu0 0.0
    %6773 = vmatpush1.msra.mxu0 0.0
    %6774 = vmatprep.subr.mxu0 0.0
    %6775 = vmatpush1.msra.mxu0 0.0
    %6776 = vmatprep.subr.mxu0 0.0
    %6777 = vmatpush1.msra.mxu0 0.0
    %6778 = vmatprep.subr.mxu0 0.0
    %6779 = vmatpush1.msra.mxu0 0.0
    %6780 = vmatprep.subr.mxu0 0.0
    %6781 = vmatpush1.msra.mxu0 0.0
    %6782 = vmatprep.subr.mxu0 0.0
    %6783 = vmatpush1.msra.mxu0 0.0
    %6784 = vmatprep.mubr.f32.mxu0 0.0
    %6785 = vmatmul.mubr.f32.gmra.mrb[0].mxu0 %v6718
    %v6786 = vpop.f32.mrb[0].mxu0
    %v6787 = vadd.f32 0.0, %v6786
    %v6788 = vpop.f32.mrb[0].mxu0
    %6789 = vdwg.mxu0
    %6790 = vmatprep.subr.mxu0 0.0
    %6791 = vmatpush1.msra.mxu0 %v5467
    %6792 = vmatprep.subr.mxu0 0.0
    %6793 = vmatpush1.msra.mxu0 %v5468
    %6794 = vmatprep.subr.mxu0 0.0
    %6795 = vmatpush1.msra.mxu0 %v5469
    %6796 = vmatprep.subr.mxu0 0.0
    %6797 = vmatpush1.msra.mxu0 %v5470
    %6798 = vmatprep.subr.mxu0 0.0
    %6799 = vmatpush1.msra.mxu0 %v5471
    %6800 = vmatprep.subr.mxu0 0.0
    %6801 = vmatpush1.msra.mxu0 %v5472
    %6802 = vmatprep.subr.mxu0 0.0
    %6803 = vmatpush1.msra.mxu0 %v5473
    %6804 = vmatprep.subr.mxu0 0.0
    %6805 = vmatpush1.msra.mxu0 %v5474
    %6806 = vmatprep.subr.mxu0 0.0
    %6807 = vmatpush1.msra.mxu0 0.0
    %6808 = vmatprep.subr.mxu0 0.0
    %6809 = vmatpush1.msra.mxu0 0.0
    %6810 = vmatprep.subr.mxu0 0.0
    %6811 = vmatpush1.msra.mxu0 0.0
    %6812 = vmatprep.subr.mxu0 0.0
    %6813 = vmatpush1.msra.mxu0 0.0
    %6814 = vmatprep.subr.mxu0 0.0
    %6815 = vmatpush1.msra.mxu0 0.0
    %6816 = vmatprep.subr.mxu0 0.0
    %6817 = vmatpush1.msra.mxu0 0.0
    %6818 = vmatprep.subr.mxu0 0.0
    %6819 = vmatpush1.msra.mxu0 0.0
    %6820 = vmatprep.subr.mxu0 0.0
    %6821 = vmatpush1.msra.mxu0 0.0
    %6822 = vmatprep.subr.mxu0 0.0
    %6823 = vmatpush1.msra.mxu0 0.0
    %6824 = vmatprep.subr.mxu0 0.0
    %6825 = vmatpush1.msra.mxu0 0.0
    %6826 = vmatprep.subr.mxu0 0.0
    %6827 = vmatpush1.msra.mxu0 0.0
    %6828 = vmatprep.subr.mxu0 0.0
    %6829 = vmatpush1.msra.mxu0 0.0
    %6830 = vmatprep.subr.mxu0 0.0
    %6831 = vmatpush1.msra.mxu0 0.0
    %6832 = vmatprep.subr.mxu0 0.0
    %6833 = vmatpush1.msra.mxu0 0.0
    %6834 = vmatprep.subr.mxu0 0.0
    %6835 = vmatpush1.msra.mxu0 0.0
    %6836 = vmatprep.subr.mxu0 0.0
    %6837 = vmatpush1.msra.mxu0 0.0
    %6838 = vmatprep.subr.mxu0 0.0
    %6839 = vmatpush1.msra.mxu0 0.0
    %6840 = vmatprep.subr.mxu0 0.0
    %6841 = vmatpush1.msra.mxu0 0.0
    %6842 = vmatprep.subr.mxu0 0.0
    %6843 = vmatpush1.msra.mxu0 0.0
    %6844 = vmatprep.subr.mxu0 0.0
    %6845 = vmatpush1.msra.mxu0 0.0
    %6846 = vmatprep.subr.mxu0 0.0
    %6847 = vmatpush1.msra.mxu0 0.0
    %6848 = vmatprep.subr.mxu0 0.0
    %6849 = vmatpush1.msra.mxu0 0.0
    %6850 = vmatprep.subr.mxu0 0.0
    %6851 = vmatpush1.msra.mxu0 0.0
    %6852 = vmatprep.subr.mxu0 0.0
    %6853 = vmatpush1.msra.mxu0 0.0
    %6854 = vmatprep.mubr.f32.mxu0 0.0
    %6855 = vmatmul.mubr.f32.gmra.mrb[0].mxu0 %v5550
    %v6856 = vpop.f32.mrb[0].mxu0
    %v6857 = vadd.f32 %v6787, %v6856
    %v6858 = vpop.f32.mrb[0].mxu0
    %6859 = vdwg.mxu0
    %v6860 = vadd.f32 %v6857, %v5622
    %v6861 = vxor.u32 %v6860, 2147483648
    %v6862 = vmul.f32 %v6861, 1.442695
    %v6863 = vpow.pop %v6862
    %v6864 = vadd.f32 %v6863, 1.0
    %v6865 = vrcp.pop %v6864
    %v6866 = vmul.f32 1.0, %v6865
    %6867 = vmatprep.subr.mxu0 0.0
    %6868 = vmatpush1.msra.mxu0 %v5640
    %6869 = vmatprep.subr.mxu0 0.0
    %6870 = vmatpush1.msra.mxu0 %v5641
    %6871 = vmatprep.subr.mxu0 0.0
    %6872 = vmatpush1.msra.mxu0 %v5642
    %6873 = vmatprep.subr.mxu0 0.0
    %6874 = vmatpush1.msra.mxu0 %v5643
    %6875 = vmatprep.subr.mxu0 0.0
    %6876 = vmatpush1.msra.mxu0 0.0
    %6877 = vmatprep.subr.mxu0 0.0
    %6878 = vmatpush1.msra.mxu0 0.0
    %6879 = vmatprep.subr.mxu0 0.0
    %6880 = vmatpush1.msra.mxu0 0.0
    %6881 = vmatprep.subr.mxu0 0.0
    %6882 = vmatpush1.msra.mxu0 0.0
    %6883 = vmatprep.subr.mxu0 0.0
    %6884 = vmatpush1.msra.mxu0 0.0
    %6885 = vmatprep.subr.mxu0 0.0
    %6886 = vmatpush1.msra.mxu0 0.0
    %6887 = vmatprep.subr.mxu0 0.0
    %6888 = vmatpush1.msra.mxu0 0.0
    %6889 = vmatprep.subr.mxu0 0.0
    %6890 = vmatpush1.msra.mxu0 0.0
    %6891 = vmatprep.subr.mxu0 0.0
    %6892 = vmatpush1.msra.mxu0 0.0
    %6893 = vmatprep.subr.mxu0 0.0
    %6894 = vmatpush1.msra.mxu0 0.0
    %6895 = vmatprep.subr.mxu0 0.0
    %6896 = vmatpush1.msra.mxu0 0.0
    %6897 = vmatprep.subr.mxu0 0.0
    %6898 = vmatpush1.msra.mxu0 0.0
    %6899 = vmatprep.subr.mxu0 0.0
    %6900 = vmatpush1.msra.mxu0 0.0
    %6901 = vmatprep.subr.mxu0 0.0
    %6902 = vmatpush1.msra.mxu0 0.0
    %6903 = vmatprep.subr.mxu0 0.0
    %6904 = vmatpush1.msra.mxu0 0.0
    %6905 = vmatprep.subr.mxu0 0.0
    %6906 = vmatpush1.msra.mxu0 0.0
    %6907 = vmatprep.subr.mxu0 0.0
    %6908 = vmatpush1.msra.mxu0 0.0
    %6909 = vmatprep.subr.mxu0 0.0
    %6910 = vmatpush1.msra.mxu0 0.0
    %6911 = vmatprep.subr.mxu0 0.0
    %6912 = vmatpush1.msra.mxu0 0.0
    %6913 = vmatprep.subr.mxu0 0.0
    %6914 = vmatpush1.msra.mxu0 0.0
    %6915 = vmatprep.subr.mxu0 0.0
    %6916 = vmatpush1.msra.mxu0 0.0
    %6917 = vmatprep.subr.mxu0 0.0
    %6918 = vmatpush1.msra.mxu0 0.0
    %6919 = vmatprep.subr.mxu0 0.0
    %6920 = vmatpush1.msra.mxu0 0.0
    %6921 = vmatprep.subr.mxu0 0.0
    %6922 = vmatpush1.msra.mxu0 0.0
    %6923 = vmatprep.subr.mxu0 0.0
    %6924 = vmatpush1.msra.mxu0 0.0
    %6925 = vmatprep.subr.mxu0 0.0
    %6926 = vmatpush1.msra.mxu0 0.0
    %6927 = vmatprep.subr.mxu0 0.0
    %6928 = vmatpush1.msra.mxu0 0.0
    %6929 = vmatprep.subr.mxu0 0.0
    %6930 = vmatpush1.msra.mxu0 0.0
    %6931 = vmatprep.mubr.f32.mxu0 0.0
    %6932 = vmatmul.mubr.f32.gmra.mrb[0].mxu0 %v6718
    %v6933 = vpop.f32.mrb[0].mxu0
    %v6934 = vadd.f32 0.0, %v6933
    %v6935 = vpop.f32.mrb[0].mxu0
    %6936 = vdwg.mxu0
    %6937 = vmatprep.subr.mxu0 0.0
    %6938 = vmatpush1.msra.mxu0 %v5631
    %6939 = vmatprep.subr.mxu0 0.0
    %6940 = vmatpush1.msra.mxu0 %v5632
    %6941 = vmatprep.subr.mxu0 0.0
    %6942 = vmatpush1.msra.mxu0 %v5633
    %6943 = vmatprep.subr.mxu0 0.0
    %6944 = vmatpush1.msra.mxu0 %v5634
    %6945 = vmatprep.subr.mxu0 0.0
    %6946 = vmatpush1.msra.mxu0 %v5635
    %6947 = vmatprep.subr.mxu0 0.0
    %6948 = vmatpush1.msra.mxu0 %v5636
    %6949 = vmatprep.subr.mxu0 0.0
    %6950 = vmatpush1.msra.mxu0 %v5637
    %6951 = vmatprep.subr.mxu0 0.0
    %6952 = vmatpush1.msra.mxu0 %v5638
    %6953 = vmatprep.subr.mxu0 0.0
    %6954 = vmatpush1.msra.mxu0 0.0
    %6955 = vmatprep.subr.mxu0 0.0
    %6956 = vmatpush1.msra.mxu0 0.0
    %6957 = vmatprep.subr.mxu0 0.0
    %6958 = vmatpush1.msra.mxu0 0.0
    %6959 = vmatprep.subr.mxu0 0.0
    %6960 = vmatpush1.msra.mxu0 0.0
    %6961 = vmatprep.subr.mxu0 0.0
    %6962 = vmatpush1.msra.mxu0 0.0
    %6963 = vmatprep.subr.mxu0 0.0
    %6964 = vmatpush1.msra.mxu0 0.0
    %6965 = vmatprep.subr.mxu0 0.0
    %6966 = vmatpush1.msra.mxu0 0.0
    %6967 = vmatprep.subr.mxu0 0.0
    %6968 = vmatpush1.msra.mxu0 0.0
    %6969 = vmatprep.subr.mxu0 0.0
    %6970 = vmatpush1.msra.mxu0 0.0
    %6971 = vmatprep.subr.mxu0 0.0
    %6972 = vmatpush1.msra.mxu0 0.0
    %6973 = vmatprep.subr.mxu0 0.0
    %6974 = vmatpush1.msra.mxu0 0.0
    %6975 = vmatprep.subr.mxu0 0.0
    %6976 = vmatpush1.msra.mxu0 0.0
    %6977 = vmatprep.subr.mxu0 0.0
    %6978 = vmatpush1.msra.mxu0 0.0
    %6979 = vmatprep.subr.mxu0 0.0
    %6980 = vmatpush1.msra.mxu0 0.0
    %6981 = vmatprep.subr.mxu0 0.0
    %6982 = vmatpush1.msra.mxu0 0.0
    %6983 = vmatprep.subr.mxu0 0.0
    %6984 = vmatpush1.msra.mxu0 0.0
    %6985 = vmatprep.subr.mxu0 0.0
    %6986 = vmatpush1.msra.mxu0 0.0
    %6987 = vmatprep.subr.mxu0 0.0
    %6988 = vmatpush1.msra.mxu0 0.0
    %6989 = vmatprep.subr.mxu0 0.0
    %6990 = vmatpush1.msra.mxu0 0.0
    %6991 = vmatprep.subr.mxu0 0.0
    %6992 = vmatpush1.msra.mxu0 0.0
    %6993 = vmatprep.subr.mxu0 0.0
    %6994 = vmatpush1.msra.mxu0 0.0
    %6995 = vmatprep.subr.mxu0 0.0
    %6996 = vmatpush1.msra.mxu0 0.0
    %6997 = vmatprep.subr.mxu0 0.0
    %6998 = vmatpush1.msra.mxu0 0.0
    %6999 = vmatprep.subr.mxu0 0.0
    %7000 = vmatpush1.msra.mxu0 0.0
    %7001 = vmatprep.mubr.f32.mxu0 0.0
    %7002 = vmatmul.mubr.f32.gmra.mrb[0].mxu0 %v5550
    %v7003 = vpop.f32.mrb[0].mxu0
    %v7004 = vadd.f32 %v6934, %v7003
    %v7005 = vpop.f32.mrb[0].mxu0
    %7006 = vdwg.mxu0
    %v7007 = vadd.f32 %v7004, %v5785
    %v7008 = vxor.u32 %v7007, 2147483648
    %v7009 = vmul.f32 %v7008, 1.442695
    %v7010 = vpow.pop %v7009
    %v7011 = vadd.f32 %v7010, 1.0
    %v7012 = vrcp.pop %v7011
    %v7013 = vmul.f32 1.0, %v7012
    %7014 = vmatprep.subr.mxu0 0.0
    %7015 = vmatpush1.msra.mxu0 %v5803
    %7016 = vmatprep.subr.mxu0 0.0
    %7017 = vmatpush1.msra.mxu0 %v5804
    %7018 = vmatprep.subr.mxu0 0.0
    %7019 = vmatpush1.msra.mxu0 %v5805
    %7020 = vmatprep.subr.mxu0 0.0
    %7021 = vmatpush1.msra.mxu0 %v5806
    %7022 = vmatprep.subr.mxu0 0.0
    %7023 = vmatpush1.msra.mxu0 0.0
    %7024 = vmatprep.subr.mxu0 0.0
    %7025 = vmatpush1.msra.mxu0 0.0
    %7026 = vmatprep.subr.mxu0 0.0
    %7027 = vmatpush1.msra.mxu0 0.0
    %7028 = vmatprep.subr.mxu0 0.0
    %7029 = vmatpush1.msra.mxu0 0.0
    %7030 = vmatprep.subr.mxu0 0.0
    %7031 = vmatpush1.msra.mxu0 0.0
    %7032 = vmatprep.subr.mxu0 0.0
    %7033 = vmatpush1.msra.mxu0 0.0
    %7034 = vmatprep.subr.mxu0 0.0
    %7035 = vmatpush1.msra.mxu0 0.0
    %7036 = vmatprep.subr.mxu0 0.0
    %7037 = vmatpush1.msra.mxu0 0.0
    %7038 = vmatprep.subr.mxu0 0.0
    %7039 = vmatpush1.msra.mxu0 0.0
    %7040 = vmatprep.subr.mxu0 0.0
    %7041 = vmatpush1.msra.mxu0 0.0
    %7042 = vmatprep.subr.mxu0 0.0
    %7043 = vmatpush1.msra.mxu0 0.0
    %7044 = vmatprep.subr.mxu0 0.0
    %7045 = vmatpush1.msra.mxu0 0.0
    %7046 = vmatprep.subr.mxu0 0.0
    %7047 = vmatpush1.msra.mxu0 0.0
    %7048 = vmatprep.subr.mxu0 0.0
    %7049 = vmatpush1.msra.mxu0 0.0
    %7050 = vmatprep.subr.mxu0 0.0
    %7051 = vmatpush1.msra.mxu0 0.0
    %7052 = vmatprep.subr.mxu0 0.0
    %7053 = vmatpush1.msra.mxu0 0.0
    %7054 = vmatprep.subr.mxu0 0.0
    %7055 = vmatpush1.msra.mxu0 0.0
    %7056 = vmatprep.subr.mxu0 0.0
    %7057 = vmatpush1.msra.mxu0 0.0
    %7058 = vmatprep.subr.mxu0 0.0
    %7059 = vmatpush1.msra.mxu0 0.0
    %7060 = vmatprep.subr.mxu0 0.0
    %7061 = vmatpush1.msra.mxu0 0.0
    %7062 = vmatprep.subr.mxu0 0.0
    %7063 = vmatpush1.msra.mxu0 0.0
    %7064 = vmatprep.subr.mxu0 0.0
    %7065 = vmatpush1.msra.mxu0 0.0
    %7066 = vmatprep.subr.mxu0 0.0
    %7067 = vmatpush1.msra.mxu0 0.0
    %7068 = vmatprep.subr.mxu0 0.0
    %7069 = vmatpush1.msra.mxu0 0.0
    %7070 = vmatprep.subr.mxu0 0.0
    %7071 = vmatpush1.msra.mxu0 0.0
    %7072 = vmatprep.subr.mxu0 0.0
    %7073 = vmatpush1.msra.mxu0 0.0
    %7074 = vmatprep.subr.mxu0 0.0
    %7075 = vmatpush1.msra.mxu0 0.0
    %7076 = vmatprep.subr.mxu0 0.0
    %7077 = vmatpush1.msra.mxu0 0.0
    %7078 = vmatprep.mubr.f32.mxu0 0.0
    %7079 = vmatmul.mubr.f32.gmra.mrb[0].mxu0 %v6718
    %v7080 = vpop.f32.mrb[0].mxu0
    %v7081 = vadd.f32 0.0, %v7080
    %v7082 = vpop.f32.mrb[0].mxu0
    %7083 = vdwg.mxu0
    %7084 = vmatprep.subr.mxu0 0.0
    %7085 = vmatpush1.msra.mxu0 %v5794
    %7086 = vmatprep.subr.mxu0 0.0
    %7087 = vmatpush1.msra.mxu0 %v5795
    %7088 = vmatprep.subr.mxu0 0.0
    %7089 = vmatpush1.msra.mxu0 %v5796
    %7090 = vmatprep.subr.mxu0 0.0
    %7091 = vmatpush1.msra.mxu0 %v5797
    %7092 = vmatprep.subr.mxu0 0.0
    %7093 = vmatpush1.msra.mxu0 %v5798
    %7094 = vmatprep.subr.mxu0 0.0
    %7095 = vmatpush1.msra.mxu0 %v5799
    %7096 = vmatprep.subr.mxu0 0.0
    %7097 = vmatpush1.msra.mxu0 %v5800
    %7098 = vmatprep.subr.mxu0 0.0
    %7099 = vmatpush1.msra.mxu0 %v5801
    %7100 = vmatprep.subr.mxu0 0.0
    %7101 = vmatpush1.msra.mxu0 0.0
    %7102 = vmatprep.subr.mxu0 0.0
    %7103 = vmatpush1.msra.mxu0 0.0
    %7104 = vmatprep.subr.mxu0 0.0
    %7105 = vmatpush1.msra.mxu0 0.0
    %7106 = vmatprep.subr.mxu0 0.0
    %7107 = vmatpush1.msra.mxu0 0.0
    %7108 = vmatprep.subr.mxu0 0.0
    %7109 = vmatpush1.msra.mxu0 0.0
    %7110 = vmatprep.subr.mxu0 0.0
    %7111 = vmatpush1.msra.mxu0 0.0
    %7112 = vmatprep.subr.mxu0 0.0
    %7113 = vmatpush1.msra.mxu0 0.0
    %7114 = vmatprep.subr.mxu0 0.0
    %7115 = vmatpush1.msra.mxu0 0.0
    %7116 = vmatprep.subr.mxu0 0.0
    %7117 = vmatpush1.msra.mxu0 0.0
    %7118 = vmatprep.subr.mxu0 0.0
    %7119 = vmatpush1.msra.mxu0 0.0
    %7120 = vmatprep.subr.mxu0 0.0
    %7121 = vmatpush1.msra.mxu0 0.0
    %7122 = vmatprep.subr.mxu0 0.0
    %7123 = vmatpush1.msra.mxu0 0.0
    %7124 = vmatprep.subr.mxu0 0.0
    %7125 = vmatpush1.msra.mxu0 0.0
    %7126 = vmatprep.subr.mxu0 0.0
    %7127 = vmatpush1.msra.mxu0 0.0
    %7128 = vmatprep.subr.mxu0 0.0
    %7129 = vmatpush1.msra.mxu0 0.0
    %7130 = vmatprep.subr.mxu0 0.0
    %7131 = vmatpush1.msra.mxu0 0.0
    %7132 = vmatprep.subr.mxu0 0.0
    %7133 = vmatpush1.msra.mxu0 0.0
    %7134 = vmatprep.subr.mxu0 0.0
    %7135 = vmatpush1.msra.mxu0 0.0
    %7136 = vmatprep.subr.mxu0 0.0
    %7137 = vmatpush1.msra.mxu0 0.0
    %7138 = vmatprep.subr.mxu0 0.0
    %7139 = vmatpush1.msra.mxu0 0.0
    %7140 = vmatprep.subr.mxu0 0.0
    %7141 = vmatpush1.msra.mxu0 0.0
    %7142 = vmatprep.subr.mxu0 0.0
    %7143 = vmatpush1.msra.mxu0 0.0
    %7144 = vmatprep.subr.mxu0 0.0
    %7145 = vmatpush1.msra.mxu0 0.0
    %7146 = vmatprep.subr.mxu0 0.0
    %7147 = vmatpush1.msra.mxu0 0.0
    %7148 = vmatprep.mubr.f32.mxu0 0.0
    %7149 = vmatmul.mubr.f32.gmra.mrb[0].mxu0 %v5550
    %v7150 = vpop.f32.mrb[0].mxu0
    %v7151 = vadd.f32 %v7081, %v7150
    %v7152 = vpop.f32.mrb[0].mxu0
    %7153 = vdwg.mxu0
    %v7154 = vadd.f32 %v7151, %v5948
    %v7155 = vtanh.pop %v7154
    %7156 = vmatprep.subr.mxu0 0.0
    %7157 = vmatpush1.msra.mxu0 %v5961
    %7158 = vmatprep.subr.mxu0 0.0
    %7159 = vmatpush1.msra.mxu0 %v5962
    %7160 = vmatprep.subr.mxu0 0.0
    %7161 = vmatpush1.msra.mxu0 %v5963
    %7162 = vmatprep.subr.mxu0 0.0
    %7163 = vmatpush1.msra.mxu0 %v5964
    %7164 = vmatprep.subr.mxu0 0.0
    %7165 = vmatpush1.msra.mxu0 0.0
    %7166 = vmatprep.subr.mxu0 0.0
    %7167 = vmatpush1.msra.mxu0 0.0
    %7168 = vmatprep.subr.mxu0 0.0
    %7169 = vmatpush1.msra.mxu0 0.0
    %7170 = vmatprep.subr.mxu0 0.0
    %7171 = vmatpush1.msra.mxu0 0.0
    %7172 = vmatprep.subr.mxu0 0.0
    %7173 = vmatpush1.msra.mxu0 0.0
    %7174 = vmatprep.subr.mxu0 0.0
    %7175 = vmatpush1.msra.mxu0 0.0
    %7176 = vmatprep.subr.mxu0 0.0
    %7177 = vmatpush1.msra.mxu0 0.0
    %7178 = vmatprep.subr.mxu0 0.0
    %7179 = vmatpush1.msra.mxu0 0.0
    %7180 = vmatprep.subr.mxu0 0.0
    %7181 = vmatpush1.msra.mxu0 0.0
    %7182 = vmatprep.subr.mxu0 0.0
    %7183 = vmatpush1.msra.mxu0 0.0
    %7184 = vmatprep.subr.mxu0 0.0
    %7185 = vmatpush1.msra.mxu0 0.0
    %7186 = vmatprep.subr.mxu0 0.0
    %7187 = vmatpush1.msra.mxu0 0.0
    %7188 = vmatprep.subr.mxu0 0.0
    %7189 = vmatpush1.msra.mxu0 0.0
    %7190 = vmatprep.subr.mxu0 0.0
    %7191 = vmatpush1.msra.mxu0 0.0
    %7192 = vmatprep.subr.mxu0 0.0
    %7193 = vmatpush1.msra.mxu0 0.0
    %7194 = vmatprep.subr.mxu0 0.0
    %7195 = vmatpush1.msra.mxu0 0.0
    %7196 = vmatprep.subr.mxu0 0.0
    %7197 = vmatpush1.msra.mxu0 0.0
    %7198 = vmatprep.subr.mxu0 0.0
    %7199 = vmatpush1.msra.mxu0 0.0
    %7200 = vmatprep.subr.mxu0 0.0
    %7201 = vmatpush1.msra.mxu0 0.0
    %7202 = vmatprep.subr.mxu0 0.0
    %7203 = vmatpush1.msra.mxu0 0.0
    %7204 = vmatprep.subr.mxu0 0.0
    %7205 = vmatpush1.msra.mxu0 0.0
    %7206 = vmatprep.subr.mxu0 0.0
    %7207 = vmatpush1.msra.mxu0 0.0
    %7208 = vmatprep.subr.mxu0 0.0
    %7209 = vmatpush1.msra.mxu0 0.0
    %7210 = vmatprep.subr.mxu0 0.0
    %7211 = vmatpush1.msra.mxu0 0.0
    %7212 = vmatprep.subr.mxu0 0.0
    %7213 = vmatpush1.msra.mxu0 0.0
    %7214 = vmatprep.subr.mxu0 0.0
    %7215 = vmatpush1.msra.mxu0 0.0
    %7216 = vmatprep.subr.mxu0 0.0
    %7217 = vmatpush1.msra.mxu0 0.0
    %7218 = vmatprep.subr.mxu0 0.0
    %7219 = vmatpush1.msra.mxu0 0.0
    %7220 = vmatprep.mubr.f32.mxu0 0.0
    %7221 = vmatmul.mubr.f32.gmra.mrb[0].mxu0 %v6718
    %v7222 = vpop.f32.mrb[0].mxu0
    %v7223 = vadd.f32 0.0, %v7222
    %v7224 = vpop.f32.mrb[0].mxu0
    %7225 = vdwg.mxu0
    %7226 = vmatprep.subr.mxu0 0.0
    %7227 = vmatpush1.msra.mxu0 %v5952
    %7228 = vmatprep.subr.mxu0 0.0
    %7229 = vmatpush1.msra.mxu0 %v5953
    %7230 = vmatprep.subr.mxu0 0.0
    %7231 = vmatpush1.msra.mxu0 %v5954
    %7232 = vmatprep.subr.mxu0 0.0
    %7233 = vmatpush1.msra.mxu0 %v5955
    %7234 = vmatprep.subr.mxu0 0.0
    %7235 = vmatpush1.msra.mxu0 %v5956
    %7236 = vmatprep.subr.mxu0 0.0
    %7237 = vmatpush1.msra.mxu0 %v5957
    %7238 = vmatprep.subr.mxu0 0.0
    %7239 = vmatpush1.msra.mxu0 %v5958
    %7240 = vmatprep.subr.mxu0 0.0
    %7241 = vmatpush1.msra.mxu0 %v5959
    %7242 = vmatprep.subr.mxu0 0.0
    %7243 = vmatpush1.msra.mxu0 0.0
    %7244 = vmatprep.subr.mxu0 0.0
    %7245 = vmatpush1.msra.mxu0 0.0
    %7246 = vmatprep.subr.mxu0 0.0
    %7247 = vmatpush1.msra.mxu0 0.0
    %7248 = vmatprep.subr.mxu0 0.0
    %7249 = vmatpush1.msra.mxu0 0.0
    %7250 = vmatprep.subr.mxu0 0.0
    %7251 = vmatpush1.msra.mxu0 0.0
    %7252 = vmatprep.subr.mxu0 0.0
    %7253 = vmatpush1.msra.mxu0 0.0
    %7254 = vmatprep.subr.mxu0 0.0
    %7255 = vmatpush1.msra.mxu0 0.0
    %7256 = vmatprep.subr.mxu0 0.0
    %7257 = vmatpush1.msra.mxu0 0.0
    %7258 = vmatprep.subr.mxu0 0.0
    %7259 = vmatpush1.msra.mxu0 0.0
    %7260 = vmatprep.subr.mxu0 0.0
    %7261 = vmatpush1.msra.mxu0 0.0
    %7262 = vmatprep.subr.mxu0 0.0
    %7263 = vmatpush1.msra.mxu0 0.0
    %7264 = vmatprep.subr.mxu0 0.0
    %7265 = vmatpush1.msra.mxu0 0.0
    %7266 = vmatprep.subr.mxu0 0.0
    %7267 = vmatpush1.msra.mxu0 0.0
    %7268 = vmatprep.subr.mxu0 0.0
    %7269 = vmatpush1.msra.mxu0 0.0
    %7270 = vmatprep.subr.mxu0 0.0
    %7271 = vmatpush1.msra.mxu0 0.0
    %7272 = vmatprep.subr.mxu0 0.0
    %7273 = vmatpush1.msra.mxu0 0.0
    %7274 = vmatprep.subr.mxu0 0.0
    %7275 = vmatpush1.msra.mxu0 0.0
    %7276 = vmatprep.subr.mxu0 0.0
    %7277 = vmatpush1.msra.mxu0 0.0
    %7278 = vmatprep.subr.mxu0 0.0
    %7279 = vmatpush1.msra.mxu0 0.0
    %7280 = vmatprep.subr.mxu0 0.0
    %7281 = vmatpush1.msra.mxu0 0.0
    %7282 = vmatprep.subr.mxu0 0.0
    %7283 = vmatpush1.msra.mxu0 0.0
    %7284 = vmatprep.subr.mxu0 0.0
    %7285 = vmatpush1.msra.mxu0 0.0
    %7286 = vmatprep.subr.mxu0 0.0
    %7287 = vmatpush1.msra.mxu0 0.0
    %7288 = vmatprep.subr.mxu0 0.0
    %7289 = vmatpush1.msra.mxu0 0.0
    %7290 = vmatprep.mubr.f32.mxu0 0.0
    %7291 = vmatmul.mubr.f32.gmra.mrb[0].mxu0 %v5550
    %v7292 = vpop.f32.mrb[0].mxu0
    %v7293 = vadd.f32 %v7223, %v7292
    %v7294 = vpop.f32.mrb[0].mxu0
    %7295 = vdwg.mxu0
    %v7296 = vadd.f32 %v7293, %v6106
    %v7297 = vxor.u32 %v7296, 2147483648
    %v7298 = vmul.f32 %v7297, 1.442695
    %v7299 = vpow.pop %v7298
    %v7300 = vadd.f32 %v7299, 1.0
    %v7301 = vrcp.pop %v7300
    %v7302 = vmul.f32 1.0, %v7301
    %v7303 = vmul.f32 %v7013, %v6710
    %v7304 = vmul.f32 %v6866, %v7155
    %v7305 = vadd.f32 %v7303, %v7304
    %v7306 = vtanh.pop %v7305
    %v7307 = vmul.f32 %v7302, %v7306
    %7309 = vrot.lane.b32.xlu0 %v7307, 32
    %v7310 = vpop.permute.xlu0 %7309
    %v7312 = vsel %vm1744, %v6716, %v7310
    %7314 = vrot.lane.b32.xlu0 %v6712, 32
    %v7315 = vpop.permute.xlu0 %7314
    %v7317 = vsel %vm1744, %v6118, %v7315
    %v7319 = vrot.slane %v7312, 7
    %v7321 = vsel %vm454, %v7317, %v7319
    %v7322 = vld [vmem:[%s18] sm:$0xff]
    %v7323 = vld [vmem:[%s18 + $0x8] sm:$0xff]
    %v7324 = vld [vmem:[%s18 + $0x10] sm:$0xff]
    %v7325 = vld [vmem:[%s18 + $0x18] sm:$0xff]
    %v7326 = vld [vmem:[%s18 + $0x20] sm:$0xff]
    %v7327 = vld [vmem:[%s18 + $0x28] sm:$0xff]
    %v7328 = vld [vmem:[%s18 + $0x30] sm:$0xff]
    %v7329 = vld [vmem:[%s18 + $0x38] sm:$0xff]
    %v7330 = vld [vmem:[%s19] sm:$0xff]
    %v7331 = vld [vmem:[%s19 + $0x8] sm:$0xff]
    %v7332 = vld [vmem:[%s19 + $0x10] sm:$0xff]
    %v7333 = vld [vmem:[%s19 + $0x18] sm:$0xff]
    %v7334 = vld [vmem:[%s19 + $0x20] sm:$0xff]
    %v7335 = vld [vmem:[%s19 + $0x28] sm:$0xff]
    %v7336 = vld [vmem:[%s19 + $0x30] sm:$0xff]
    %v7337 = vld [vmem:[%s19 + $0x38] sm:$0xff]
    %v7338 = vsel %vm104, %v7312, 0
    %7340 = vmatprep.subr.mxu0 0.0
    %7341 = vmatpush1.msra.mxu0 %v7330
    %7342 = vmatprep.subr.mxu0 0.0
    %7343 = vmatpush1.msra.mxu0 %v7331
    %7344 = vmatprep.subr.mxu0 0.0
    %7345 = vmatpush1.msra.mxu0 %v7332
    %7346 = vmatprep.subr.mxu0 0.0
    %7347 = vmatpush1.msra.mxu0 %v7333
    %7348 = vmatprep.subr.mxu0 0.0
    %7349 = vmatpush1.msra.mxu0 %v7334
    %7350 = vmatprep.subr.mxu0 0.0
    %7351 = vmatpush1.msra.mxu0 %v7335
    %7352 = vmatprep.subr.mxu0 0.0
    %7353 = vmatpush1.msra.mxu0 %v7336
    %7354 = vmatprep.subr.mxu0 0.0
    %7355 = vmatpush1.msra.mxu0 %v7337
    %7356 = vmatprep.subr.mxu0 0.0
    %7357 = vmatpush1.msra.mxu0 0.0
    %7358 = vmatprep.subr.mxu0 0.0
    %7359 = vmatpush1.msra.mxu0 0.0
    %7360 = vmatprep.subr.mxu0 0.0
    %7361 = vmatpush1.msra.mxu0 0.0
    %7362 = vmatprep.subr.mxu0 0.0
    %7363 = vmatpush1.msra.mxu0 0.0
    %7364 = vmatprep.subr.mxu0 0.0
    %7365 = vmatpush1.msra.mxu0 0.0
    %7366 = vmatprep.subr.mxu0 0.0
    %7367 = vmatpush1.msra.mxu0 0.0
    %7368 = vmatprep.subr.mxu0 0.0
    %7369 = vmatpush1.msra.mxu0 0.0
    %7370 = vmatprep.subr.mxu0 0.0
    %7371 = vmatpush1.msra.mxu0 0.0
    %7372 = vmatprep.subr.mxu0 0.0
    %7373 = vmatpush1.msra.mxu0 0.0
    %7374 = vmatprep.subr.mxu0 0.0
    %7375 = vmatpush1.msra.mxu0 0.0
    %7376 = vmatprep.subr.mxu0 0.0
    %7377 = vmatpush1.msra.mxu0 0.0
    %7378 = vmatprep.subr.mxu0 0.0
    %7379 = vmatpush1.msra.mxu0 0.0
    %7380 = vmatprep.subr.mxu0 0.0
    %7381 = vmatpush1.msra.mxu0 0.0
    %7382 = vmatprep.subr.mxu0 0.0
    %7383 = vmatpush1.msra.mxu0 0.0
    %7384 = vmatprep.subr.mxu0 0.0
    %7385 = vmatpush1.msra.mxu0 0.0
    %7386 = vmatprep.subr.mxu0 0.0
    %7387 = vmatpush1.msra.mxu0 0.0
    %7388 = vmatprep.subr.mxu0 0.0
    %7389 = vmatpush1.msra.mxu0 0.0
    %7390 = vmatprep.subr.mxu0 0.0
    %7391 = vmatpush1.msra.mxu0 0.0
    %7392 = vmatprep.subr.mxu0 0.0
    %7393 = vmatpush1.msra.mxu0 0.0
    %7394 = vmatprep.subr.mxu0 0.0
    %7395 = vmatpush1.msra.mxu0 0.0
    %7396 = vmatprep.subr.mxu0 0.0
    %7397 = vmatpush1.msra.mxu0 0.0
    %7398 = vmatprep.subr.mxu0 0.0
    %7399 = vmatpush1.msra.mxu0 0.0
    %7400 = vmatprep.subr.mxu0 0.0
    %7401 = vmatpush1.msra.mxu0 0.0
    %7402 = vmatprep.subr.mxu0 0.0
    %7403 = vmatpush1.msra.mxu0 0.0
    %7404 = vmatprep.mubr.f32.mxu0 0.0
    %7405 = vmatmul.mubr.f32.gmra.mrb[0].mxu0 %v7338
    %v7406 = vpop.f32.mrb[0].mxu0
    %v7407 = vadd.f32 0.0, %v7406
    %v7408 = vpop.f32.mrb[0].mxu0
    %7409 = vdwg.mxu0
    %v7410 = vlaneseq
    %v7411 = vshrl.u32 %v7410, 7
    %v7412 = vsub.s32 0, %v7411
    %v7413 = vrot.slane %v7407, %v7412
    %v7415 = vsel %vm104, %v7321, 0
    %7417 = vmatprep.subr.mxu0 0.0
    %7418 = vmatpush1.msra.mxu0 %v7322
    %7419 = vmatprep.subr.mxu0 0.0
    %7420 = vmatpush1.msra.mxu0 %v7323
    %7421 = vmatprep.subr.mxu0 0.0
    %7422 = vmatpush1.msra.mxu0 %v7324
    %7423 = vmatprep.subr.mxu0 0.0
    %7424 = vmatpush1.msra.mxu0 %v7325
    %7425 = vmatprep.subr.mxu0 0.0
    %7426 = vmatpush1.msra.mxu0 %v7326
    %7427 = vmatprep.subr.mxu0 0.0
    %7428 = vmatpush1.msra.mxu0 %v7327
    %7429 = vmatprep.subr.mxu0 0.0
    %7430 = vmatpush1.msra.mxu0 %v7328
    %7431 = vmatprep.subr.mxu0 0.0
    %7432 = vmatpush1.msra.mxu0 %v7329
    %7433 = vmatprep.subr.mxu0 0.0
    %7434 = vmatpush1.msra.mxu0 0.0
    %7435 = vmatprep.subr.mxu0 0.0
    %7436 = vmatpush1.msra.mxu0 0.0
    %7437 = vmatprep.subr.mxu0 0.0
    %7438 = vmatpush1.msra.mxu0 0.0
    %7439 = vmatprep.subr.mxu0 0.0
    %7440 = vmatpush1.msra.mxu0 0.0
    %7441 = vmatprep.subr.mxu0 0.0
    %7442 = vmatpush1.msra.mxu0 0.0
    %7443 = vmatprep.subr.mxu0 0.0
    %7444 = vmatpush1.msra.mxu0 0.0
    %7445 = vmatprep.subr.mxu0 0.0
    %7446 = vmatpush1.msra.mxu0 0.0
    %7447 = vmatprep.subr.mxu0 0.0
    %7448 = vmatpush1.msra.mxu0 0.0
    %7449 = vmatprep.subr.mxu0 0.0
    %7450 = vmatpush1.msra.mxu0 0.0
    %7451 = vmatprep.subr.mxu0 0.0
    %7452 = vmatpush1.msra.mxu0 0.0
    %7453 = vmatprep.subr.mxu0 0.0
    %7454 = vmatpush1.msra.mxu0 0.0
    %7455 = vmatprep.subr.mxu0 0.0
    %7456 = vmatpush1.msra.mxu0 0.0
    %7457 = vmatprep.subr.mxu0 0.0
    %7458 = vmatpush1.msra.mxu0 0.0
    %7459 = vmatprep.subr.mxu0 0.0
    %7460 = vmatpush1.msra.mxu0 0.0
    %7461 = vmatprep.subr.mxu0 0.0
    %7462 = vmatpush1.msra.mxu0 0.0
    %7463 = vmatprep.subr.mxu0 0.0
    %7464 = vmatpush1.msra.mxu0 0.0
    %7465 = vmatprep.subr.mxu0 0.0
    %7466 = vmatpush1.msra.mxu0 0.0
    %7467 = vmatprep.subr.mxu0 0.0
    %7468 = vmatpush1.msra.mxu0 0.0
    %7469 = vmatprep.subr.mxu0 0.0
    %7470 = vmatpush1.msra.mxu0 0.0
    %7471 = vmatprep.subr.mxu0 0.0
    %7472 = vmatpush1.msra.mxu0 0.0
    %7473 = vmatprep.subr.mxu0 0.0
    %7474 = vmatpush1.msra.mxu0 0.0
    %7475 = vmatprep.subr.mxu0 0.0
    %7476 = vmatpush1.msra.mxu0 0.0
    %7477 = vmatprep.subr.mxu0 0.0
    %7478 = vmatpush1.msra.mxu0 0.0
    %7479 = vmatprep.subr.mxu0 0.0
    %7480 = vmatpush1.msra.mxu0 0.0
    %7481 = vmatprep.mubr.f32.mxu0 0.0
    %7482 = vmatmul.mubr.f32.gmra.mrb[0].mxu0 %v7415
    %v7483 = vpop.f32.mrb[0].mxu0
    %v7484 = vadd.f32 %v7413, %v7483
    %v7485 = vpop.f32.mrb[0].mxu0
    %7486 = vdwg.mxu0
    %v7487 = vld [vmem:[%s20] sm:$0x1]
    %v7489 = vlaneseq
    %v7490 = vshrl.u32 %v7489, 7
    %v7491 = vsub.s32 0, %v7490
    %v7492 = vrot.slane %v7487, %v7491
    %v7494 = vadd.f32 %v7484, %v7492
    %v7495 = vsel %vm1148, %v7494, -inf
    %7496 = vmax.xlane.f32.xlu0 %v7495
    %v7497 = vpop.xlane.xlu0 %7496
    %v7498 = vsub.f32 %v7494, %v7497
    %v7499 = vmul.f32 %v7498, 1.442695
    %v7500 = vpow.pop %v7499
    %v7501 = vsel %vm1148, %v7500, 0.0
    %7502 = vadd.xlane.f32.xlu0 %v7501
    %v7503 = vpop.xlane.xlu0 %7502
    %v7504 = vrcp.pop %v7503
    %v7505 = vmul.f32 %v7500, %v7504
    %v7506 = vmul.f32 %v7321, %v7505
    %v7507 = vsel %vm1148, %v7506, 0.0
    %v7508 = vrot.slane %v7507, 4
    %v7509 = vadd.f32 %v7507, %v7508
    %v7510 = vrot.slane %v7509, 2
    %v7511 = vadd.f32 %v7509, %v7510
    %v7512 = vrot.slane %v7511, 1
    %v7513 = vadd.f32 %v7511, %v7512
    %v7514 = vmul.f32 %v7513, %v1716
    %v7515 = vsub.f32 %v7513, %v1716
    %v7516 = vand.u32 2147483647, %v7515
    %v7517 = vld [vmem:[%s21] sm:$0xff]
    %v7518 = vld [vmem:[%s21 + $0x8] sm:$0xff]
    %v7519 = vld [vmem:[%s21 + $0x10] sm:$0xff]
    %v7520 = vld [vmem:[%s21 + $0x18] sm:$0xff]
    %v7521 = vld [vmem:[%s21 + $0x20] sm:$0xff]
    %v7522 = vld [vmem:[%s21 + $0x28] sm:$0xff]
    %v7523 = vld [vmem:[%s21 + $0x30] sm:$0xff]
    %v7524 = vld [vmem:[%s21 + $0x38] sm:$0xff]
    %s7525 = scalar_lea.vmem %s21, 64
    %v7526 = vld [vmem:[%s7525] sm:$0xff]
    %v7527 = vld [vmem:[%s7525 + $0x8] sm:$0xff]
    %v7528 = vld [vmem:[%s7525 + $0x10] sm:$0xff]
    %v7529 = vld [vmem:[%s7525 + $0x18] sm:$0xff]
    %v7530 = vld [vmem:[%s7525 + $0x20] sm:$0xff]
    %v7531 = vld [vmem:[%s7525 + $0x28] sm:$0xff]
    %v7532 = vld [vmem:[%s7525 + $0x30] sm:$0xff]
    %v7533 = vld [vmem:[%s7525 + $0x38] sm:$0xff]
    %v7535 = vsel %vm104, %v7516, 0
    %7537 = vmatprep.subr.mxu0 0.0
    %7538 = vmatpush1.msra.mxu0 %v7526
    %7539 = vmatprep.subr.mxu0 0.0
    %7540 = vmatpush1.msra.mxu0 %v7527
    %7541 = vmatprep.subr.mxu0 0.0
    %7542 = vmatpush1.msra.mxu0 %v7528
    %7543 = vmatprep.subr.mxu0 0.0
    %7544 = vmatpush1.msra.mxu0 %v7529
    %7545 = vmatprep.subr.mxu0 0.0
    %7546 = vmatpush1.msra.mxu0 %v7530
    %7547 = vmatprep.subr.mxu0 0.0
    %7548 = vmatpush1.msra.mxu0 %v7531
    %7549 = vmatprep.subr.mxu0 0.0
    %7550 = vmatpush1.msra.mxu0 %v7532
    %7551 = vmatprep.subr.mxu0 0.0
    %7552 = vmatpush1.msra.mxu0 %v7533
    %7553 = vmatprep.subr.mxu0 0.0
    %7554 = vmatpush1.msra.mxu0 0.0
    %7555 = vmatprep.subr.mxu0 0.0
    %7556 = vmatpush1.msra.mxu0 0.0
    %7557 = vmatprep.subr.mxu0 0.0
    %7558 = vmatpush1.msra.mxu0 0.0
    %7559 = vmatprep.subr.mxu0 0.0
    %7560 = vmatpush1.msra.mxu0 0.0
    %7561 = vmatprep.subr.mxu0 0.0
    %7562 = vmatpush1.msra.mxu0 0.0
    %7563 = vmatprep.subr.mxu0 0.0
    %7564 = vmatpush1.msra.mxu0 0.0
    %7565 = vmatprep.subr.mxu0 0.0
    %7566 = vmatpush1.msra.mxu0 0.0
    %7567 = vmatprep.subr.mxu0 0.0
    %7568 = vmatpush1.msra.mxu0 0.0
    %7569 = vmatprep.subr.mxu0 0.0
    %7570 = vmatpush1.msra.mxu0 0.0
    %7571 = vmatprep.subr.mxu0 0.0
    %7572 = vmatpush1.msra.mxu0 0.0
    %7573 = vmatprep.subr.mxu0 0.0
    %7574 = vmatpush1.msra.mxu0 0.0
    %7575 = vmatprep.subr.mxu0 0.0
    %7576 = vmatpush1.msra.mxu0 0.0
    %7577 = vmatprep.subr.mxu0 0.0
    %7578 = vmatpush1.msra.mxu0 0.0
    %7579 = vmatprep.subr.mxu0 0.0
    %7580 = vmatpush1.msra.mxu0 0.0
    %7581 = vmatprep.subr.mxu0 0.0
    %7582 = vmatpush1.msra.mxu0 0.0
    %7583 = vmatprep.subr.mxu0 0.0
    %7584 = vmatpush1.msra.mxu0 0.0
    %7585 = vmatprep.subr.mxu0 0.0
    %7586 = vmatpush1.msra.mxu0 0.0
    %7587 = vmatprep.subr.mxu0 0.0
    %7588 = vmatpush1.msra.mxu0 0.0
    %7589 = vmatprep.subr.mxu0 0.0
    %7590 = vmatpush1.msra.mxu0 0.0
    %7591 = vmatprep.subr.mxu0 0.0
    %7592 = vmatpush1.msra.mxu0 0.0
    %7593 = vmatprep.subr.mxu0 0.0
    %7594 = vmatpush1.msra.mxu0 0.0
    %7595 = vmatprep.subr.mxu0 0.0
    %7596 = vmatpush1.msra.mxu0 0.0
    %7597 = vmatprep.subr.mxu0 0.0
    %7598 = vmatpush1.msra.mxu0 0.0
    %7599 = vmatprep.subr.mxu0 0.0
    %7600 = vmatpush1.msra.mxu0 0.0
    %7601 = vmatprep.mubr.f32.mxu0 0.0
    %7602 = vmatmul.mubr.f32.gmra.mrb[0].mxu0 %v7535
    %v7603 = vpop.f32.mrb[0].mxu0
    %v7604 = vadd.f32 0.0, %v7603
    %v7605 = vpop.f32.mrb[0].mxu0
    %7606 = vdwg.mxu0
    %v7608 = vsel %vm104, %v7514, 0
    %7610 = vmatprep.subr.mxu0 0.0
    %7611 = vmatpush1.msra.mxu0 %v7517
    %7612 = vmatprep.subr.mxu0 0.0
    %7613 = vmatpush1.msra.mxu0 %v7518
    %7614 = vmatprep.subr.mxu0 0.0
    %7615 = vmatpush1.msra.mxu0 %v7519
    %7616 = vmatprep.subr.mxu0 0.0
    %7617 = vmatpush1.msra.mxu0 %v7520
    %7618 = vmatprep.subr.mxu0 0.0
    %7619 = vmatpush1.msra.mxu0 %v7521
    %7620 = vmatprep.subr.mxu0 0.0
    %7621 = vmatpush1.msra.mxu0 %v7522
    %7622 = vmatprep.subr.mxu0 0.0
    %7623 = vmatpush1.msra.mxu0 %v7523
    %7624 = vmatprep.subr.mxu0 0.0
    %7625 = vmatpush1.msra.mxu0 %v7524
    %7626 = vmatprep.subr.mxu0 0.0
    %7627 = vmatpush1.msra.mxu0 0.0
    %7628 = vmatprep.subr.mxu0 0.0
    %7629 = vmatpush1.msra.mxu0 0.0
    %7630 = vmatprep.subr.mxu0 0.0
    %7631 = vmatpush1.msra.mxu0 0.0
    %7632 = vmatprep.subr.mxu0 0.0
    %7633 = vmatpush1.msra.mxu0 0.0
    %7634 = vmatprep.subr.mxu0 0.0
    %7635 = vmatpush1.msra.mxu0 0.0
    %7636 = vmatprep.subr.mxu0 0.0
    %7637 = vmatpush1.msra.mxu0 0.0
    %7638 = vmatprep.subr.mxu0 0.0
    %7639 = vmatpush1.msra.mxu0 0.0
    %7640 = vmatprep.subr.mxu0 0.0
    %7641 = vmatpush1.msra.mxu0 0.0
    %7642 = vmatprep.subr.mxu0 0.0
    %7643 = vmatpush1.msra.mxu0 0.0
    %7644 = vmatprep.subr.mxu0 0.0
    %7645 = vmatpush1.msra.mxu0 0.0
    %7646 = vmatprep.subr.mxu0 0.0
    %7647 = vmatpush1.msra.mxu0 0.0
    %7648 = vmatprep.subr.mxu0 0.0
    %7649 = vmatpush1.msra.mxu0 0.0
    %7650 = vmatprep.subr.mxu0 0.0
    %7651 = vmatpush1.msra.mxu0 0.0
    %7652 = vmatprep.subr.mxu0 0.0
    %7653 = vmatpush1.msra.mxu0 0.0
    %7654 = vmatprep.subr.mxu0 0.0
    %7655 = vmatpush1.msra.mxu0 0.0
    %7656 = vmatprep.subr.mxu0 0.0
    %7657 = vmatpush1.msra.mxu0 0.0
    %7658 = vmatprep.subr.mxu0 0.0
    %7659 = vmatpush1.msra.mxu0 0.0
    %7660 = vmatprep.subr.mxu0 0.0
    %7661 = vmatpush1.msra.mxu0 0.0
    %7662 = vmatprep.subr.mxu0 0.0
    %7663 = vmatpush1.msra.mxu0 0.0
    %7664 = vmatprep.subr.mxu0 0.0
    %7665 = vmatpush1.msra.mxu0 0.0
    %7666 = vmatprep.subr.mxu0 0.0
    %7667 = vmatpush1.msra.mxu0 0.0
    %7668 = vmatprep.subr.mxu0 0.0
    %7669 = vmatpush1.msra.mxu0 0.0
    %7670 = vmatprep.subr.mxu0 0.0
    %7671 = vmatpush1.msra.mxu0 0.0
    %7672 = vmatprep.subr.mxu0 0.0
    %7673 = vmatpush1.msra.mxu0 0.0
    %7674 = vmatprep.mubr.f32.mxu0 0.0
    %7675 = vmatmul.mubr.f32.gmra.mrb[0].mxu0 %v7608
    %v7676 = vpop.f32.mrb[0].mxu0
    %v7677 = vadd.f32 %v7604, %v7676
    %v7678 = vpop.f32.mrb[0].mxu0
    %7679 = vdwg.mxu0
    %s7680 = scalar_lea.vmem %s21, 128
    %v7681 = vld [vmem:[%s7680] sm:$0xff]
    %v7682 = vld [vmem:[%s7680 + $0x8] sm:$0xff]
    %v7683 = vld [vmem:[%s7680 + $0x10] sm:$0xff]
    %v7684 = vld [vmem:[%s7680 + $0x18] sm:$0xff]
    %v7685 = vld [vmem:[%s7680 + $0x20] sm:$0xff]
    %v7686 = vld [vmem:[%s7680 + $0x28] sm:$0xff]
    %v7687 = vld [vmem:[%s7680 + $0x30] sm:$0xff]
    %v7688 = vld [vmem:[%s7680 + $0x38] sm:$0xff]
    %v7690 = vsel %vm104, %v7513, 0
    %7692 = vmatprep.subr.mxu0 0.0
    %7693 = vmatpush1.msra.mxu0 %v7681
    %7694 = vmatprep.subr.mxu0 0.0
    %7695 = vmatpush1.msra.mxu0 %v7682
    %7696 = vmatprep.subr.mxu0 0.0
    %7697 = vmatpush1.msra.mxu0 %v7683
    %7698 = vmatprep.subr.mxu0 0.0
    %7699 = vmatpush1.msra.mxu0 %v7684
    %7700 = vmatprep.subr.mxu0 0.0
    %7701 = vmatpush1.msra.mxu0 %v7685
    %7702 = vmatprep.subr.mxu0 0.0
    %7703 = vmatpush1.msra.mxu0 %v7686
    %7704 = vmatprep.subr.mxu0 0.0
    %7705 = vmatpush1.msra.mxu0 %v7687
    %7706 = vmatprep.subr.mxu0 0.0
    %7707 = vmatpush1.msra.mxu0 %v7688
    %7708 = vmatprep.subr.mxu0 0.0
    %7709 = vmatpush1.msra.mxu0 0.0
    %7710 = vmatprep.subr.mxu0 0.0
    %7711 = vmatpush1.msra.mxu0 0.0
    %7712 = vmatprep.subr.mxu0 0.0
    %7713 = vmatpush1.msra.mxu0 0.0
    %7714 = vmatprep.subr.mxu0 0.0
    %7715 = vmatpush1.msra.mxu0 0.0
    %7716 = vmatprep.subr.mxu0 0.0
    %7717 = vmatpush1.msra.mxu0 0.0
    %7718 = vmatprep.subr.mxu0 0.0
    %7719 = vmatpush1.msra.mxu0 0.0
    %7720 = vmatprep.subr.mxu0 0.0
    %7721 = vmatpush1.msra.mxu0 0.0
    %7722 = vmatprep.subr.mxu0 0.0
    %7723 = vmatpush1.msra.mxu0 0.0
    %7724 = vmatprep.subr.mxu0 0.0
    %7725 = vmatpush1.msra.mxu0 0.0
    %7726 = vmatprep.subr.mxu0 0.0
    %7727 = vmatpush1.msra.mxu0 0.0
    %7728 = vmatprep.subr.mxu0 0.0
    %7729 = vmatpush1.msra.mxu0 0.0
    %7730 = vmatprep.subr.mxu0 0.0
    %7731 = vmatpush1.msra.mxu0 0.0
    %7732 = vmatprep.subr.mxu0 0.0
    %7733 = vmatpush1.msra.mxu0 0.0
    %7734 = vmatprep.subr.mxu0 0.0
    %7735 = vmatpush1.msra.mxu0 0.0
    %7736 = vmatprep.subr.mxu0 0.0
    %7737 = vmatpush1.msra.mxu0 0.0
    %7738 = vmatprep.subr.mxu0 0.0
    %7739 = vmatpush1.msra.mxu0 0.0
    %7740 = vmatprep.subr.mxu0 0.0
    %7741 = vmatpush1.msra.mxu0 0.0
    %7742 = vmatprep.subr.mxu0 0.0
    %7743 = vmatpush1.msra.mxu0 0.0
    %7744 = vmatprep.subr.mxu0 0.0
    %7745 = vmatpush1.msra.mxu0 0.0
    %7746 = vmatprep.subr.mxu0 0.0
    %7747 = vmatpush1.msra.mxu0 0.0
    %7748 = vmatprep.subr.mxu0 0.0
    %7749 = vmatpush1.msra.mxu0 0.0
    %7750 = vmatprep.subr.mxu0 0.0
    %7751 = vmatpush1.msra.mxu0 0.0
    %7752 = vmatprep.subr.mxu0 0.0
    %7753 = vmatpush1.msra.mxu0 0.0
    %7754 = vmatprep.subr.mxu0 0.0
    %7755 = vmatpush1.msra.mxu0 0.0
    %7756 = vmatprep.mubr.f32.mxu0 0.0
    %7757 = vmatmul.mubr.f32.gmra.mrb[0].mxu0 %v7690
    %v7758 = vpop.f32.mrb[0].mxu0
    %v7759 = vadd.f32 0.0, %v7758
    %v7760 = vpop.f32.mrb[0].mxu0
    %7761 = vdwg.mxu0
    %v7762 = vadd.f32 %v7677, %v7759
    %s7763 = scalar_lea.vmem %s21, 192
    %v7764 = vld [vmem:[%s7763] sm:$0xff]
    %v7765 = vld [vmem:[%s7763 + $0x8] sm:$0xff]
    %v7766 = vld [vmem:[%s7763 + $0x10] sm:$0xff]
    %v7767 = vld [vmem:[%s7763 + $0x18] sm:$0xff]
    %v7768 = vld [vmem:[%s7763 + $0x20] sm:$0xff]
    %v7769 = vld [vmem:[%s7763 + $0x28] sm:$0xff]
    %v7770 = vld [vmem:[%s7763 + $0x30] sm:$0xff]
    %v7771 = vld [vmem:[%s7763 + $0x38] sm:$0xff]
    %v7773 = vsel %vm104, %v1716, 0
    %7775 = vmatprep.subr.mxu0 0.0
    %7776 = vmatpush1.msra.mxu0 %v7764
    %7777 = vmatprep.subr.mxu0 0.0
    %7778 = vmatpush1.msra.mxu0 %v7765
    %7779 = vmatprep.subr.mxu0 0.0
    %7780 = vmatpush1.msra.mxu0 %v7766
    %7781 = vmatprep.subr.mxu0 0.0
    %7782 = vmatpush1.msra.mxu0 %v7767
    %7783 = vmatprep.subr.mxu0 0.0
    %7784 = vmatpush1.msra.mxu0 %v7768
    %7785 = vmatprep.subr.mxu0 0.0
    %7786 = vmatpush1.msra.mxu0 %v7769
    %7787 = vmatprep.subr.mxu0 0.0
    %7788 = vmatpush1.msra.mxu0 %v7770
    %7789 = vmatprep.subr.mxu0 0.0
    %7790 = vmatpush1.msra.mxu0 %v7771
    %7791 = vmatprep.subr.mxu0 0.0
    %7792 = vmatpush1.msra.mxu0 0.0
    %7793 = vmatprep.subr.mxu0 0.0
    %7794 = vmatpush1.msra.mxu0 0.0
    %7795 = vmatprep.subr.mxu0 0.0
    %7796 = vmatpush1.msra.mxu0 0.0
    %7797 = vmatprep.subr.mxu0 0.0
    %7798 = vmatpush1.msra.mxu0 0.0
    %7799 = vmatprep.subr.mxu0 0.0
    %7800 = vmatpush1.msra.mxu0 0.0
    %7801 = vmatprep.subr.mxu0 0.0
    %7802 = vmatpush1.msra.mxu0 0.0
    %7803 = vmatprep.subr.mxu0 0.0
    %7804 = vmatpush1.msra.mxu0 0.0
    %7805 = vmatprep.subr.mxu0 0.0
    %7806 = vmatpush1.msra.mxu0 0.0
    %7807 = vmatprep.subr.mxu0 0.0
    %7808 = vmatpush1.msra.mxu0 0.0
    %7809 = vmatprep.subr.mxu0 0.0
    %7810 = vmatpush1.msra.mxu0 0.0
    %7811 = vmatprep.subr.mxu0 0.0
    %7812 = vmatpush1.msra.mxu0 0.0
    %7813 = vmatprep.subr.mxu0 0.0
    %7814 = vmatpush1.msra.mxu0 0.0
    %7815 = vmatprep.subr.mxu0 0.0
    %7816 = vmatpush1.msra.mxu0 0.0
    %7817 = vmatprep.subr.mxu0 0.0
    %7818 = vmatpush1.msra.mxu0 0.0
    %7819 = vmatprep.subr.mxu0 0.0
    %7820 = vmatpush1.msra.mxu0 0.0
    %7821 = vmatprep.subr.mxu0 0.0
    %7822 = vmatpush1.msra.mxu0 0.0
    %7823 = vmatprep.subr.mxu0 0.0
    %7824 = vmatpush1.msra.mxu0 0.0
    %7825 = vmatprep.subr.mxu0 0.0
    %7826 = vmatpush1.msra.mxu0 0.0
    %7827 = vmatprep.subr.mxu0 0.0
    %7828 = vmatpush1.msra.mxu0 0.0
    %7829 = vmatprep.subr.mxu0 0.0
    %7830 = vmatpush1.msra.mxu0 0.0
    %7831 = vmatprep.subr.mxu0 0.0
    %7832 = vmatpush1.msra.mxu0 0.0
    %7833 = vmatprep.subr.mxu0 0.0
    %7834 = vmatpush1.msra.mxu0 0.0
    %7835 = vmatprep.subr.mxu0 0.0
    %7836 = vmatpush1.msra.mxu0 0.0
    %7837 = vmatprep.subr.mxu0 0.0
    %7838 = vmatpush1.msra.mxu0 0.0
    %7839 = vmatprep.mubr.f32.mxu0 0.0
    %7840 = vmatmul.mubr.f32.gmra.mrb[0].mxu0 %v7773
    %v7841 = vpop.f32.mrb[0].mxu0
    %v7842 = vadd.f32 0.0, %v7841
    %v7843 = vpop.f32.mrb[0].mxu0
    %7844 = vdwg.mxu0
    %v7845 = vadd.f32 %v7762, %v7842
    %v7846 = vld [vmem:[%s22] sm:$0x1]
    %v7847 = vadd.f32 %v7845, %v7846
    %v7848 = vxor.u32 %v7847, 2147483648
    %v7849 = vmul.f32 %v7848, 1.442695
    %v7850 = vpow.pop %v7849
    %v7851 = vadd.f32 %v7850, 1.0
    %v7852 = vrcp.pop %v7851
    %v7853 = vmul.f32 1.0, %v7852
    %v7854 = vld [vmem:[%s23] sm:$0xff]
    %v7855 = vld [vmem:[%s23 + $0x8] sm:$0xff]
    %v7856 = vld [vmem:[%s23 + $0x10] sm:$0xff]
    %v7857 = vld [vmem:[%s23 + $0x18] sm:$0xff]
    %v7858 = vld [vmem:[%s24] sm:$0x1]
    %v7860 = vsel %vm1744, %v7853, 0
    %7862 = vmatprep.subr.mxu0 0.0
    %7863 = vmatpush1.msra.mxu0 %v7854
    %7864 = vmatprep.subr.mxu0 0.0
    %7865 = vmatpush1.msra.mxu0 %v7855
    %7866 = vmatprep.subr.mxu0 0.0
    %7867 = vmatpush1.msra.mxu0 %v7856
    %7868 = vmatprep.subr.mxu0 0.0
    %7869 = vmatpush1.msra.mxu0 %v7857
    %7870 = vmatprep.subr.mxu0 0.0
    %7871 = vmatpush1.msra.mxu0 0.0
    %7872 = vmatprep.subr.mxu0 0.0
    %7873 = vmatpush1.msra.mxu0 0.0
    %7874 = vmatprep.subr.mxu0 0.0
    %7875 = vmatpush1.msra.mxu0 0.0
    %7876 = vmatprep.subr.mxu0 0.0
    %7877 = vmatpush1.msra.mxu0 0.0
    %7878 = vmatprep.subr.mxu0 0.0
    %7879 = vmatpush1.msra.mxu0 0.0
    %7880 = vmatprep.subr.mxu0 0.0
    %7881 = vmatpush1.msra.mxu0 0.0
    %7882 = vmatprep.subr.mxu0 0.0
    %7883 = vmatpush1.msra.mxu0 0.0
    %7884 = vmatprep.subr.mxu0 0.0
    %7885 = vmatpush1.msra.mxu0 0.0
    %7886 = vmatprep.subr.mxu0 0.0
    %7887 = vmatpush1.msra.mxu0 0.0
    %7888 = vmatprep.subr.mxu0 0.0
    %7889 = vmatpush1.msra.mxu0 0.0
    %7890 = vmatprep.subr.mxu0 0.0
    %7891 = vmatpush1.msra.mxu0 0.0
    %7892 = vmatprep.subr.mxu0 0.0
    %7893 = vmatpush1.msra.mxu0 0.0
    %7894 = vmatprep.subr.mxu0 0.0
    %7895 = vmatpush1.msra.mxu0 0.0
    %7896 = vmatprep.subr.mxu0 0.0
    %7897 = vmatpush1.msra.mxu0 0.0
    %7898 = vmatprep.subr.mxu0 0.0
    %7899 = vmatpush1.msra.mxu0 0.0
    %7900 = vmatprep.subr.mxu0 0.0
    %7901 = vmatpush1.msra.mxu0 0.0
    %7902 = vmatprep.subr.mxu0 0.0
    %7903 = vmatpush1.msra.mxu0 0.0
    %7904 = vmatprep.subr.mxu0 0.0
    %7905 = vmatpush1.msra.mxu0 0.0
    %7906 = vmatprep.subr.mxu0 0.0
    %7907 = vmatpush1.msra.mxu0 0.0
    %7908 = vmatprep.subr.mxu0 0.0
    %7909 = vmatpush1.msra.mxu0 0.0
    %7910 = vmatprep.subr.mxu0 0.0
    %7911 = vmatpush1.msra.mxu0 0.0
    %7912 = vmatprep.subr.mxu0 0.0
    %7913 = vmatpush1.msra.mxu0 0.0
    %7914 = vmatprep.subr.mxu0 0.0
    %7915 = vmatpush1.msra.mxu0 0.0
    %7916 = vmatprep.subr.mxu0 0.0
    %7917 = vmatpush1.msra.mxu0 0.0
    %7918 = vmatprep.subr.mxu0 0.0
    %7919 = vmatpush1.msra.mxu0 0.0
    %7920 = vmatprep.subr.mxu0 0.0
    %7921 = vmatpush1.msra.mxu0 0.0
    %7922 = vmatprep.subr.mxu0 0.0
    %7923 = vmatpush1.msra.mxu0 0.0
    %7924 = vmatprep.subr.mxu0 0.0
    %7925 = vmatpush1.msra.mxu0 0.0
    %7926 = vmatprep.mubr.f32.mxu0 0.0
    %7927 = vmatmul.mubr.f32.gmra.mrb[0].mxu0 %v7860
    %v7928 = vpop.f32.mrb[0].mxu0
    %v7929 = vadd.f32 %v7858, %v7928
    %v7930 = vpop.f32.mrb[0].mxu0
    %7931 = vdwg.mxu0
    %7932 = vst [vmem:[#allocation2] sm:$0x1] %v7929
    // Predicated region
    $region110: #{forward.1} parent=1 // pred_check
      _
    $region111: #{forward.1} parent=1 // pred_check_branch
      %7934 = sbr.rel (0) target = $region113
    $region112: #{forward.1} parent=1 // pred_region
      %s7936 = ssub.s32 16, 16
      %7937 = vsyncadd [#allocation3], %s7936
      %s7939 = sshll.u32 [#allocation2], 4
      %s7940 = int_to_ptr.vmem [resolvable:$true] %s7939
      %7942 = dma.vmem_to_hbm [thread:$0]  %s7940, 16, %s27, [#allocation3]
    $region113: #{forward.1} parent=1 // pred_fallthru
      _
    // Predicated region
    $region114: #{forward.1} parent=1 // pred_check
      _
    $region115: #{forward.1} parent=1 // pred_check_branch
      %7944 = sbr.rel (0) target = $region117
    $region116: #{forward.1} parent=1 // pred_region
      %7945 = dma.done [#allocation3], 16
    $region117: #{forward.1} parent=1 // pred_fallthru
      _
    %7946 = vsyncpa [#allocation3], 1

</llo_original>
